<compile_context>
chip_gen: v7x
topology: tpu7x:2x2x1
jax: 0.10.0
libtpu: 0.0.40
codegen_flags: <defaults>
</compile_context>

<pallas_src>
import functools

import jax
import jax.numpy as jnp
from jax.experimental import pallas as pl
from jax.experimental.pallas import tpu as pltpu


def _round_up(x, m):
    return ((x + m - 1) // m) * m


def _pick_tm(M, cap=1024):
    """Lane-tile size: multiple of 128, <= cap, and halved when the M-grid
    would otherwise have a single step so v7x's two TensorCores both get work.
    """
    m128 = _round_up(max(M, 1), 128)
    tm = min(cap, m128)
    if m128 > 128 and _round_up(M, tm) // tm < 2:
        tm = max(128, _round_up(tm // 2, 128))
    return tm


# ----------------------------------------------------------------------------
# Pallas kernel 1: lane-dense fused (W @ patches) + bias + activation
# ----------------------------------------------------------------------------
def _matmul_bias_act_kernel(w_ref, p_ref, b_ref, o_ref, *, act):
    # bf16 operands, f32 accumulation on the MXU.
    acc = jnp.dot(w_ref[...], p_ref[...], preferred_element_type=jnp.float32)
    acc = acc + b_ref[...]                      # (Co, 1) broadcast over lanes
    if act == "relu":
        acc = jnp.maximum(acc, 0.0)
    elif act == "sigmoid":
        # 1/(1+exp(-x)) on the EUP (exp + approx reciprocal); clamp to [0,1]
        # to guard the reciprocal approximation at the range boundary.
        acc = pl.reciprocal(1.0 + jnp.exp(-acc), approx=True)
        acc = jnp.clip(acc, 0.0, 1.0)
    o_ref[...] = acc.astype(o_ref.dtype)


def pallas_matmul_bias_act_t(w_t, patches_t, bias, act, *,
                             out_dtype=jnp.bfloat16, tm_cap=1024):
    """w_t: (Co, K), patches_t: (K, M), bias: (Co,) -> (Co, M) out_dtype.

    M (= N*Ho*Wo) is the lane axis; the patch matrix is tiled over M and
    pipelined; W and bias stay grid-resident (constant index_map).
    """
    Co, K = w_t.shape
    K2, M = patches_t.shape
    assert K == K2
    tm = _pick_tm(M, tm_cap)
    m_pad = _round_up(M, tm)
    if m_pad != M:
        patches_t = jnp.pad(patches_t, ((0, 0), (0, m_pad - M)))
    kernel = functools.partial(_matmul_bias_act_kernel, act=act)
    out = pl.pallas_call(
        kernel,
        out_shape=jax.ShapeDtypeStruct((Co, m_pad), out_dtype),
        grid=(m_pad // tm,),
        in_specs=[
            pl.BlockSpec((Co, K), lambda i: (0, 0)),    # resident weights
            pl.BlockSpec((K, tm), lambda i: (0, i)),    # pipelined patch tile
            pl.BlockSpec((Co, 1), lambda i: (0, 0)),    # resident bias column
        ],
        out_specs=pl.BlockSpec((Co, tm), lambda i: (0, i)),
        compiler_params=pltpu.CompilerParams(
            dimension_semantics=("parallel",)),
    )(w_t.astype(jnp.bfloat16), patches_t.astype(jnp.bfloat16),
      bias.reshape(Co, 1).astype(jnp.float32))
    return out[:, :M]


# ----------------------------------------------------------------------------
# Pallas kernel 2: fused bottleneck
#   Conv2d(32,64,7) [no act]  +  ConvTranspose2d(64,32,7) + ReLU
# Both layers act on 7x7 / 1x1 spatial extents, so each is a single matmul;
# the 64-channel latent stays in vregs/VMEM (no HBM round trip).
# ----------------------------------------------------------------------------
def _bottleneck_kernel(w1_ref, p_ref, b1_ref, w2_ref, b2_ref, o_ref):
    z = jnp.dot(w1_ref[...], p_ref[...], preferred_element_type=jnp.float32)
    z = (z + b1_ref[...]).astype(jnp.bfloat16)        # encoder conv3 (no act)
    y = jnp.dot(w2_ref[...], z, preferred_element_type=jnp.float32)
    o_ref[...] = jnp.maximum(y + b2_ref[...], 0.0).astype(o_ref.dtype)


def pallas_bottleneck(w1_t, x_t, b1, w2_t, b2, *, tm_cap=512):
    """w1_t: (C1, K1), x_t: (K1, M), w2_t: (C2, C1) -> (C2, M) bf16.

    tm capped at 512: dominant buffers are the (K1, tm) bf16 patch and
    (C2, tm) bf16 output tiles, double-buffered -> ~7 MB worst case, safe
    under the default 32 MiB scoped VMEM on v5e/v6e/v7x.
    """
    C1, K1 = w1_t.shape
    C2, C1b = w2_t.shape
    K1b, M = x_t.shape
    assert K1 == K1b and C1 == C1b
    tm = _pick_tm(M, tm_cap)
    m_pad = _round_up(M, tm)
    if m_pad != M:
        x_t = jnp.pad(x_t, ((0, 0), (0, m_pad - M)))
    out = pl.pallas_call(
        _bottleneck_kernel,
        out_shape=jax.ShapeDtypeStruct((C2, m_pad), jnp.bfloat16),
        grid=(m_pad // tm,),
        in_specs=[
            pl.BlockSpec((C1, K1), lambda i: (0, 0)),
            pl.BlockSpec((K1, tm), lambda i: (0, i)),
            pl.BlockSpec((C1, 1), lambda i: (0, 0)),
            pl.BlockSpec((C2, C1), lambda i: (0, 0)),
            pl.BlockSpec((C2, 1), lambda i: (0, 0)),
        ],
        out_specs=pl.BlockSpec((C2, tm), lambda i: (0, i)),
        compiler_params=pltpu.CompilerParams(
            dimension_semantics=("parallel",)),
    )(w1_t.astype(jnp.bfloat16), x_t.astype(jnp.bfloat16),
      b1.reshape(C1, 1).astype(jnp.float32),
      w2_t.astype(jnp.bfloat16), b2.reshape(C2, 1).astype(jnp.float32))
    return out[:, :M]


# ----------------------------------------------------------------------------
# Plain-JAX glue: channel-major im2col (no transposes of big activations)
# ----------------------------------------------------------------------------
def _im2col_cm(x_cm, kh, kw, stride):
    """x_cm: (C, N, H, W), already padded.
    Returns (kh*kw*C, N*Ho*Wo) with row = (i*kw+j)*C + c, col = n*Ho*Wo+a*Wo+b.
    """
    C, N, H, W = x_cm.shape
    Ho = (H - kh) // stride + 1
    Wo = (W - kw) // stride + 1
    taps = []
    for i in range(kh):
        for j in range(kw):
            taps.append(x_cm[:, :, i:i + (Ho - 1) * stride + 1:stride,
                                   j:j + (Wo - 1) * stride + 1:stride])
    pt = jnp.stack(taps, axis=0)                   # (kh*kw, C, N, Ho, Wo)
    return pt.reshape(kh * kw * C, N * Ho * Wo), (N, Ho, Wo)


def conv2d_cm(x_cm, w, b, stride, padding, act, out_dtype):
    """Channel-major conv. w: (Cout, Cin, kh, kw) — PyTorch Conv2d layout.
    x_cm: (Cin, N, H, W) -> (Cout, N, Ho, Wo)."""
    Cout, Cin, kh, kw = w.shape
    x_p = jnp.pad(x_cm, ((0, 0), (0, 0),
                         (padding, padding), (padding, padding)))
    pt, (N, Ho, Wo) = _im2col_cm(x_p, kh, kw, stride)
    # w_t[co, (i*kw+j)*Cin + c] = w[co, c, i, j]
    w_t = jnp.transpose(w, (0, 2, 3, 1)).reshape(Cout, kh * kw * Cin)
    out_t = pallas_matmul_bias_act_t(w_t, pt, b, act, out_dtype=out_dtype)
    return out_t.reshape(Cout, N, Ho, Wo)


def conv_transpose2d_subpixel_cm(x_cm, wT, b, act, out_dtype):
    """ConvTranspose2d(kernel=3, stride=2, padding=1, output_padding=1) as a
    sub-pixel conv: stride-1 conv with 2x2 effective taps producing 4*Cout
    channels, then depth-to-space.  No zero insertion, no zero-multiplies.

    wT: (Cin, Cout, 3, 3) — PyTorch ConvTranspose2d layout.
    x_cm: (Cin, N, H, W) -> (Cout, N, 2H, 2W) channel-major.

    Derivation (gather form): out[2a+dy, 2b+dx] sums wT[..,ky,kx]*x[iy,ix]
    with ky ≡ dy+1 (mod 2), iy = a + ti where
      dy=0: (ti=0 -> ky=1), dy=1: (ti=0 -> ky=2, ti=1 -> ky=0)   (same in x).
    One zero row/col padded at the high edge covers the a+1 boundary tap
    (this is exactly the output_padding=1 semantics).
    """
    Cin, Cout, kh, kw = wT.shape
    assert kh == 3 and kw == 3
    C, N, H, W = x_cm.shape
    assert C == Cin
    x_p = jnp.pad(x_cm, ((0, 0), (0, 0), (0, 1), (0, 1)))
    pt, _ = _im2col_cm(x_p, 2, 2, 1)               # (4*Cin, N*H*W)

    # Sub-pixel weight: rows (dy,dx,co), cols (ti,tj,ci).
    kT = {(0, 0): 1, (0, 1): None, (1, 0): 2, (1, 1): 0}
    w_sub = jnp.zeros((4 * Cout, 4 * Cin), wT.dtype)
    for dy in range(2):
        for dx in range(2):
            for ti in range(2):
                for tj in range(2):
                    ky, kx = kT[(dy, ti)], kT[(dx, tj)]
                    if ky is None or kx is None:
                        continue
                    blk = jnp.transpose(wT[:, :, ky, kx], (1, 0))  # (Cout,Cin)
                    r = (dy * 2 + dx) * Cout
                    c = (ti * 2 + tj) * Cin
                    w_sub = w_sub.at[r:r + Cout, c:c + Cin].set(blk)
    b_sub = jnp.tile(b, 4)                         # b_sub[(dy*2+dx)*Co+co]=b[co]

    out_t = pallas_matmul_bias_act_t(w_sub, pt, b_sub, act, out_dtype=out_dtype)
    # depth-to-space: (dy, dx, co, n, a, b) -> (co, n, 2a+dy, 2b+dx)
    out = out_t.reshape(2, 2, Cout, N, H, W)
    out = jnp.transpose(out, (2, 3, 4, 0, 5, 1)).reshape(Cout, N, 2 * H, 2 * W)
    return out


# ----------------------------------------------------------------------------
# Parameter construction (deterministic, PyTorch shapes)
# ----------------------------------------------------------------------------
def init_params(key):
    def _u(key, shape, fan_in):
        bound = 1.0 / jnp.sqrt(float(fan_in))
        return jax.random.uniform(key, shape, jnp.float32, -bound, bound)

    ks = jax.random.split(key, 12)
    p = {}
    # Encoder: Conv2d(1,16,3,s2,p1), Conv2d(16,32,3,s2,p1), Conv2d(32,64,7)
    p["e1_w"] = _u(ks[0], (16, 1, 3, 3), 1 * 9);    p["e1_b"] = _u(ks[1], (16,), 1 * 9)
    p["e2_w"] = _u(ks[2], (32, 16, 3, 3), 16 * 9);  p["e2_b"] = _u(ks[3], (32,), 16 * 9)
    p["e3_w"] = _u(ks[4], (64, 32, 7, 7), 32 * 49); p["e3_b"] = _u(ks[5], (64,), 32 * 49)
    # Decoder: ConvT(64,32,7), ConvT(32,16,3,s2,p1,op1), ConvT(16,1,3,s2,p1,op1)
    p["d1_w"] = _u(ks[6], (64, 32, 7, 7), 32 * 49); p["d1_b"] = _u(ks[7], (32,), 32 * 49)
    p["d2_w"] = _u(ks[8], (32, 16, 3, 3), 16 * 9);  p["d2_b"] = _u(ks[9], (16,), 16 * 9)
    p["d3_w"] = _u(ks[10], (16, 1, 3, 3), 1 * 9);   p["d3_b"] = _u(ks[11], (1,), 1 * 9)
    return p


# ----------------------------------------------------------------------------
# Full forward pass (NCHW in, NCHW out — matches the PyTorch module)
# ----------------------------------------------------------------------------
@jax.jit
def autoencoder_forward(params, x_nchw):
    N = x_nchw.shape[0]
    # Channel-major activations throughout (C, N, H, W); bf16 intermediates.
    x = jnp.transpose(x_nchw, (1, 0, 2, 3)).astype(jnp.bfloat16)  # (1,N,28,28)

    # Encoder (first two conv+ReLU layers)
    x = conv2d_cm(x, params["e1_w"], params["e1_b"], 2, 1, "relu",
                  jnp.bfloat16)                                    # (16,N,14,14)
    x = conv2d_cm(x, params["e2_w"], params["e2_b"], 2, 1, "relu",
                  jnp.bfloat16)                                    # (32,N,7,7)

    # Fused bottleneck: Conv2d(32,64,7) (valid conv on 7x7 input -> pure
    # matmul) chained with ConvTranspose2d(64,32,7)+ReLU (1x1 input -> pure
    # matmul) in a single Pallas kernel.
    # Rows of x_t / cols of w1_t are ordered c*49 + ky*7 + kx.
    x_t = jnp.transpose(x, (0, 2, 3, 1)).reshape(32 * 49, N)       # (1568, N)
    w1_t = params["e3_w"].reshape(64, 32 * 49)                     # (64, 1568)
    # Output rows ordered co*49 + ky*7 + kx (channel-major friendly).
    w2_t = jnp.transpose(params["d1_w"], (1, 2, 3, 0)).reshape(32 * 49, 64)
    b2 = jnp.repeat(params["d1_b"], 49)            # b2[co*49 + s] = d1_b[co]
    y_t = pallas_bottleneck(w1_t, x_t, params["e3_b"], w2_t, b2)   # (1568, N)
    x = jnp.transpose(y_t.reshape(32, 7, 7, N), (0, 3, 1, 2))      # (32,N,7,7)

    # Decoder tail (sub-pixel formulation of the stride-2 ConvTranspose layers)
    x = conv_transpose2d_subpixel_cm(x, params["d2_w"], params["d2_b"],
                                     "relu", jnp.bfloat16)         # (16,N,14,14)
    x = conv_transpose2d_subpixel_cm(x, params["d3_w"], params["d3_b"],
                                     "sigmoid", jnp.float32)       # (1,N,28,28)
    return jnp.transpose(x, (1, 0, 2, 3))                          # (N,1,28,28)


if __name__ == "__main__":
    key = jax.random.PRNGKey(0)
    k_param, k_x = jax.random.split(key)
    params = init_params(k_param)
    # The architecture (two stride-2 convs then a 7x7 valid conv) implies 28x28.
    x = jax.random.uniform(k_x, (2, 1, 28, 28), jnp.float32)

    y = autoencoder_forward(params, x)
    y = jax.block_until_ready(y)

    assert y.shape == (2, 1, 28, 28), y.shape
    assert bool(jnp.all(jnp.isfinite(y)))
    assert bool(jnp.all((y >= 0.0) & (y <= 1.0)))  # sigmoid output range
    print("KERNEL_OK")
</pallas_src>

<mosaic_0001>
module attributes {stable_mosaic.version = 11 : i64} {
  func.func @_matmul_bias_act_kernel(%arg0: i32, %arg1: memref<16x9xbf16, #tpu.memory_space<vmem>>, %arg2: memref<9x256xbf16, #tpu.memory_space<vmem>>, %arg3: memref<16x1xf32, #tpu.memory_space<vmem>>, %arg4: memref<16x256xbf16, #tpu.memory_space<vmem>>) attributes {dimension_semantics = [#tpu.dimension_semantics<parallel>], iteration_bounds = array<i64: 2>, scalar_prefetch = 0 : i64, scratch_operands = 0 : i64, tpu.core_type = #tpu.core_type<tc>, window_params = [{pipeline_mode = #tpu.pipeline_mode<synchronous>, transform_indices = @transform_0, window_bounds = array<i64: 16, 9>}, {transform_indices = @transform_1, window_bounds = array<i64: 9, 256>}, {pipeline_mode = #tpu.pipeline_mode<synchronous>, transform_indices = @transform_2, window_bounds = array<i64: 16, 1>}, {transform_indices = @transform_3, window_bounds = array<i64: 16, 256>}]} {
    %c0 = arith.constant 0 : index
    %c0_0 = arith.constant 0 : index
    %0 = vector.load %arg1[%c0, %c0_0] : memref<16x9xbf16, #tpu.memory_space<vmem>>, vector<16x9xbf16>
    %c0_1 = arith.constant 0 : index
    %c0_2 = arith.constant 0 : index
    %1 = vector.load %arg2[%c0_1, %c0_2] : memref<9x256xbf16, #tpu.memory_space<vmem>>, vector<9x256xbf16>
    %cst = arith.constant dense<0.000000e+00> : vector<16x256xf32>
    %2 = tpu.matmul %0, %1, %cst {dimension_numbers = #tpu.dot_dimension_numbers<[1], [0], [0], [1], [0, 0, 1, 1], [], []>} : vector<16x9xbf16>, vector<9x256xbf16>, vector<16x256xf32> -> vector<16x256xf32>
    %c0_3 = arith.constant 0 : index
    %c0_4 = arith.constant 0 : index
    %3 = vector.load %arg3[%c0_3, %c0_4] : memref<16x1xf32, #tpu.memory_space<vmem>>, vector<16x1xf32>
    %4 = vector.broadcast %3 : vector<16x1xf32> to vector<16x256xf32>
    %5 = arith.addf %2, %4 : vector<16x256xf32>
    %cst_5 = arith.constant 0.000000e+00 : f32
    %6 = vector.broadcast %cst_5 : f32 to vector<16x256xf32>
    %7 = arith.maximumf %5, %6 : vector<16x256xf32>
    %8 = arith.truncf %7 : vector<16x256xf32> to vector<16x256xbf16>
    %c0_6 = arith.constant 0 : index
    %c0_7 = arith.constant 0 : index
    %9 = vector.load %arg4[%c0_6, %c0_7] : memref<16x256xbf16, #tpu.memory_space<vmem>>, vector<16x256xbf16>
    tpu.vector_store %arg4[%c0_6, %c0_7], %8 {strides = array<i32>} : memref<16x256xbf16, #tpu.memory_space<vmem>>, vector<16x256xbf16>,
    return
  }
  func.func @transform_0(%arg0: i32) -> (i32, i32) {
    %c0_i32 = arith.constant 0 : i32
    %c0_i32_0 = arith.constant 0 : i32
    %c0_i32_1 = arith.constant 0 : i32
    return %c0_i32, %c0_i32_0 : i32, i32
  }
  func.func @transform_1(%arg0: i32) -> (i32, i32) {
    %c0_i32 = arith.constant 0 : i32
    %c0_i32_0 = arith.constant 0 : i32
    return %c0_i32, %arg0 : i32, i32
  }
  func.func @transform_2(%arg0: i32) -> (i32, i32) {
    %c0_i32 = arith.constant 0 : i32
    %c0_i32_0 = arith.constant 0 : i32
    %c0_i32_1 = arith.constant 0 : i32
    return %c0_i32, %c0_i32_0 : i32, i32
  }
  func.func @transform_3(%arg0: i32) -> (i32, i32) {
    %c0_i32 = arith.constant 0 : i32
    %c0_i32_0 = arith.constant 0 : i32
    return %c0_i32, %arg0 : i32, i32
  }
}

module attributes {stable_mosaic.version = 11 : i64} {
  func.func @_matmul_bias_act_kernel(%arg0: i32, %arg1: memref<32x144xbf16, #tpu.memory_space<vmem>>, %arg2: memref<144x128xbf16, #tpu.memory_space<vmem>>, %arg3: memref<32x1xf32, #tpu.memory_space<vmem>>, %arg4: memref<32x128xbf16, #tpu.memory_space<vmem>>) attributes {dimension_semantics = [#tpu.dimension_semantics<parallel>], iteration_bounds = array<i64: 1>, scalar_prefetch = 0 : i64, scratch_operands = 0 : i64, tpu.core_type = #tpu.core_type<tc>, window_params = [{pipeline_mode = #tpu.pipeline_mode<synchronous>, transform_indices = @transform_0, window_bounds = array<i64: 32, 144>}, {transform_indices = @transform_1, window_bounds = array<i64: 144, 128>}, {pipeline_mode = #tpu.pipeline_mode<synchronous>, transform_indices = @transform_2, window_bounds = array<i64: 32, 1>}, {transform_indices = @transform_3, window_bounds = array<i64: 32, 128>}]} {
    %c0 = arith.constant 0 : index
    %c0_0 = arith.constant 0 : index
    %0 = vector.load %arg1[%c0, %c0_0] : memref<32x144xbf16, #tpu.memory_space<vmem>>, vector<32x144xbf16>
    %c0_1 = arith.constant 0 : index
    %c0_2 = arith.constant 0 : index
    %1 = vector.load %arg2[%c0_1, %c0_2] : memref<144x128xbf16, #tpu.memory_space<vmem>>, vector<144x128xbf16>
    %cst = arith.constant dense<0.000000e+00> : vector<32x128xf32>
    %2 = tpu.matmul %0, %1, %cst {dimension_numbers = #tpu.dot_dimension_numbers<[1], [0], [0], [1], [0, 0, 1, 1], [], []>} : vector<32x144xbf16>, vector<144x128xbf16>, vector<32x128xf32> -> vector<32x128xf32>
    %c0_3 = arith.constant 0 : index
    %c0_4 = arith.constant 0 : index
    %3 = vector.load %arg3[%c0_3, %c0_4] : memref<32x1xf32, #tpu.memory_space<vmem>>, vector<32x1xf32>
    %4 = vector.broadcast %3 : vector<32x1xf32> to vector<32x128xf32>
    %5 = arith.addf %2, %4 : vector<32x128xf32>
    %cst_5 = arith.constant 0.000000e+00 : f32
    %6 = vector.broadcast %cst_5 : f32 to vector<32x128xf32>
    %7 = arith.maximumf %5, %6 : vector<32x128xf32>
    %8 = arith.truncf %7 : vector<32x128xf32> to vector<32x128xbf16>
    %c0_6 = arith.constant 0 : index
    %c0_7 = arith.constant 0 : index
    %9 = vector.load %arg4[%c0_6, %c0_7] : memref<32x128xbf16, #tpu.memory_space<vmem>>, vector<32x128xbf16>
    tpu.vector_store %arg4[%c0_6, %c0_7], %8 {strides = array<i32>} : memref<32x128xbf16, #tpu.memory_space<vmem>>, vector<32x128xbf16>,
    return
  }
  func.func @transform_0(%arg0: i32) -> (i32, i32) {
    %c0_i32 = arith.constant 0 : i32
    %c0_i32_0 = arith.constant 0 : i32
    %c0_i32_1 = arith.constant 0 : i32
    return %c0_i32, %c0_i32_0 : i32, i32
  }
  func.func @transform_1(%arg0: i32) -> (i32, i32) {
    %c0_i32 = arith.constant 0 : i32
    %c0_i32_0 = arith.constant 0 : i32
    return %c0_i32, %arg0 : i32, i32
  }
  func.func @transform_2(%arg0: i32) -> (i32, i32) {
    %c0_i32 = arith.constant 0 : i32
    %c0_i32_0 = arith.constant 0 : i32
    %c0_i32_1 = arith.constant 0 : i32
    return %c0_i32, %c0_i32_0 : i32, i32
  }
  func.func @transform_3(%arg0: i32) -> (i32, i32) {
    %c0_i32 = arith.constant 0 : i32
    %c0_i32_0 = arith.constant 0 : i32
    return %c0_i32, %arg0 : i32, i32
  }
}

module attributes {stable_mosaic.version = 11 : i64} {
  func.func @_bottleneck_kernel(%arg0: i32, %arg1: memref<64x1568xbf16, #tpu.memory_space<vmem>>, %arg2: memref<1568x128xbf16, #tpu.memory_space<vmem>>, %arg3: memref<64x1xf32, #tpu.memory_space<vmem>>, %arg4: memref<1568x64xbf16, #tpu.memory_space<vmem>>, %arg5: memref<1568x1xf32, #tpu.memory_space<vmem>>, %arg6: memref<1568x128xbf16, #tpu.memory_space<vmem>>) attributes {dimension_semantics = [#tpu.dimension_semantics<parallel>], iteration_bounds = array<i64: 1>, scalar_prefetch = 0 : i64, scratch_operands = 0 : i64, tpu.core_type = #tpu.core_type<tc>, window_params = [{pipeline_mode = #tpu.pipeline_mode<synchronous>, transform_indices = @transform_0, window_bounds = array<i64: 64, 1568>}, {transform_indices = @transform_1, window_bounds = array<i64: 1568, 128>}, {pipeline_mode = #tpu.pipeline_mode<synchronous>, transform_indices = @transform_2, window_bounds = array<i64: 64, 1>}, {pipeline_mode = #tpu.pipeline_mode<synchronous>, transform_indices = @transform_3, window_bounds = array<i64: 1568, 64>}, {pipeline_mode = #tpu.pipeline_mode<synchronous>, transform_indices = @transform_4, window_bounds = array<i64: 1568, 1>}, {transform_indices = @transform_5, window_bounds = array<i64: 1568, 128>}]} {
    %c0 = arith.constant 0 : index
    %c0_0 = arith.constant 0 : index
    %0 = vector.load %arg1[%c0, %c0_0] : memref<64x1568xbf16, #tpu.memory_space<vmem>>, vector<64x1568xbf16>
    %c0_1 = arith.constant 0 : index
    %c0_2 = arith.constant 0 : index
    %1 = vector.load %arg2[%c0_1, %c0_2] : memref<1568x128xbf16, #tpu.memory_space<vmem>>, vector<1568x128xbf16>
    %cst = arith.constant dense<0.000000e+00> : vector<64x128xf32>
    %2 = tpu.matmul %0, %1, %cst {dimension_numbers = #tpu.dot_dimension_numbers<[1], [0], [0], [1], [0, 0, 1, 1], [], []>} : vector<64x1568xbf16>, vector<1568x128xbf16>, vector<64x128xf32> -> vector<64x128xf32>
    %c0_3 = arith.constant 0 : index
    %c0_4 = arith.constant 0 : index
    %3 = vector.load %arg3[%c0_3, %c0_4] : memref<64x1xf32, #tpu.memory_space<vmem>>, vector<64x1xf32>
    %4 = vector.broadcast %3 : vector<64x1xf32> to vector<64x128xf32>
    %5 = arith.addf %2, %4 : vector<64x128xf32>
    %6 = arith.truncf %5 : vector<64x128xf32> to vector<64x128xbf16>
    %c0_5 = arith.constant 0 : index
    %c0_6 = arith.constant 0 : index
    %7 = vector.load %arg4[%c0_5, %c0_6] : memref<1568x64xbf16, #tpu.memory_space<vmem>>, vector<1568x64xbf16>
    %cst_7 = arith.constant dense<0.000000e+00> : vector<1568x128xf32>
    %8 = tpu.matmul %7, %6, %cst_7 {dimension_numbers = #tpu.dot_dimension_numbers<[1], [0], [0], [1], [0, 0, 1, 1], [], []>} : vector<1568x64xbf16>, vector<64x128xbf16>, vector<1568x128xf32> -> vector<1568x128xf32>
    %c0_8 = arith.constant 0 : index
    %c0_9 = arith.constant 0 : index
    %9 = vector.load %arg5[%c0_8, %c0_9] : memref<1568x1xf32, #tpu.memory_space<vmem>>, vector<1568x1xf32>
    %10 = vector.broadcast %9 : vector<1568x1xf32> to vector<1568x128xf32>
    %11 = arith.addf %8, %10 : vector<1568x128xf32>
    %cst_10 = arith.constant 0.000000e+00 : f32
    %12 = vector.broadcast %cst_10 : f32 to vector<1568x128xf32>
    %13 = arith.maximumf %11, %12 : vector<1568x128xf32>
    %14 = arith.truncf %13 : vector<1568x128xf32> to vector<1568x128xbf16>
    %c0_11 = arith.constant 0 : index
    %c0_12 = arith.constant 0 : index
    %15 = vector.load %arg6[%c0_11, %c0_12] : memref<1568x128xbf16, #tpu.memory_space<vmem>>, vector<1568x128xbf16>
    tpu.vector_store %arg6[%c0_11, %c0_12], %14 {strides = array<i32>} : memref<1568x128xbf16, #tpu.memory_space<vmem>>, vector<1568x128xbf16>,
    return
  }
  func.func @transform_0(%arg0: i32) -> (i32, i32) {
    %c0_i32 = arith.constant 0 : i32
    %c0_i32_0 = arith.constant 0 : i32
    %c0_i32_1 = arith.constant 0 : i32
    return %c0_i32, %c0_i32_0 : i32, i32
  }
  func.func @transform_1(%arg0: i32) -> (i32, i32) {
    %c0_i32 = arith.constant 0 : i32
    %c0_i32_0 = arith.constant 0 : i32
    return %c0_i32, %arg0 : i32, i32
  }
  func.func @transform_2(%arg0: i32) -> (i32, i32) {
    %c0_i32 = arith.constant 0 : i32
    %c0_i32_0 = arith.constant 0 : i32
    %c0_i32_1 = arith.constant 0 : i32
    return %c0_i32, %c0_i32_0 : i32, i32
  }
  func.func @transform_3(%arg0: i32) -> (i32, i32) {
    %c0_i32 = arith.constant 0 : i32
    %c0_i32_0 = arith.constant 0 : i32
    %c0_i32_1 = arith.constant 0 : i32
    return %c0_i32, %c0_i32_0 : i32, i32
  }
  func.func @transform_4(%arg0: i32) -> (i32, i32) {
    %c0_i32 = arith.constant 0 : i32
    %c0_i32_0 = arith.constant 0 : i32
    %c0_i32_1 = arith.constant 0 : i32
    return %c0_i32, %c0_i32_0 : i32, i32
  }
  func.func @transform_5(%arg0: i32) -> (i32, i32) {
    %c0_i32 = arith.constant 0 : i32
    %c0_i32_0 = arith.constant 0 : i32
    return %c0_i32, %arg0 : i32, i32
  }
}

module attributes {stable_mosaic.version = 11 : i64} {
  func.func @_matmul_bias_act_kernel(%arg0: i32, %arg1: memref<64x128xbf16, #tpu.memory_space<vmem>>, %arg2: memref<128x128xbf16, #tpu.memory_space<vmem>>, %arg3: memref<64x1xf32, #tpu.memory_space<vmem>>, %arg4: memref<64x128xbf16, #tpu.memory_space<vmem>>) attributes {dimension_semantics = [#tpu.dimension_semantics<parallel>], iteration_bounds = array<i64: 1>, scalar_prefetch = 0 : i64, scratch_operands = 0 : i64, tpu.core_type = #tpu.core_type<tc>, window_params = [{pipeline_mode = #tpu.pipeline_mode<synchronous>, transform_indices = @transform_0, window_bounds = array<i64: 64, 128>}, {transform_indices = @transform_1, window_bounds = array<i64: 128, 128>}, {pipeline_mode = #tpu.pipeline_mode<synchronous>, transform_indices = @transform_2, window_bounds = array<i64: 64, 1>}, {transform_indices = @transform_3, window_bounds = array<i64: 64, 128>}]} {
    %c0 = arith.constant 0 : index
    %c0_0 = arith.constant 0 : index
    %0 = vector.load %arg1[%c0, %c0_0] : memref<64x128xbf16, #tpu.memory_space<vmem>>, vector<64x128xbf16>
    %c0_1 = arith.constant 0 : index
    %c0_2 = arith.constant 0 : index
    %1 = vector.load %arg2[%c0_1, %c0_2] : memref<128x128xbf16, #tpu.memory_space<vmem>>, vector<128x128xbf16>
    %cst = arith.constant dense<0.000000e+00> : vector<64x128xf32>
    %2 = tpu.matmul %0, %1, %cst {dimension_numbers = #tpu.dot_dimension_numbers<[1], [0], [0], [1], [0, 0, 1, 1], [], []>} : vector<64x128xbf16>, vector<128x128xbf16>, vector<64x128xf32> -> vector<64x128xf32>
    %c0_3 = arith.constant 0 : index
    %c0_4 = arith.constant 0 : index
    %3 = vector.load %arg3[%c0_3, %c0_4] : memref<64x1xf32, #tpu.memory_space<vmem>>, vector<64x1xf32>
    %4 = vector.broadcast %3 : vector<64x1xf32> to vector<64x128xf32>
    %5 = arith.addf %2, %4 : vector<64x128xf32>
    %cst_5 = arith.constant 0.000000e+00 : f32
    %6 = vector.broadcast %cst_5 : f32 to vector<64x128xf32>
    %7 = arith.maximumf %5, %6 : vector<64x128xf32>
    %8 = arith.truncf %7 : vector<64x128xf32> to vector<64x128xbf16>
    %c0_6 = arith.constant 0 : index
    %c0_7 = arith.constant 0 : index
    %9 = vector.load %arg4[%c0_6, %c0_7] : memref<64x128xbf16, #tpu.memory_space<vmem>>, vector<64x128xbf16>
    tpu.vector_store %arg4[%c0_6, %c0_7], %8 {strides = array<i32>} : memref<64x128xbf16, #tpu.memory_space<vmem>>, vector<64x128xbf16>,
    return
  }
  func.func @transform_0(%arg0: i32) -> (i32, i32) {
    %c0_i32 = arith.constant 0 : i32
    %c0_i32_0 = arith.constant 0 : i32
    %c0_i32_1 = arith.constant 0 : i32
    return %c0_i32, %c0_i32_0 : i32, i32
  }
  func.func @transform_1(%arg0: i32) -> (i32, i32) {
    %c0_i32 = arith.constant 0 : i32
    %c0_i32_0 = arith.constant 0 : i32
    return %c0_i32, %arg0 : i32, i32
  }
  func.func @transform_2(%arg0: i32) -> (i32, i32) {
    %c0_i32 = arith.constant 0 : i32
    %c0_i32_0 = arith.constant 0 : i32
    %c0_i32_1 = arith.constant 0 : i32
    return %c0_i32, %c0_i32_0 : i32, i32
  }
  func.func @transform_3(%arg0: i32) -> (i32, i32) {
    %c0_i32 = arith.constant 0 : i32
    %c0_i32_0 = arith.constant 0 : i32
    return %c0_i32, %arg0 : i32, i32
  }
}

module attributes {stable_mosaic.version = 11 : i64} {
  func.func @_matmul_bias_act_kernel(%arg0: i32, %arg1: memref<4x64xbf16, #tpu.memory_space<vmem>>, %arg2: memref<64x256xbf16, #tpu.memory_space<vmem>>, %arg3: memref<4x1xf32, #tpu.memory_space<vmem>>, %arg4: memref<4x256xf32, #tpu.memory_space<vmem>>) attributes {dimension_semantics = [#tpu.dimension_semantics<parallel>], iteration_bounds = array<i64: 2>, scalar_prefetch = 0 : i64, scratch_operands = 0 : i64, tpu.core_type = #tpu.core_type<tc>, window_params = [{pipeline_mode = #tpu.pipeline_mode<synchronous>, transform_indices = @transform_0, window_bounds = array<i64: 4, 64>}, {transform_indices = @transform_1, window_bounds = array<i64: 64, 256>}, {pipeline_mode = #tpu.pipeline_mode<synchronous>, transform_indices = @transform_2, window_bounds = array<i64: 4, 1>}, {transform_indices = @transform_3, window_bounds = array<i64: 4, 256>}]} {
    %c0 = arith.constant 0 : index
    %c0_0 = arith.constant 0 : index
    %0 = vector.load %arg1[%c0, %c0_0] : memref<4x64xbf16, #tpu.memory_space<vmem>>, vector<4x64xbf16>
    %c0_1 = arith.constant 0 : index
    %c0_2 = arith.constant 0 : index
    %1 = vector.load %arg2[%c0_1, %c0_2] : memref<64x256xbf16, #tpu.memory_space<vmem>>, vector<64x256xbf16>
    %cst = arith.constant dense<0.000000e+00> : vector<4x256xf32>
    %2 = tpu.matmul %0, %1, %cst {dimension_numbers = #tpu.dot_dimension_numbers<[1], [0], [0], [1], [0, 0, 1, 1], [], []>} : vector<4x64xbf16>, vector<64x256xbf16>, vector<4x256xf32> -> vector<4x256xf32>
    %c0_3 = arith.constant 0 : index
    %c0_4 = arith.constant 0 : index
    %3 = vector.load %arg3[%c0_3, %c0_4] : memref<4x1xf32, #tpu.memory_space<vmem>>, vector<4x1xf32>
    %4 = vector.broadcast %3 : vector<4x1xf32> to vector<4x256xf32>
    %5 = arith.addf %2, %4 : vector<4x256xf32>
    %cst_5 = arith.constant 0.000000e+00 : f32
    %6 = vector.broadcast %cst_5 : f32 to vector<4x256xf32>
    %7 = arith.subf %6, %5 : vector<4x256xf32>
    %8 = math.exp %7 : vector<4x256xf32>
    %cst_6 = arith.constant 1.000000e+00 : f32
    %9 = vector.broadcast %cst_6 : f32 to vector<4x256xf32>
    %10 = arith.addf %9, %8 : vector<4x256xf32>
    %11 = tpu.reciprocal %10 {approx = true} : vector<4x256xf32> -> vector<4x256xf32>
    %cst_7 = arith.constant 0.000000e+00 : f32
    %cst_8 = arith.constant 1.000000e+00 : f32
    %12 = vector.broadcast %cst_7 : f32 to vector<4x256xf32>
    %13 = arith.maximumf %12, %11 : vector<4x256xf32>
    %14 = vector.broadcast %cst_8 : f32 to vector<4x256xf32>
    %15 = arith.minimumf %14, %13 : vector<4x256xf32>
    %c0_9 = arith.constant 0 : index
    %c0_10 = arith.constant 0 : index
    %16 = vector.load %arg4[%c0_9, %c0_10] : memref<4x256xf32, #tpu.memory_space<vmem>>, vector<4x256xf32>
    tpu.vector_store %arg4[%c0_9, %c0_10], %15 {strides = array<i32>} : memref<4x256xf32, #tpu.memory_space<vmem>>, vector<4x256xf32>,
    return
  }
  func.func @transform_0(%arg0: i32) -> (i32, i32) {
    %c0_i32 = arith.constant 0 : i32
    %c0_i32_0 = arith.constant 0 : i32
    %c0_i32_1 = arith.constant 0 : i32
    return %c0_i32, %c0_i32_0 : i32, i32
  }
  func.func @transform_1(%arg0: i32) -> (i32, i32) {
    %c0_i32 = arith.constant 0 : i32
    %c0_i32_0 = arith.constant 0 : i32
    return %c0_i32, %arg0 : i32, i32
  }
  func.func @transform_2(%arg0: i32) -> (i32, i32) {
    %c0_i32 = arith.constant 0 : i32
    %c0_i32_0 = arith.constant 0 : i32
    %c0_i32_1 = arith.constant 0 : i32
    return %c0_i32, %c0_i32_0 : i32, i32
  }
  func.func @transform_3(%arg0: i32) -> (i32, i32) {
    %c0_i32 = arith.constant 0 : i32
    %c0_i32_0 = arith.constant 0 : i32
    return %c0_i32, %arg0 : i32, i32
  }
}

</mosaic_0001>

<llo_original>
// kernel: autoencoder_forward.5
$region0: #{autoencoder_forward.5}
  #allocation0 [shape = 'u32[]', space=smem, size = 0x4, offset = 0x4, fixed_abs, tag = 'smem constant byte address 0x4 - core index']
  #allocation1 [shape = 'u32[144,128]{1,0:T(1,128)}', space=vmem, size = 0x12000, scoped, tag = 'internal scratch']
  %s0 = inlined_call_operand.vmem [shape: bf16[16,9], index: 0, kind: input, shape index: {}]
  %s1 = inlined_call_operand.vmem [shape: bf16[9,512], index: 1, kind: input, shape index: {}]
  %s2 = inlined_call_operand.vmem [shape: f32[16,1], index: 2, kind: input, shape index: {}]
  %s3 = inlined_call_operand.vmem [shape: bf16[16,512], index: 3, kind: output, shape index: {}]
  %s4 = sld [smem:[#allocation0]]
  $region117: #{autoencoder_forward.5} parent=0
    _
  %s6 = ssub.s32 1, %s4
  %s7 = scalar_select 0, %s6, %s4
  $region1: #{autoencoder_forward.5} parent=0
    #allocation2 [shape = 'u8[16384]{0}', space=vmem, size = 0x4000, scoped, tag = 'input window, operand 1']
    #allocation3 [shape = 'u8[16384]{0}', space=vmem, size = 0x4000, scoped, tag = 'output window, operand 0']
    loop: start=0, step=1, limit=4
    $region2: #{autoencoder_forward.5} parent=1 // loop_pre_header
      _
    $region3: #{autoencoder_forward.5} parent=1 // loop_header
      %s9 = sphi 0, %s13
      %p10 = scmp.ge.s32.totalorder %s9, 4
      %s17 = sphi 0, %s17
      %s19 = sphi 0, %s17
      %s20 = sphi 0, %s19
      %s34 = sphi 0, %s20
      %s40 = sphi 0, %s42
      %s43 = sphi 0, %s40
      %s44 = sphi 0, %s43
      %s60 = sphi 0, %s44
      %s64 = sphi 0, %s64
      %s66 = sphi 0, %s64
      %s67 = sphi 0, %s66
      %s81 = sphi 0, %s67
      %s87 = sphi 0, %s89
      %s90 = sphi 0, %s87
      %s91 = sphi 0, %s90
      %s107 = sphi 0, %s91
    $region4: #{autoencoder_forward.5} parent=1 // loop_header_branch
      %12 = sbr.rel (%p10) target = $region8
    $region5: #{autoencoder_forward.5} parent=1 // loop_body
      %s14 = ssub.s32 %s9, 1
      %s15 = ssub.s32 %s9, 2
      %s16 = sadd.s32 %s9, 1
      %s18 = sadd.s32 %s17, 1
      %p21 = scmp.eq.s32.totalorder %s9, 1
      %p22 = scmp.ne.s32.totalorder %s17, %s19
      %p23 = scmp.eq.s32.totalorder %s9, 0
      %p24 = por %p22, %p23
      %p25 = scmp.ne.s32.totalorder %s17, %s19
      %p26 = scmp.eq.s32.totalorder %s14, 1
      %p27 = por %p25, %p26
      %p28 = scmp.ne.s32.totalorder %s19, %s20
      %p29 = scmp.eq.s32.totalorder %s14, 0
      %p30 = por %p28, %p29
      %p31 = scmp.ne.s32.totalorder %s19, %s20
      %p32 = scmp.eq.s32.totalorder %s15, 1
      %p33 = por %p31, %p32
      %p35 = scmp.ne.s32.totalorder %s20, %s34
      %p36 = scmp.eq.s32.totalorder %s15, 0
      %p37 = por %p35, %p36
      %s38 = ssub.s32 %s9, %s16
      %p39 = scmp.eq.s32.totalorder %s38, 0
      %s41 = sadd.s32 %s40, 1
      %s42 = scalar_select %p39, %s40, %s41
      %p45 = pneg %p39
      %p46 = scmp.eq.s32.totalorder %s9, 1
      %p47 = por %p45, %p46
      %p48 = scmp.ne.s32.totalorder %s40, %s43
      %p49 = scmp.eq.s32.totalorder %s9, 0
      %p50 = por %p48, %p49
      %p51 = scmp.ne.s32.totalorder %s40, %s43
      %p52 = scmp.eq.s32.totalorder %s14, 1
      %p53 = por %p51, %p52
      %p54 = scmp.ne.s32.totalorder %s43, %s44
      %p55 = scmp.eq.s32.totalorder %s14, 0
      %p56 = por %p54, %p55
      %p57 = scmp.ne.s32.totalorder %s43, %s44
      %p58 = scmp.eq.s32.totalorder %s15, 1
      %p59 = por %p57, %p58
      %p61 = scmp.ne.s32.totalorder %s44, %s60
      %p62 = scmp.eq.s32.totalorder %s15, 0
      %p63 = por %p61, %p62
      %s65 = sadd.s32 %s64, 1
      %p68 = scmp.eq.s32.totalorder %s9, 1
      %p69 = scmp.ne.s32.totalorder %s64, %s66
      %p70 = scmp.eq.s32.totalorder %s9, 0
      %p71 = por %p69, %p70
      %p72 = scmp.ne.s32.totalorder %s64, %s66
      %p73 = scmp.eq.s32.totalorder %s14, 1
      %p74 = por %p72, %p73
      %p75 = scmp.ne.s32.totalorder %s66, %s67
      %p76 = scmp.eq.s32.totalorder %s14, 0
      %p77 = por %p75, %p76
      %p78 = scmp.ne.s32.totalorder %s66, %s67
      %p79 = scmp.eq.s32.totalorder %s15, 1
      %p80 = por %p78, %p79
      %p82 = scmp.ne.s32.totalorder %s67, %s81
      %p83 = scmp.eq.s32.totalorder %s15, 0
      %p84 = por %p82, %p83
      %s85 = ssub.s32 %s9, %s16
      %p86 = scmp.eq.s32.totalorder %s85, 0
      %s88 = sadd.s32 %s87, 1
      %s89 = scalar_select %p86, %s87, %s88
      %p92 = pneg %p86
      %p93 = scmp.eq.s32.totalorder %s9, 1
      %p94 = por %p92, %p93
      %p95 = scmp.ne.s32.totalorder %s87, %s90
      %p96 = scmp.eq.s32.totalorder %s9, 0
      %p97 = por %p95, %p96
      %p98 = scmp.ne.s32.totalorder %s87, %s90
      %p99 = scmp.eq.s32.totalorder %s14, 1
      %p100 = por %p98, %p99
      %p101 = scmp.ne.s32.totalorder %s90, %s91
      %p102 = scmp.eq.s32.totalorder %s14, 0
      %p103 = por %p101, %p102
      %p104 = scmp.ne.s32.totalorder %s90, %s91
      %p105 = scmp.eq.s32.totalorder %s15, 1
      %p106 = por %p104, %p105
      %p108 = scmp.ne.s32.totalorder %s91, %s107
      %p109 = scmp.eq.s32.totalorder %s15, 0
      %p110 = por %p108, %p109
      %p111 = scmp.le.s32.totalorder 1, %s9
      %p112 = scmp.lt.s32.totalorder %s9, 3
      %p113 = pnand %p111, %p112
      %p114 = pneg %p113
      // Predicated region
      $region9: #{autoencoder_forward.5} parent=5 // pred_check
        _
      $region10: #{autoencoder_forward.5} parent=5 // pred_check_branch
        %116 = sbr.rel (%p113) target = $region12
      $region11: #{autoencoder_forward.5} parent=5 // pred_region
        %s117 = ssub.s32 %s9, 1
        // Predicated region
        $region13: #{autoencoder_forward.5} parent=11 // pred_check
          %p118 = pneg %p30
        $region14: #{autoencoder_forward.5} parent=11 // pred_check_branch
          %120 = sbr.rel (%p118) target = $region16
        $region15: #{autoencoder_forward.5} parent=11 // pred_region
          _
        $region16: #{autoencoder_forward.5} parent=11 // pred_fallthru
          _
        // Predicated region
        $region17: #{autoencoder_forward.5} parent=11 // pred_check
          %p121 = pneg %p77
        $region18: #{autoencoder_forward.5} parent=11 // pred_check_branch
          %123 = sbr.rel (%p121) target = $region20
        $region19: #{autoencoder_forward.5} parent=11 // pred_region
          _
        $region20: #{autoencoder_forward.5} parent=11 // pred_fallthru
          _
      $region12: #{autoencoder_forward.5} parent=5 // pred_fallthru
        _
      %p124 = scmp.lt.s32.totalorder %s9, 2
      // Predicated region
      $region21: #{autoencoder_forward.5} parent=5 // pred_check
        %p125 = pneg %p124
      $region22: #{autoencoder_forward.5} parent=5 // pred_check_branch
        %127 = sbr.rel (%p125) target = $region24
      $region23: #{autoencoder_forward.5} parent=5 // pred_region
        // Predicated region
        $region25: #{autoencoder_forward.5} parent=23 // pred_check
          %p128 = pneg %p50
        $region26: #{autoencoder_forward.5} parent=23 // pred_check_branch
          %130 = sbr.rel (%p128) target = $region28
        $region27: #{autoencoder_forward.5} parent=23 // pred_region
          %s131 = sand.u32 %s40, 1
          %s132 = sand.u32 %s40, 1
          %s133 = smul.addr %s132, 16
          %s134 = scalar_lea.vmem [#allocation2], %s133
          %s135 = smul.u32 2, %s9
          %s136 = smul.addr %s135, 4
          %s137 = scalar_lea.vmem %s1, %s136
          // Predicated region
          $region29: #{autoencoder_forward.5} parent=27 // pred_check
            _
          $region30: #{autoencoder_forward.5} parent=27 // pred_check_branch
            %139 = sbr.rel (0) target = $region32
          $region31: #{autoencoder_forward.5} parent=27 // pred_region
            // Predicated region
            $region33: #{autoencoder_forward.5} parent=31 // pred_check
              _
            $region34: #{autoencoder_forward.5} parent=31 // pred_check_branch
              %141 = sbr.rel (0) target = $region36
            $region35: #{autoencoder_forward.5} parent=31 // pred_region
              // Predicated region
              $region48: #{autoencoder_forward.5} parent=35 // pred_check
                _
              $region49: #{autoencoder_forward.5} parent=35 // pred_check_branch
                %158 = sbr.rel (0) target = $region51
              $region50: #{autoencoder_forward.5} parent=35 // pred_region
                loop: start=0, step=1, limit=1
                $region52: #{autoencoder_forward.5} parent=50 // loop_pre_header
                  _
                $region53: #{autoencoder_forward.5} parent=50 // loop_header
                  %s160 = sphi 0, %s164
                  %p161 = scmp.ge.s32.totalorder %s160, 1
                  %s165 = sphi %s137, %s137
                  %s166 = sphi %s134, %s134
                $region54: #{autoencoder_forward.5} parent=50 // loop_header_branch
                  %163 = sbr.rel (%p161) target = $region58
                $region55: #{autoencoder_forward.5} parent=50 // loop_body
                  %v167 = vld [vmem:[%s165] sm:$0xff]
                  %168 = vst [vmem:[%s166] sm:$0xff] %v167
                  %v169 = vld [vmem:[%s165 + $0x10] sm:$0xff]
                  %170 = vst [vmem:[%s166 + $0x8] sm:$0xff] %v169
                $region56: #{autoencoder_forward.5} parent=50 // loop_footer
                  %s164 = sadd.s32 1, %s160
                $region57: #{autoencoder_forward.5} parent=50 // loop_footer_branch
                  %159 = sbr.rel target = $region53
                $region58: #{autoencoder_forward.5} parent=50 // loop_exit
                  _
              $region51: #{autoencoder_forward.5} parent=35 // pred_fallthru
                _
              // Predicated region
              $region59: #{autoencoder_forward.5} parent=35 // pred_check
                _
              $region60: #{autoencoder_forward.5} parent=35 // pred_check_branch
                %172 = sbr.rel target = $region62
              $region61: #{autoencoder_forward.5} parent=35 // pred_region
                _
              $region62: #{autoencoder_forward.5} parent=35 // pred_fallthru
                _
            $region36: #{autoencoder_forward.5} parent=31 // pred_fallthru
              _
            // Predicated region
            $region37: #{autoencoder_forward.5} parent=31 // pred_check
              _
            $region38: #{autoencoder_forward.5} parent=31 // pred_check_branch
              %143 = sbr.rel target = $region40
            $region39: #{autoencoder_forward.5} parent=31 // pred_region
              loop: start=0, step=1, limit=1
              $region41: #{autoencoder_forward.5} parent=39 // loop_pre_header
                _
              $region42: #{autoencoder_forward.5} parent=39 // loop_header
                %s146 = sphi 0, %s150
                %p147 = scmp.ge.s32.totalorder %s146, 1
                %s151 = sphi %s137, %s137
                %s152 = sphi %s134, %s134
              $region43: #{autoencoder_forward.5} parent=39 // loop_header_branch
                %149 = sbr.rel (%p147) target = $region47
              $region44: #{autoencoder_forward.5} parent=39 // loop_body
                %v153 = vld [vmem:[%s151] sm:$0xff]
                %154 = vst [vmem:[%s152] sm:$0xff] %v153
                %v155 = vld [vmem:[%s151 + $0x10] sm:$0xff]
                %156 = vst [vmem:[%s152 + $0x8] sm:$0xff] %v155
              $region45: #{autoencoder_forward.5} parent=39 // loop_footer
                %s150 = sadd.s32 1, %s146
              $region46: #{autoencoder_forward.5} parent=39 // loop_footer_branch
                %145 = sbr.rel target = $region42
              $region47: #{autoencoder_forward.5} parent=39 // loop_exit
                _
            $region40: #{autoencoder_forward.5} parent=31 // pred_fallthru
              _
          $region32: #{autoencoder_forward.5} parent=27 // pred_fallthru
            _
          %173 = vnop
        $region28: #{autoencoder_forward.5} parent=23 // pred_fallthru
          _
      $region24: #{autoencoder_forward.5} parent=5 // pred_fallthru
        _
      %p174 = scmp.le.s32.totalorder 1, %s9
      %p175 = scmp.lt.s32.totalorder %s9, 3
      %p176 = pnand %p174, %p175
      %p177 = pneg %p176
      // Predicated region
      $region63: #{autoencoder_forward.5} parent=5 // pred_check
        _
      $region64: #{autoencoder_forward.5} parent=5 // pred_check_branch
        %179 = sbr.rel (%p176) target = $region66
      $region65: #{autoencoder_forward.5} parent=5 // pred_region
        %s180 = ssub.s32 %s9, 1
        %s181 = sand.u32 %s43, 1
        %s182 = sand.u32 %s43, 1
        %s183 = smul.addr %s182, 16
        %s184 = scalar_lea.vmem [#allocation2], %s183
        // Predicated region
        $region67: #{autoencoder_forward.5} parent=65 // pred_check
          %p185 = pneg %p56
        $region68: #{autoencoder_forward.5} parent=65 // pred_check_branch
          %187 = sbr.rel (%p185) target = $region70
        $region69: #{autoencoder_forward.5} parent=65 // pred_region
          _
        $region70: #{autoencoder_forward.5} parent=65 // pred_fallthru
          _
        %p188 = pneg %p30
        %p189 = pneg %p27
        %s190 = sand.u32 %s43, 1
        %s191 = sand.u32 %s43, 1
        %s192 = smul.addr %s191, 16
        %s193 = scalar_lea.vmem [#allocation2], %s192
        %p194 = pneg %p56
        %p195 = pneg %p53
        %p196 = pneg %p77
        %p197 = pneg %p74
        %p198 = pneg %p103
        %p199 = pneg %p100
        %s200 = sand.u32 %s90, 1
        %s201 = sand.u32 %s90, 1
        %s202 = smul.addr %s201, 16
        %s203 = scalar_lea.vmem [#allocation3], %s202
        %s204 = smul.u32 2, %s14
        %s205 = smul.u32 2, %s14
        %v207 = vld [vmem:[%s0] sm:$0xf]
        %v208 = vld [vmem:[%s0 + $0x4] sm:$0xf]
        %v209 = vld [vmem:[%s184] sm:$0xff]
        %v210 = vld [vmem:[%s184 + $0x8] sm:$0x11]
        %v211 = vld [vmem:[%s2] sm:$0xff]
        %v212 = vld [vmem:[%s2 + $0x8] sm:$0xff]
        %214 = vset.pattern.permute.xlu0 0
        %215 = vperm.xlu0 %214, %v211
        %v216 = vpop.permute.xlu0 %215
        %219 = vset.pattern.permute.xlu0 0
        %220 = vperm.xlu0 %219, %v212
        %v221 = vpop.permute.xlu0 %220
        %v225 = vunpack.c.l.b16 %v207
        %v226 = vunpack.c.l.b16 %v208
        %v227 = vpack.c.b16 %v226, %v225
        %v230 = vunpack.c.l.b16 %v209
        %v231 = vunpack.c.h.b16 %v209
        %v232 = vunpack.c.l.b16 %v210
        %v233 = vunpack.c.h.b16 %v210
        %v234 = vpack.c.b16 %v232, %v230
        %v235 = vpack.c.b16 %v233, %v231
        %vm236 = vcmask 72704
        %v238 = vsel %vm236, %v227, 0
        %vm240 = vcmask 1043456
        %vm241 = vcmask 1044480
        %v242 = vsel %vm240, 4294967295, 65535
        %v243 = vsel %vm241, %v242, 0
        %v245 = vand.u32 %v234, %v243
        %v248 = vand.u32 %v235, %v243
        %250 = vmatprep.subr.bf16.mxu0 %v248
        %251 = vmatpush1.bf16.msra.mxu0 %v245
        %252 = vmatprep.subr.bf16.mxu0 0
        %253 = vmatpush1.bf16.msra.mxu0 0
        %254 = vmatprep.subr.bf16.mxu0 0
        %255 = vmatpush1.bf16.msra.mxu0 0
        %256 = vmatprep.subr.bf16.mxu0 0
        %257 = vmatpush1.bf16.msra.mxu0 0
        %258 = vmatprep.subr.bf16.mxu0 0
        %259 = vmatpush1.bf16.msra.mxu0 0
        %260 = vmatprep.subr.bf16.mxu0 0
        %261 = vmatpush1.bf16.msra.mxu0 0
        %262 = vmatprep.subr.bf16.mxu0 0
        %263 = vmatpush1.bf16.msra.mxu0 0
        %264 = vmatprep.subr.bf16.mxu0 0
        %265 = vmatpush1.bf16.msra.mxu0 0
        %266 = vmatprep.subr.bf16.mxu0 0
        %267 = vmatpush1.bf16.msra.mxu0 0
        %268 = vmatprep.subr.bf16.mxu0 0
        %269 = vmatpush1.bf16.msra.mxu0 0
        %270 = vmatprep.subr.bf16.mxu0 0
        %271 = vmatpush1.bf16.msra.mxu0 0
        %272 = vmatprep.subr.bf16.mxu0 0
        %273 = vmatpush1.bf16.msra.mxu0 0
        %274 = vmatprep.subr.bf16.mxu0 0
        %275 = vmatpush1.bf16.msra.mxu0 0
        %276 = vmatprep.subr.bf16.mxu0 0
        %277 = vmatpush1.bf16.msra.mxu0 0
        %278 = vmatprep.subr.bf16.mxu0 0
        %279 = vmatpush1.bf16.msra.mxu0 0
        %280 = vmatprep.subr.bf16.mxu0 0
        %281 = vmatpush1.bf16.msra.mxu0 0
        %282 = vmatprep.mubr.bf16.mxu0 0
        %283 = vmatmul.mubr.bf16.gmra.mrb[0].mxu0 %v238
        %v284 = vpop.f32.mrb[0].mxu0
        %v285 = vadd.f32 %v216, %v284
        %v286 = vpop.f32.mrb[0].mxu0
        %v287 = vadd.f32 %v216, %v286
        %v288 = vpop.f32.mrb[0].mxu0
        %v289 = vadd.f32 %v221, %v288
        %v290 = vpop.f32.mrb[0].mxu0
        %v291 = vadd.f32 %v221, %v290
        %292 = vdwg.mxu0
        %v293 = vmax.f32 %v285, 0.0
        %v294 = vmax.f32 %v287, 0.0
        %v295 = vmax.f32 %v289, 0.0
        %v296 = vmax.f32 %v291, 0.0
        %v297 = vpack.c.bf16 %v295, %v293
        %v298 = vpack.c.bf16 %v296, %v294
        %v301 = vunpack.c.l.b16 %v297
        %v302 = vunpack.c.l.b16 %v298
        %v303 = vunpack.c.h.b16 %v297
        %v304 = vunpack.c.h.b16 %v298
        %v305 = vpack.c.b16 %v302, %v301
        %v306 = vpack.c.b16 %v304, %v303
        %309 = vst [vmem:[%s203] sm:$0xff] %v305
        %310 = vst [vmem:[%s203 + $0x8] sm:$0xff] %v306
        %s311 = sand.u32 %s90, 1
        %s312 = sand.u32 %s90, 1
        %s313 = smul.addr %s312, 16
        %s314 = scalar_lea.vmem [#allocation3], %s313
        // Predicated region
        $region71: #{autoencoder_forward.5} parent=65 // pred_check
          %p315 = pneg %p100
        $region72: #{autoencoder_forward.5} parent=65 // pred_check_branch
          %317 = sbr.rel (%p315) target = $region74
        $region73: #{autoencoder_forward.5} parent=65 // pred_region
          %s318 = smul.u32 2, %s14
          %s319 = smul.addr %s318, 4
          %s320 = scalar_lea.vmem %s3, %s319
          // Predicated region
          $region75: #{autoencoder_forward.5} parent=73 // pred_check
            _
          $region76: #{autoencoder_forward.5} parent=73 // pred_check_branch
            %322 = sbr.rel (0) target = $region78
          $region77: #{autoencoder_forward.5} parent=73 // pred_region
            // Predicated region
            $region79: #{autoencoder_forward.5} parent=77 // pred_check
              _
            $region80: #{autoencoder_forward.5} parent=77 // pred_check_branch
              %324 = sbr.rel (0) target = $region82
            $region81: #{autoencoder_forward.5} parent=77 // pred_region
              // Predicated region
              $region94: #{autoencoder_forward.5} parent=81 // pred_check
                _
              $region95: #{autoencoder_forward.5} parent=81 // pred_check_branch
                %341 = sbr.rel (0) target = $region97
              $region96: #{autoencoder_forward.5} parent=81 // pred_region
                loop: start=0, step=1, limit=1
                $region98: #{autoencoder_forward.5} parent=96 // loop_pre_header
                  _
                $region99: #{autoencoder_forward.5} parent=96 // loop_header
                  %s343 = sphi 0, %s347
                  %p344 = scmp.ge.s32.totalorder %s343, 1
                  %s348 = sphi %s314, %s314
                  %s349 = sphi %s320, %s320
                $region100: #{autoencoder_forward.5} parent=96 // loop_header_branch
                  %346 = sbr.rel (%p344) target = $region104
                $region101: #{autoencoder_forward.5} parent=96 // loop_body
                  %v350 = vld [vmem:[%s348] sm:$0xff]
                  %351 = vst [vmem:[%s349] sm:$0xff] %v350
                  %v352 = vld [vmem:[%s348 + $0x8] sm:$0xff]
                  %353 = vst [vmem:[%s349 + $0x10] sm:$0xff] %v352
                $region102: #{autoencoder_forward.5} parent=96 // loop_footer
                  %s347 = sadd.s32 1, %s343
                $region103: #{autoencoder_forward.5} parent=96 // loop_footer_branch
                  %342 = sbr.rel target = $region99
                $region104: #{autoencoder_forward.5} parent=96 // loop_exit
                  _
              $region97: #{autoencoder_forward.5} parent=81 // pred_fallthru
                _
              // Predicated region
              $region105: #{autoencoder_forward.5} parent=81 // pred_check
                _
              $region106: #{autoencoder_forward.5} parent=81 // pred_check_branch
                %355 = sbr.rel target = $region108
              $region107: #{autoencoder_forward.5} parent=81 // pred_region
                _
              $region108: #{autoencoder_forward.5} parent=81 // pred_fallthru
                _
            $region82: #{autoencoder_forward.5} parent=77 // pred_fallthru
              _
            // Predicated region
            $region83: #{autoencoder_forward.5} parent=77 // pred_check
              _
            $region84: #{autoencoder_forward.5} parent=77 // pred_check_branch
              %326 = sbr.rel target = $region86
            $region85: #{autoencoder_forward.5} parent=77 // pred_region
              loop: start=0, step=1, limit=1
              $region87: #{autoencoder_forward.5} parent=85 // loop_pre_header
                _
              $region88: #{autoencoder_forward.5} parent=85 // loop_header
                %s329 = sphi 0, %s333
                %p330 = scmp.ge.s32.totalorder %s329, 1
                %s334 = sphi %s314, %s314
                %s335 = sphi %s320, %s320
              $region89: #{autoencoder_forward.5} parent=85 // loop_header_branch
                %332 = sbr.rel (%p330) target = $region93
              $region90: #{autoencoder_forward.5} parent=85 // loop_body
                %v336 = vld [vmem:[%s334] sm:$0xff]
                %337 = vst [vmem:[%s335] sm:$0xff] %v336
                %v338 = vld [vmem:[%s334 + $0x8] sm:$0xff]
                %339 = vst [vmem:[%s335 + $0x10] sm:$0xff] %v338
              $region91: #{autoencoder_forward.5} parent=85 // loop_footer
                %s333 = sadd.s32 1, %s329
              $region92: #{autoencoder_forward.5} parent=85 // loop_footer_branch
                %328 = sbr.rel target = $region88
              $region93: #{autoencoder_forward.5} parent=85 // loop_exit
                _
            $region86: #{autoencoder_forward.5} parent=77 // pred_fallthru
              _
          $region78: #{autoencoder_forward.5} parent=73 // pred_fallthru
            _
          %356 = vnop
        $region74: #{autoencoder_forward.5} parent=65 // pred_fallthru
          _
      $region66: #{autoencoder_forward.5} parent=5 // pred_fallthru
        _
      %p357 = scmp.le.s32.totalorder 2, %s9
      // Predicated region
      $region109: #{autoencoder_forward.5} parent=5 // pred_check
        %p358 = pneg %p357
      $region110: #{autoencoder_forward.5} parent=5 // pred_check_branch
        %360 = sbr.rel (%p358) target = $region112
      $region111: #{autoencoder_forward.5} parent=5 // pred_region
        %s361 = ssub.s32 %s9, 2
        // Predicated region
        $region113: #{autoencoder_forward.5} parent=111 // pred_check
          %p362 = pneg %p106
        $region114: #{autoencoder_forward.5} parent=111 // pred_check_branch
          %364 = sbr.rel (%p362) target = $region116
        $region115: #{autoencoder_forward.5} parent=111 // pred_region
          %s365 = sand.u32 %s91, 1
          %s366 = sand.u32 %s91, 1
          %s367 = smul.addr %s366, 16
          %s368 = scalar_lea.vmem [#allocation3], %s367
        $region116: #{autoencoder_forward.5} parent=111 // pred_fallthru
          _
      $region112: #{autoencoder_forward.5} parent=5 // pred_fallthru
        _
    $region6: #{autoencoder_forward.5} parent=1 // loop_footer
      %s13 = sadd.s32 1, %s9
    $region7: #{autoencoder_forward.5} parent=1 // loop_footer_branch
      %8 = sbr.rel target = $region3
    $region8: #{autoencoder_forward.5} parent=1 // loop_exit
      _

// kernel: autoencoder_forward.6
$region0: #{autoencoder_forward.6}
  #allocation0 [shape = 'u32[]', space=smem, size = 0x4, offset = 0x4, fixed_abs, tag = 'smem constant byte address 0x4 - core index']
  #allocation1 [shape = 'u32[144,128]{1,0:T(1,128)}', space=vmem, size = 0x12000, scoped, tag = 'internal scratch']
  %s0 = inlined_call_operand.vmem [shape: bf16[32,144], index: 0, kind: input, shape index: {}]
  %s1 = inlined_call_operand.vmem [shape: bf16[144,128], index: 1, kind: input, shape index: {}]
  %s2 = inlined_call_operand.vmem [shape: f32[32,1], index: 2, kind: input, shape index: {}]
  %s3 = inlined_call_operand.vmem [shape: bf16[32,128], index: 3, kind: output, shape index: {}]
  %s4 = sld [smem:[#allocation0]]
  $region22: #{autoencoder_forward.6} parent=0
    _
  %s6 = ssub.s32 1, %s4
  %s7 = scalar_select 0, %s6, %s4
  // Predicated region
  $region2: #{autoencoder_forward.6} parent=0 // pred_check
    _
  $region3: #{autoencoder_forward.6} parent=0 // pred_check_branch
    %9 = sbr.rel (0) target = $region5
  $region4: #{autoencoder_forward.6} parent=0 // pred_region
    _
  $region5: #{autoencoder_forward.6} parent=0 // pred_fallthru
    _
  // Predicated region
  $region6: #{autoencoder_forward.6} parent=0 // pred_check
    _
  $region7: #{autoencoder_forward.6} parent=0 // pred_check_branch
    %11 = sbr.rel (0) target = $region9
  $region8: #{autoencoder_forward.6} parent=0 // pred_region
    _
  $region9: #{autoencoder_forward.6} parent=0 // pred_fallthru
    _
  // Predicated region
  $region10: #{autoencoder_forward.6} parent=0 // pred_check
    _
  $region11: #{autoencoder_forward.6} parent=0 // pred_check_branch
    %13 = sbr.rel (0) target = $region13
  $region12: #{autoencoder_forward.6} parent=0 // pred_region
    _
  $region13: #{autoencoder_forward.6} parent=0 // pred_fallthru
    _
  %v15 = vld [vmem:[%s0] sm:$0xff]
  %v16 = vld [vmem:[%s0 + $0x8] sm:$0xff]
  %v17 = vld [vmem:[%s0 + $0x10] sm:$0xff]
  %v18 = vld [vmem:[%s0 + $0x18] sm:$0xff]
  %v19 = vld [vmem:[%s1] sm:$0xf]
  %v20 = vld [vmem:[%s1 + $0x4] sm:$0xf]
  %v21 = vld [vmem:[%s1 + $0x8] sm:$0xf]
  %v22 = vld [vmem:[%s1 + $0xc] sm:$0xf]
  %v23 = vld [vmem:[%s1 + $0x10] sm:$0xf]
  %v24 = vld [vmem:[%s1 + $0x14] sm:$0xf]
  %v25 = vld [vmem:[%s1 + $0x18] sm:$0xf]
  %v26 = vld [vmem:[%s1 + $0x1c] sm:$0xf]
  %v27 = vld [vmem:[%s1 + $0x20] sm:$0xf]
  %v28 = vld [vmem:[%s1 + $0x24] sm:$0xf]
  %v29 = vld [vmem:[%s1 + $0x28] sm:$0xf]
  %v30 = vld [vmem:[%s1 + $0x2c] sm:$0xf]
  %v31 = vld [vmem:[%s1 + $0x30] sm:$0xf]
  %v32 = vld [vmem:[%s1 + $0x34] sm:$0xf]
  %v33 = vld [vmem:[%s1 + $0x38] sm:$0xf]
  %v34 = vld [vmem:[%s1 + $0x3c] sm:$0xf]
  %v35 = vld [vmem:[%s1 + $0x40] sm:$0xf]
  %v36 = vld [vmem:[%s1 + $0x44] sm:$0xf]
  %v37 = vld [vmem:[%s2] sm:$0xff]
  %v38 = vld [vmem:[%s2 + $0x8] sm:$0xff]
  %v39 = vld [vmem:[%s2 + $0x10] sm:$0xff]
  %v40 = vld [vmem:[%s2 + $0x18] sm:$0xff]
  %42 = vset.pattern.permute.xlu0 0
  %43 = vperm.xlu0 %42, %v37
  %v44 = vpop.permute.xlu0 %43
  %47 = vset.pattern.permute.xlu0 0
  %48 = vperm.xlu0 %47, %v38
  %v49 = vpop.permute.xlu0 %48
  %52 = vset.pattern.permute.xlu0 0
  %53 = vperm.xlu0 %52, %v39
  %v54 = vpop.permute.xlu0 %53
  %57 = vset.pattern.permute.xlu0 0
  %58 = vperm.xlu0 %57, %v40
  %v59 = vpop.permute.xlu0 %58
  %v65 = vunpack.c.l.b16 %v15
  %v66 = vunpack.c.h.b16 %v15
  %v67 = vunpack.c.l.b16 %v16
  %v68 = vunpack.c.h.b16 %v16
  %v69 = vunpack.c.l.b16 %v17
  %v70 = vunpack.c.h.b16 %v17
  %v71 = vunpack.c.l.b16 %v18
  %v72 = vunpack.c.h.b16 %v18
  %v73 = vpack.c.b16 %v67, %v65
  %v74 = vpack.c.b16 %v68, %v66
  %v75 = vpack.c.b16 %v71, %v69
  %v76 = vpack.c.b16 %v72, %v70
  %v97 = vunpack.c.l.b16 %v19
  %v98 = vunpack.c.l.b16 %v20
  %v99 = vunpack.c.l.b16 %v21
  %v100 = vunpack.c.l.b16 %v22
  %v101 = vunpack.c.l.b16 %v23
  %v102 = vunpack.c.l.b16 %v24
  %v103 = vunpack.c.l.b16 %v25
  %v104 = vunpack.c.l.b16 %v26
  %v105 = vunpack.c.l.b16 %v27
  %v106 = vunpack.c.l.b16 %v28
  %v107 = vunpack.c.l.b16 %v29
  %v108 = vunpack.c.l.b16 %v30
  %v109 = vunpack.c.l.b16 %v31
  %v110 = vunpack.c.l.b16 %v32
  %v111 = vunpack.c.l.b16 %v33
  %v112 = vunpack.c.l.b16 %v34
  %v113 = vunpack.c.l.b16 %v35
  %v114 = vunpack.c.l.b16 %v36
  %v115 = vpack.c.b16 %v98, %v97
  %v116 = vpack.c.b16 %v100, %v99
  %v117 = vpack.c.b16 %v102, %v101
  %v118 = vpack.c.b16 %v104, %v103
  %v119 = vpack.c.b16 %v106, %v105
  %v120 = vpack.c.b16 %v108, %v107
  %v121 = vpack.c.b16 %v110, %v109
  %v122 = vpack.c.b16 %v112, %v111
  %v123 = vpack.c.b16 %v114, %v113
  %vm133 = vcmask 130048
  %v135 = vsel %vm133, %v74, 0
  %v138 = vsel %vm133, %v76, 0
  %140 = vmatprep.subr.bf16.mxu0 0
  %141 = vmatpush1.bf16.msra.mxu0 %v115
  %142 = vmatprep.subr.bf16.mxu0 0
  %143 = vmatpush1.bf16.msra.mxu0 %v116
  %144 = vmatprep.subr.bf16.mxu0 0
  %145 = vmatpush1.bf16.msra.mxu0 %v117
  %146 = vmatprep.subr.bf16.mxu0 0
  %147 = vmatpush1.bf16.msra.mxu0 %v118
  %148 = vmatprep.subr.bf16.mxu0 0
  %149 = vmatpush1.bf16.msra.mxu0 %v119
  %150 = vmatprep.subr.bf16.mxu0 0
  %151 = vmatpush1.bf16.msra.mxu0 %v120
  %152 = vmatprep.subr.bf16.mxu0 0
  %153 = vmatpush1.bf16.msra.mxu0 %v121
  %154 = vmatprep.subr.bf16.mxu0 0
  %155 = vmatpush1.bf16.msra.mxu0 %v122
  %156 = vmatprep.subr.bf16.mxu0 0
  %157 = vmatpush1.bf16.msra.mxu0 %v123
  %158 = vmatprep.subr.bf16.mxu0 0
  %159 = vmatpush1.bf16.msra.mxu0 0
  %160 = vmatprep.subr.bf16.mxu0 0
  %161 = vmatpush1.bf16.msra.mxu0 0
  %162 = vmatprep.subr.bf16.mxu0 0
  %163 = vmatpush1.bf16.msra.mxu0 0
  %164 = vmatprep.subr.bf16.mxu0 0
  %165 = vmatpush1.bf16.msra.mxu0 0
  %166 = vmatprep.subr.bf16.mxu0 0
  %167 = vmatpush1.bf16.msra.mxu0 0
  %168 = vmatprep.subr.bf16.mxu0 0
  %169 = vmatpush1.bf16.msra.mxu0 0
  %170 = vmatprep.subr.bf16.mxu0 0
  %171 = vmatpush1.bf16.msra.mxu0 0
  %172 = vmatprep.mubr.bf16.mxu0 %v135
  %173 = vmatmul.mubr.bf16.gmra.mrb[0].mxu0 %v73
  %v174 = vpop.f32.mrb[0].mxu0
  %v175 = vadd.f32 %v44, %v174
  %v176 = vpop.f32.mrb[0].mxu0
  %v177 = vpop.f32.mrb[0].mxu0
  %v178 = vadd.f32 %v49, %v177
  %v179 = vpop.f32.mrb[0].mxu0
  %180 = vmatprep.mubr.bf16.mxu0 %v138
  %181 = vmatmul.mubr.bf16.gmra.mrb[0].mxu0 %v75
  %v182 = vpop.f32.mrb[0].mxu0
  %v183 = vadd.f32 %v54, %v182
  %v184 = vpop.f32.mrb[0].mxu0
  %v185 = vpop.f32.mrb[0].mxu0
  %v186 = vadd.f32 %v59, %v185
  %v187 = vpop.f32.mrb[0].mxu0
  %188 = vdwg.mxu0
  %v189 = vmax.f32 %v175, 0.0
  %v190 = vmax.f32 %v178, 0.0
  %v191 = vmax.f32 %v183, 0.0
  %v192 = vmax.f32 %v186, 0.0
  %v193 = vpack.c.bf16 %v190, %v189
  %v194 = vpack.c.bf16 %v192, %v191
  %v197 = vunpack.c.l.b16 %v193
  %v198 = vunpack.c.h.b16 %v193
  %v199 = vunpack.c.l.b16 %v194
  %v200 = vunpack.c.h.b16 %v194
  %v201 = vpack.c.b16 %v197, %v197
  %v202 = vpack.c.b16 %v198, %v198
  %v203 = vpack.c.b16 %v199, %v199
  %v204 = vpack.c.b16 %v200, %v200
  %209 = vst [vmem:[%s3] sm:$0xf] %v201
  %210 = vst [vmem:[%s3 + $0x4] sm:$0xf] %v202
  %211 = vst [vmem:[%s3 + $0x8] sm:$0xf] %v203
  %212 = vst [vmem:[%s3 + $0xc] sm:$0xf] %v204
  // Predicated region
  $region14: #{autoencoder_forward.6} parent=0 // pred_check
    _
  $region15: #{autoencoder_forward.6} parent=0 // pred_check_branch
    %214 = sbr.rel (0) target = $region17
  $region16: #{autoencoder_forward.6} parent=0 // pred_region
    _
  $region17: #{autoencoder_forward.6} parent=0 // pred_fallthru
    _
  // Predicated region
  $region18: #{autoencoder_forward.6} parent=0 // pred_check
    _
  $region19: #{autoencoder_forward.6} parent=0 // pred_check_branch
    %216 = sbr.rel (0) target = $region21
  $region20: #{autoencoder_forward.6} parent=0 // pred_region
    _
  $region21: #{autoencoder_forward.6} parent=0 // pred_fallthru
    _

// kernel: autoencoder_forward.7
$region0: #{autoencoder_forward.7}
  #allocation0 [shape = 'u32[]', space=smem, size = 0x4, offset = 0x4, fixed_abs, tag = 'smem constant byte address 0x4 - core index']
  #allocation1 [shape = 'u32[144,128]{1,0:T(1,128)}', space=vmem, size = 0x12000, scoped, tag = 'internal scratch']
  %s0 = inlined_call_operand.vmem [shape: bf16[64,1568], index: 0, kind: input, shape index: {}]
  %s1 = inlined_call_operand.vmem [shape: bf16[1568,128], index: 1, kind: input, shape index: {}]
  %s2 = inlined_call_operand.vmem [shape: f32[64,1], index: 2, kind: input, shape index: {}]
  %s3 = inlined_call_operand.vmem [shape: bf16[1568,64], index: 3, kind: input, shape index: {}]
  %s4 = inlined_call_operand.vmem [shape: f32[1568,1], index: 4, kind: input, shape index: {}]
  %s5 = inlined_call_operand.vmem [shape: bf16[1568,128], index: 5, kind: output, shape index: {}]
  %s6 = sld [smem:[#allocation0]]
  $region30: #{autoencoder_forward.7} parent=0
    _
  %s8 = ssub.s32 1, %s6
  %s9 = scalar_select 0, %s8, %s6
  // Predicated region
  $region2: #{autoencoder_forward.7} parent=0 // pred_check
    _
  $region3: #{autoencoder_forward.7} parent=0 // pred_check_branch
    %11 = sbr.rel (0) target = $region5
  $region4: #{autoencoder_forward.7} parent=0 // pred_region
    _
  $region5: #{autoencoder_forward.7} parent=0 // pred_fallthru
    _
  // Predicated region
  $region6: #{autoencoder_forward.7} parent=0 // pred_check
    _
  $region7: #{autoencoder_forward.7} parent=0 // pred_check_branch
    %13 = sbr.rel (0) target = $region9
  $region8: #{autoencoder_forward.7} parent=0 // pred_region
    _
  $region9: #{autoencoder_forward.7} parent=0 // pred_fallthru
    _
  // Predicated region
  $region10: #{autoencoder_forward.7} parent=0 // pred_check
    _
  $region11: #{autoencoder_forward.7} parent=0 // pred_check_branch
    %15 = sbr.rel (0) target = $region13
  $region12: #{autoencoder_forward.7} parent=0 // pred_region
    _
  $region13: #{autoencoder_forward.7} parent=0 // pred_fallthru
    _
  // Predicated region
  $region14: #{autoencoder_forward.7} parent=0 // pred_check
    _
  $region15: #{autoencoder_forward.7} parent=0 // pred_check_branch
    %17 = sbr.rel (0) target = $region17
  $region16: #{autoencoder_forward.7} parent=0 // pred_region
    _
  $region17: #{autoencoder_forward.7} parent=0 // pred_fallthru
    _
  // Predicated region
  $region18: #{autoencoder_forward.7} parent=0 // pred_check
    _
  $region19: #{autoencoder_forward.7} parent=0 // pred_check_branch
    %19 = sbr.rel (0) target = $region21
  $region20: #{autoencoder_forward.7} parent=0 // pred_region
    _
  $region21: #{autoencoder_forward.7} parent=0 // pred_fallthru
    _
  %v21 = vld [vmem:[%s0] sm:$0xff]
  %v22 = vld [vmem:[%s0 + $0x8] sm:$0xff]
  %v23 = vld [vmem:[%s0 + $0x10] sm:$0xff]
  %v24 = vld [vmem:[%s0 + $0x18] sm:$0xff]
  %v25 = vld [vmem:[%s0 + $0x20] sm:$0xff]
  %v26 = vld [vmem:[%s0 + $0x28] sm:$0xff]
  %v27 = vld [vmem:[%s0 + $0x30] sm:$0xf]
  %v28 = vld [vmem:[%s0 + $0x34] sm:$0xff]
  %v29 = vld [vmem:[%s0 + $0x3c] sm:$0xff]
  %v30 = vld [vmem:[%s0 + $0x44] sm:$0xff]
  %v31 = vld [vmem:[%s0 + $0x4c] sm:$0xff]
  %v32 = vld [vmem:[%s0 + $0x54] sm:$0xff]
  %v33 = vld [vmem:[%s0 + $0x5c] sm:$0xff]
  %v34 = vld [vmem:[%s0 + $0x64] sm:$0xf]
  %v35 = vld [vmem:[%s0 + $0x68] sm:$0xff]
  %v36 = vld [vmem:[%s0 + $0x70] sm:$0xff]
  %v37 = vld [vmem:[%s0 + $0x78] sm:$0xff]
  %v38 = vld [vmem:[%s0 + $0x80] sm:$0xff]
  %v39 = vld [vmem:[%s0 + $0x88] sm:$0xff]
  %v40 = vld [vmem:[%s0 + $0x90] sm:$0xff]
  %v41 = vld [vmem:[%s0 + $0x98] sm:$0xf]
  %v42 = vld [vmem:[%s0 + $0x9c] sm:$0xff]
  %v43 = vld [vmem:[%s0 + $0xa4] sm:$0xff]
  %v44 = vld [vmem:[%s0 + $0xac] sm:$0xff]
  %v45 = vld [vmem:[%s0 + $0xb4] sm:$0xff]
  %v46 = vld [vmem:[%s0 + $0xbc] sm:$0xff]
  %v47 = vld [vmem:[%s0 + $0xc4] sm:$0xff]
  %v48 = vld [vmem:[%s0 + $0xcc] sm:$0xf]
  %v49 = vld [vmem:[%s0 + $0xd0] sm:$0xff]
  %v50 = vld [vmem:[%s0 + $0xd8] sm:$0xff]
  %v51 = vld [vmem:[%s0 + $0xe0] sm:$0xff]
  %v52 = vld [vmem:[%s0 + $0xe8] sm:$0xff]
  %v53 = vld [vmem:[%s0 + $0xf0] sm:$0xff]
  %v54 = vld [vmem:[%s0 + $0xf8] sm:$0xff]
  %v55 = vld [vmem:[%s0 + $0x100] sm:$0xf]
  %v56 = vld [vmem:[%s0 + $0x104] sm:$0xff]
  %v57 = vld [vmem:[%s0 + $0x10c] sm:$0xff]
  %v58 = vld [vmem:[%s0 + $0x114] sm:$0xff]
  %v59 = vld [vmem:[%s0 + $0x11c] sm:$0xff]
  %v60 = vld [vmem:[%s0 + $0x124] sm:$0xff]
  %v61 = vld [vmem:[%s0 + $0x12c] sm:$0xff]
  %v62 = vld [vmem:[%s0 + $0x134] sm:$0xf]
  %v63 = vld [vmem:[%s0 + $0x138] sm:$0xff]
  %v64 = vld [vmem:[%s0 + $0x140] sm:$0xff]
  %v65 = vld [vmem:[%s0 + $0x148] sm:$0xff]
  %v66 = vld [vmem:[%s0 + $0x150] sm:$0xff]
  %v67 = vld [vmem:[%s0 + $0x158] sm:$0xff]
  %v68 = vld [vmem:[%s0 + $0x160] sm:$0xff]
  %v69 = vld [vmem:[%s0 + $0x168] sm:$0xf]
  %v70 = vld [vmem:[%s0 + $0x16c] sm:$0xff]
  %v71 = vld [vmem:[%s0 + $0x174] sm:$0xff]
  %v72 = vld [vmem:[%s0 + $0x17c] sm:$0xff]
  %v73 = vld [vmem:[%s0 + $0x184] sm:$0xff]
  %v74 = vld [vmem:[%s0 + $0x18c] sm:$0xff]
  %v75 = vld [vmem:[%s0 + $0x194] sm:$0xff]
  %v76 = vld [vmem:[%s0 + $0x19c] sm:$0xf]
  %v77 = vld [vmem:[%s1] sm:$0xf]
  %v78 = vld [vmem:[%s1 + $0x4] sm:$0xf]
  %v79 = vld [vmem:[%s1 + $0x8] sm:$0xf]
  %v80 = vld [vmem:[%s1 + $0xc] sm:$0xf]
  %v81 = vld [vmem:[%s1 + $0x10] sm:$0xf]
  %v82 = vld [vmem:[%s1 + $0x14] sm:$0xf]
  %v83 = vld [vmem:[%s1 + $0x18] sm:$0xf]
  %v84 = vld [vmem:[%s1 + $0x1c] sm:$0xf]
  %v85 = vld [vmem:[%s1 + $0x20] sm:$0xf]
  %v86 = vld [vmem:[%s1 + $0x24] sm:$0xf]
  %v87 = vld [vmem:[%s1 + $0x28] sm:$0xf]
  %v88 = vld [vmem:[%s1 + $0x2c] sm:$0xf]
  %v89 = vld [vmem:[%s1 + $0x30] sm:$0xf]
  %v90 = vld [vmem:[%s1 + $0x34] sm:$0xf]
  %v91 = vld [vmem:[%s1 + $0x38] sm:$0xf]
  %v92 = vld [vmem:[%s1 + $0x3c] sm:$0xf]
  %v93 = vld [vmem:[%s1 + $0x40] sm:$0xf]
  %v94 = vld [vmem:[%s1 + $0x44] sm:$0xf]
  %v95 = vld [vmem:[%s1 + $0x48] sm:$0xf]
  %v96 = vld [vmem:[%s1 + $0x4c] sm:$0xf]
  %v97 = vld [vmem:[%s1 + $0x50] sm:$0xf]
  %v98 = vld [vmem:[%s1 + $0x54] sm:$0xf]
  %v99 = vld [vmem:[%s1 + $0x58] sm:$0xf]
  %v100 = vld [vmem:[%s1 + $0x5c] sm:$0xf]
  %v101 = vld [vmem:[%s1 + $0x60] sm:$0xf]
  %v102 = vld [vmem:[%s1 + $0x64] sm:$0xf]
  %v103 = vld [vmem:[%s1 + $0x68] sm:$0xf]
  %v104 = vld [vmem:[%s1 + $0x6c] sm:$0xf]
  %v105 = vld [vmem:[%s1 + $0x70] sm:$0xf]
  %v106 = vld [vmem:[%s1 + $0x74] sm:$0xf]
  %v107 = vld [vmem:[%s1 + $0x78] sm:$0xf]
  %v108 = vld [vmem:[%s1 + $0x7c] sm:$0xf]
  %v109 = vld [vmem:[%s1 + $0x80] sm:$0xf]
  %v110 = vld [vmem:[%s1 + $0x84] sm:$0xf]
  %v111 = vld [vmem:[%s1 + $0x88] sm:$0xf]
  %v112 = vld [vmem:[%s1 + $0x8c] sm:$0xf]
  %v113 = vld [vmem:[%s1 + $0x90] sm:$0xf]
  %v114 = vld [vmem:[%s1 + $0x94] sm:$0xf]
  %v115 = vld [vmem:[%s1 + $0x98] sm:$0xf]
  %v116 = vld [vmem:[%s1 + $0x9c] sm:$0xf]
  %v117 = vld [vmem:[%s1 + $0xa0] sm:$0xf]
  %v118 = vld [vmem:[%s1 + $0xa4] sm:$0xf]
  %v119 = vld [vmem:[%s1 + $0xa8] sm:$0xf]
  %v120 = vld [vmem:[%s1 + $0xac] sm:$0xf]
  %v121 = vld [vmem:[%s1 + $0xb0] sm:$0xf]
  %v122 = vld [vmem:[%s1 + $0xb4] sm:$0xf]
  %v123 = vld [vmem:[%s1 + $0xb8] sm:$0xf]
  %v124 = vld [vmem:[%s1 + $0xbc] sm:$0xf]
  %v125 = vld [vmem:[%s1 + $0xc0] sm:$0xf]
  %v126 = vld [vmem:[%s1 + $0xc4] sm:$0xf]
  %v127 = vld [vmem:[%s1 + $0xc8] sm:$0xf]
  %v128 = vld [vmem:[%s1 + $0xcc] sm:$0xf]
  %v129 = vld [vmem:[%s1 + $0xd0] sm:$0xf]
  %v130 = vld [vmem:[%s1 + $0xd4] sm:$0xf]
  %v131 = vld [vmem:[%s1 + $0xd8] sm:$0xf]
  %v132 = vld [vmem:[%s1 + $0xdc] sm:$0xf]
  %v133 = vld [vmem:[%s1 + $0xe0] sm:$0xf]
  %v134 = vld [vmem:[%s1 + $0xe4] sm:$0xf]
  %v135 = vld [vmem:[%s1 + $0xe8] sm:$0xf]
  %v136 = vld [vmem:[%s1 + $0xec] sm:$0xf]
  %v137 = vld [vmem:[%s1 + $0xf0] sm:$0xf]
  %v138 = vld [vmem:[%s1 + $0xf4] sm:$0xf]
  %v139 = vld [vmem:[%s1 + $0xf8] sm:$0xf]
  %v140 = vld [vmem:[%s1 + $0xfc] sm:$0xf]
  %v141 = vld [vmem:[%s1 + $0x100] sm:$0xf]
  %v142 = vld [vmem:[%s1 + $0x104] sm:$0xf]
  %v143 = vld [vmem:[%s1 + $0x108] sm:$0xf]
  %v144 = vld [vmem:[%s1 + $0x10c] sm:$0xf]
  %v145 = vld [vmem:[%s1 + $0x110] sm:$0xf]
  %v146 = vld [vmem:[%s1 + $0x114] sm:$0xf]
  %v147 = vld [vmem:[%s1 + $0x118] sm:$0xf]
  %v148 = vld [vmem:[%s1 + $0x11c] sm:$0xf]
  %v149 = vld [vmem:[%s1 + $0x120] sm:$0xf]
  %v150 = vld [vmem:[%s1 + $0x124] sm:$0xf]
  %v151 = vld [vmem:[%s1 + $0x128] sm:$0xf]
  %v152 = vld [vmem:[%s1 + $0x12c] sm:$0xf]
  %v153 = vld [vmem:[%s1 + $0x130] sm:$0xf]
  %v154 = vld [vmem:[%s1 + $0x134] sm:$0xf]
  %v155 = vld [vmem:[%s1 + $0x138] sm:$0xf]
  %v156 = vld [vmem:[%s1 + $0x13c] sm:$0xf]
  %v157 = vld [vmem:[%s1 + $0x140] sm:$0xf]
  %v158 = vld [vmem:[%s1 + $0x144] sm:$0xf]
  %v159 = vld [vmem:[%s1 + $0x148] sm:$0xf]
  %v160 = vld [vmem:[%s1 + $0x14c] sm:$0xf]
  %v161 = vld [vmem:[%s1 + $0x150] sm:$0xf]
  %v162 = vld [vmem:[%s1 + $0x154] sm:$0xf]
  %v163 = vld [vmem:[%s1 + $0x158] sm:$0xf]
  %v164 = vld [vmem:[%s1 + $0x15c] sm:$0xf]
  %v165 = vld [vmem:[%s1 + $0x160] sm:$0xf]
  %v166 = vld [vmem:[%s1 + $0x164] sm:$0xf]
  %v167 = vld [vmem:[%s1 + $0x168] sm:$0xf]
  %v168 = vld [vmem:[%s1 + $0x16c] sm:$0xf]
  %v169 = vld [vmem:[%s1 + $0x170] sm:$0xf]
  %v170 = vld [vmem:[%s1 + $0x174] sm:$0xf]
  %v171 = vld [vmem:[%s1 + $0x178] sm:$0xf]
  %v172 = vld [vmem:[%s1 + $0x17c] sm:$0xf]
  %v173 = vld [vmem:[%s1 + $0x180] sm:$0xf]
  %v174 = vld [vmem:[%s1 + $0x184] sm:$0xf]
  %v175 = vld [vmem:[%s1 + $0x188] sm:$0xf]
  %v176 = vld [vmem:[%s1 + $0x18c] sm:$0xf]
  %v177 = vld [vmem:[%s1 + $0x190] sm:$0xf]
  %v178 = vld [vmem:[%s1 + $0x194] sm:$0xf]
  %v179 = vld [vmem:[%s1 + $0x198] sm:$0xf]
  %v180 = vld [vmem:[%s1 + $0x19c] sm:$0xf]
  %v181 = vld [vmem:[%s1 + $0x1a0] sm:$0xf]
  %v182 = vld [vmem:[%s1 + $0x1a4] sm:$0xf]
  %v183 = vld [vmem:[%s1 + $0x1a8] sm:$0xf]
  %v184 = vld [vmem:[%s1 + $0x1ac] sm:$0xf]
  %v185 = vld [vmem:[%s1 + $0x1b0] sm:$0xf]
  %v186 = vld [vmem:[%s1 + $0x1b4] sm:$0xf]
  %v187 = vld [vmem:[%s1 + $0x1b8] sm:$0xf]
  %v188 = vld [vmem:[%s1 + $0x1bc] sm:$0xf]
  %v189 = vld [vmem:[%s1 + $0x1c0] sm:$0xf]
  %v190 = vld [vmem:[%s1 + $0x1c4] sm:$0xf]
  %v191 = vld [vmem:[%s1 + $0x1c8] sm:$0xf]
  %v192 = vld [vmem:[%s1 + $0x1cc] sm:$0xf]
  %v193 = vld [vmem:[%s1 + $0x1d0] sm:$0xf]
  %v194 = vld [vmem:[%s1 + $0x1d4] sm:$0xf]
  %v195 = vld [vmem:[%s1 + $0x1d8] sm:$0xf]
  %v196 = vld [vmem:[%s1 + $0x1dc] sm:$0xf]
  %v197 = vld [vmem:[%s1 + $0x1e0] sm:$0xf]
  %v198 = vld [vmem:[%s1 + $0x1e4] sm:$0xf]
  %v199 = vld [vmem:[%s1 + $0x1e8] sm:$0xf]
  %v200 = vld [vmem:[%s1 + $0x1ec] sm:$0xf]
  %v201 = vld [vmem:[%s1 + $0x1f0] sm:$0xf]
  %v202 = vld [vmem:[%s1 + $0x1f4] sm:$0xf]
  %v203 = vld [vmem:[%s1 + $0x1f8] sm:$0xf]
  %v204 = vld [vmem:[%s1 + $0x1fc] sm:$0xf]
  %v205 = vld [vmem:[%s1 + $0x200] sm:$0xf]
  %v206 = vld [vmem:[%s1 + $0x204] sm:$0xf]
  %v207 = vld [vmem:[%s1 + $0x208] sm:$0xf]
  %v208 = vld [vmem:[%s1 + $0x20c] sm:$0xf]
  %v209 = vld [vmem:[%s1 + $0x210] sm:$0xf]
  %v210 = vld [vmem:[%s1 + $0x214] sm:$0xf]
  %v211 = vld [vmem:[%s1 + $0x218] sm:$0xf]
  %v212 = vld [vmem:[%s1 + $0x21c] sm:$0xf]
  %v213 = vld [vmem:[%s1 + $0x220] sm:$0xf]
  %v214 = vld [vmem:[%s1 + $0x224] sm:$0xf]
  %v215 = vld [vmem:[%s1 + $0x228] sm:$0xf]
  %v216 = vld [vmem:[%s1 + $0x22c] sm:$0xf]
  %v217 = vld [vmem:[%s1 + $0x230] sm:$0xf]
  %v218 = vld [vmem:[%s1 + $0x234] sm:$0xf]
  %v219 = vld [vmem:[%s1 + $0x238] sm:$0xf]
  %v220 = vld [vmem:[%s1 + $0x23c] sm:$0xf]
  %v221 = vld [vmem:[%s1 + $0x240] sm:$0xf]
  %v222 = vld [vmem:[%s1 + $0x244] sm:$0xf]
  %v223 = vld [vmem:[%s1 + $0x248] sm:$0xf]
  %v224 = vld [vmem:[%s1 + $0x24c] sm:$0xf]
  %v225 = vld [vmem:[%s1 + $0x250] sm:$0xf]
  %v226 = vld [vmem:[%s1 + $0x254] sm:$0xf]
  %v227 = vld [vmem:[%s1 + $0x258] sm:$0xf]
  %v228 = vld [vmem:[%s1 + $0x25c] sm:$0xf]
  %v229 = vld [vmem:[%s1 + $0x260] sm:$0xf]
  %v230 = vld [vmem:[%s1 + $0x264] sm:$0xf]
  %v231 = vld [vmem:[%s1 + $0x268] sm:$0xf]
  %v232 = vld [vmem:[%s1 + $0x26c] sm:$0xf]
  %v233 = vld [vmem:[%s1 + $0x270] sm:$0xf]
  %v234 = vld [vmem:[%s1 + $0x274] sm:$0xf]
  %v235 = vld [vmem:[%s1 + $0x278] sm:$0xf]
  %v236 = vld [vmem:[%s1 + $0x27c] sm:$0xf]
  %v237 = vld [vmem:[%s1 + $0x280] sm:$0xf]
  %v238 = vld [vmem:[%s1 + $0x284] sm:$0xf]
  %v239 = vld [vmem:[%s1 + $0x288] sm:$0xf]
  %v240 = vld [vmem:[%s1 + $0x28c] sm:$0xf]
  %v241 = vld [vmem:[%s1 + $0x290] sm:$0xf]
  %v242 = vld [vmem:[%s1 + $0x294] sm:$0xf]
  %v243 = vld [vmem:[%s1 + $0x298] sm:$0xf]
  %v244 = vld [vmem:[%s1 + $0x29c] sm:$0xf]
  %v245 = vld [vmem:[%s1 + $0x2a0] sm:$0xf]
  %v246 = vld [vmem:[%s1 + $0x2a4] sm:$0xf]
  %v247 = vld [vmem:[%s1 + $0x2a8] sm:$0xf]
  %v248 = vld [vmem:[%s1 + $0x2ac] sm:$0xf]
  %v249 = vld [vmem:[%s1 + $0x2b0] sm:$0xf]
  %v250 = vld [vmem:[%s1 + $0x2b4] sm:$0xf]
  %v251 = vld [vmem:[%s1 + $0x2b8] sm:$0xf]
  %v252 = vld [vmem:[%s1 + $0x2bc] sm:$0xf]
  %v253 = vld [vmem:[%s1 + $0x2c0] sm:$0xf]
  %v254 = vld [vmem:[%s1 + $0x2c4] sm:$0xf]
  %v255 = vld [vmem:[%s1 + $0x2c8] sm:$0xf]
  %v256 = vld [vmem:[%s1 + $0x2cc] sm:$0xf]
  %v257 = vld [vmem:[%s1 + $0x2d0] sm:$0xf]
  %v258 = vld [vmem:[%s1 + $0x2d4] sm:$0xf]
  %v259 = vld [vmem:[%s1 + $0x2d8] sm:$0xf]
  %v260 = vld [vmem:[%s1 + $0x2dc] sm:$0xf]
  %v261 = vld [vmem:[%s1 + $0x2e0] sm:$0xf]
  %v262 = vld [vmem:[%s1 + $0x2e4] sm:$0xf]
  %v263 = vld [vmem:[%s1 + $0x2e8] sm:$0xf]
  %v264 = vld [vmem:[%s1 + $0x2ec] sm:$0xf]
  %v265 = vld [vmem:[%s1 + $0x2f0] sm:$0xf]
  %v266 = vld [vmem:[%s1 + $0x2f4] sm:$0xf]
  %v267 = vld [vmem:[%s1 + $0x2f8] sm:$0xf]
  %v268 = vld [vmem:[%s1 + $0x2fc] sm:$0xf]
  %v269 = vld [vmem:[%s1 + $0x300] sm:$0xf]
  %v270 = vld [vmem:[%s1 + $0x304] sm:$0xf]
  %v271 = vld [vmem:[%s1 + $0x308] sm:$0xf]
  %v272 = vld [vmem:[%s1 + $0x30c] sm:$0xf]
  %v273 = vld [vmem:[%s2] sm:$0xff]
  %v274 = vld [vmem:[%s2 + $0x8] sm:$0xff]
  %v275 = vld [vmem:[%s2 + $0x10] sm:$0xff]
  %v276 = vld [vmem:[%s2 + $0x18] sm:$0xff]
  %v277 = vld [vmem:[%s2 + $0x20] sm:$0xff]
  %v278 = vld [vmem:[%s2 + $0x28] sm:$0xff]
  %v279 = vld [vmem:[%s2 + $0x30] sm:$0xff]
  %v280 = vld [vmem:[%s2 + $0x38] sm:$0xff]
  %282 = vset.pattern.permute.xlu0 0
  %283 = vperm.xlu0 %282, %v273
  %v284 = vpop.permute.xlu0 %283
  %287 = vset.pattern.permute.xlu0 0
  %288 = vperm.xlu0 %287, %v274
  %v289 = vpop.permute.xlu0 %288
  %292 = vset.pattern.permute.xlu0 0
  %293 = vperm.xlu0 %292, %v275
  %v294 = vpop.permute.xlu0 %293
  %297 = vset.pattern.permute.xlu0 0
  %298 = vperm.xlu0 %297, %v276
  %v299 = vpop.permute.xlu0 %298
  %302 = vset.pattern.permute.xlu0 0
  %303 = vperm.xlu0 %302, %v277
  %v304 = vpop.permute.xlu0 %303
  %307 = vset.pattern.permute.xlu0 0
  %308 = vperm.xlu0 %307, %v278
  %v309 = vpop.permute.xlu0 %308
  %312 = vset.pattern.permute.xlu0 0
  %313 = vperm.xlu0 %312, %v279
  %v314 = vpop.permute.xlu0 %313
  %317 = vset.pattern.permute.xlu0 0
  %318 = vperm.xlu0 %317, %v280
  %v319 = vpop.permute.xlu0 %318
  %v377 = vunpack.c.l.b16 %v21
  %v378 = vunpack.c.h.b16 %v21
  %v379 = vunpack.c.l.b16 %v22
  %v380 = vunpack.c.h.b16 %v22
  %v381 = vunpack.c.l.b16 %v23
  %v382 = vunpack.c.h.b16 %v23
  %v383 = vunpack.c.l.b16 %v24
  %v384 = vunpack.c.h.b16 %v24
  %v385 = vunpack.c.l.b16 %v25
  %v386 = vunpack.c.h.b16 %v25
  %v387 = vunpack.c.l.b16 %v26
  %v388 = vunpack.c.h.b16 %v26
  %v389 = vunpack.c.l.b16 %v27
  %v390 = vunpack.c.l.b16 %v28
  %v391 = vunpack.c.h.b16 %v28
  %v392 = vunpack.c.l.b16 %v29
  %v393 = vunpack.c.h.b16 %v29
  %v394 = vunpack.c.l.b16 %v30
  %v395 = vunpack.c.h.b16 %v30
  %v396 = vunpack.c.l.b16 %v31
  %v397 = vunpack.c.h.b16 %v31
  %v398 = vunpack.c.l.b16 %v32
  %v399 = vunpack.c.h.b16 %v32
  %v400 = vunpack.c.l.b16 %v33
  %v401 = vunpack.c.h.b16 %v33
  %v402 = vunpack.c.l.b16 %v34
  %v403 = vunpack.c.l.b16 %v35
  %v404 = vunpack.c.h.b16 %v35
  %v405 = vunpack.c.l.b16 %v36
  %v406 = vunpack.c.h.b16 %v36
  %v407 = vunpack.c.l.b16 %v37
  %v408 = vunpack.c.h.b16 %v37
  %v409 = vunpack.c.l.b16 %v38
  %v410 = vunpack.c.h.b16 %v38
  %v411 = vunpack.c.l.b16 %v39
  %v412 = vunpack.c.h.b16 %v39
  %v413 = vunpack.c.l.b16 %v40
  %v414 = vunpack.c.h.b16 %v40
  %v415 = vunpack.c.l.b16 %v41
  %v416 = vunpack.c.l.b16 %v42
  %v417 = vunpack.c.h.b16 %v42
  %v418 = vunpack.c.l.b16 %v43
  %v419 = vunpack.c.h.b16 %v43
  %v420 = vunpack.c.l.b16 %v44
  %v421 = vunpack.c.h.b16 %v44
  %v422 = vunpack.c.l.b16 %v45
  %v423 = vunpack.c.h.b16 %v45
  %v424 = vunpack.c.l.b16 %v46
  %v425 = vunpack.c.h.b16 %v46
  %v426 = vunpack.c.l.b16 %v47
  %v427 = vunpack.c.h.b16 %v47
  %v428 = vunpack.c.l.b16 %v48
  %v429 = vunpack.c.l.b16 %v49
  %v430 = vunpack.c.h.b16 %v49
  %v431 = vunpack.c.l.b16 %v50
  %v432 = vunpack.c.h.b16 %v50
  %v433 = vunpack.c.l.b16 %v51
  %v434 = vunpack.c.h.b16 %v51
  %v435 = vunpack.c.l.b16 %v52
  %v436 = vunpack.c.h.b16 %v52
  %v437 = vunpack.c.l.b16 %v53
  %v438 = vunpack.c.h.b16 %v53
  %v439 = vunpack.c.l.b16 %v54
  %v440 = vunpack.c.h.b16 %v54
  %v441 = vunpack.c.l.b16 %v55
  %v442 = vunpack.c.l.b16 %v56
  %v443 = vunpack.c.h.b16 %v56
  %v444 = vunpack.c.l.b16 %v57
  %v445 = vunpack.c.h.b16 %v57
  %v446 = vunpack.c.l.b16 %v58
  %v447 = vunpack.c.h.b16 %v58
  %v448 = vunpack.c.l.b16 %v59
  %v449 = vunpack.c.h.b16 %v59
  %v450 = vunpack.c.l.b16 %v60
  %v451 = vunpack.c.h.b16 %v60
  %v452 = vunpack.c.l.b16 %v61
  %v453 = vunpack.c.h.b16 %v61
  %v454 = vunpack.c.l.b16 %v62
  %v455 = vunpack.c.l.b16 %v63
  %v456 = vunpack.c.h.b16 %v63
  %v457 = vunpack.c.l.b16 %v64
  %v458 = vunpack.c.h.b16 %v64
  %v459 = vunpack.c.l.b16 %v65
  %v460 = vunpack.c.h.b16 %v65
  %v461 = vunpack.c.l.b16 %v66
  %v462 = vunpack.c.h.b16 %v66
  %v463 = vunpack.c.l.b16 %v67
  %v464 = vunpack.c.h.b16 %v67
  %v465 = vunpack.c.l.b16 %v68
  %v466 = vunpack.c.h.b16 %v68
  %v467 = vunpack.c.l.b16 %v69
  %v468 = vunpack.c.l.b16 %v70
  %v469 = vunpack.c.h.b16 %v70
  %v470 = vunpack.c.l.b16 %v71
  %v471 = vunpack.c.h.b16 %v71
  %v472 = vunpack.c.l.b16 %v72
  %v473 = vunpack.c.h.b16 %v72
  %v474 = vunpack.c.l.b16 %v73
  %v475 = vunpack.c.h.b16 %v73
  %v476 = vunpack.c.l.b16 %v74
  %v477 = vunpack.c.h.b16 %v74
  %v478 = vunpack.c.l.b16 %v75
  %v479 = vunpack.c.h.b16 %v75
  %v480 = vunpack.c.l.b16 %v76
  %v481 = vpack.c.b16 %v390, %v377
  %v482 = vpack.c.b16 %v391, %v378
  %v483 = vpack.c.b16 %v392, %v379
  %v484 = vpack.c.b16 %v393, %v380
  %v485 = vpack.c.b16 %v394, %v381
  %v486 = vpack.c.b16 %v395, %v382
  %v487 = vpack.c.b16 %v396, %v383
  %v488 = vpack.c.b16 %v397, %v384
  %v489 = vpack.c.b16 %v398, %v385
  %v490 = vpack.c.b16 %v399, %v386
  %v491 = vpack.c.b16 %v400, %v387
  %v492 = vpack.c.b16 %v401, %v388
  %v493 = vpack.c.b16 %v402, %v389
  %v494 = vpack.c.b16 %v416, %v403
  %v495 = vpack.c.b16 %v417, %v404
  %v496 = vpack.c.b16 %v418, %v405
  %v497 = vpack.c.b16 %v419, %v406
  %v498 = vpack.c.b16 %v420, %v407
  %v499 = vpack.c.b16 %v421, %v408
  %v500 = vpack.c.b16 %v422, %v409
  %v501 = vpack.c.b16 %v423, %v410
  %v502 = vpack.c.b16 %v424, %v411
  %v503 = vpack.c.b16 %v425, %v412
  %v504 = vpack.c.b16 %v426, %v413
  %v505 = vpack.c.b16 %v427, %v414
  %v506 = vpack.c.b16 %v428, %v415
  %v507 = vpack.c.b16 %v442, %v429
  %v508 = vpack.c.b16 %v443, %v430
  %v509 = vpack.c.b16 %v444, %v431
  %v510 = vpack.c.b16 %v445, %v432
  %v511 = vpack.c.b16 %v446, %v433
  %v512 = vpack.c.b16 %v447, %v434
  %v513 = vpack.c.b16 %v448, %v435
  %v514 = vpack.c.b16 %v449, %v436
  %v515 = vpack.c.b16 %v450, %v437
  %v516 = vpack.c.b16 %v451, %v438
  %v517 = vpack.c.b16 %v452, %v439
  %v518 = vpack.c.b16 %v453, %v440
  %v519 = vpack.c.b16 %v454, %v441
  %v520 = vpack.c.b16 %v468, %v455
  %v521 = vpack.c.b16 %v469, %v456
  %v522 = vpack.c.b16 %v470, %v457
  %v523 = vpack.c.b16 %v471, %v458
  %v524 = vpack.c.b16 %v472, %v459
  %v525 = vpack.c.b16 %v473, %v460
  %v526 = vpack.c.b16 %v474, %v461
  %v527 = vpack.c.b16 %v475, %v462
  %v528 = vpack.c.b16 %v476, %v463
  %v529 = vpack.c.b16 %v477, %v464
  %v530 = vpack.c.b16 %v478, %v465
  %v531 = vpack.c.b16 %v479, %v466
  %v532 = vpack.c.b16 %v480, %v467
  %v777 = vunpack.c.l.b16 %v77
  %v778 = vunpack.c.l.b16 %v78
  %v779 = vunpack.c.l.b16 %v79
  %v780 = vunpack.c.l.b16 %v80
  %v781 = vunpack.c.l.b16 %v81
  %v782 = vunpack.c.l.b16 %v82
  %v783 = vunpack.c.l.b16 %v83
  %v784 = vunpack.c.l.b16 %v84
  %v785 = vunpack.c.l.b16 %v85
  %v786 = vunpack.c.l.b16 %v86
  %v787 = vunpack.c.l.b16 %v87
  %v788 = vunpack.c.l.b16 %v88
  %v789 = vunpack.c.l.b16 %v89
  %v790 = vunpack.c.l.b16 %v90
  %v791 = vunpack.c.l.b16 %v91
  %v792 = vunpack.c.l.b16 %v92
  %v793 = vunpack.c.l.b16 %v93
  %v794 = vunpack.c.l.b16 %v94
  %v795 = vunpack.c.l.b16 %v95
  %v796 = vunpack.c.l.b16 %v96
  %v797 = vunpack.c.l.b16 %v97
  %v798 = vunpack.c.l.b16 %v98
  %v799 = vunpack.c.l.b16 %v99
  %v800 = vunpack.c.l.b16 %v100
  %v801 = vunpack.c.l.b16 %v101
  %v802 = vunpack.c.l.b16 %v102
  %v803 = vunpack.c.l.b16 %v103
  %v804 = vunpack.c.l.b16 %v104
  %v805 = vunpack.c.l.b16 %v105
  %v806 = vunpack.c.l.b16 %v106
  %v807 = vunpack.c.l.b16 %v107
  %v808 = vunpack.c.l.b16 %v108
  %v809 = vunpack.c.l.b16 %v109
  %v810 = vunpack.c.l.b16 %v110
  %v811 = vunpack.c.l.b16 %v111
  %v812 = vunpack.c.l.b16 %v112
  %v813 = vunpack.c.l.b16 %v113
  %v814 = vunpack.c.l.b16 %v114
  %v815 = vunpack.c.l.b16 %v115
  %v816 = vunpack.c.l.b16 %v116
  %v817 = vunpack.c.l.b16 %v117
  %v818 = vunpack.c.l.b16 %v118
  %v819 = vunpack.c.l.b16 %v119
  %v820 = vunpack.c.l.b16 %v120
  %v821 = vunpack.c.l.b16 %v121
  %v822 = vunpack.c.l.b16 %v122
  %v823 = vunpack.c.l.b16 %v123
  %v824 = vunpack.c.l.b16 %v124
  %v825 = vunpack.c.l.b16 %v125
  %v826 = vunpack.c.l.b16 %v126
  %v827 = vunpack.c.l.b16 %v127
  %v828 = vunpack.c.l.b16 %v128
  %v829 = vunpack.c.l.b16 %v129
  %v830 = vunpack.c.l.b16 %v130
  %v831 = vunpack.c.l.b16 %v131
  %v832 = vunpack.c.l.b16 %v132
  %v833 = vunpack.c.l.b16 %v133
  %v834 = vunpack.c.l.b16 %v134
  %v835 = vunpack.c.l.b16 %v135
  %v836 = vunpack.c.l.b16 %v136
  %v837 = vunpack.c.l.b16 %v137
  %v838 = vunpack.c.l.b16 %v138
  %v839 = vunpack.c.l.b16 %v139
  %v840 = vunpack.c.l.b16 %v140
  %v841 = vunpack.c.l.b16 %v141
  %v842 = vunpack.c.l.b16 %v142
  %v843 = vunpack.c.l.b16 %v143
  %v844 = vunpack.c.l.b16 %v144
  %v845 = vunpack.c.l.b16 %v145
  %v846 = vunpack.c.l.b16 %v146
  %v847 = vunpack.c.l.b16 %v147
  %v848 = vunpack.c.l.b16 %v148
  %v849 = vunpack.c.l.b16 %v149
  %v850 = vunpack.c.l.b16 %v150
  %v851 = vunpack.c.l.b16 %v151
  %v852 = vunpack.c.l.b16 %v152
  %v853 = vunpack.c.l.b16 %v153
  %v854 = vunpack.c.l.b16 %v154
  %v855 = vunpack.c.l.b16 %v155
  %v856 = vunpack.c.l.b16 %v156
  %v857 = vunpack.c.l.b16 %v157
  %v858 = vunpack.c.l.b16 %v158
  %v859 = vunpack.c.l.b16 %v159
  %v860 = vunpack.c.l.b16 %v160
  %v861 = vunpack.c.l.b16 %v161
  %v862 = vunpack.c.l.b16 %v162
  %v863 = vunpack.c.l.b16 %v163
  %v864 = vunpack.c.l.b16 %v164
  %v865 = vunpack.c.l.b16 %v165
  %v866 = vunpack.c.l.b16 %v166
  %v867 = vunpack.c.l.b16 %v167
  %v868 = vunpack.c.l.b16 %v168
  %v869 = vunpack.c.l.b16 %v169
  %v870 = vunpack.c.l.b16 %v170
  %v871 = vunpack.c.l.b16 %v171
  %v872 = vunpack.c.l.b16 %v172
  %v873 = vunpack.c.l.b16 %v173
  %v874 = vunpack.c.l.b16 %v174
  %v875 = vunpack.c.l.b16 %v175
  %v876 = vunpack.c.l.b16 %v176
  %v877 = vunpack.c.l.b16 %v177
  %v878 = vunpack.c.l.b16 %v178
  %v879 = vunpack.c.l.b16 %v179
  %v880 = vunpack.c.l.b16 %v180
  %v881 = vunpack.c.l.b16 %v181
  %v882 = vunpack.c.l.b16 %v182
  %v883 = vunpack.c.l.b16 %v183
  %v884 = vunpack.c.l.b16 %v184
  %v885 = vunpack.c.l.b16 %v185
  %v886 = vunpack.c.l.b16 %v186
  %v887 = vunpack.c.l.b16 %v187
  %v888 = vunpack.c.l.b16 %v188
  %v889 = vunpack.c.l.b16 %v189
  %v890 = vunpack.c.l.b16 %v190
  %v891 = vunpack.c.l.b16 %v191
  %v892 = vunpack.c.l.b16 %v192
  %v893 = vunpack.c.l.b16 %v193
  %v894 = vunpack.c.l.b16 %v194
  %v895 = vunpack.c.l.b16 %v195
  %v896 = vunpack.c.l.b16 %v196
  %v897 = vunpack.c.l.b16 %v197
  %v898 = vunpack.c.l.b16 %v198
  %v899 = vunpack.c.l.b16 %v199
  %v900 = vunpack.c.l.b16 %v200
  %v901 = vunpack.c.l.b16 %v201
  %v902 = vunpack.c.l.b16 %v202
  %v903 = vunpack.c.l.b16 %v203
  %v904 = vunpack.c.l.b16 %v204
  %v905 = vunpack.c.l.b16 %v205
  %v906 = vunpack.c.l.b16 %v206
  %v907 = vunpack.c.l.b16 %v207
  %v908 = vunpack.c.l.b16 %v208
  %v909 = vunpack.c.l.b16 %v209
  %v910 = vunpack.c.l.b16 %v210
  %v911 = vunpack.c.l.b16 %v211
  %v912 = vunpack.c.l.b16 %v212
  %v913 = vunpack.c.l.b16 %v213
  %v914 = vunpack.c.l.b16 %v214
  %v915 = vunpack.c.l.b16 %v215
  %v916 = vunpack.c.l.b16 %v216
  %v917 = vunpack.c.l.b16 %v217
  %v918 = vunpack.c.l.b16 %v218
  %v919 = vunpack.c.l.b16 %v219
  %v920 = vunpack.c.l.b16 %v220
  %v921 = vunpack.c.l.b16 %v221
  %v922 = vunpack.c.l.b16 %v222
  %v923 = vunpack.c.l.b16 %v223
  %v924 = vunpack.c.l.b16 %v224
  %v925 = vunpack.c.l.b16 %v225
  %v926 = vunpack.c.l.b16 %v226
  %v927 = vunpack.c.l.b16 %v227
  %v928 = vunpack.c.l.b16 %v228
  %v929 = vunpack.c.l.b16 %v229
  %v930 = vunpack.c.l.b16 %v230
  %v931 = vunpack.c.l.b16 %v231
  %v932 = vunpack.c.l.b16 %v232
  %v933 = vunpack.c.l.b16 %v233
  %v934 = vunpack.c.l.b16 %v234
  %v935 = vunpack.c.l.b16 %v235
  %v936 = vunpack.c.l.b16 %v236
  %v937 = vunpack.c.l.b16 %v237
  %v938 = vunpack.c.l.b16 %v238
  %v939 = vunpack.c.l.b16 %v239
  %v940 = vunpack.c.l.b16 %v240
  %v941 = vunpack.c.l.b16 %v241
  %v942 = vunpack.c.l.b16 %v242
  %v943 = vunpack.c.l.b16 %v243
  %v944 = vunpack.c.l.b16 %v244
  %v945 = vunpack.c.l.b16 %v245
  %v946 = vunpack.c.l.b16 %v246
  %v947 = vunpack.c.l.b16 %v247
  %v948 = vunpack.c.l.b16 %v248
  %v949 = vunpack.c.l.b16 %v249
  %v950 = vunpack.c.l.b16 %v250
  %v951 = vunpack.c.l.b16 %v251
  %v952 = vunpack.c.l.b16 %v252
  %v953 = vunpack.c.l.b16 %v253
  %v954 = vunpack.c.l.b16 %v254
  %v955 = vunpack.c.l.b16 %v255
  %v956 = vunpack.c.l.b16 %v256
  %v957 = vunpack.c.l.b16 %v257
  %v958 = vunpack.c.l.b16 %v258
  %v959 = vunpack.c.l.b16 %v259
  %v960 = vunpack.c.l.b16 %v260
  %v961 = vunpack.c.l.b16 %v261
  %v962 = vunpack.c.l.b16 %v262
  %v963 = vunpack.c.l.b16 %v263
  %v964 = vunpack.c.l.b16 %v264
  %v965 = vunpack.c.l.b16 %v265
  %v966 = vunpack.c.l.b16 %v266
  %v967 = vunpack.c.l.b16 %v267
  %v968 = vunpack.c.l.b16 %v268
  %v969 = vunpack.c.l.b16 %v269
  %v970 = vunpack.c.l.b16 %v270
  %v971 = vunpack.c.l.b16 %v271
  %v972 = vunpack.c.l.b16 %v272
  %v973 = vpack.c.b16 %v778, %v777
  %v974 = vpack.c.b16 %v780, %v779
  %v975 = vpack.c.b16 %v782, %v781
  %v976 = vpack.c.b16 %v784, %v783
  %v977 = vpack.c.b16 %v786, %v785
  %v978 = vpack.c.b16 %v788, %v787
  %v979 = vpack.c.b16 %v790, %v789
  %v980 = vpack.c.b16 %v792, %v791
  %v981 = vpack.c.b16 %v794, %v793
  %v982 = vpack.c.b16 %v796, %v795
  %v983 = vpack.c.b16 %v798, %v797
  %v984 = vpack.c.b16 %v800, %v799
  %v985 = vpack.c.b16 %v802, %v801
  %v986 = vpack.c.b16 %v804, %v803
  %v987 = vpack.c.b16 %v806, %v805
  %v988 = vpack.c.b16 %v808, %v807
  %v989 = vpack.c.b16 %v810, %v809
  %v990 = vpack.c.b16 %v812, %v811
  %v991 = vpack.c.b16 %v814, %v813
  %v992 = vpack.c.b16 %v816, %v815
  %v993 = vpack.c.b16 %v818, %v817
  %v994 = vpack.c.b16 %v820, %v819
  %v995 = vpack.c.b16 %v822, %v821
  %v996 = vpack.c.b16 %v824, %v823
  %v997 = vpack.c.b16 %v826, %v825
  %v998 = vpack.c.b16 %v828, %v827
  %v999 = vpack.c.b16 %v830, %v829
  %v1000 = vpack.c.b16 %v832, %v831
  %v1001 = vpack.c.b16 %v834, %v833
  %v1002 = vpack.c.b16 %v836, %v835
  %v1003 = vpack.c.b16 %v838, %v837
  %v1004 = vpack.c.b16 %v840, %v839
  %v1005 = vpack.c.b16 %v842, %v841
  %v1006 = vpack.c.b16 %v844, %v843
  %v1007 = vpack.c.b16 %v846, %v845
  %v1008 = vpack.c.b16 %v848, %v847
  %v1009 = vpack.c.b16 %v850, %v849
  %v1010 = vpack.c.b16 %v852, %v851
  %v1011 = vpack.c.b16 %v854, %v853
  %v1012 = vpack.c.b16 %v856, %v855
  %v1013 = vpack.c.b16 %v858, %v857
  %v1014 = vpack.c.b16 %v860, %v859
  %v1015 = vpack.c.b16 %v862, %v861
  %v1016 = vpack.c.b16 %v864, %v863
  %v1017 = vpack.c.b16 %v866, %v865
  %v1018 = vpack.c.b16 %v868, %v867
  %v1019 = vpack.c.b16 %v870, %v869
  %v1020 = vpack.c.b16 %v872, %v871
  %v1021 = vpack.c.b16 %v874, %v873
  %v1022 = vpack.c.b16 %v876, %v875
  %v1023 = vpack.c.b16 %v878, %v877
  %v1024 = vpack.c.b16 %v880, %v879
  %v1025 = vpack.c.b16 %v882, %v881
  %v1026 = vpack.c.b16 %v884, %v883
  %v1027 = vpack.c.b16 %v886, %v885
  %v1028 = vpack.c.b16 %v888, %v887
  %v1029 = vpack.c.b16 %v890, %v889
  %v1030 = vpack.c.b16 %v892, %v891
  %v1031 = vpack.c.b16 %v894, %v893
  %v1032 = vpack.c.b16 %v896, %v895
  %v1033 = vpack.c.b16 %v898, %v897
  %v1034 = vpack.c.b16 %v900, %v899
  %v1035 = vpack.c.b16 %v902, %v901
  %v1036 = vpack.c.b16 %v904, %v903
  %v1037 = vpack.c.b16 %v906, %v905
  %v1038 = vpack.c.b16 %v908, %v907
  %v1039 = vpack.c.b16 %v910, %v909
  %v1040 = vpack.c.b16 %v912, %v911
  %v1041 = vpack.c.b16 %v914, %v913
  %v1042 = vpack.c.b16 %v916, %v915
  %v1043 = vpack.c.b16 %v918, %v917
  %v1044 = vpack.c.b16 %v920, %v919
  %v1045 = vpack.c.b16 %v922, %v921
  %v1046 = vpack.c.b16 %v924, %v923
  %v1047 = vpack.c.b16 %v926, %v925
  %v1048 = vpack.c.b16 %v928, %v927
  %v1049 = vpack.c.b16 %v930, %v929
  %v1050 = vpack.c.b16 %v932, %v931
  %v1051 = vpack.c.b16 %v934, %v933
  %v1052 = vpack.c.b16 %v936, %v935
  %v1053 = vpack.c.b16 %v938, %v937
  %v1054 = vpack.c.b16 %v940, %v939
  %v1055 = vpack.c.b16 %v942, %v941
  %v1056 = vpack.c.b16 %v944, %v943
  %v1057 = vpack.c.b16 %v946, %v945
  %v1058 = vpack.c.b16 %v948, %v947
  %v1059 = vpack.c.b16 %v950, %v949
  %v1060 = vpack.c.b16 %v952, %v951
  %v1061 = vpack.c.b16 %v954, %v953
  %v1062 = vpack.c.b16 %v956, %v955
  %v1063 = vpack.c.b16 %v958, %v957
  %v1064 = vpack.c.b16 %v960, %v959
  %v1065 = vpack.c.b16 %v962, %v961
  %v1066 = vpack.c.b16 %v964, %v963
  %v1067 = vpack.c.b16 %v966, %v965
  %v1068 = vpack.c.b16 %v968, %v967
  %v1069 = vpack.c.b16 %v970, %v969
  %v1070 = vpack.c.b16 %v972, %v971
  %vm1169 = vcmask 261120
  %v1171 = vsel %vm1169, %v493, 0
  %v1174 = vsel %vm1169, %v506, 0
  %v1177 = vsel %vm1169, %v519, 0
  %v1180 = vsel %vm1169, %v532, 0
  %1182 = vmatprep.subr.bf16.mxu0 0
  %1183 = vmatpush1.bf16.msra.mxu0 %v973
  %1184 = vmatprep.subr.bf16.mxu0 0
  %1185 = vmatpush1.bf16.msra.mxu0 %v974
  %1186 = vmatprep.subr.bf16.mxu0 0
  %1187 = vmatpush1.bf16.msra.mxu0 %v975
  %1188 = vmatprep.subr.bf16.mxu0 0
  %1189 = vmatpush1.bf16.msra.mxu0 %v976
  %1190 = vmatprep.subr.bf16.mxu0 0
  %1191 = vmatpush1.bf16.msra.mxu0 %v977
  %1192 = vmatprep.subr.bf16.mxu0 0
  %1193 = vmatpush1.bf16.msra.mxu0 %v978
  %1194 = vmatprep.subr.bf16.mxu0 0
  %1195 = vmatpush1.bf16.msra.mxu0 %v979
  %1196 = vmatprep.subr.bf16.mxu0 0
  %1197 = vmatpush1.bf16.msra.mxu0 %v980
  %1198 = vmatprep.subr.bf16.mxu0 0
  %1199 = vmatpush1.bf16.msra.mxu0 %v981
  %1200 = vmatprep.subr.bf16.mxu0 0
  %1201 = vmatpush1.bf16.msra.mxu0 %v982
  %1202 = vmatprep.subr.bf16.mxu0 0
  %1203 = vmatpush1.bf16.msra.mxu0 %v983
  %1204 = vmatprep.subr.bf16.mxu0 0
  %1205 = vmatpush1.bf16.msra.mxu0 %v984
  %1206 = vmatprep.subr.bf16.mxu0 0
  %1207 = vmatpush1.bf16.msra.mxu0 %v985
  %1208 = vmatprep.subr.bf16.mxu0 0
  %1209 = vmatpush1.bf16.msra.mxu0 %v986
  %1210 = vmatprep.subr.bf16.mxu0 0
  %1211 = vmatpush1.bf16.msra.mxu0 %v987
  %1212 = vmatprep.subr.bf16.mxu0 0
  %1213 = vmatpush1.bf16.msra.mxu0 %v988
  %1214 = vmatprep.mubr.bf16.mxu0 %v482
  %1215 = vmatmul.mubr.bf16.gmra.mrb[0].mxu0 %v481
  %v1216 = vpop.f32.mrb[0].mxu0
  %v1217 = vadd.f32 %v284, %v1216
  %v1218 = vpop.f32.mrb[0].mxu0
  %v1219 = vpop.f32.mrb[0].mxu0
  %v1220 = vadd.f32 %v289, %v1219
  %v1221 = vpop.f32.mrb[0].mxu0
  %1222 = vmatprep.mubr.bf16.mxu0 %v495
  %1223 = vmatmul.mubr.bf16.gmra.mrb[0].mxu0 %v494
  %v1224 = vpop.f32.mrb[0].mxu0
  %v1225 = vadd.f32 %v294, %v1224
  %v1226 = vpop.f32.mrb[0].mxu0
  %v1227 = vpop.f32.mrb[0].mxu0
  %v1228 = vadd.f32 %v299, %v1227
  %v1229 = vpop.f32.mrb[0].mxu0
  %1230 = vmatprep.mubr.bf16.mxu0 %v508
  %1231 = vmatmul.mubr.bf16.gmra.mrb[0].mxu0 %v507
  %v1232 = vpop.f32.mrb[0].mxu0
  %v1233 = vadd.f32 %v304, %v1232
  %v1234 = vpop.f32.mrb[0].mxu0
  %v1235 = vpop.f32.mrb[0].mxu0
  %v1236 = vadd.f32 %v309, %v1235
  %v1237 = vpop.f32.mrb[0].mxu0
  %1238 = vmatprep.mubr.bf16.mxu0 %v521
  %1239 = vmatmul.mubr.bf16.gmra.mrb[0].mxu0 %v520
  %v1240 = vpop.f32.mrb[0].mxu0
  %v1241 = vadd.f32 %v314, %v1240
  %v1242 = vpop.f32.mrb[0].mxu0
  %v1243 = vpop.f32.mrb[0].mxu0
  %v1244 = vadd.f32 %v319, %v1243
  %v1245 = vpop.f32.mrb[0].mxu0
  %1246 = vdwg.mxu0
  %1247 = vmatprep.subr.bf16.mxu0 0
  %1248 = vmatpush1.bf16.msra.mxu0 %v989
  %1249 = vmatprep.subr.bf16.mxu0 0
  %1250 = vmatpush1.bf16.msra.mxu0 %v990
  %1251 = vmatprep.subr.bf16.mxu0 0
  %1252 = vmatpush1.bf16.msra.mxu0 %v991
  %1253 = vmatprep.subr.bf16.mxu0 0
  %1254 = vmatpush1.bf16.msra.mxu0 %v992
  %1255 = vmatprep.subr.bf16.mxu0 0
  %1256 = vmatpush1.bf16.msra.mxu0 %v993
  %1257 = vmatprep.subr.bf16.mxu0 0
  %1258 = vmatpush1.bf16.msra.mxu0 %v994
  %1259 = vmatprep.subr.bf16.mxu0 0
  %1260 = vmatpush1.bf16.msra.mxu0 %v995
  %1261 = vmatprep.subr.bf16.mxu0 0
  %1262 = vmatpush1.bf16.msra.mxu0 %v996
  %1263 = vmatprep.subr.bf16.mxu0 0
  %1264 = vmatpush1.bf16.msra.mxu0 %v997
  %1265 = vmatprep.subr.bf16.mxu0 0
  %1266 = vmatpush1.bf16.msra.mxu0 %v998
  %1267 = vmatprep.subr.bf16.mxu0 0
  %1268 = vmatpush1.bf16.msra.mxu0 %v999
  %1269 = vmatprep.subr.bf16.mxu0 0
  %1270 = vmatpush1.bf16.msra.mxu0 %v1000
  %1271 = vmatprep.subr.bf16.mxu0 0
  %1272 = vmatpush1.bf16.msra.mxu0 %v1001
  %1273 = vmatprep.subr.bf16.mxu0 0
  %1274 = vmatpush1.bf16.msra.mxu0 %v1002
  %1275 = vmatprep.subr.bf16.mxu0 0
  %1276 = vmatpush1.bf16.msra.mxu0 %v1003
  %1277 = vmatprep.subr.bf16.mxu0 0
  %1278 = vmatpush1.bf16.msra.mxu0 %v1004
  %1279 = vmatprep.mubr.bf16.mxu0 %v484
  %1280 = vmatmul.mubr.bf16.gmra.mrb[0].mxu0 %v483
  %v1281 = vpop.f32.mrb[0].mxu0
  %v1282 = vadd.f32 %v1217, %v1281
  %v1283 = vpop.f32.mrb[0].mxu0
  %v1284 = vpop.f32.mrb[0].mxu0
  %v1285 = vadd.f32 %v1220, %v1284
  %v1286 = vpop.f32.mrb[0].mxu0
  %1287 = vmatprep.mubr.bf16.mxu0 %v497
  %1288 = vmatmul.mubr.bf16.gmra.mrb[0].mxu0 %v496
  %v1289 = vpop.f32.mrb[0].mxu0
  %v1290 = vadd.f32 %v1225, %v1289
  %v1291 = vpop.f32.mrb[0].mxu0
  %v1292 = vpop.f32.mrb[0].mxu0
  %v1293 = vadd.f32 %v1228, %v1292
  %v1294 = vpop.f32.mrb[0].mxu0
  %1295 = vmatprep.mubr.bf16.mxu0 %v510
  %1296 = vmatmul.mubr.bf16.gmra.mrb[0].mxu0 %v509
  %v1297 = vpop.f32.mrb[0].mxu0
  %v1298 = vadd.f32 %v1233, %v1297
  %v1299 = vpop.f32.mrb[0].mxu0
  %v1300 = vpop.f32.mrb[0].mxu0
  %v1301 = vadd.f32 %v1236, %v1300
  %v1302 = vpop.f32.mrb[0].mxu0
  %1303 = vmatprep.mubr.bf16.mxu0 %v523
  %1304 = vmatmul.mubr.bf16.gmra.mrb[0].mxu0 %v522
  %v1305 = vpop.f32.mrb[0].mxu0
  %v1306 = vadd.f32 %v1241, %v1305
  %v1307 = vpop.f32.mrb[0].mxu0
  %v1308 = vpop.f32.mrb[0].mxu0
  %v1309 = vadd.f32 %v1244, %v1308
  %v1310 = vpop.f32.mrb[0].mxu0
  %1311 = vdwg.mxu0
  %1312 = vmatprep.subr.bf16.mxu0 0
  %1313 = vmatpush1.bf16.msra.mxu0 %v1005
  %1314 = vmatprep.subr.bf16.mxu0 0
  %1315 = vmatpush1.bf16.msra.mxu0 %v1006
  %1316 = vmatprep.subr.bf16.mxu0 0
  %1317 = vmatpush1.bf16.msra.mxu0 %v1007
  %1318 = vmatprep.subr.bf16.mxu0 0
  %1319 = vmatpush1.bf16.msra.mxu0 %v1008
  %1320 = vmatprep.subr.bf16.mxu0 0
  %1321 = vmatpush1.bf16.msra.mxu0 %v1009
  %1322 = vmatprep.subr.bf16.mxu0 0
  %1323 = vmatpush1.bf16.msra.mxu0 %v1010
  %1324 = vmatprep.subr.bf16.mxu0 0
  %1325 = vmatpush1.bf16.msra.mxu0 %v1011
  %1326 = vmatprep.subr.bf16.mxu0 0
  %1327 = vmatpush1.bf16.msra.mxu0 %v1012
  %1328 = vmatprep.subr.bf16.mxu0 0
  %1329 = vmatpush1.bf16.msra.mxu0 %v1013
  %1330 = vmatprep.subr.bf16.mxu0 0
  %1331 = vmatpush1.bf16.msra.mxu0 %v1014
  %1332 = vmatprep.subr.bf16.mxu0 0
  %1333 = vmatpush1.bf16.msra.mxu0 %v1015
  %1334 = vmatprep.subr.bf16.mxu0 0
  %1335 = vmatpush1.bf16.msra.mxu0 %v1016
  %1336 = vmatprep.subr.bf16.mxu0 0
  %1337 = vmatpush1.bf16.msra.mxu0 %v1017
  %1338 = vmatprep.subr.bf16.mxu0 0
  %1339 = vmatpush1.bf16.msra.mxu0 %v1018
  %1340 = vmatprep.subr.bf16.mxu0 0
  %1341 = vmatpush1.bf16.msra.mxu0 %v1019
  %1342 = vmatprep.subr.bf16.mxu0 0
  %1343 = vmatpush1.bf16.msra.mxu0 %v1020
  %1344 = vmatprep.mubr.bf16.mxu0 %v486
  %1345 = vmatmul.mubr.bf16.gmra.mrb[0].mxu0 %v485
  %v1346 = vpop.f32.mrb[0].mxu0
  %v1347 = vadd.f32 %v1282, %v1346
  %v1348 = vpop.f32.mrb[0].mxu0
  %v1349 = vpop.f32.mrb[0].mxu0
  %v1350 = vadd.f32 %v1285, %v1349
  %v1351 = vpop.f32.mrb[0].mxu0
  %1352 = vmatprep.mubr.bf16.mxu0 %v499
  %1353 = vmatmul.mubr.bf16.gmra.mrb[0].mxu0 %v498
  %v1354 = vpop.f32.mrb[0].mxu0
  %v1355 = vadd.f32 %v1290, %v1354
  %v1356 = vpop.f32.mrb[0].mxu0
  %v1357 = vpop.f32.mrb[0].mxu0
  %v1358 = vadd.f32 %v1293, %v1357
  %v1359 = vpop.f32.mrb[0].mxu0
  %1360 = vmatprep.mubr.bf16.mxu0 %v512
  %1361 = vmatmul.mubr.bf16.gmra.mrb[0].mxu0 %v511
  %v1362 = vpop.f32.mrb[0].mxu0
  %v1363 = vadd.f32 %v1298, %v1362
  %v1364 = vpop.f32.mrb[0].mxu0
  %v1365 = vpop.f32.mrb[0].mxu0
  %v1366 = vadd.f32 %v1301, %v1365
  %v1367 = vpop.f32.mrb[0].mxu0
  %1368 = vmatprep.mubr.bf16.mxu0 %v525
  %1369 = vmatmul.mubr.bf16.gmra.mrb[0].mxu0 %v524
  %v1370 = vpop.f32.mrb[0].mxu0
  %v1371 = vadd.f32 %v1306, %v1370
  %v1372 = vpop.f32.mrb[0].mxu0
  %v1373 = vpop.f32.mrb[0].mxu0
  %v1374 = vadd.f32 %v1309, %v1373
  %v1375 = vpop.f32.mrb[0].mxu0
  %1376 = vdwg.mxu0
  %1377 = vmatprep.subr.bf16.mxu0 0
  %1378 = vmatpush1.bf16.msra.mxu0 %v1021
  %1379 = vmatprep.subr.bf16.mxu0 0
  %1380 = vmatpush1.bf16.msra.mxu0 %v1022
  %1381 = vmatprep.subr.bf16.mxu0 0
  %1382 = vmatpush1.bf16.msra.mxu0 %v1023
  %1383 = vmatprep.subr.bf16.mxu0 0
  %1384 = vmatpush1.bf16.msra.mxu0 %v1024
  %1385 = vmatprep.subr.bf16.mxu0 0
  %1386 = vmatpush1.bf16.msra.mxu0 %v1025
  %1387 = vmatprep.subr.bf16.mxu0 0
  %1388 = vmatpush1.bf16.msra.mxu0 %v1026
  %1389 = vmatprep.subr.bf16.mxu0 0
  %1390 = vmatpush1.bf16.msra.mxu0 %v1027
  %1391 = vmatprep.subr.bf16.mxu0 0
  %1392 = vmatpush1.bf16.msra.mxu0 %v1028
  %1393 = vmatprep.subr.bf16.mxu0 0
  %1394 = vmatpush1.bf16.msra.mxu0 %v1029
  %1395 = vmatprep.subr.bf16.mxu0 0
  %1396 = vmatpush1.bf16.msra.mxu0 %v1030
  %1397 = vmatprep.subr.bf16.mxu0 0
  %1398 = vmatpush1.bf16.msra.mxu0 %v1031
  %1399 = vmatprep.subr.bf16.mxu0 0
  %1400 = vmatpush1.bf16.msra.mxu0 %v1032
  %1401 = vmatprep.subr.bf16.mxu0 0
  %1402 = vmatpush1.bf16.msra.mxu0 %v1033
  %1403 = vmatprep.subr.bf16.mxu0 0
  %1404 = vmatpush1.bf16.msra.mxu0 %v1034
  %1405 = vmatprep.subr.bf16.mxu0 0
  %1406 = vmatpush1.bf16.msra.mxu0 %v1035
  %1407 = vmatprep.subr.bf16.mxu0 0
  %1408 = vmatpush1.bf16.msra.mxu0 %v1036
  %1409 = vmatprep.mubr.bf16.mxu0 %v488
  %1410 = vmatmul.mubr.bf16.gmra.mrb[0].mxu0 %v487
  %v1411 = vpop.f32.mrb[0].mxu0
  %v1412 = vadd.f32 %v1347, %v1411
  %v1413 = vpop.f32.mrb[0].mxu0
  %v1414 = vpop.f32.mrb[0].mxu0
  %v1415 = vadd.f32 %v1350, %v1414
  %v1416 = vpop.f32.mrb[0].mxu0
  %1417 = vmatprep.mubr.bf16.mxu0 %v501
  %1418 = vmatmul.mubr.bf16.gmra.mrb[0].mxu0 %v500
  %v1419 = vpop.f32.mrb[0].mxu0
  %v1420 = vadd.f32 %v1355, %v1419
  %v1421 = vpop.f32.mrb[0].mxu0
  %v1422 = vpop.f32.mrb[0].mxu0
  %v1423 = vadd.f32 %v1358, %v1422
  %v1424 = vpop.f32.mrb[0].mxu0
  %1425 = vmatprep.mubr.bf16.mxu0 %v514
  %1426 = vmatmul.mubr.bf16.gmra.mrb[0].mxu0 %v513
  %v1427 = vpop.f32.mrb[0].mxu0
  %v1428 = vadd.f32 %v1363, %v1427
  %v1429 = vpop.f32.mrb[0].mxu0
  %v1430 = vpop.f32.mrb[0].mxu0
  %v1431 = vadd.f32 %v1366, %v1430
  %v1432 = vpop.f32.mrb[0].mxu0
  %1433 = vmatprep.mubr.bf16.mxu0 %v527
  %1434 = vmatmul.mubr.bf16.gmra.mrb[0].mxu0 %v526
  %v1435 = vpop.f32.mrb[0].mxu0
  %v1436 = vadd.f32 %v1371, %v1435
  %v1437 = vpop.f32.mrb[0].mxu0
  %v1438 = vpop.f32.mrb[0].mxu0
  %v1439 = vadd.f32 %v1374, %v1438
  %v1440 = vpop.f32.mrb[0].mxu0
  %1441 = vdwg.mxu0
  %1442 = vmatprep.subr.bf16.mxu0 0
  %1443 = vmatpush1.bf16.msra.mxu0 %v1037
  %1444 = vmatprep.subr.bf16.mxu0 0
  %1445 = vmatpush1.bf16.msra.mxu0 %v1038
  %1446 = vmatprep.subr.bf16.mxu0 0
  %1447 = vmatpush1.bf16.msra.mxu0 %v1039
  %1448 = vmatprep.subr.bf16.mxu0 0
  %1449 = vmatpush1.bf16.msra.mxu0 %v1040
  %1450 = vmatprep.subr.bf16.mxu0 0
  %1451 = vmatpush1.bf16.msra.mxu0 %v1041
  %1452 = vmatprep.subr.bf16.mxu0 0
  %1453 = vmatpush1.bf16.msra.mxu0 %v1042
  %1454 = vmatprep.subr.bf16.mxu0 0
  %1455 = vmatpush1.bf16.msra.mxu0 %v1043
  %1456 = vmatprep.subr.bf16.mxu0 0
  %1457 = vmatpush1.bf16.msra.mxu0 %v1044
  %1458 = vmatprep.subr.bf16.mxu0 0
  %1459 = vmatpush1.bf16.msra.mxu0 %v1045
  %1460 = vmatprep.subr.bf16.mxu0 0
  %1461 = vmatpush1.bf16.msra.mxu0 %v1046
  %1462 = vmatprep.subr.bf16.mxu0 0
  %1463 = vmatpush1.bf16.msra.mxu0 %v1047
  %1464 = vmatprep.subr.bf16.mxu0 0
  %1465 = vmatpush1.bf16.msra.mxu0 %v1048
  %1466 = vmatprep.subr.bf16.mxu0 0
  %1467 = vmatpush1.bf16.msra.mxu0 %v1049
  %1468 = vmatprep.subr.bf16.mxu0 0
  %1469 = vmatpush1.bf16.msra.mxu0 %v1050
  %1470 = vmatprep.subr.bf16.mxu0 0
  %1471 = vmatpush1.bf16.msra.mxu0 %v1051
  %1472 = vmatprep.subr.bf16.mxu0 0
  %1473 = vmatpush1.bf16.msra.mxu0 %v1052
  %1474 = vmatprep.mubr.bf16.mxu0 %v490
  %1475 = vmatmul.mubr.bf16.gmra.mrb[0].mxu0 %v489
  %v1476 = vpop.f32.mrb[0].mxu0
  %v1477 = vadd.f32 %v1412, %v1476
  %v1478 = vpop.f32.mrb[0].mxu0
  %v1479 = vpop.f32.mrb[0].mxu0
  %v1480 = vadd.f32 %v1415, %v1479
  %v1481 = vpop.f32.mrb[0].mxu0
  %1482 = vmatprep.mubr.bf16.mxu0 %v503
  %1483 = vmatmul.mubr.bf16.gmra.mrb[0].mxu0 %v502
  %v1484 = vpop.f32.mrb[0].mxu0
  %v1485 = vadd.f32 %v1420, %v1484
  %v1486 = vpop.f32.mrb[0].mxu0
  %v1487 = vpop.f32.mrb[0].mxu0
  %v1488 = vadd.f32 %v1423, %v1487
  %v1489 = vpop.f32.mrb[0].mxu0
  %1490 = vmatprep.mubr.bf16.mxu0 %v516
  %1491 = vmatmul.mubr.bf16.gmra.mrb[0].mxu0 %v515
  %v1492 = vpop.f32.mrb[0].mxu0
  %v1493 = vadd.f32 %v1428, %v1492
  %v1494 = vpop.f32.mrb[0].mxu0
  %v1495 = vpop.f32.mrb[0].mxu0
  %v1496 = vadd.f32 %v1431, %v1495
  %v1497 = vpop.f32.mrb[0].mxu0
  %1498 = vmatprep.mubr.bf16.mxu0 %v529
  %1499 = vmatmul.mubr.bf16.gmra.mrb[0].mxu0 %v528
  %v1500 = vpop.f32.mrb[0].mxu0
  %v1501 = vadd.f32 %v1436, %v1500
  %v1502 = vpop.f32.mrb[0].mxu0
  %v1503 = vpop.f32.mrb[0].mxu0
  %v1504 = vadd.f32 %v1439, %v1503
  %v1505 = vpop.f32.mrb[0].mxu0
  %1506 = vdwg.mxu0
  %1507 = vmatprep.subr.bf16.mxu0 0
  %1508 = vmatpush1.bf16.msra.mxu0 %v1053
  %1509 = vmatprep.subr.bf16.mxu0 0
  %1510 = vmatpush1.bf16.msra.mxu0 %v1054
  %1511 = vmatprep.subr.bf16.mxu0 0
  %1512 = vmatpush1.bf16.msra.mxu0 %v1055
  %1513 = vmatprep.subr.bf16.mxu0 0
  %1514 = vmatpush1.bf16.msra.mxu0 %v1056
  %1515 = vmatprep.subr.bf16.mxu0 0
  %1516 = vmatpush1.bf16.msra.mxu0 %v1057
  %1517 = vmatprep.subr.bf16.mxu0 0
  %1518 = vmatpush1.bf16.msra.mxu0 %v1058
  %1519 = vmatprep.subr.bf16.mxu0 0
  %1520 = vmatpush1.bf16.msra.mxu0 %v1059
  %1521 = vmatprep.subr.bf16.mxu0 0
  %1522 = vmatpush1.bf16.msra.mxu0 %v1060
  %1523 = vmatprep.subr.bf16.mxu0 0
  %1524 = vmatpush1.bf16.msra.mxu0 %v1061
  %1525 = vmatprep.subr.bf16.mxu0 0
  %1526 = vmatpush1.bf16.msra.mxu0 %v1062
  %1527 = vmatprep.subr.bf16.mxu0 0
  %1528 = vmatpush1.bf16.msra.mxu0 %v1063
  %1529 = vmatprep.subr.bf16.mxu0 0
  %1530 = vmatpush1.bf16.msra.mxu0 %v1064
  %1531 = vmatprep.subr.bf16.mxu0 0
  %1532 = vmatpush1.bf16.msra.mxu0 %v1065
  %1533 = vmatprep.subr.bf16.mxu0 0
  %1534 = vmatpush1.bf16.msra.mxu0 %v1066
  %1535 = vmatprep.subr.bf16.mxu0 0
  %1536 = vmatpush1.bf16.msra.mxu0 %v1067
  %1537 = vmatprep.subr.bf16.mxu0 0
  %1538 = vmatpush1.bf16.msra.mxu0 %v1068
  %1539 = vmatprep.mubr.bf16.mxu0 %v492
  %1540 = vmatmul.mubr.bf16.gmra.mrb[0].mxu0 %v491
  %v1541 = vpop.f32.mrb[0].mxu0
  %v1542 = vadd.f32 %v1477, %v1541
  %v1543 = vpop.f32.mrb[0].mxu0
  %v1544 = vpop.f32.mrb[0].mxu0
  %v1545 = vadd.f32 %v1480, %v1544
  %v1546 = vpop.f32.mrb[0].mxu0
  %1547 = vmatprep.mubr.bf16.mxu0 %v505
  %1548 = vmatmul.mubr.bf16.gmra.mrb[0].mxu0 %v504
  %v1549 = vpop.f32.mrb[0].mxu0
  %v1550 = vadd.f32 %v1485, %v1549
  %v1551 = vpop.f32.mrb[0].mxu0
  %v1552 = vpop.f32.mrb[0].mxu0
  %v1553 = vadd.f32 %v1488, %v1552
  %v1554 = vpop.f32.mrb[0].mxu0
  %1555 = vmatprep.mubr.bf16.mxu0 %v518
  %1556 = vmatmul.mubr.bf16.gmra.mrb[0].mxu0 %v517
  %v1557 = vpop.f32.mrb[0].mxu0
  %v1558 = vadd.f32 %v1493, %v1557
  %v1559 = vpop.f32.mrb[0].mxu0
  %v1560 = vpop.f32.mrb[0].mxu0
  %v1561 = vadd.f32 %v1496, %v1560
  %v1562 = vpop.f32.mrb[0].mxu0
  %1563 = vmatprep.mubr.bf16.mxu0 %v531
  %1564 = vmatmul.mubr.bf16.gmra.mrb[0].mxu0 %v530
  %v1565 = vpop.f32.mrb[0].mxu0
  %v1566 = vadd.f32 %v1501, %v1565
  %v1567 = vpop.f32.mrb[0].mxu0
  %v1568 = vpop.f32.mrb[0].mxu0
  %v1569 = vadd.f32 %v1504, %v1568
  %v1570 = vpop.f32.mrb[0].mxu0
  %1571 = vdwg.mxu0
  %1572 = vmatprep.subr.bf16.mxu0 0
  %1573 = vmatpush1.bf16.msra.mxu0 %v1069
  %1574 = vmatprep.subr.bf16.mxu0 0
  %1575 = vmatpush1.bf16.msra.mxu0 %v1070
  %1576 = vmatprep.subr.bf16.mxu0 0
  %1577 = vmatpush1.bf16.msra.mxu0 0
  %1578 = vmatprep.subr.bf16.mxu0 0
  %1579 = vmatpush1.bf16.msra.mxu0 0
  %1580 = vmatprep.subr.bf16.mxu0 0
  %1581 = vmatpush1.bf16.msra.mxu0 0
  %1582 = vmatprep.subr.bf16.mxu0 0
  %1583 = vmatpush1.bf16.msra.mxu0 0
  %1584 = vmatprep.subr.bf16.mxu0 0
  %1585 = vmatpush1.bf16.msra.mxu0 0
  %1586 = vmatprep.subr.bf16.mxu0 0
  %1587 = vmatpush1.bf16.msra.mxu0 0
  %1588 = vmatprep.subr.bf16.mxu0 0
  %1589 = vmatpush1.bf16.msra.mxu0 0
  %1590 = vmatprep.subr.bf16.mxu0 0
  %1591 = vmatpush1.bf16.msra.mxu0 0
  %1592 = vmatprep.subr.bf16.mxu0 0
  %1593 = vmatpush1.bf16.msra.mxu0 0
  %1594 = vmatprep.subr.bf16.mxu0 0
  %1595 = vmatpush1.bf16.msra.mxu0 0
  %1596 = vmatprep.subr.bf16.mxu0 0
  %1597 = vmatpush1.bf16.msra.mxu0 0
  %1598 = vmatprep.subr.bf16.mxu0 0
  %1599 = vmatpush1.bf16.msra.mxu0 0
  %1600 = vmatprep.subr.bf16.mxu0 0
  %1601 = vmatpush1.bf16.msra.mxu0 0
  %1602 = vmatprep.subr.bf16.mxu0 0
  %1603 = vmatpush1.bf16.msra.mxu0 0
  %1604 = vmatprep.mubr.bf16.mxu0 0
  %1605 = vmatmul.mubr.bf16.gmra.mrb[0].mxu0 %v1171
  %v1606 = vpop.f32.mrb[0].mxu0
  %v1607 = vadd.f32 %v1542, %v1606
  %v1608 = vpop.f32.mrb[0].mxu0
  %v1609 = vpop.f32.mrb[0].mxu0
  %v1610 = vadd.f32 %v1545, %v1609
  %v1611 = vpop.f32.mrb[0].mxu0
  %1612 = vmatprep.mubr.bf16.mxu0 0
  %1613 = vmatmul.mubr.bf16.gmra.mrb[0].mxu0 %v1174
  %v1614 = vpop.f32.mrb[0].mxu0
  %v1615 = vadd.f32 %v1550, %v1614
  %v1616 = vpop.f32.mrb[0].mxu0
  %v1617 = vpop.f32.mrb[0].mxu0
  %v1618 = vadd.f32 %v1553, %v1617
  %v1619 = vpop.f32.mrb[0].mxu0
  %1620 = vmatprep.mubr.bf16.mxu0 0
  %1621 = vmatmul.mubr.bf16.gmra.mrb[0].mxu0 %v1177
  %v1622 = vpop.f32.mrb[0].mxu0
  %v1623 = vadd.f32 %v1558, %v1622
  %v1624 = vpop.f32.mrb[0].mxu0
  %v1625 = vpop.f32.mrb[0].mxu0
  %v1626 = vadd.f32 %v1561, %v1625
  %v1627 = vpop.f32.mrb[0].mxu0
  %1628 = vmatprep.mubr.bf16.mxu0 0
  %1629 = vmatmul.mubr.bf16.gmra.mrb[0].mxu0 %v1180
  %v1630 = vpop.f32.mrb[0].mxu0
  %v1631 = vadd.f32 %v1566, %v1630
  %v1632 = vpop.f32.mrb[0].mxu0
  %v1633 = vpop.f32.mrb[0].mxu0
  %v1634 = vadd.f32 %v1569, %v1633
  %v1635 = vpop.f32.mrb[0].mxu0
  %1636 = vdwg.mxu0
  %v1637 = vpack.c.bf16 %v1610, %v1607
  %v1638 = vpack.c.bf16 %v1618, %v1615
  %v1639 = vpack.c.bf16 %v1626, %v1623
  %v1640 = vpack.c.bf16 %v1634, %v1631
  %v1641 = vld [vmem:[%s3] sm:$0xf]
  %v1642 = vld [vmem:[%s3 + $0x4] sm:$0xf]
  %v1643 = vld [vmem:[%s3 + $0x8] sm:$0xf]
  %v1644 = vld [vmem:[%s3 + $0xc] sm:$0xf]
  %v1645 = vld [vmem:[%s3 + $0x10] sm:$0xf]
  %v1646 = vld [vmem:[%s3 + $0x14] sm:$0xf]
  %v1647 = vld [vmem:[%s3 + $0x18] sm:$0xf]
  %v1648 = vld [vmem:[%s3 + $0x1c] sm:$0xf]
  %v1649 = vld [vmem:[%s3 + $0x20] sm:$0xf]
  %v1650 = vld [vmem:[%s3 + $0x24] sm:$0xf]
  %v1651 = vld [vmem:[%s3 + $0x28] sm:$0xf]
  %v1652 = vld [vmem:[%s3 + $0x2c] sm:$0xf]
  %v1653 = vld [vmem:[%s3 + $0x30] sm:$0xf]
  %v1654 = vld [vmem:[%s3 + $0x34] sm:$0xf]
  %v1655 = vld [vmem:[%s3 + $0x38] sm:$0xf]
  %v1656 = vld [vmem:[%s3 + $0x3c] sm:$0xf]
  %v1657 = vld [vmem:[%s3 + $0x40] sm:$0xf]
  %v1658 = vld [vmem:[%s3 + $0x44] sm:$0xf]
  %v1659 = vld [vmem:[%s3 + $0x48] sm:$0xf]
  %v1660 = vld [vmem:[%s3 + $0x4c] sm:$0xf]
  %v1661 = vld [vmem:[%s3 + $0x50] sm:$0xf]
  %v1662 = vld [vmem:[%s3 + $0x54] sm:$0xf]
  %v1663 = vld [vmem:[%s3 + $0x58] sm:$0xf]
  %v1664 = vld [vmem:[%s3 + $0x5c] sm:$0xf]
  %v1665 = vld [vmem:[%s3 + $0x60] sm:$0xf]
  %v1666 = vld [vmem:[%s3 + $0x64] sm:$0xf]
  %v1667 = vld [vmem:[%s3 + $0x68] sm:$0xf]
  %v1668 = vld [vmem:[%s3 + $0x6c] sm:$0xf]
  %v1669 = vld [vmem:[%s3 + $0x70] sm:$0xf]
  %v1670 = vld [vmem:[%s3 + $0x74] sm:$0xf]
  %v1671 = vld [vmem:[%s3 + $0x78] sm:$0xf]
  %v1672 = vld [vmem:[%s3 + $0x7c] sm:$0xf]
  %v1673 = vld [vmem:[%s3 + $0x80] sm:$0xf]
  %v1674 = vld [vmem:[%s3 + $0x84] sm:$0xf]
  %v1675 = vld [vmem:[%s3 + $0x88] sm:$0xf]
  %v1676 = vld [vmem:[%s3 + $0x8c] sm:$0xf]
  %v1677 = vld [vmem:[%s3 + $0x90] sm:$0xf]
  %v1678 = vld [vmem:[%s3 + $0x94] sm:$0xf]
  %v1679 = vld [vmem:[%s3 + $0x98] sm:$0xf]
  %v1680 = vld [vmem:[%s3 + $0x9c] sm:$0xf]
  %v1681 = vld [vmem:[%s3 + $0xa0] sm:$0xf]
  %v1682 = vld [vmem:[%s3 + $0xa4] sm:$0xf]
  %v1683 = vld [vmem:[%s3 + $0xa8] sm:$0xf]
  %v1684 = vld [vmem:[%s3 + $0xac] sm:$0xf]
  %v1685 = vld [vmem:[%s3 + $0xb0] sm:$0xf]
  %v1686 = vld [vmem:[%s3 + $0xb4] sm:$0xf]
  %v1687 = vld [vmem:[%s3 + $0xb8] sm:$0xf]
  %v1688 = vld [vmem:[%s3 + $0xbc] sm:$0xf]
  %v1689 = vld [vmem:[%s3 + $0xc0] sm:$0xf]
  %v1690 = vld [vmem:[%s3 + $0xc4] sm:$0xf]
  %v1691 = vld [vmem:[%s3 + $0xc8] sm:$0xf]
  %v1692 = vld [vmem:[%s3 + $0xcc] sm:$0xf]
  %v1693 = vld [vmem:[%s3 + $0xd0] sm:$0xf]
  %v1694 = vld [vmem:[%s3 + $0xd4] sm:$0xf]
  %v1695 = vld [vmem:[%s3 + $0xd8] sm:$0xf]
  %v1696 = vld [vmem:[%s3 + $0xdc] sm:$0xf]
  %v1697 = vld [vmem:[%s3 + $0xe0] sm:$0xf]
  %v1698 = vld [vmem:[%s3 + $0xe4] sm:$0xf]
  %v1699 = vld [vmem:[%s3 + $0xe8] sm:$0xf]
  %v1700 = vld [vmem:[%s3 + $0xec] sm:$0xf]
  %v1701 = vld [vmem:[%s3 + $0xf0] sm:$0xf]
  %v1702 = vld [vmem:[%s3 + $0xf4] sm:$0xf]
  %v1703 = vld [vmem:[%s3 + $0xf8] sm:$0xf]
  %v1704 = vld [vmem:[%s3 + $0xfc] sm:$0xf]
  %v1705 = vld [vmem:[%s3 + $0x100] sm:$0xf]
  %v1706 = vld [vmem:[%s3 + $0x104] sm:$0xf]
  %v1707 = vld [vmem:[%s3 + $0x108] sm:$0xf]
  %v1708 = vld [vmem:[%s3 + $0x10c] sm:$0xf]
  %v1709 = vld [vmem:[%s3 + $0x110] sm:$0xf]
  %v1710 = vld [vmem:[%s3 + $0x114] sm:$0xf]
  %v1711 = vld [vmem:[%s3 + $0x118] sm:$0xf]
  %v1712 = vld [vmem:[%s3 + $0x11c] sm:$0xf]
  %v1713 = vld [vmem:[%s3 + $0x120] sm:$0xf]
  %v1714 = vld [vmem:[%s3 + $0x124] sm:$0xf]
  %v1715 = vld [vmem:[%s3 + $0x128] sm:$0xf]
  %v1716 = vld [vmem:[%s3 + $0x12c] sm:$0xf]
  %v1717 = vld [vmem:[%s3 + $0x130] sm:$0xf]
  %v1718 = vld [vmem:[%s3 + $0x134] sm:$0xf]
  %v1719 = vld [vmem:[%s3 + $0x138] sm:$0xf]
  %v1720 = vld [vmem:[%s3 + $0x13c] sm:$0xf]
  %v1721 = vld [vmem:[%s3 + $0x140] sm:$0xf]
  %v1722 = vld [vmem:[%s3 + $0x144] sm:$0xf]
  %v1723 = vld [vmem:[%s3 + $0x148] sm:$0xf]
  %v1724 = vld [vmem:[%s3 + $0x14c] sm:$0xf]
  %v1725 = vld [vmem:[%s3 + $0x150] sm:$0xf]
  %v1726 = vld [vmem:[%s3 + $0x154] sm:$0xf]
  %v1727 = vld [vmem:[%s3 + $0x158] sm:$0xf]
  %v1728 = vld [vmem:[%s3 + $0x15c] sm:$0xf]
  %v1729 = vld [vmem:[%s3 + $0x160] sm:$0xf]
  %v1730 = vld [vmem:[%s3 + $0x164] sm:$0xf]
  %v1731 = vld [vmem:[%s3 + $0x168] sm:$0xf]
  %v1732 = vld [vmem:[%s3 + $0x16c] sm:$0xf]
  %v1733 = vld [vmem:[%s3 + $0x170] sm:$0xf]
  %v1734 = vld [vmem:[%s3 + $0x174] sm:$0xf]
  %v1735 = vld [vmem:[%s3 + $0x178] sm:$0xf]
  %v1736 = vld [vmem:[%s3 + $0x17c] sm:$0xf]
  %v1737 = vld [vmem:[%s3 + $0x180] sm:$0xf]
  %v1738 = vld [vmem:[%s3 + $0x184] sm:$0xf]
  %v1739 = vld [vmem:[%s3 + $0x188] sm:$0xf]
  %v1740 = vld [vmem:[%s3 + $0x18c] sm:$0xf]
  %v1741 = vld [vmem:[%s3 + $0x190] sm:$0xf]
  %v1742 = vld [vmem:[%s3 + $0x194] sm:$0xf]
  %v1743 = vld [vmem:[%s3 + $0x198] sm:$0xf]
  %v1744 = vld [vmem:[%s3 + $0x19c] sm:$0xf]
  %v1745 = vld [vmem:[%s3 + $0x1a0] sm:$0xf]
  %v1746 = vld [vmem:[%s3 + $0x1a4] sm:$0xf]
  %v1747 = vld [vmem:[%s3 + $0x1a8] sm:$0xf]
  %v1748 = vld [vmem:[%s3 + $0x1ac] sm:$0xf]
  %v1749 = vld [vmem:[%s3 + $0x1b0] sm:$0xf]
  %v1750 = vld [vmem:[%s3 + $0x1b4] sm:$0xf]
  %v1751 = vld [vmem:[%s3 + $0x1b8] sm:$0xf]
  %v1752 = vld [vmem:[%s3 + $0x1bc] sm:$0xf]
  %v1753 = vld [vmem:[%s3 + $0x1c0] sm:$0xf]
  %v1754 = vld [vmem:[%s3 + $0x1c4] sm:$0xf]
  %v1755 = vld [vmem:[%s3 + $0x1c8] sm:$0xf]
  %v1756 = vld [vmem:[%s3 + $0x1cc] sm:$0xf]
  %v1757 = vld [vmem:[%s3 + $0x1d0] sm:$0xf]
  %v1758 = vld [vmem:[%s3 + $0x1d4] sm:$0xf]
  %v1759 = vld [vmem:[%s3 + $0x1d8] sm:$0xf]
  %v1760 = vld [vmem:[%s3 + $0x1dc] sm:$0xf]
  %v1761 = vld [vmem:[%s3 + $0x1e0] sm:$0xf]
  %v1762 = vld [vmem:[%s3 + $0x1e4] sm:$0xf]
  %v1763 = vld [vmem:[%s3 + $0x1e8] sm:$0xf]
  %v1764 = vld [vmem:[%s3 + $0x1ec] sm:$0xf]
  %v1765 = vld [vmem:[%s3 + $0x1f0] sm:$0xf]
  %v1766 = vld [vmem:[%s3 + $0x1f4] sm:$0xf]
  %v1767 = vld [vmem:[%s3 + $0x1f8] sm:$0xf]
  %v1768 = vld [vmem:[%s3 + $0x1fc] sm:$0xf]
  %v1769 = vld [vmem:[%s3 + $0x200] sm:$0xf]
  %v1770 = vld [vmem:[%s3 + $0x204] sm:$0xf]
  %v1771 = vld [vmem:[%s3 + $0x208] sm:$0xf]
  %v1772 = vld [vmem:[%s3 + $0x20c] sm:$0xf]
  %v1773 = vld [vmem:[%s3 + $0x210] sm:$0xf]
  %v1774 = vld [vmem:[%s3 + $0x214] sm:$0xf]
  %v1775 = vld [vmem:[%s3 + $0x218] sm:$0xf]
  %v1776 = vld [vmem:[%s3 + $0x21c] sm:$0xf]
  %v1777 = vld [vmem:[%s3 + $0x220] sm:$0xf]
  %v1778 = vld [vmem:[%s3 + $0x224] sm:$0xf]
  %v1779 = vld [vmem:[%s3 + $0x228] sm:$0xf]
  %v1780 = vld [vmem:[%s3 + $0x22c] sm:$0xf]
  %v1781 = vld [vmem:[%s3 + $0x230] sm:$0xf]
  %v1782 = vld [vmem:[%s3 + $0x234] sm:$0xf]
  %v1783 = vld [vmem:[%s3 + $0x238] sm:$0xf]
  %v1784 = vld [vmem:[%s3 + $0x23c] sm:$0xf]
  %v1785 = vld [vmem:[%s3 + $0x240] sm:$0xf]
  %v1786 = vld [vmem:[%s3 + $0x244] sm:$0xf]
  %v1787 = vld [vmem:[%s3 + $0x248] sm:$0xf]
  %v1788 = vld [vmem:[%s3 + $0x24c] sm:$0xf]
  %v1789 = vld [vmem:[%s3 + $0x250] sm:$0xf]
  %v1790 = vld [vmem:[%s3 + $0x254] sm:$0xf]
  %v1791 = vld [vmem:[%s3 + $0x258] sm:$0xf]
  %v1792 = vld [vmem:[%s3 + $0x25c] sm:$0xf]
  %v1793 = vld [vmem:[%s3 + $0x260] sm:$0xf]
  %v1794 = vld [vmem:[%s3 + $0x264] sm:$0xf]
  %v1795 = vld [vmem:[%s3 + $0x268] sm:$0xf]
  %v1796 = vld [vmem:[%s3 + $0x26c] sm:$0xf]
  %v1797 = vld [vmem:[%s3 + $0x270] sm:$0xf]
  %v1798 = vld [vmem:[%s3 + $0x274] sm:$0xf]
  %v1799 = vld [vmem:[%s3 + $0x278] sm:$0xf]
  %v1800 = vld [vmem:[%s3 + $0x27c] sm:$0xf]
  %v1801 = vld [vmem:[%s3 + $0x280] sm:$0xf]
  %v1802 = vld [vmem:[%s3 + $0x284] sm:$0xf]
  %v1803 = vld [vmem:[%s3 + $0x288] sm:$0xf]
  %v1804 = vld [vmem:[%s3 + $0x28c] sm:$0xf]
  %v1805 = vld [vmem:[%s3 + $0x290] sm:$0xf]
  %v1806 = vld [vmem:[%s3 + $0x294] sm:$0xf]
  %v1807 = vld [vmem:[%s3 + $0x298] sm:$0xf]
  %v1808 = vld [vmem:[%s3 + $0x29c] sm:$0xf]
  %v1809 = vld [vmem:[%s3 + $0x2a0] sm:$0xf]
  %v1810 = vld [vmem:[%s3 + $0x2a4] sm:$0xf]
  %v1811 = vld [vmem:[%s3 + $0x2a8] sm:$0xf]
  %v1812 = vld [vmem:[%s3 + $0x2ac] sm:$0xf]
  %v1813 = vld [vmem:[%s3 + $0x2b0] sm:$0xf]
  %v1814 = vld [vmem:[%s3 + $0x2b4] sm:$0xf]
  %v1815 = vld [vmem:[%s3 + $0x2b8] sm:$0xf]
  %v1816 = vld [vmem:[%s3 + $0x2bc] sm:$0xf]
  %v1817 = vld [vmem:[%s3 + $0x2c0] sm:$0xf]
  %v1818 = vld [vmem:[%s3 + $0x2c4] sm:$0xf]
  %v1819 = vld [vmem:[%s3 + $0x2c8] sm:$0xf]
  %v1820 = vld [vmem:[%s3 + $0x2cc] sm:$0xf]
  %v1821 = vld [vmem:[%s3 + $0x2d0] sm:$0xf]
  %v1822 = vld [vmem:[%s3 + $0x2d4] sm:$0xf]
  %v1823 = vld [vmem:[%s3 + $0x2d8] sm:$0xf]
  %v1824 = vld [vmem:[%s3 + $0x2dc] sm:$0xf]
  %v1825 = vld [vmem:[%s3 + $0x2e0] sm:$0xf]
  %v1826 = vld [vmem:[%s3 + $0x2e4] sm:$0xf]
  %v1827 = vld [vmem:[%s3 + $0x2e8] sm:$0xf]
  %v1828 = vld [vmem:[%s3 + $0x2ec] sm:$0xf]
  %v1829 = vld [vmem:[%s3 + $0x2f0] sm:$0xf]
  %v1830 = vld [vmem:[%s3 + $0x2f4] sm:$0xf]
  %v1831 = vld [vmem:[%s3 + $0x2f8] sm:$0xf]
  %v1832 = vld [vmem:[%s3 + $0x2fc] sm:$0xf]
  %v1833 = vld [vmem:[%s3 + $0x300] sm:$0xf]
  %v1834 = vld [vmem:[%s3 + $0x304] sm:$0xf]
  %v1835 = vld [vmem:[%s3 + $0x308] sm:$0xf]
  %v1836 = vld [vmem:[%s3 + $0x30c] sm:$0xf]
  %v1837 = vld [vmem:[%s4] sm:$0xff]
  %v1838 = vld [vmem:[%s4 + $0x8] sm:$0xff]
  %v1839 = vld [vmem:[%s4 + $0x10] sm:$0xff]
  %v1840 = vld [vmem:[%s4 + $0x18] sm:$0xff]
  %v1841 = vld [vmem:[%s4 + $0x20] sm:$0xff]
  %v1842 = vld [vmem:[%s4 + $0x28] sm:$0xff]
  %v1843 = vld [vmem:[%s4 + $0x30] sm:$0xff]
  %v1844 = vld [vmem:[%s4 + $0x38] sm:$0xff]
  %v1845 = vld [vmem:[%s4 + $0x40] sm:$0xff]
  %v1846 = vld [vmem:[%s4 + $0x48] sm:$0xff]
  %v1847 = vld [vmem:[%s4 + $0x50] sm:$0xff]
  %v1848 = vld [vmem:[%s4 + $0x58] sm:$0xff]
  %v1849 = vld [vmem:[%s4 + $0x60] sm:$0xff]
  %v1850 = vld [vmem:[%s4 + $0x68] sm:$0xff]
  %v1851 = vld [vmem:[%s4 + $0x70] sm:$0xff]
  %v1852 = vld [vmem:[%s4 + $0x78] sm:$0xff]
  %v1853 = vld [vmem:[%s4 + $0x80] sm:$0xff]
  %v1854 = vld [vmem:[%s4 + $0x88] sm:$0xff]
  %v1855 = vld [vmem:[%s4 + $0x90] sm:$0xff]
  %v1856 = vld [vmem:[%s4 + $0x98] sm:$0xff]
  %v1857 = vld [vmem:[%s4 + $0xa0] sm:$0xff]
  %v1858 = vld [vmem:[%s4 + $0xa8] sm:$0xff]
  %v1859 = vld [vmem:[%s4 + $0xb0] sm:$0xff]
  %v1860 = vld [vmem:[%s4 + $0xb8] sm:$0xff]
  %v1861 = vld [vmem:[%s4 + $0xc0] sm:$0xff]
  %v1862 = vld [vmem:[%s4 + $0xc8] sm:$0xff]
  %v1863 = vld [vmem:[%s4 + $0xd0] sm:$0xff]
  %v1864 = vld [vmem:[%s4 + $0xd8] sm:$0xff]
  %v1865 = vld [vmem:[%s4 + $0xe0] sm:$0xff]
  %v1866 = vld [vmem:[%s4 + $0xe8] sm:$0xff]
  %v1867 = vld [vmem:[%s4 + $0xf0] sm:$0xff]
  %v1868 = vld [vmem:[%s4 + $0xf8] sm:$0xff]
  %v1869 = vld [vmem:[%s4 + $0x100] sm:$0xff]
  %v1870 = vld [vmem:[%s4 + $0x108] sm:$0xff]
  %v1871 = vld [vmem:[%s4 + $0x110] sm:$0xff]
  %v1872 = vld [vmem:[%s4 + $0x118] sm:$0xff]
  %v1873 = vld [vmem:[%s4 + $0x120] sm:$0xff]
  %v1874 = vld [vmem:[%s4 + $0x128] sm:$0xff]
  %v1875 = vld [vmem:[%s4 + $0x130] sm:$0xff]
  %v1876 = vld [vmem:[%s4 + $0x138] sm:$0xff]
  %v1877 = vld [vmem:[%s4 + $0x140] sm:$0xff]
  %v1878 = vld [vmem:[%s4 + $0x148] sm:$0xff]
  %v1879 = vld [vmem:[%s4 + $0x150] sm:$0xff]
  %v1880 = vld [vmem:[%s4 + $0x158] sm:$0xff]
  %v1881 = vld [vmem:[%s4 + $0x160] sm:$0xff]
  %v1882 = vld [vmem:[%s4 + $0x168] sm:$0xff]
  %v1883 = vld [vmem:[%s4 + $0x170] sm:$0xff]
  %v1884 = vld [vmem:[%s4 + $0x178] sm:$0xff]
  %v1885 = vld [vmem:[%s4 + $0x180] sm:$0xff]
  %v1886 = vld [vmem:[%s4 + $0x188] sm:$0xff]
  %v1887 = vld [vmem:[%s4 + $0x190] sm:$0xff]
  %v1888 = vld [vmem:[%s4 + $0x198] sm:$0xff]
  %v1889 = vld [vmem:[%s4 + $0x1a0] sm:$0xff]
  %v1890 = vld [vmem:[%s4 + $0x1a8] sm:$0xff]
  %v1891 = vld [vmem:[%s4 + $0x1b0] sm:$0xff]
  %v1892 = vld [vmem:[%s4 + $0x1b8] sm:$0xff]
  %v1893 = vld [vmem:[%s4 + $0x1c0] sm:$0xff]
  %v1894 = vld [vmem:[%s4 + $0x1c8] sm:$0xff]
  %v1895 = vld [vmem:[%s4 + $0x1d0] sm:$0xff]
  %v1896 = vld [vmem:[%s4 + $0x1d8] sm:$0xff]
  %v1897 = vld [vmem:[%s4 + $0x1e0] sm:$0xff]
  %v1898 = vld [vmem:[%s4 + $0x1e8] sm:$0xff]
  %v1899 = vld [vmem:[%s4 + $0x1f0] sm:$0xff]
  %v1900 = vld [vmem:[%s4 + $0x1f8] sm:$0xff]
  %v1901 = vld [vmem:[%s4 + $0x200] sm:$0xff]
  %v1902 = vld [vmem:[%s4 + $0x208] sm:$0xff]
  %v1903 = vld [vmem:[%s4 + $0x210] sm:$0xff]
  %v1904 = vld [vmem:[%s4 + $0x218] sm:$0xff]
  %v1905 = vld [vmem:[%s4 + $0x220] sm:$0xff]
  %v1906 = vld [vmem:[%s4 + $0x228] sm:$0xff]
  %v1907 = vld [vmem:[%s4 + $0x230] sm:$0xff]
  %v1908 = vld [vmem:[%s4 + $0x238] sm:$0xff]
  %v1909 = vld [vmem:[%s4 + $0x240] sm:$0xff]
  %v1910 = vld [vmem:[%s4 + $0x248] sm:$0xff]
  %v1911 = vld [vmem:[%s4 + $0x250] sm:$0xff]
  %v1912 = vld [vmem:[%s4 + $0x258] sm:$0xff]
  %v1913 = vld [vmem:[%s4 + $0x260] sm:$0xff]
  %v1914 = vld [vmem:[%s4 + $0x268] sm:$0xff]
  %v1915 = vld [vmem:[%s4 + $0x270] sm:$0xff]
  %v1916 = vld [vmem:[%s4 + $0x278] sm:$0xff]
  %v1917 = vld [vmem:[%s4 + $0x280] sm:$0xff]
  %v1918 = vld [vmem:[%s4 + $0x288] sm:$0xff]
  %v1919 = vld [vmem:[%s4 + $0x290] sm:$0xff]
  %v1920 = vld [vmem:[%s4 + $0x298] sm:$0xff]
  %v1921 = vld [vmem:[%s4 + $0x2a0] sm:$0xff]
  %v1922 = vld [vmem:[%s4 + $0x2a8] sm:$0xff]
  %v1923 = vld [vmem:[%s4 + $0x2b0] sm:$0xff]
  %v1924 = vld [vmem:[%s4 + $0x2b8] sm:$0xff]
  %v1925 = vld [vmem:[%s4 + $0x2c0] sm:$0xff]
  %v1926 = vld [vmem:[%s4 + $0x2c8] sm:$0xff]
  %v1927 = vld [vmem:[%s4 + $0x2d0] sm:$0xff]
  %v1928 = vld [vmem:[%s4 + $0x2d8] sm:$0xff]
  %v1929 = vld [vmem:[%s4 + $0x2e0] sm:$0xff]
  %v1930 = vld [vmem:[%s4 + $0x2e8] sm:$0xff]
  %v1931 = vld [vmem:[%s4 + $0x2f0] sm:$0xff]
  %v1932 = vld [vmem:[%s4 + $0x2f8] sm:$0xff]
  %v1933 = vld [vmem:[%s4 + $0x300] sm:$0xff]
  %v1934 = vld [vmem:[%s4 + $0x308] sm:$0xff]
  %v1935 = vld [vmem:[%s4 + $0x310] sm:$0xff]
  %v1936 = vld [vmem:[%s4 + $0x318] sm:$0xff]
  %v1937 = vld [vmem:[%s4 + $0x320] sm:$0xff]
  %v1938 = vld [vmem:[%s4 + $0x328] sm:$0xff]
  %v1939 = vld [vmem:[%s4 + $0x330] sm:$0xff]
  %v1940 = vld [vmem:[%s4 + $0x338] sm:$0xff]
  %v1941 = vld [vmem:[%s4 + $0x340] sm:$0xff]
  %v1942 = vld [vmem:[%s4 + $0x348] sm:$0xff]
  %v1943 = vld [vmem:[%s4 + $0x350] sm:$0xff]
  %v1944 = vld [vmem:[%s4 + $0x358] sm:$0xff]
  %v1945 = vld [vmem:[%s4 + $0x360] sm:$0xff]
  %v1946 = vld [vmem:[%s4 + $0x368] sm:$0xff]
  %v1947 = vld [vmem:[%s4 + $0x370] sm:$0xff]
  %v1948 = vld [vmem:[%s4 + $0x378] sm:$0xff]
  %v1949 = vld [vmem:[%s4 + $0x380] sm:$0xff]
  %v1950 = vld [vmem:[%s4 + $0x388] sm:$0xff]
  %v1951 = vld [vmem:[%s4 + $0x390] sm:$0xff]
  %v1952 = vld [vmem:[%s4 + $0x398] sm:$0xff]
  %v1953 = vld [vmem:[%s4 + $0x3a0] sm:$0xff]
  %v1954 = vld [vmem:[%s4 + $0x3a8] sm:$0xff]
  %v1955 = vld [vmem:[%s4 + $0x3b0] sm:$0xff]
  %v1956 = vld [vmem:[%s4 + $0x3b8] sm:$0xff]
  %v1957 = vld [vmem:[%s4 + $0x3c0] sm:$0xff]
  %v1958 = vld [vmem:[%s4 + $0x3c8] sm:$0xff]
  %v1959 = vld [vmem:[%s4 + $0x3d0] sm:$0xff]
  %v1960 = vld [vmem:[%s4 + $0x3d8] sm:$0xff]
  %v1961 = vld [vmem:[%s4 + $0x3e0] sm:$0xff]
  %v1962 = vld [vmem:[%s4 + $0x3e8] sm:$0xff]
  %v1963 = vld [vmem:[%s4 + $0x3f0] sm:$0xff]
  %v1964 = vld [vmem:[%s4 + $0x3f8] sm:$0xff]
  %v1965 = vld [vmem:[%s4 + $0x400] sm:$0xff]
  %v1966 = vld [vmem:[%s4 + $0x408] sm:$0xff]
  %v1967 = vld [vmem:[%s4 + $0x410] sm:$0xff]
  %v1968 = vld [vmem:[%s4 + $0x418] sm:$0xff]
  %v1969 = vld [vmem:[%s4 + $0x420] sm:$0xff]
  %v1970 = vld [vmem:[%s4 + $0x428] sm:$0xff]
  %v1971 = vld [vmem:[%s4 + $0x430] sm:$0xff]
  %v1972 = vld [vmem:[%s4 + $0x438] sm:$0xff]
  %v1973 = vld [vmem:[%s4 + $0x440] sm:$0xff]
  %v1974 = vld [vmem:[%s4 + $0x448] sm:$0xff]
  %v1975 = vld [vmem:[%s4 + $0x450] sm:$0xff]
  %v1976 = vld [vmem:[%s4 + $0x458] sm:$0xff]
  %v1977 = vld [vmem:[%s4 + $0x460] sm:$0xff]
  %v1978 = vld [vmem:[%s4 + $0x468] sm:$0xff]
  %v1979 = vld [vmem:[%s4 + $0x470] sm:$0xff]
  %v1980 = vld [vmem:[%s4 + $0x478] sm:$0xff]
  %v1981 = vld [vmem:[%s4 + $0x480] sm:$0xff]
  %v1982 = vld [vmem:[%s4 + $0x488] sm:$0xff]
  %v1983 = vld [vmem:[%s4 + $0x490] sm:$0xff]
  %v1984 = vld [vmem:[%s4 + $0x498] sm:$0xff]
  %v1985 = vld [vmem:[%s4 + $0x4a0] sm:$0xff]
  %v1986 = vld [vmem:[%s4 + $0x4a8] sm:$0xff]
  %v1987 = vld [vmem:[%s4 + $0x4b0] sm:$0xff]
  %v1988 = vld [vmem:[%s4 + $0x4b8] sm:$0xff]
  %v1989 = vld [vmem:[%s4 + $0x4c0] sm:$0xff]
  %v1990 = vld [vmem:[%s4 + $0x4c8] sm:$0xff]
  %v1991 = vld [vmem:[%s4 + $0x4d0] sm:$0xff]
  %v1992 = vld [vmem:[%s4 + $0x4d8] sm:$0xff]
  %v1993 = vld [vmem:[%s4 + $0x4e0] sm:$0xff]
  %v1994 = vld [vmem:[%s4 + $0x4e8] sm:$0xff]
  %v1995 = vld [vmem:[%s4 + $0x4f0] sm:$0xff]
  %v1996 = vld [vmem:[%s4 + $0x4f8] sm:$0xff]
  %v1997 = vld [vmem:[%s4 + $0x500] sm:$0xff]
  %v1998 = vld [vmem:[%s4 + $0x508] sm:$0xff]
  %v1999 = vld [vmem:[%s4 + $0x510] sm:$0xff]
  %v2000 = vld [vmem:[%s4 + $0x518] sm:$0xff]
  %v2001 = vld [vmem:[%s4 + $0x520] sm:$0xff]
  %v2002 = vld [vmem:[%s4 + $0x528] sm:$0xff]
  %v2003 = vld [vmem:[%s4 + $0x530] sm:$0xff]
  %v2004 = vld [vmem:[%s4 + $0x538] sm:$0xff]
  %v2005 = vld [vmem:[%s4 + $0x540] sm:$0xff]
  %v2006 = vld [vmem:[%s4 + $0x548] sm:$0xff]
  %v2007 = vld [vmem:[%s4 + $0x550] sm:$0xff]
  %v2008 = vld [vmem:[%s4 + $0x558] sm:$0xff]
  %v2009 = vld [vmem:[%s4 + $0x560] sm:$0xff]
  %v2010 = vld [vmem:[%s4 + $0x568] sm:$0xff]
  %v2011 = vld [vmem:[%s4 + $0x570] sm:$0xff]
  %v2012 = vld [vmem:[%s4 + $0x578] sm:$0xff]
  %v2013 = vld [vmem:[%s4 + $0x580] sm:$0xff]
  %v2014 = vld [vmem:[%s4 + $0x588] sm:$0xff]
  %v2015 = vld [vmem:[%s4 + $0x590] sm:$0xff]
  %v2016 = vld [vmem:[%s4 + $0x598] sm:$0xff]
  %v2017 = vld [vmem:[%s4 + $0x5a0] sm:$0xff]
  %v2018 = vld [vmem:[%s4 + $0x5a8] sm:$0xff]
  %v2019 = vld [vmem:[%s4 + $0x5b0] sm:$0xff]
  %v2020 = vld [vmem:[%s4 + $0x5b8] sm:$0xff]
  %v2021 = vld [vmem:[%s4 + $0x5c0] sm:$0xff]
  %v2022 = vld [vmem:[%s4 + $0x5c8] sm:$0xff]
  %v2023 = vld [vmem:[%s4 + $0x5d0] sm:$0xff]
  %v2024 = vld [vmem:[%s4 + $0x5d8] sm:$0xff]
  %v2025 = vld [vmem:[%s4 + $0x5e0] sm:$0xff]
  %v2026 = vld [vmem:[%s4 + $0x5e8] sm:$0xff]
  %v2027 = vld [vmem:[%s4 + $0x5f0] sm:$0xff]
  %v2028 = vld [vmem:[%s4 + $0x5f8] sm:$0xff]
  %v2029 = vld [vmem:[%s4 + $0x600] sm:$0xff]
  %v2030 = vld [vmem:[%s4 + $0x608] sm:$0xff]
  %v2031 = vld [vmem:[%s4 + $0x610] sm:$0xff]
  %v2032 = vld [vmem:[%s4 + $0x618] sm:$0xff]
  %2034 = vset.pattern.permute.xlu0 0
  %2035 = vperm.xlu0 %2034, %v1837
  %v2036 = vpop.permute.xlu0 %2035
  %2039 = vset.pattern.permute.xlu0 0
  %2040 = vperm.xlu0 %2039, %v1838
  %v2041 = vpop.permute.xlu0 %2040
  %2044 = vset.pattern.permute.xlu0 0
  %2045 = vperm.xlu0 %2044, %v1839
  %v2046 = vpop.permute.xlu0 %2045
  %2049 = vset.pattern.permute.xlu0 0
  %2050 = vperm.xlu0 %2049, %v1840
  %v2051 = vpop.permute.xlu0 %2050
  %2054 = vset.pattern.permute.xlu0 0
  %2055 = vperm.xlu0 %2054, %v1841
  %v2056 = vpop.permute.xlu0 %2055
  %2059 = vset.pattern.permute.xlu0 0
  %2060 = vperm.xlu0 %2059, %v1842
  %v2061 = vpop.permute.xlu0 %2060
  %2064 = vset.pattern.permute.xlu0 0
  %2065 = vperm.xlu0 %2064, %v1843
  %v2066 = vpop.permute.xlu0 %2065
  %2069 = vset.pattern.permute.xlu0 0
  %2070 = vperm.xlu0 %2069, %v1844
  %v2071 = vpop.permute.xlu0 %2070
  %2074 = vset.pattern.permute.xlu0 0
  %2075 = vperm.xlu0 %2074, %v1845
  %v2076 = vpop.permute.xlu0 %2075
  %2079 = vset.pattern.permute.xlu0 0
  %2080 = vperm.xlu0 %2079, %v1846
  %v2081 = vpop.permute.xlu0 %2080
  %2084 = vset.pattern.permute.xlu0 0
  %2085 = vperm.xlu0 %2084, %v1847
  %v2086 = vpop.permute.xlu0 %2085
  %2089 = vset.pattern.permute.xlu0 0
  %2090 = vperm.xlu0 %2089, %v1848
  %v2091 = vpop.permute.xlu0 %2090
  %2094 = vset.pattern.permute.xlu0 0
  %2095 = vperm.xlu0 %2094, %v1849
  %v2096 = vpop.permute.xlu0 %2095
  %2099 = vset.pattern.permute.xlu0 0
  %2100 = vperm.xlu0 %2099, %v1850
  %v2101 = vpop.permute.xlu0 %2100
  %2104 = vset.pattern.permute.xlu0 0
  %2105 = vperm.xlu0 %2104, %v1851
  %v2106 = vpop.permute.xlu0 %2105
  %2109 = vset.pattern.permute.xlu0 0
  %2110 = vperm.xlu0 %2109, %v1852
  %v2111 = vpop.permute.xlu0 %2110
  %2114 = vset.pattern.permute.xlu0 0
  %2115 = vperm.xlu0 %2114, %v1853
  %v2116 = vpop.permute.xlu0 %2115
  %2119 = vset.pattern.permute.xlu0 0
  %2120 = vperm.xlu0 %2119, %v1854
  %v2121 = vpop.permute.xlu0 %2120
  %2124 = vset.pattern.permute.xlu0 0
  %2125 = vperm.xlu0 %2124, %v1855
  %v2126 = vpop.permute.xlu0 %2125
  %2129 = vset.pattern.permute.xlu0 0
  %2130 = vperm.xlu0 %2129, %v1856
  %v2131 = vpop.permute.xlu0 %2130
  %2134 = vset.pattern.permute.xlu0 0
  %2135 = vperm.xlu0 %2134, %v1857
  %v2136 = vpop.permute.xlu0 %2135
  %2139 = vset.pattern.permute.xlu0 0
  %2140 = vperm.xlu0 %2139, %v1858
  %v2141 = vpop.permute.xlu0 %2140
  %2144 = vset.pattern.permute.xlu0 0
  %2145 = vperm.xlu0 %2144, %v1859
  %v2146 = vpop.permute.xlu0 %2145
  %2149 = vset.pattern.permute.xlu0 0
  %2150 = vperm.xlu0 %2149, %v1860
  %v2151 = vpop.permute.xlu0 %2150
  %2154 = vset.pattern.permute.xlu0 0
  %2155 = vperm.xlu0 %2154, %v1861
  %v2156 = vpop.permute.xlu0 %2155
  %2159 = vset.pattern.permute.xlu0 0
  %2160 = vperm.xlu0 %2159, %v1862
  %v2161 = vpop.permute.xlu0 %2160
  %2164 = vset.pattern.permute.xlu0 0
  %2165 = vperm.xlu0 %2164, %v1863
  %v2166 = vpop.permute.xlu0 %2165
  %2169 = vset.pattern.permute.xlu0 0
  %2170 = vperm.xlu0 %2169, %v1864
  %v2171 = vpop.permute.xlu0 %2170
  %2174 = vset.pattern.permute.xlu0 0
  %2175 = vperm.xlu0 %2174, %v1865
  %v2176 = vpop.permute.xlu0 %2175
  %2179 = vset.pattern.permute.xlu0 0
  %2180 = vperm.xlu0 %2179, %v1866
  %v2181 = vpop.permute.xlu0 %2180
  %2184 = vset.pattern.permute.xlu0 0
  %2185 = vperm.xlu0 %2184, %v1867
  %v2186 = vpop.permute.xlu0 %2185
  %2189 = vset.pattern.permute.xlu0 0
  %2190 = vperm.xlu0 %2189, %v1868
  %v2191 = vpop.permute.xlu0 %2190
  %2194 = vset.pattern.permute.xlu0 0
  %2195 = vperm.xlu0 %2194, %v1869
  %v2196 = vpop.permute.xlu0 %2195
  %2199 = vset.pattern.permute.xlu0 0
  %2200 = vperm.xlu0 %2199, %v1870
  %v2201 = vpop.permute.xlu0 %2200
  %2204 = vset.pattern.permute.xlu0 0
  %2205 = vperm.xlu0 %2204, %v1871
  %v2206 = vpop.permute.xlu0 %2205
  %2209 = vset.pattern.permute.xlu0 0
  %2210 = vperm.xlu0 %2209, %v1872
  %v2211 = vpop.permute.xlu0 %2210
  %2214 = vset.pattern.permute.xlu0 0
  %2215 = vperm.xlu0 %2214, %v1873
  %v2216 = vpop.permute.xlu0 %2215
  %2219 = vset.pattern.permute.xlu0 0
  %2220 = vperm.xlu0 %2219, %v1874
  %v2221 = vpop.permute.xlu0 %2220
  %2224 = vset.pattern.permute.xlu0 0
  %2225 = vperm.xlu0 %2224, %v1875
  %v2226 = vpop.permute.xlu0 %2225
  %2229 = vset.pattern.permute.xlu0 0
  %2230 = vperm.xlu0 %2229, %v1876
  %v2231 = vpop.permute.xlu0 %2230
  %2234 = vset.pattern.permute.xlu0 0
  %2235 = vperm.xlu0 %2234, %v1877
  %v2236 = vpop.permute.xlu0 %2235
  %2239 = vset.pattern.permute.xlu0 0
  %2240 = vperm.xlu0 %2239, %v1878
  %v2241 = vpop.permute.xlu0 %2240
  %2244 = vset.pattern.permute.xlu0 0
  %2245 = vperm.xlu0 %2244, %v1879
  %v2246 = vpop.permute.xlu0 %2245
  %2249 = vset.pattern.permute.xlu0 0
  %2250 = vperm.xlu0 %2249, %v1880
  %v2251 = vpop.permute.xlu0 %2250
  %2254 = vset.pattern.permute.xlu0 0
  %2255 = vperm.xlu0 %2254, %v1881
  %v2256 = vpop.permute.xlu0 %2255
  %2259 = vset.pattern.permute.xlu0 0
  %2260 = vperm.xlu0 %2259, %v1882
  %v2261 = vpop.permute.xlu0 %2260
  %2264 = vset.pattern.permute.xlu0 0
  %2265 = vperm.xlu0 %2264, %v1883
  %v2266 = vpop.permute.xlu0 %2265
  %2269 = vset.pattern.permute.xlu0 0
  %2270 = vperm.xlu0 %2269, %v1884
  %v2271 = vpop.permute.xlu0 %2270
  %2274 = vset.pattern.permute.xlu0 0
  %2275 = vperm.xlu0 %2274, %v1885
  %v2276 = vpop.permute.xlu0 %2275
  %2279 = vset.pattern.permute.xlu0 0
  %2280 = vperm.xlu0 %2279, %v1886
  %v2281 = vpop.permute.xlu0 %2280
  %2284 = vset.pattern.permute.xlu0 0
  %2285 = vperm.xlu0 %2284, %v1887
  %v2286 = vpop.permute.xlu0 %2285
  %2289 = vset.pattern.permute.xlu0 0
  %2290 = vperm.xlu0 %2289, %v1888
  %v2291 = vpop.permute.xlu0 %2290
  %2294 = vset.pattern.permute.xlu0 0
  %2295 = vperm.xlu0 %2294, %v1889
  %v2296 = vpop.permute.xlu0 %2295
  %2299 = vset.pattern.permute.xlu0 0
  %2300 = vperm.xlu0 %2299, %v1890
  %v2301 = vpop.permute.xlu0 %2300
  %2304 = vset.pattern.permute.xlu0 0
  %2305 = vperm.xlu0 %2304, %v1891
  %v2306 = vpop.permute.xlu0 %2305
  %2309 = vset.pattern.permute.xlu0 0
  %2310 = vperm.xlu0 %2309, %v1892
  %v2311 = vpop.permute.xlu0 %2310
  %2314 = vset.pattern.permute.xlu0 0
  %2315 = vperm.xlu0 %2314, %v1893
  %v2316 = vpop.permute.xlu0 %2315
  %2319 = vset.pattern.permute.xlu0 0
  %2320 = vperm.xlu0 %2319, %v1894
  %v2321 = vpop.permute.xlu0 %2320
  %2324 = vset.pattern.permute.xlu0 0
  %2325 = vperm.xlu0 %2324, %v1895
  %v2326 = vpop.permute.xlu0 %2325
  %2329 = vset.pattern.permute.xlu0 0
  %2330 = vperm.xlu0 %2329, %v1896
  %v2331 = vpop.permute.xlu0 %2330
  %2334 = vset.pattern.permute.xlu0 0
  %2335 = vperm.xlu0 %2334, %v1897
  %v2336 = vpop.permute.xlu0 %2335
  %2339 = vset.pattern.permute.xlu0 0
  %2340 = vperm.xlu0 %2339, %v1898
  %v2341 = vpop.permute.xlu0 %2340
  %2344 = vset.pattern.permute.xlu0 0
  %2345 = vperm.xlu0 %2344, %v1899
  %v2346 = vpop.permute.xlu0 %2345
  %2349 = vset.pattern.permute.xlu0 0
  %2350 = vperm.xlu0 %2349, %v1900
  %v2351 = vpop.permute.xlu0 %2350
  %2354 = vset.pattern.permute.xlu0 0
  %2355 = vperm.xlu0 %2354, %v1901
  %v2356 = vpop.permute.xlu0 %2355
  %2359 = vset.pattern.permute.xlu0 0
  %2360 = vperm.xlu0 %2359, %v1902
  %v2361 = vpop.permute.xlu0 %2360
  %2364 = vset.pattern.permute.xlu0 0
  %2365 = vperm.xlu0 %2364, %v1903
  %v2366 = vpop.permute.xlu0 %2365
  %2369 = vset.pattern.permute.xlu0 0
  %2370 = vperm.xlu0 %2369, %v1904
  %v2371 = vpop.permute.xlu0 %2370
  %2374 = vset.pattern.permute.xlu0 0
  %2375 = vperm.xlu0 %2374, %v1905
  %v2376 = vpop.permute.xlu0 %2375
  %2379 = vset.pattern.permute.xlu0 0
  %2380 = vperm.xlu0 %2379, %v1906
  %v2381 = vpop.permute.xlu0 %2380
  %2384 = vset.pattern.permute.xlu0 0
  %2385 = vperm.xlu0 %2384, %v1907
  %v2386 = vpop.permute.xlu0 %2385
  %2389 = vset.pattern.permute.xlu0 0
  %2390 = vperm.xlu0 %2389, %v1908
  %v2391 = vpop.permute.xlu0 %2390
  %2394 = vset.pattern.permute.xlu0 0
  %2395 = vperm.xlu0 %2394, %v1909
  %v2396 = vpop.permute.xlu0 %2395
  %2399 = vset.pattern.permute.xlu0 0
  %2400 = vperm.xlu0 %2399, %v1910
  %v2401 = vpop.permute.xlu0 %2400
  %2404 = vset.pattern.permute.xlu0 0
  %2405 = vperm.xlu0 %2404, %v1911
  %v2406 = vpop.permute.xlu0 %2405
  %2409 = vset.pattern.permute.xlu0 0
  %2410 = vperm.xlu0 %2409, %v1912
  %v2411 = vpop.permute.xlu0 %2410
  %2414 = vset.pattern.permute.xlu0 0
  %2415 = vperm.xlu0 %2414, %v1913
  %v2416 = vpop.permute.xlu0 %2415
  %2419 = vset.pattern.permute.xlu0 0
  %2420 = vperm.xlu0 %2419, %v1914
  %v2421 = vpop.permute.xlu0 %2420
  %2424 = vset.pattern.permute.xlu0 0
  %2425 = vperm.xlu0 %2424, %v1915
  %v2426 = vpop.permute.xlu0 %2425
  %2429 = vset.pattern.permute.xlu0 0
  %2430 = vperm.xlu0 %2429, %v1916
  %v2431 = vpop.permute.xlu0 %2430
  %2434 = vset.pattern.permute.xlu0 0
  %2435 = vperm.xlu0 %2434, %v1917
  %v2436 = vpop.permute.xlu0 %2435
  %2439 = vset.pattern.permute.xlu0 0
  %2440 = vperm.xlu0 %2439, %v1918
  %v2441 = vpop.permute.xlu0 %2440
  %2444 = vset.pattern.permute.xlu0 0
  %2445 = vperm.xlu0 %2444, %v1919
  %v2446 = vpop.permute.xlu0 %2445
  %2449 = vset.pattern.permute.xlu0 0
  %2450 = vperm.xlu0 %2449, %v1920
  %v2451 = vpop.permute.xlu0 %2450
  %2454 = vset.pattern.permute.xlu0 0
  %2455 = vperm.xlu0 %2454, %v1921
  %v2456 = vpop.permute.xlu0 %2455
  %2459 = vset.pattern.permute.xlu0 0
  %2460 = vperm.xlu0 %2459, %v1922
  %v2461 = vpop.permute.xlu0 %2460
  %2464 = vset.pattern.permute.xlu0 0
  %2465 = vperm.xlu0 %2464, %v1923
  %v2466 = vpop.permute.xlu0 %2465
  %2469 = vset.pattern.permute.xlu0 0
  %2470 = vperm.xlu0 %2469, %v1924
  %v2471 = vpop.permute.xlu0 %2470
  %2474 = vset.pattern.permute.xlu0 0
  %2475 = vperm.xlu0 %2474, %v1925
  %v2476 = vpop.permute.xlu0 %2475
  %2479 = vset.pattern.permute.xlu0 0
  %2480 = vperm.xlu0 %2479, %v1926
  %v2481 = vpop.permute.xlu0 %2480
  %2484 = vset.pattern.permute.xlu0 0
  %2485 = vperm.xlu0 %2484, %v1927
  %v2486 = vpop.permute.xlu0 %2485
  %2489 = vset.pattern.permute.xlu0 0
  %2490 = vperm.xlu0 %2489, %v1928
  %v2491 = vpop.permute.xlu0 %2490
  %2494 = vset.pattern.permute.xlu0 0
  %2495 = vperm.xlu0 %2494, %v1929
  %v2496 = vpop.permute.xlu0 %2495
  %2499 = vset.pattern.permute.xlu0 0
  %2500 = vperm.xlu0 %2499, %v1930
  %v2501 = vpop.permute.xlu0 %2500
  %2504 = vset.pattern.permute.xlu0 0
  %2505 = vperm.xlu0 %2504, %v1931
  %v2506 = vpop.permute.xlu0 %2505
  %2509 = vset.pattern.permute.xlu0 0
  %2510 = vperm.xlu0 %2509, %v1932
  %v2511 = vpop.permute.xlu0 %2510
  %2514 = vset.pattern.permute.xlu0 0
  %2515 = vperm.xlu0 %2514, %v1933
  %v2516 = vpop.permute.xlu0 %2515
  %2519 = vset.pattern.permute.xlu0 0
  %2520 = vperm.xlu0 %2519, %v1934
  %v2521 = vpop.permute.xlu0 %2520
  %2524 = vset.pattern.permute.xlu0 0
  %2525 = vperm.xlu0 %2524, %v1935
  %v2526 = vpop.permute.xlu0 %2525
  %2529 = vset.pattern.permute.xlu0 0
  %2530 = vperm.xlu0 %2529, %v1936
  %v2531 = vpop.permute.xlu0 %2530
  %2534 = vset.pattern.permute.xlu0 0
  %2535 = vperm.xlu0 %2534, %v1937
  %v2536 = vpop.permute.xlu0 %2535
  %2539 = vset.pattern.permute.xlu0 0
  %2540 = vperm.xlu0 %2539, %v1938
  %v2541 = vpop.permute.xlu0 %2540
  %2544 = vset.pattern.permute.xlu0 0
  %2545 = vperm.xlu0 %2544, %v1939
  %v2546 = vpop.permute.xlu0 %2545
  %2549 = vset.pattern.permute.xlu0 0
  %2550 = vperm.xlu0 %2549, %v1940
  %v2551 = vpop.permute.xlu0 %2550
  %2554 = vset.pattern.permute.xlu0 0
  %2555 = vperm.xlu0 %2554, %v1941
  %v2556 = vpop.permute.xlu0 %2555
  %2559 = vset.pattern.permute.xlu0 0
  %2560 = vperm.xlu0 %2559, %v1942
  %v2561 = vpop.permute.xlu0 %2560
  %2564 = vset.pattern.permute.xlu0 0
  %2565 = vperm.xlu0 %2564, %v1943
  %v2566 = vpop.permute.xlu0 %2565
  %2569 = vset.pattern.permute.xlu0 0
  %2570 = vperm.xlu0 %2569, %v1944
  %v2571 = vpop.permute.xlu0 %2570
  %2574 = vset.pattern.permute.xlu0 0
  %2575 = vperm.xlu0 %2574, %v1945
  %v2576 = vpop.permute.xlu0 %2575
  %2579 = vset.pattern.permute.xlu0 0
  %2580 = vperm.xlu0 %2579, %v1946
  %v2581 = vpop.permute.xlu0 %2580
  %2584 = vset.pattern.permute.xlu0 0
  %2585 = vperm.xlu0 %2584, %v1947
  %v2586 = vpop.permute.xlu0 %2585
  %2589 = vset.pattern.permute.xlu0 0
  %2590 = vperm.xlu0 %2589, %v1948
  %v2591 = vpop.permute.xlu0 %2590
  %2594 = vset.pattern.permute.xlu0 0
  %2595 = vperm.xlu0 %2594, %v1949
  %v2596 = vpop.permute.xlu0 %2595
  %2599 = vset.pattern.permute.xlu0 0
  %2600 = vperm.xlu0 %2599, %v1950
  %v2601 = vpop.permute.xlu0 %2600
  %2604 = vset.pattern.permute.xlu0 0
  %2605 = vperm.xlu0 %2604, %v1951
  %v2606 = vpop.permute.xlu0 %2605
  %2609 = vset.pattern.permute.xlu0 0
  %2610 = vperm.xlu0 %2609, %v1952
  %v2611 = vpop.permute.xlu0 %2610
  %2614 = vset.pattern.permute.xlu0 0
  %2615 = vperm.xlu0 %2614, %v1953
  %v2616 = vpop.permute.xlu0 %2615
  %2619 = vset.pattern.permute.xlu0 0
  %2620 = vperm.xlu0 %2619, %v1954
  %v2621 = vpop.permute.xlu0 %2620
  %2624 = vset.pattern.permute.xlu0 0
  %2625 = vperm.xlu0 %2624, %v1955
  %v2626 = vpop.permute.xlu0 %2625
  %2629 = vset.pattern.permute.xlu0 0
  %2630 = vperm.xlu0 %2629, %v1956
  %v2631 = vpop.permute.xlu0 %2630
  %2634 = vset.pattern.permute.xlu0 0
  %2635 = vperm.xlu0 %2634, %v1957
  %v2636 = vpop.permute.xlu0 %2635
  %2639 = vset.pattern.permute.xlu0 0
  %2640 = vperm.xlu0 %2639, %v1958
  %v2641 = vpop.permute.xlu0 %2640
  %2644 = vset.pattern.permute.xlu0 0
  %2645 = vperm.xlu0 %2644, %v1959
  %v2646 = vpop.permute.xlu0 %2645
  %2649 = vset.pattern.permute.xlu0 0
  %2650 = vperm.xlu0 %2649, %v1960
  %v2651 = vpop.permute.xlu0 %2650
  %2654 = vset.pattern.permute.xlu0 0
  %2655 = vperm.xlu0 %2654, %v1961
  %v2656 = vpop.permute.xlu0 %2655
  %2659 = vset.pattern.permute.xlu0 0
  %2660 = vperm.xlu0 %2659, %v1962
  %v2661 = vpop.permute.xlu0 %2660
  %2664 = vset.pattern.permute.xlu0 0
  %2665 = vperm.xlu0 %2664, %v1963
  %v2666 = vpop.permute.xlu0 %2665
  %2669 = vset.pattern.permute.xlu0 0
  %2670 = vperm.xlu0 %2669, %v1964
  %v2671 = vpop.permute.xlu0 %2670
  %2674 = vset.pattern.permute.xlu0 0
  %2675 = vperm.xlu0 %2674, %v1965
  %v2676 = vpop.permute.xlu0 %2675
  %2679 = vset.pattern.permute.xlu0 0
  %2680 = vperm.xlu0 %2679, %v1966
  %v2681 = vpop.permute.xlu0 %2680
  %2684 = vset.pattern.permute.xlu0 0
  %2685 = vperm.xlu0 %2684, %v1967
  %v2686 = vpop.permute.xlu0 %2685
  %2689 = vset.pattern.permute.xlu0 0
  %2690 = vperm.xlu0 %2689, %v1968
  %v2691 = vpop.permute.xlu0 %2690
  %2694 = vset.pattern.permute.xlu0 0
  %2695 = vperm.xlu0 %2694, %v1969
  %v2696 = vpop.permute.xlu0 %2695
  %2699 = vset.pattern.permute.xlu0 0
  %2700 = vperm.xlu0 %2699, %v1970
  %v2701 = vpop.permute.xlu0 %2700
  %2704 = vset.pattern.permute.xlu0 0
  %2705 = vperm.xlu0 %2704, %v1971
  %v2706 = vpop.permute.xlu0 %2705
  %2709 = vset.pattern.permute.xlu0 0
  %2710 = vperm.xlu0 %2709, %v1972
  %v2711 = vpop.permute.xlu0 %2710
  %2714 = vset.pattern.permute.xlu0 0
  %2715 = vperm.xlu0 %2714, %v1973
  %v2716 = vpop.permute.xlu0 %2715
  %2719 = vset.pattern.permute.xlu0 0
  %2720 = vperm.xlu0 %2719, %v1974
  %v2721 = vpop.permute.xlu0 %2720
  %2724 = vset.pattern.permute.xlu0 0
  %2725 = vperm.xlu0 %2724, %v1975
  %v2726 = vpop.permute.xlu0 %2725
  %2729 = vset.pattern.permute.xlu0 0
  %2730 = vperm.xlu0 %2729, %v1976
  %v2731 = vpop.permute.xlu0 %2730
  %2734 = vset.pattern.permute.xlu0 0
  %2735 = vperm.xlu0 %2734, %v1977
  %v2736 = vpop.permute.xlu0 %2735
  %2739 = vset.pattern.permute.xlu0 0
  %2740 = vperm.xlu0 %2739, %v1978
  %v2741 = vpop.permute.xlu0 %2740
  %2744 = vset.pattern.permute.xlu0 0
  %2745 = vperm.xlu0 %2744, %v1979
  %v2746 = vpop.permute.xlu0 %2745
  %2749 = vset.pattern.permute.xlu0 0
  %2750 = vperm.xlu0 %2749, %v1980
  %v2751 = vpop.permute.xlu0 %2750
  %2754 = vset.pattern.permute.xlu0 0
  %2755 = vperm.xlu0 %2754, %v1981
  %v2756 = vpop.permute.xlu0 %2755
  %2759 = vset.pattern.permute.xlu0 0
  %2760 = vperm.xlu0 %2759, %v1982
  %v2761 = vpop.permute.xlu0 %2760
  %2764 = vset.pattern.permute.xlu0 0
  %2765 = vperm.xlu0 %2764, %v1983
  %v2766 = vpop.permute.xlu0 %2765
  %2769 = vset.pattern.permute.xlu0 0
  %2770 = vperm.xlu0 %2769, %v1984
  %v2771 = vpop.permute.xlu0 %2770
  %2774 = vset.pattern.permute.xlu0 0
  %2775 = vperm.xlu0 %2774, %v1985
  %v2776 = vpop.permute.xlu0 %2775
  %2779 = vset.pattern.permute.xlu0 0
  %2780 = vperm.xlu0 %2779, %v1986
  %v2781 = vpop.permute.xlu0 %2780
  %2784 = vset.pattern.permute.xlu0 0
  %2785 = vperm.xlu0 %2784, %v1987
  %v2786 = vpop.permute.xlu0 %2785
  %2789 = vset.pattern.permute.xlu0 0
  %2790 = vperm.xlu0 %2789, %v1988
  %v2791 = vpop.permute.xlu0 %2790
  %2794 = vset.pattern.permute.xlu0 0
  %2795 = vperm.xlu0 %2794, %v1989
  %v2796 = vpop.permute.xlu0 %2795
  %2799 = vset.pattern.permute.xlu0 0
  %2800 = vperm.xlu0 %2799, %v1990
  %v2801 = vpop.permute.xlu0 %2800
  %2804 = vset.pattern.permute.xlu0 0
  %2805 = vperm.xlu0 %2804, %v1991
  %v2806 = vpop.permute.xlu0 %2805
  %2809 = vset.pattern.permute.xlu0 0
  %2810 = vperm.xlu0 %2809, %v1992
  %v2811 = vpop.permute.xlu0 %2810
  %2814 = vset.pattern.permute.xlu0 0
  %2815 = vperm.xlu0 %2814, %v1993
  %v2816 = vpop.permute.xlu0 %2815
  %2819 = vset.pattern.permute.xlu0 0
  %2820 = vperm.xlu0 %2819, %v1994
  %v2821 = vpop.permute.xlu0 %2820
  %2824 = vset.pattern.permute.xlu0 0
  %2825 = vperm.xlu0 %2824, %v1995
  %v2826 = vpop.permute.xlu0 %2825
  %2829 = vset.pattern.permute.xlu0 0
  %2830 = vperm.xlu0 %2829, %v1996
  %v2831 = vpop.permute.xlu0 %2830
  %2834 = vset.pattern.permute.xlu0 0
  %2835 = vperm.xlu0 %2834, %v1997
  %v2836 = vpop.permute.xlu0 %2835
  %2839 = vset.pattern.permute.xlu0 0
  %2840 = vperm.xlu0 %2839, %v1998
  %v2841 = vpop.permute.xlu0 %2840
  %2844 = vset.pattern.permute.xlu0 0
  %2845 = vperm.xlu0 %2844, %v1999
  %v2846 = vpop.permute.xlu0 %2845
  %2849 = vset.pattern.permute.xlu0 0
  %2850 = vperm.xlu0 %2849, %v2000
  %v2851 = vpop.permute.xlu0 %2850
  %2854 = vset.pattern.permute.xlu0 0
  %2855 = vperm.xlu0 %2854, %v2001
  %v2856 = vpop.permute.xlu0 %2855
  %2859 = vset.pattern.permute.xlu0 0
  %2860 = vperm.xlu0 %2859, %v2002
  %v2861 = vpop.permute.xlu0 %2860
  %2864 = vset.pattern.permute.xlu0 0
  %2865 = vperm.xlu0 %2864, %v2003
  %v2866 = vpop.permute.xlu0 %2865
  %2869 = vset.pattern.permute.xlu0 0
  %2870 = vperm.xlu0 %2869, %v2004
  %v2871 = vpop.permute.xlu0 %2870
  %2874 = vset.pattern.permute.xlu0 0
  %2875 = vperm.xlu0 %2874, %v2005
  %v2876 = vpop.permute.xlu0 %2875
  %2879 = vset.pattern.permute.xlu0 0
  %2880 = vperm.xlu0 %2879, %v2006
  %v2881 = vpop.permute.xlu0 %2880
  %2884 = vset.pattern.permute.xlu0 0
  %2885 = vperm.xlu0 %2884, %v2007
  %v2886 = vpop.permute.xlu0 %2885
  %2889 = vset.pattern.permute.xlu0 0
  %2890 = vperm.xlu0 %2889, %v2008
  %v2891 = vpop.permute.xlu0 %2890
  %2894 = vset.pattern.permute.xlu0 0
  %2895 = vperm.xlu0 %2894, %v2009
  %v2896 = vpop.permute.xlu0 %2895
  %2899 = vset.pattern.permute.xlu0 0
  %2900 = vperm.xlu0 %2899, %v2010
  %v2901 = vpop.permute.xlu0 %2900
  %2904 = vset.pattern.permute.xlu0 0
  %2905 = vperm.xlu0 %2904, %v2011
  %v2906 = vpop.permute.xlu0 %2905
  %2909 = vset.pattern.permute.xlu0 0
  %2910 = vperm.xlu0 %2909, %v2012
  %v2911 = vpop.permute.xlu0 %2910
  %2914 = vset.pattern.permute.xlu0 0
  %2915 = vperm.xlu0 %2914, %v2013
  %v2916 = vpop.permute.xlu0 %2915
  %2919 = vset.pattern.permute.xlu0 0
  %2920 = vperm.xlu0 %2919, %v2014
  %v2921 = vpop.permute.xlu0 %2920
  %2924 = vset.pattern.permute.xlu0 0
  %2925 = vperm.xlu0 %2924, %v2015
  %v2926 = vpop.permute.xlu0 %2925
  %2929 = vset.pattern.permute.xlu0 0
  %2930 = vperm.xlu0 %2929, %v2016
  %v2931 = vpop.permute.xlu0 %2930
  %2934 = vset.pattern.permute.xlu0 0
  %2935 = vperm.xlu0 %2934, %v2017
  %v2936 = vpop.permute.xlu0 %2935
  %2939 = vset.pattern.permute.xlu0 0
  %2940 = vperm.xlu0 %2939, %v2018
  %v2941 = vpop.permute.xlu0 %2940
  %2944 = vset.pattern.permute.xlu0 0
  %2945 = vperm.xlu0 %2944, %v2019
  %v2946 = vpop.permute.xlu0 %2945
  %2949 = vset.pattern.permute.xlu0 0
  %2950 = vperm.xlu0 %2949, %v2020
  %v2951 = vpop.permute.xlu0 %2950
  %2954 = vset.pattern.permute.xlu0 0
  %2955 = vperm.xlu0 %2954, %v2021
  %v2956 = vpop.permute.xlu0 %2955
  %2959 = vset.pattern.permute.xlu0 0
  %2960 = vperm.xlu0 %2959, %v2022
  %v2961 = vpop.permute.xlu0 %2960
  %2964 = vset.pattern.permute.xlu0 0
  %2965 = vperm.xlu0 %2964, %v2023
  %v2966 = vpop.permute.xlu0 %2965
  %2969 = vset.pattern.permute.xlu0 0
  %2970 = vperm.xlu0 %2969, %v2024
  %v2971 = vpop.permute.xlu0 %2970
  %2974 = vset.pattern.permute.xlu0 0
  %2975 = vperm.xlu0 %2974, %v2025
  %v2976 = vpop.permute.xlu0 %2975
  %2979 = vset.pattern.permute.xlu0 0
  %2980 = vperm.xlu0 %2979, %v2026
  %v2981 = vpop.permute.xlu0 %2980
  %2984 = vset.pattern.permute.xlu0 0
  %2985 = vperm.xlu0 %2984, %v2027
  %v2986 = vpop.permute.xlu0 %2985
  %2989 = vset.pattern.permute.xlu0 0
  %2990 = vperm.xlu0 %2989, %v2028
  %v2991 = vpop.permute.xlu0 %2990
  %2994 = vset.pattern.permute.xlu0 0
  %2995 = vperm.xlu0 %2994, %v2029
  %v2996 = vpop.permute.xlu0 %2995
  %2999 = vset.pattern.permute.xlu0 0
  %3000 = vperm.xlu0 %2999, %v2030
  %v3001 = vpop.permute.xlu0 %3000
  %3004 = vset.pattern.permute.xlu0 0
  %3005 = vperm.xlu0 %3004, %v2031
  %v3006 = vpop.permute.xlu0 %3005
  %3009 = vset.pattern.permute.xlu0 0
  %3010 = vperm.xlu0 %3009, %v2032
  %v3011 = vpop.permute.xlu0 %3010
  %v3209 = vunpack.c.l.b16 %v1641
  %v3210 = vunpack.c.l.b16 %v1642
  %v3211 = vunpack.c.l.b16 %v1643
  %v3212 = vunpack.c.l.b16 %v1644
  %v3213 = vunpack.c.l.b16 %v1645
  %v3214 = vunpack.c.l.b16 %v1646
  %v3215 = vunpack.c.l.b16 %v1647
  %v3216 = vunpack.c.l.b16 %v1648
  %v3217 = vunpack.c.l.b16 %v1649
  %v3218 = vunpack.c.l.b16 %v1650
  %v3219 = vunpack.c.l.b16 %v1651
  %v3220 = vunpack.c.l.b16 %v1652
  %v3221 = vunpack.c.l.b16 %v1653
  %v3222 = vunpack.c.l.b16 %v1654
  %v3223 = vunpack.c.l.b16 %v1655
  %v3224 = vunpack.c.l.b16 %v1656
  %v3225 = vunpack.c.l.b16 %v1657
  %v3226 = vunpack.c.l.b16 %v1658
  %v3227 = vunpack.c.l.b16 %v1659
  %v3228 = vunpack.c.l.b16 %v1660
  %v3229 = vunpack.c.l.b16 %v1661
  %v3230 = vunpack.c.l.b16 %v1662
  %v3231 = vunpack.c.l.b16 %v1663
  %v3232 = vunpack.c.l.b16 %v1664
  %v3233 = vunpack.c.l.b16 %v1665
  %v3234 = vunpack.c.l.b16 %v1666
  %v3235 = vunpack.c.l.b16 %v1667
  %v3236 = vunpack.c.l.b16 %v1668
  %v3237 = vunpack.c.l.b16 %v1669
  %v3238 = vunpack.c.l.b16 %v1670
  %v3239 = vunpack.c.l.b16 %v1671
  %v3240 = vunpack.c.l.b16 %v1672
  %v3241 = vunpack.c.l.b16 %v1673
  %v3242 = vunpack.c.l.b16 %v1674
  %v3243 = vunpack.c.l.b16 %v1675
  %v3244 = vunpack.c.l.b16 %v1676
  %v3245 = vunpack.c.l.b16 %v1677
  %v3246 = vunpack.c.l.b16 %v1678
  %v3247 = vunpack.c.l.b16 %v1679
  %v3248 = vunpack.c.l.b16 %v1680
  %v3249 = vunpack.c.l.b16 %v1681
  %v3250 = vunpack.c.l.b16 %v1682
  %v3251 = vunpack.c.l.b16 %v1683
  %v3252 = vunpack.c.l.b16 %v1684
  %v3253 = vunpack.c.l.b16 %v1685
  %v3254 = vunpack.c.l.b16 %v1686
  %v3255 = vunpack.c.l.b16 %v1687
  %v3256 = vunpack.c.l.b16 %v1688
  %v3257 = vunpack.c.l.b16 %v1689
  %v3258 = vunpack.c.l.b16 %v1690
  %v3259 = vunpack.c.l.b16 %v1691
  %v3260 = vunpack.c.l.b16 %v1692
  %v3261 = vunpack.c.l.b16 %v1693
  %v3262 = vunpack.c.l.b16 %v1694
  %v3263 = vunpack.c.l.b16 %v1695
  %v3264 = vunpack.c.l.b16 %v1696
  %v3265 = vunpack.c.l.b16 %v1697
  %v3266 = vunpack.c.l.b16 %v1698
  %v3267 = vunpack.c.l.b16 %v1699
  %v3268 = vunpack.c.l.b16 %v1700
  %v3269 = vunpack.c.l.b16 %v1701
  %v3270 = vunpack.c.l.b16 %v1702
  %v3271 = vunpack.c.l.b16 %v1703
  %v3272 = vunpack.c.l.b16 %v1704
  %v3273 = vunpack.c.l.b16 %v1705
  %v3274 = vunpack.c.l.b16 %v1706
  %v3275 = vunpack.c.l.b16 %v1707
  %v3276 = vunpack.c.l.b16 %v1708
  %v3277 = vunpack.c.l.b16 %v1709
  %v3278 = vunpack.c.l.b16 %v1710
  %v3279 = vunpack.c.l.b16 %v1711
  %v3280 = vunpack.c.l.b16 %v1712
  %v3281 = vunpack.c.l.b16 %v1713
  %v3282 = vunpack.c.l.b16 %v1714
  %v3283 = vunpack.c.l.b16 %v1715
  %v3284 = vunpack.c.l.b16 %v1716
  %v3285 = vunpack.c.l.b16 %v1717
  %v3286 = vunpack.c.l.b16 %v1718
  %v3287 = vunpack.c.l.b16 %v1719
  %v3288 = vunpack.c.l.b16 %v1720
  %v3289 = vunpack.c.l.b16 %v1721
  %v3290 = vunpack.c.l.b16 %v1722
  %v3291 = vunpack.c.l.b16 %v1723
  %v3292 = vunpack.c.l.b16 %v1724
  %v3293 = vunpack.c.l.b16 %v1725
  %v3294 = vunpack.c.l.b16 %v1726
  %v3295 = vunpack.c.l.b16 %v1727
  %v3296 = vunpack.c.l.b16 %v1728
  %v3297 = vunpack.c.l.b16 %v1729
  %v3298 = vunpack.c.l.b16 %v1730
  %v3299 = vunpack.c.l.b16 %v1731
  %v3300 = vunpack.c.l.b16 %v1732
  %v3301 = vunpack.c.l.b16 %v1733
  %v3302 = vunpack.c.l.b16 %v1734
  %v3303 = vunpack.c.l.b16 %v1735
  %v3304 = vunpack.c.l.b16 %v1736
  %v3305 = vunpack.c.l.b16 %v1737
  %v3306 = vunpack.c.l.b16 %v1738
  %v3307 = vunpack.c.l.b16 %v1739
  %v3308 = vunpack.c.l.b16 %v1740
  %v3309 = vunpack.c.l.b16 %v1741
  %v3310 = vunpack.c.l.b16 %v1742
  %v3311 = vunpack.c.l.b16 %v1743
  %v3312 = vunpack.c.l.b16 %v1744
  %v3313 = vunpack.c.l.b16 %v1745
  %v3314 = vunpack.c.l.b16 %v1746
  %v3315 = vunpack.c.l.b16 %v1747
  %v3316 = vunpack.c.l.b16 %v1748
  %v3317 = vunpack.c.l.b16 %v1749
  %v3318 = vunpack.c.l.b16 %v1750
  %v3319 = vunpack.c.l.b16 %v1751
  %v3320 = vunpack.c.l.b16 %v1752
  %v3321 = vunpack.c.l.b16 %v1753
  %v3322 = vunpack.c.l.b16 %v1754
  %v3323 = vunpack.c.l.b16 %v1755
  %v3324 = vunpack.c.l.b16 %v1756
  %v3325 = vunpack.c.l.b16 %v1757
  %v3326 = vunpack.c.l.b16 %v1758
  %v3327 = vunpack.c.l.b16 %v1759
  %v3328 = vunpack.c.l.b16 %v1760
  %v3329 = vunpack.c.l.b16 %v1761
  %v3330 = vunpack.c.l.b16 %v1762
  %v3331 = vunpack.c.l.b16 %v1763
  %v3332 = vunpack.c.l.b16 %v1764
  %v3333 = vunpack.c.l.b16 %v1765
  %v3334 = vunpack.c.l.b16 %v1766
  %v3335 = vunpack.c.l.b16 %v1767
  %v3336 = vunpack.c.l.b16 %v1768
  %v3337 = vunpack.c.l.b16 %v1769
  %v3338 = vunpack.c.l.b16 %v1770
  %v3339 = vunpack.c.l.b16 %v1771
  %v3340 = vunpack.c.l.b16 %v1772
  %v3341 = vunpack.c.l.b16 %v1773
  %v3342 = vunpack.c.l.b16 %v1774
  %v3343 = vunpack.c.l.b16 %v1775
  %v3344 = vunpack.c.l.b16 %v1776
  %v3345 = vunpack.c.l.b16 %v1777
  %v3346 = vunpack.c.l.b16 %v1778
  %v3347 = vunpack.c.l.b16 %v1779
  %v3348 = vunpack.c.l.b16 %v1780
  %v3349 = vunpack.c.l.b16 %v1781
  %v3350 = vunpack.c.l.b16 %v1782
  %v3351 = vunpack.c.l.b16 %v1783
  %v3352 = vunpack.c.l.b16 %v1784
  %v3353 = vunpack.c.l.b16 %v1785
  %v3354 = vunpack.c.l.b16 %v1786
  %v3355 = vunpack.c.l.b16 %v1787
  %v3356 = vunpack.c.l.b16 %v1788
  %v3357 = vunpack.c.l.b16 %v1789
  %v3358 = vunpack.c.l.b16 %v1790
  %v3359 = vunpack.c.l.b16 %v1791
  %v3360 = vunpack.c.l.b16 %v1792
  %v3361 = vunpack.c.l.b16 %v1793
  %v3362 = vunpack.c.l.b16 %v1794
  %v3363 = vunpack.c.l.b16 %v1795
  %v3364 = vunpack.c.l.b16 %v1796
  %v3365 = vunpack.c.l.b16 %v1797
  %v3366 = vunpack.c.l.b16 %v1798
  %v3367 = vunpack.c.l.b16 %v1799
  %v3368 = vunpack.c.l.b16 %v1800
  %v3369 = vunpack.c.l.b16 %v1801
  %v3370 = vunpack.c.l.b16 %v1802
  %v3371 = vunpack.c.l.b16 %v1803
  %v3372 = vunpack.c.l.b16 %v1804
  %v3373 = vunpack.c.l.b16 %v1805
  %v3374 = vunpack.c.l.b16 %v1806
  %v3375 = vunpack.c.l.b16 %v1807
  %v3376 = vunpack.c.l.b16 %v1808
  %v3377 = vunpack.c.l.b16 %v1809
  %v3378 = vunpack.c.l.b16 %v1810
  %v3379 = vunpack.c.l.b16 %v1811
  %v3380 = vunpack.c.l.b16 %v1812
  %v3381 = vunpack.c.l.b16 %v1813
  %v3382 = vunpack.c.l.b16 %v1814
  %v3383 = vunpack.c.l.b16 %v1815
  %v3384 = vunpack.c.l.b16 %v1816
  %v3385 = vunpack.c.l.b16 %v1817
  %v3386 = vunpack.c.l.b16 %v1818
  %v3387 = vunpack.c.l.b16 %v1819
  %v3388 = vunpack.c.l.b16 %v1820
  %v3389 = vunpack.c.l.b16 %v1821
  %v3390 = vunpack.c.l.b16 %v1822
  %v3391 = vunpack.c.l.b16 %v1823
  %v3392 = vunpack.c.l.b16 %v1824
  %v3393 = vunpack.c.l.b16 %v1825
  %v3394 = vunpack.c.l.b16 %v1826
  %v3395 = vunpack.c.l.b16 %v1827
  %v3396 = vunpack.c.l.b16 %v1828
  %v3397 = vunpack.c.l.b16 %v1829
  %v3398 = vunpack.c.l.b16 %v1830
  %v3399 = vunpack.c.l.b16 %v1831
  %v3400 = vunpack.c.l.b16 %v1832
  %v3401 = vunpack.c.l.b16 %v1833
  %v3402 = vunpack.c.l.b16 %v1834
  %v3403 = vunpack.c.l.b16 %v1835
  %v3404 = vunpack.c.l.b16 %v1836
  %v3405 = vpack.c.b16 %v3210, %v3209
  %v3406 = vpack.c.b16 %v3212, %v3211
  %v3407 = vpack.c.b16 %v3214, %v3213
  %v3408 = vpack.c.b16 %v3216, %v3215
  %v3409 = vpack.c.b16 %v3218, %v3217
  %v3410 = vpack.c.b16 %v3220, %v3219
  %v3411 = vpack.c.b16 %v3222, %v3221
  %v3412 = vpack.c.b16 %v3224, %v3223
  %v3413 = vpack.c.b16 %v3226, %v3225
  %v3414 = vpack.c.b16 %v3228, %v3227
  %v3415 = vpack.c.b16 %v3230, %v3229
  %v3416 = vpack.c.b16 %v3232, %v3231
  %v3417 = vpack.c.b16 %v3234, %v3233
  %v3418 = vpack.c.b16 %v3236, %v3235
  %v3419 = vpack.c.b16 %v3238, %v3237
  %v3420 = vpack.c.b16 %v3240, %v3239
  %v3421 = vpack.c.b16 %v3242, %v3241
  %v3422 = vpack.c.b16 %v3244, %v3243
  %v3423 = vpack.c.b16 %v3246, %v3245
  %v3424 = vpack.c.b16 %v3248, %v3247
  %v3425 = vpack.c.b16 %v3250, %v3249
  %v3426 = vpack.c.b16 %v3252, %v3251
  %v3427 = vpack.c.b16 %v3254, %v3253
  %v3428 = vpack.c.b16 %v3256, %v3255
  %v3429 = vpack.c.b16 %v3258, %v3257
  %v3430 = vpack.c.b16 %v3260, %v3259
  %v3431 = vpack.c.b16 %v3262, %v3261
  %v3432 = vpack.c.b16 %v3264, %v3263
  %v3433 = vpack.c.b16 %v3266, %v3265
  %v3434 = vpack.c.b16 %v3268, %v3267
  %v3435 = vpack.c.b16 %v3270, %v3269
  %v3436 = vpack.c.b16 %v3272, %v3271
  %v3437 = vpack.c.b16 %v3274, %v3273
  %v3438 = vpack.c.b16 %v3276, %v3275
  %v3439 = vpack.c.b16 %v3278, %v3277
  %v3440 = vpack.c.b16 %v3280, %v3279
  %v3441 = vpack.c.b16 %v3282, %v3281
  %v3442 = vpack.c.b16 %v3284, %v3283
  %v3443 = vpack.c.b16 %v3286, %v3285
  %v3444 = vpack.c.b16 %v3288, %v3287
  %v3445 = vpack.c.b16 %v3290, %v3289
  %v3446 = vpack.c.b16 %v3292, %v3291
  %v3447 = vpack.c.b16 %v3294, %v3293
  %v3448 = vpack.c.b16 %v3296, %v3295
  %v3449 = vpack.c.b16 %v3298, %v3297
  %v3450 = vpack.c.b16 %v3300, %v3299
  %v3451 = vpack.c.b16 %v3302, %v3301
  %v3452 = vpack.c.b16 %v3304, %v3303
  %v3453 = vpack.c.b16 %v3306, %v3305
  %v3454 = vpack.c.b16 %v3308, %v3307
  %v3455 = vpack.c.b16 %v3310, %v3309
  %v3456 = vpack.c.b16 %v3312, %v3311
  %v3457 = vpack.c.b16 %v3314, %v3313
  %v3458 = vpack.c.b16 %v3316, %v3315
  %v3459 = vpack.c.b16 %v3318, %v3317
  %v3460 = vpack.c.b16 %v3320, %v3319
  %v3461 = vpack.c.b16 %v3322, %v3321
  %v3462 = vpack.c.b16 %v3324, %v3323
  %v3463 = vpack.c.b16 %v3326, %v3325
  %v3464 = vpack.c.b16 %v3328, %v3327
  %v3465 = vpack.c.b16 %v3330, %v3329
  %v3466 = vpack.c.b16 %v3332, %v3331
  %v3467 = vpack.c.b16 %v3334, %v3333
  %v3468 = vpack.c.b16 %v3336, %v3335
  %v3469 = vpack.c.b16 %v3338, %v3337
  %v3470 = vpack.c.b16 %v3340, %v3339
  %v3471 = vpack.c.b16 %v3342, %v3341
  %v3472 = vpack.c.b16 %v3344, %v3343
  %v3473 = vpack.c.b16 %v3346, %v3345
  %v3474 = vpack.c.b16 %v3348, %v3347
  %v3475 = vpack.c.b16 %v3350, %v3349
  %v3476 = vpack.c.b16 %v3352, %v3351
  %v3477 = vpack.c.b16 %v3354, %v3353
  %v3478 = vpack.c.b16 %v3356, %v3355
  %v3479 = vpack.c.b16 %v3358, %v3357
  %v3480 = vpack.c.b16 %v3360, %v3359
  %v3481 = vpack.c.b16 %v3362, %v3361
  %v3482 = vpack.c.b16 %v3364, %v3363
  %v3483 = vpack.c.b16 %v3366, %v3365
  %v3484 = vpack.c.b16 %v3368, %v3367
  %v3485 = vpack.c.b16 %v3370, %v3369
  %v3486 = vpack.c.b16 %v3372, %v3371
  %v3487 = vpack.c.b16 %v3374, %v3373
  %v3488 = vpack.c.b16 %v3376, %v3375
  %v3489 = vpack.c.b16 %v3378, %v3377
  %v3490 = vpack.c.b16 %v3380, %v3379
  %v3491 = vpack.c.b16 %v3382, %v3381
  %v3492 = vpack.c.b16 %v3384, %v3383
  %v3493 = vpack.c.b16 %v3386, %v3385
  %v3494 = vpack.c.b16 %v3388, %v3387
  %v3495 = vpack.c.b16 %v3390, %v3389
  %v3496 = vpack.c.b16 %v3392, %v3391
  %v3497 = vpack.c.b16 %v3394, %v3393
  %v3498 = vpack.c.b16 %v3396, %v3395
  %v3499 = vpack.c.b16 %v3398, %v3397
  %v3500 = vpack.c.b16 %v3400, %v3399
  %v3501 = vpack.c.b16 %v3402, %v3401
  %v3502 = vpack.c.b16 %v3404, %v3403
  %vm3503 = vcmask 523264
  %v3505 = vsel %vm3503, %v3405, 0
  %v3508 = vsel %vm3503, %v3406, 0
  %v3511 = vsel %vm3503, %v3407, 0
  %v3514 = vsel %vm3503, %v3408, 0
  %v3517 = vsel %vm3503, %v3409, 0
  %v3520 = vsel %vm3503, %v3410, 0
  %v3523 = vsel %vm3503, %v3411, 0
  %v3526 = vsel %vm3503, %v3412, 0
  %v3529 = vsel %vm3503, %v3413, 0
  %v3532 = vsel %vm3503, %v3414, 0
  %v3535 = vsel %vm3503, %v3415, 0
  %v3538 = vsel %vm3503, %v3416, 0
  %v3541 = vsel %vm3503, %v3417, 0
  %v3544 = vsel %vm3503, %v3418, 0
  %v3547 = vsel %vm3503, %v3419, 0
  %v3550 = vsel %vm3503, %v3420, 0
  %v3553 = vsel %vm3503, %v3421, 0
  %v3556 = vsel %vm3503, %v3422, 0
  %v3559 = vsel %vm3503, %v3423, 0
  %v3562 = vsel %vm3503, %v3424, 0
  %v3565 = vsel %vm3503, %v3425, 0
  %v3568 = vsel %vm3503, %v3426, 0
  %v3571 = vsel %vm3503, %v3427, 0
  %v3574 = vsel %vm3503, %v3428, 0
  %v3577 = vsel %vm3503, %v3429, 0
  %v3580 = vsel %vm3503, %v3430, 0
  %v3583 = vsel %vm3503, %v3431, 0
  %v3586 = vsel %vm3503, %v3432, 0
  %v3589 = vsel %vm3503, %v3433, 0
  %v3592 = vsel %vm3503, %v3434, 0
  %v3595 = vsel %vm3503, %v3435, 0
  %v3598 = vsel %vm3503, %v3436, 0
  %v3601 = vsel %vm3503, %v3437, 0
  %v3604 = vsel %vm3503, %v3438, 0
  %v3607 = vsel %vm3503, %v3439, 0
  %v3610 = vsel %vm3503, %v3440, 0
  %v3613 = vsel %vm3503, %v3441, 0
  %v3616 = vsel %vm3503, %v3442, 0
  %v3619 = vsel %vm3503, %v3443, 0
  %v3622 = vsel %vm3503, %v3444, 0
  %v3625 = vsel %vm3503, %v3445, 0
  %v3628 = vsel %vm3503, %v3446, 0
  %v3631 = vsel %vm3503, %v3447, 0
  %v3634 = vsel %vm3503, %v3448, 0
  %v3637 = vsel %vm3503, %v3449, 0
  %v3640 = vsel %vm3503, %v3450, 0
  %v3643 = vsel %vm3503, %v3451, 0
  %v3646 = vsel %vm3503, %v3452, 0
  %v3649 = vsel %vm3503, %v3453, 0
  %v3652 = vsel %vm3503, %v3454, 0
  %v3655 = vsel %vm3503, %v3455, 0
  %v3658 = vsel %vm3503, %v3456, 0
  %v3661 = vsel %vm3503, %v3457, 0
  %v3664 = vsel %vm3503, %v3458, 0
  %v3667 = vsel %vm3503, %v3459, 0
  %v3670 = vsel %vm3503, %v3460, 0
  %v3673 = vsel %vm3503, %v3461, 0
  %v3676 = vsel %vm3503, %v3462, 0
  %v3679 = vsel %vm3503, %v3463, 0
  %v3682 = vsel %vm3503, %v3464, 0
  %v3685 = vsel %vm3503, %v3465, 0
  %v3688 = vsel %vm3503, %v3466, 0
  %v3691 = vsel %vm3503, %v3467, 0
  %v3694 = vsel %vm3503, %v3468, 0
  %v3697 = vsel %vm3503, %v3469, 0
  %v3700 = vsel %vm3503, %v3470, 0
  %v3703 = vsel %vm3503, %v3471, 0
  %v3706 = vsel %vm3503, %v3472, 0
  %v3709 = vsel %vm3503, %v3473, 0
  %v3712 = vsel %vm3503, %v3474, 0
  %v3715 = vsel %vm3503, %v3475, 0
  %v3718 = vsel %vm3503, %v3476, 0
  %v3721 = vsel %vm3503, %v3477, 0
  %v3724 = vsel %vm3503, %v3478, 0
  %v3727 = vsel %vm3503, %v3479, 0
  %v3730 = vsel %vm3503, %v3480, 0
  %v3733 = vsel %vm3503, %v3481, 0
  %v3736 = vsel %vm3503, %v3482, 0
  %v3739 = vsel %vm3503, %v3483, 0
  %v3742 = vsel %vm3503, %v3484, 0
  %v3745 = vsel %vm3503, %v3485, 0
  %v3748 = vsel %vm3503, %v3486, 0
  %v3751 = vsel %vm3503, %v3487, 0
  %v3754 = vsel %vm3503, %v3488, 0
  %v3757 = vsel %vm3503, %v3489, 0
  %v3760 = vsel %vm3503, %v3490, 0
  %v3763 = vsel %vm3503, %v3491, 0
  %v3766 = vsel %vm3503, %v3492, 0
  %v3769 = vsel %vm3503, %v3493, 0
  %v3772 = vsel %vm3503, %v3494, 0
  %v3775 = vsel %vm3503, %v3495, 0
  %v3778 = vsel %vm3503, %v3496, 0
  %v3781 = vsel %vm3503, %v3497, 0
  %v3784 = vsel %vm3503, %v3498, 0
  %v3787 = vsel %vm3503, %v3499, 0
  %v3790 = vsel %vm3503, %v3500, 0
  %v3793 = vsel %vm3503, %v3501, 0
  %v3796 = vsel %vm3503, %v3502, 0
  %3798 = vmatprep.subr.bf16.mxu0 0
  %3799 = vmatpush1.bf16.msra.mxu0 %v1637
  %3800 = vmatprep.subr.bf16.mxu0 0
  %3801 = vmatpush1.bf16.msra.mxu0 %v1638
  %3802 = vmatprep.subr.bf16.mxu0 0
  %3803 = vmatpush1.bf16.msra.mxu0 %v1639
  %3804 = vmatprep.subr.bf16.mxu0 0
  %3805 = vmatpush1.bf16.msra.mxu0 %v1640
  %3806 = vmatprep.subr.bf16.mxu0 0
  %3807 = vmatpush1.bf16.msra.mxu0 0
  %3808 = vmatprep.subr.bf16.mxu0 0
  %3809 = vmatpush1.bf16.msra.mxu0 0
  %3810 = vmatprep.subr.bf16.mxu0 0
  %3811 = vmatpush1.bf16.msra.mxu0 0
  %3812 = vmatprep.subr.bf16.mxu0 0
  %3813 = vmatpush1.bf16.msra.mxu0 0
  %3814 = vmatprep.subr.bf16.mxu0 0
  %3815 = vmatpush1.bf16.msra.mxu0 0
  %3816 = vmatprep.subr.bf16.mxu0 0
  %3817 = vmatpush1.bf16.msra.mxu0 0
  %3818 = vmatprep.subr.bf16.mxu0 0
  %3819 = vmatpush1.bf16.msra.mxu0 0
  %3820 = vmatprep.subr.bf16.mxu0 0
  %3821 = vmatpush1.bf16.msra.mxu0 0
  %3822 = vmatprep.subr.bf16.mxu0 0
  %3823 = vmatpush1.bf16.msra.mxu0 0
  %3824 = vmatprep.subr.bf16.mxu0 0
  %3825 = vmatpush1.bf16.msra.mxu0 0
  %3826 = vmatprep.subr.bf16.mxu0 0
  %3827 = vmatpush1.bf16.msra.mxu0 0
  %3828 = vmatprep.subr.bf16.mxu0 0
  %3829 = vmatpush1.bf16.msra.mxu0 0
  %3830 = vmatprep.mubr.bf16.mxu0 0
  %3831 = vmatmul.mubr.bf16.gmra.mrb[0].mxu0 %v3505
  %v3832 = vpop.f32.mrb[0].mxu0
  %v3833 = vadd.f32 %v2036, %v3832
  %v3834 = vpop.f32.mrb[0].mxu0
  %v3835 = vpop.f32.mrb[0].mxu0
  %v3836 = vadd.f32 %v2041, %v3835
  %v3837 = vpop.f32.mrb[0].mxu0
  %3838 = vmatprep.mubr.bf16.mxu0 0
  %3839 = vmatmul.mubr.bf16.gmra.mrb[0].mxu0 %v3508
  %v3840 = vpop.f32.mrb[0].mxu0
  %v3841 = vadd.f32 %v2046, %v3840
  %v3842 = vpop.f32.mrb[0].mxu0
  %v3843 = vpop.f32.mrb[0].mxu0
  %v3844 = vadd.f32 %v2051, %v3843
  %v3845 = vpop.f32.mrb[0].mxu0
  %3846 = vmatprep.mubr.bf16.mxu0 0
  %3847 = vmatmul.mubr.bf16.gmra.mrb[0].mxu0 %v3511
  %v3848 = vpop.f32.mrb[0].mxu0
  %v3849 = vadd.f32 %v2056, %v3848
  %v3850 = vpop.f32.mrb[0].mxu0
  %v3851 = vpop.f32.mrb[0].mxu0
  %v3852 = vadd.f32 %v2061, %v3851
  %v3853 = vpop.f32.mrb[0].mxu0
  %3854 = vmatprep.mubr.bf16.mxu0 0
  %3855 = vmatmul.mubr.bf16.gmra.mrb[0].mxu0 %v3514
  %v3856 = vpop.f32.mrb[0].mxu0
  %v3857 = vadd.f32 %v2066, %v3856
  %v3858 = vpop.f32.mrb[0].mxu0
  %v3859 = vpop.f32.mrb[0].mxu0
  %v3860 = vadd.f32 %v2071, %v3859
  %v3861 = vpop.f32.mrb[0].mxu0
  %3862 = vmatprep.mubr.bf16.mxu0 0
  %3863 = vmatmul.mubr.bf16.gmra.mrb[0].mxu0 %v3517
  %v3864 = vpop.f32.mrb[0].mxu0
  %v3865 = vadd.f32 %v2076, %v3864
  %v3866 = vpop.f32.mrb[0].mxu0
  %v3867 = vpop.f32.mrb[0].mxu0
  %v3868 = vadd.f32 %v2081, %v3867
  %v3869 = vpop.f32.mrb[0].mxu0
  %3870 = vmatprep.mubr.bf16.mxu0 0
  %3871 = vmatmul.mubr.bf16.gmra.mrb[0].mxu0 %v3520
  %v3872 = vpop.f32.mrb[0].mxu0
  %v3873 = vadd.f32 %v2086, %v3872
  %v3874 = vpop.f32.mrb[0].mxu0
  %v3875 = vpop.f32.mrb[0].mxu0
  %v3876 = vadd.f32 %v2091, %v3875
  %v3877 = vpop.f32.mrb[0].mxu0
  %3878 = vmatprep.mubr.bf16.mxu0 0
  %3879 = vmatmul.mubr.bf16.gmra.mrb[0].mxu0 %v3523
  %v3880 = vpop.f32.mrb[0].mxu0
  %v3881 = vadd.f32 %v2096, %v3880
  %v3882 = vpop.f32.mrb[0].mxu0
  %v3883 = vpop.f32.mrb[0].mxu0
  %v3884 = vadd.f32 %v2101, %v3883
  %v3885 = vpop.f32.mrb[0].mxu0
  %3886 = vmatprep.mubr.bf16.mxu0 0
  %3887 = vmatmul.mubr.bf16.gmra.mrb[0].mxu0 %v3526
  %v3888 = vpop.f32.mrb[0].mxu0
  %v3889 = vadd.f32 %v2106, %v3888
  %v3890 = vpop.f32.mrb[0].mxu0
  %v3891 = vpop.f32.mrb[0].mxu0
  %v3892 = vadd.f32 %v2111, %v3891
  %v3893 = vpop.f32.mrb[0].mxu0
  %3894 = vmatprep.mubr.bf16.mxu0 0
  %3895 = vmatmul.mubr.bf16.gmra.mrb[0].mxu0 %v3529
  %v3896 = vpop.f32.mrb[0].mxu0
  %v3897 = vadd.f32 %v2116, %v3896
  %v3898 = vpop.f32.mrb[0].mxu0
  %v3899 = vpop.f32.mrb[0].mxu0
  %v3900 = vadd.f32 %v2121, %v3899
  %v3901 = vpop.f32.mrb[0].mxu0
  %3902 = vmatprep.mubr.bf16.mxu0 0
  %3903 = vmatmul.mubr.bf16.gmra.mrb[0].mxu0 %v3532
  %v3904 = vpop.f32.mrb[0].mxu0
  %v3905 = vadd.f32 %v2126, %v3904
  %v3906 = vpop.f32.mrb[0].mxu0
  %v3907 = vpop.f32.mrb[0].mxu0
  %v3908 = vadd.f32 %v2131, %v3907
  %v3909 = vpop.f32.mrb[0].mxu0
  %3910 = vmatprep.mubr.bf16.mxu0 0
  %3911 = vmatmul.mubr.bf16.gmra.mrb[0].mxu0 %v3535
  %v3912 = vpop.f32.mrb[0].mxu0
  %v3913 = vadd.f32 %v2136, %v3912
  %v3914 = vpop.f32.mrb[0].mxu0
  %v3915 = vpop.f32.mrb[0].mxu0
  %v3916 = vadd.f32 %v2141, %v3915
  %v3917 = vpop.f32.mrb[0].mxu0
  %3918 = vmatprep.mubr.bf16.mxu0 0
  %3919 = vmatmul.mubr.bf16.gmra.mrb[0].mxu0 %v3538
  %v3920 = vpop.f32.mrb[0].mxu0
  %v3921 = vadd.f32 %v2146, %v3920
  %v3922 = vpop.f32.mrb[0].mxu0
  %v3923 = vpop.f32.mrb[0].mxu0
  %v3924 = vadd.f32 %v2151, %v3923
  %v3925 = vpop.f32.mrb[0].mxu0
  %3926 = vmatprep.mubr.bf16.mxu0 0
  %3927 = vmatmul.mubr.bf16.gmra.mrb[0].mxu0 %v3541
  %v3928 = vpop.f32.mrb[0].mxu0
  %v3929 = vadd.f32 %v2156, %v3928
  %v3930 = vpop.f32.mrb[0].mxu0
  %v3931 = vpop.f32.mrb[0].mxu0
  %v3932 = vadd.f32 %v2161, %v3931
  %v3933 = vpop.f32.mrb[0].mxu0
  %3934 = vmatprep.mubr.bf16.mxu0 0
  %3935 = vmatmul.mubr.bf16.gmra.mrb[0].mxu0 %v3544
  %v3936 = vpop.f32.mrb[0].mxu0
  %v3937 = vadd.f32 %v2166, %v3936
  %v3938 = vpop.f32.mrb[0].mxu0
  %v3939 = vpop.f32.mrb[0].mxu0
  %v3940 = vadd.f32 %v2171, %v3939
  %v3941 = vpop.f32.mrb[0].mxu0
  %3942 = vmatprep.mubr.bf16.mxu0 0
  %3943 = vmatmul.mubr.bf16.gmra.mrb[0].mxu0 %v3547
  %v3944 = vpop.f32.mrb[0].mxu0
  %v3945 = vadd.f32 %v2176, %v3944
  %v3946 = vpop.f32.mrb[0].mxu0
  %v3947 = vpop.f32.mrb[0].mxu0
  %v3948 = vadd.f32 %v2181, %v3947
  %v3949 = vpop.f32.mrb[0].mxu0
  %3950 = vmatprep.mubr.bf16.mxu0 0
  %3951 = vmatmul.mubr.bf16.gmra.mrb[0].mxu0 %v3550
  %v3952 = vpop.f32.mrb[0].mxu0
  %v3953 = vadd.f32 %v2186, %v3952
  %v3954 = vpop.f32.mrb[0].mxu0
  %v3955 = vpop.f32.mrb[0].mxu0
  %v3956 = vadd.f32 %v2191, %v3955
  %v3957 = vpop.f32.mrb[0].mxu0
  %3958 = vmatprep.mubr.bf16.mxu0 0
  %3959 = vmatmul.mubr.bf16.gmra.mrb[0].mxu0 %v3553
  %v3960 = vpop.f32.mrb[0].mxu0
  %v3961 = vadd.f32 %v2196, %v3960
  %v3962 = vpop.f32.mrb[0].mxu0
  %v3963 = vpop.f32.mrb[0].mxu0
  %v3964 = vadd.f32 %v2201, %v3963
  %v3965 = vpop.f32.mrb[0].mxu0
  %3966 = vmatprep.mubr.bf16.mxu0 0
  %3967 = vmatmul.mubr.bf16.gmra.mrb[0].mxu0 %v3556
  %v3968 = vpop.f32.mrb[0].mxu0
  %v3969 = vadd.f32 %v2206, %v3968
  %v3970 = vpop.f32.mrb[0].mxu0
  %v3971 = vpop.f32.mrb[0].mxu0
  %v3972 = vadd.f32 %v2211, %v3971
  %v3973 = vpop.f32.mrb[0].mxu0
  %3974 = vmatprep.mubr.bf16.mxu0 0
  %3975 = vmatmul.mubr.bf16.gmra.mrb[0].mxu0 %v3559
  %v3976 = vpop.f32.mrb[0].mxu0
  %v3977 = vadd.f32 %v2216, %v3976
  %v3978 = vpop.f32.mrb[0].mxu0
  %v3979 = vpop.f32.mrb[0].mxu0
  %v3980 = vadd.f32 %v2221, %v3979
  %v3981 = vpop.f32.mrb[0].mxu0
  %3982 = vmatprep.mubr.bf16.mxu0 0
  %3983 = vmatmul.mubr.bf16.gmra.mrb[0].mxu0 %v3562
  %v3984 = vpop.f32.mrb[0].mxu0
  %v3985 = vadd.f32 %v2226, %v3984
  %v3986 = vpop.f32.mrb[0].mxu0
  %v3987 = vpop.f32.mrb[0].mxu0
  %v3988 = vadd.f32 %v2231, %v3987
  %v3989 = vpop.f32.mrb[0].mxu0
  %3990 = vmatprep.mubr.bf16.mxu0 0
  %3991 = vmatmul.mubr.bf16.gmra.mrb[0].mxu0 %v3565
  %v3992 = vpop.f32.mrb[0].mxu0
  %v3993 = vadd.f32 %v2236, %v3992
  %v3994 = vpop.f32.mrb[0].mxu0
  %v3995 = vpop.f32.mrb[0].mxu0
  %v3996 = vadd.f32 %v2241, %v3995
  %v3997 = vpop.f32.mrb[0].mxu0
  %3998 = vmatprep.mubr.bf16.mxu0 0
  %3999 = vmatmul.mubr.bf16.gmra.mrb[0].mxu0 %v3568
  %v4000 = vpop.f32.mrb[0].mxu0
  %v4001 = vadd.f32 %v2246, %v4000
  %v4002 = vpop.f32.mrb[0].mxu0
  %v4003 = vpop.f32.mrb[0].mxu0
  %v4004 = vadd.f32 %v2251, %v4003
  %v4005 = vpop.f32.mrb[0].mxu0
  %4006 = vmatprep.mubr.bf16.mxu0 0
  %4007 = vmatmul.mubr.bf16.gmra.mrb[0].mxu0 %v3571
  %v4008 = vpop.f32.mrb[0].mxu0
  %v4009 = vadd.f32 %v2256, %v4008
  %v4010 = vpop.f32.mrb[0].mxu0
  %v4011 = vpop.f32.mrb[0].mxu0
  %v4012 = vadd.f32 %v2261, %v4011
  %v4013 = vpop.f32.mrb[0].mxu0
  %4014 = vmatprep.mubr.bf16.mxu0 0
  %4015 = vmatmul.mubr.bf16.gmra.mrb[0].mxu0 %v3574
  %v4016 = vpop.f32.mrb[0].mxu0
  %v4017 = vadd.f32 %v2266, %v4016
  %v4018 = vpop.f32.mrb[0].mxu0
  %v4019 = vpop.f32.mrb[0].mxu0
  %v4020 = vadd.f32 %v2271, %v4019
  %v4021 = vpop.f32.mrb[0].mxu0
  %4022 = vmatprep.mubr.bf16.mxu0 0
  %4023 = vmatmul.mubr.bf16.gmra.mrb[0].mxu0 %v3577
  %v4024 = vpop.f32.mrb[0].mxu0
  %v4025 = vadd.f32 %v2276, %v4024
  %v4026 = vpop.f32.mrb[0].mxu0
  %v4027 = vpop.f32.mrb[0].mxu0
  %v4028 = vadd.f32 %v2281, %v4027
  %v4029 = vpop.f32.mrb[0].mxu0
  %4030 = vmatprep.mubr.bf16.mxu0 0
  %4031 = vmatmul.mubr.bf16.gmra.mrb[0].mxu0 %v3580
  %v4032 = vpop.f32.mrb[0].mxu0
  %v4033 = vadd.f32 %v2286, %v4032
  %v4034 = vpop.f32.mrb[0].mxu0
  %v4035 = vpop.f32.mrb[0].mxu0
  %v4036 = vadd.f32 %v2291, %v4035
  %v4037 = vpop.f32.mrb[0].mxu0
  %4038 = vmatprep.mubr.bf16.mxu0 0
  %4039 = vmatmul.mubr.bf16.gmra.mrb[0].mxu0 %v3583
  %v4040 = vpop.f32.mrb[0].mxu0
  %v4041 = vadd.f32 %v2296, %v4040
  %v4042 = vpop.f32.mrb[0].mxu0
  %v4043 = vpop.f32.mrb[0].mxu0
  %v4044 = vadd.f32 %v2301, %v4043
  %v4045 = vpop.f32.mrb[0].mxu0
  %4046 = vmatprep.mubr.bf16.mxu0 0
  %4047 = vmatmul.mubr.bf16.gmra.mrb[0].mxu0 %v3586
  %v4048 = vpop.f32.mrb[0].mxu0
  %v4049 = vadd.f32 %v2306, %v4048
  %v4050 = vpop.f32.mrb[0].mxu0
  %v4051 = vpop.f32.mrb[0].mxu0
  %v4052 = vadd.f32 %v2311, %v4051
  %v4053 = vpop.f32.mrb[0].mxu0
  %4054 = vmatprep.mubr.bf16.mxu0 0
  %4055 = vmatmul.mubr.bf16.gmra.mrb[0].mxu0 %v3589
  %v4056 = vpop.f32.mrb[0].mxu0
  %v4057 = vadd.f32 %v2316, %v4056
  %v4058 = vpop.f32.mrb[0].mxu0
  %v4059 = vpop.f32.mrb[0].mxu0
  %v4060 = vadd.f32 %v2321, %v4059
  %v4061 = vpop.f32.mrb[0].mxu0
  %4062 = vmatprep.mubr.bf16.mxu0 0
  %4063 = vmatmul.mubr.bf16.gmra.mrb[0].mxu0 %v3592
  %v4064 = vpop.f32.mrb[0].mxu0
  %v4065 = vadd.f32 %v2326, %v4064
  %v4066 = vpop.f32.mrb[0].mxu0
  %v4067 = vpop.f32.mrb[0].mxu0
  %v4068 = vadd.f32 %v2331, %v4067
  %v4069 = vpop.f32.mrb[0].mxu0
  %4070 = vmatprep.mubr.bf16.mxu0 0
  %4071 = vmatmul.mubr.bf16.gmra.mrb[0].mxu0 %v3595
  %v4072 = vpop.f32.mrb[0].mxu0
  %v4073 = vadd.f32 %v2336, %v4072
  %v4074 = vpop.f32.mrb[0].mxu0
  %v4075 = vpop.f32.mrb[0].mxu0
  %v4076 = vadd.f32 %v2341, %v4075
  %v4077 = vpop.f32.mrb[0].mxu0
  %4078 = vmatprep.mubr.bf16.mxu0 0
  %4079 = vmatmul.mubr.bf16.gmra.mrb[0].mxu0 %v3598
  %v4080 = vpop.f32.mrb[0].mxu0
  %v4081 = vadd.f32 %v2346, %v4080
  %v4082 = vpop.f32.mrb[0].mxu0
  %v4083 = vpop.f32.mrb[0].mxu0
  %v4084 = vadd.f32 %v2351, %v4083
  %v4085 = vpop.f32.mrb[0].mxu0
  %4086 = vmatprep.mubr.bf16.mxu0 0
  %4087 = vmatmul.mubr.bf16.gmra.mrb[0].mxu0 %v3601
  %v4088 = vpop.f32.mrb[0].mxu0
  %v4089 = vadd.f32 %v2356, %v4088
  %v4090 = vpop.f32.mrb[0].mxu0
  %v4091 = vpop.f32.mrb[0].mxu0
  %v4092 = vadd.f32 %v2361, %v4091
  %v4093 = vpop.f32.mrb[0].mxu0
  %4094 = vmatprep.mubr.bf16.mxu0 0
  %4095 = vmatmul.mubr.bf16.gmra.mrb[0].mxu0 %v3604
  %v4096 = vpop.f32.mrb[0].mxu0
  %v4097 = vadd.f32 %v2366, %v4096
  %v4098 = vpop.f32.mrb[0].mxu0
  %v4099 = vpop.f32.mrb[0].mxu0
  %v4100 = vadd.f32 %v2371, %v4099
  %v4101 = vpop.f32.mrb[0].mxu0
  %4102 = vmatprep.mubr.bf16.mxu0 0
  %4103 = vmatmul.mubr.bf16.gmra.mrb[0].mxu0 %v3607
  %v4104 = vpop.f32.mrb[0].mxu0
  %v4105 = vadd.f32 %v2376, %v4104
  %v4106 = vpop.f32.mrb[0].mxu0
  %v4107 = vpop.f32.mrb[0].mxu0
  %v4108 = vadd.f32 %v2381, %v4107
  %v4109 = vpop.f32.mrb[0].mxu0
  %4110 = vmatprep.mubr.bf16.mxu0 0
  %4111 = vmatmul.mubr.bf16.gmra.mrb[0].mxu0 %v3610
  %v4112 = vpop.f32.mrb[0].mxu0
  %v4113 = vadd.f32 %v2386, %v4112
  %v4114 = vpop.f32.mrb[0].mxu0
  %v4115 = vpop.f32.mrb[0].mxu0
  %v4116 = vadd.f32 %v2391, %v4115
  %v4117 = vpop.f32.mrb[0].mxu0
  %4118 = vmatprep.mubr.bf16.mxu0 0
  %4119 = vmatmul.mubr.bf16.gmra.mrb[0].mxu0 %v3613
  %v4120 = vpop.f32.mrb[0].mxu0
  %v4121 = vadd.f32 %v2396, %v4120
  %v4122 = vpop.f32.mrb[0].mxu0
  %v4123 = vpop.f32.mrb[0].mxu0
  %v4124 = vadd.f32 %v2401, %v4123
  %v4125 = vpop.f32.mrb[0].mxu0
  %4126 = vmatprep.mubr.bf16.mxu0 0
  %4127 = vmatmul.mubr.bf16.gmra.mrb[0].mxu0 %v3616
  %v4128 = vpop.f32.mrb[0].mxu0
  %v4129 = vadd.f32 %v2406, %v4128
  %v4130 = vpop.f32.mrb[0].mxu0
  %v4131 = vpop.f32.mrb[0].mxu0
  %v4132 = vadd.f32 %v2411, %v4131
  %v4133 = vpop.f32.mrb[0].mxu0
  %4134 = vmatprep.mubr.bf16.mxu0 0
  %4135 = vmatmul.mubr.bf16.gmra.mrb[0].mxu0 %v3619
  %v4136 = vpop.f32.mrb[0].mxu0
  %v4137 = vadd.f32 %v2416, %v4136
  %v4138 = vpop.f32.mrb[0].mxu0
  %v4139 = vpop.f32.mrb[0].mxu0
  %v4140 = vadd.f32 %v2421, %v4139
  %v4141 = vpop.f32.mrb[0].mxu0
  %4142 = vmatprep.mubr.bf16.mxu0 0
  %4143 = vmatmul.mubr.bf16.gmra.mrb[0].mxu0 %v3622
  %v4144 = vpop.f32.mrb[0].mxu0
  %v4145 = vadd.f32 %v2426, %v4144
  %v4146 = vpop.f32.mrb[0].mxu0
  %v4147 = vpop.f32.mrb[0].mxu0
  %v4148 = vadd.f32 %v2431, %v4147
  %v4149 = vpop.f32.mrb[0].mxu0
  %4150 = vmatprep.mubr.bf16.mxu0 0
  %4151 = vmatmul.mubr.bf16.gmra.mrb[0].mxu0 %v3625
  %v4152 = vpop.f32.mrb[0].mxu0
  %v4153 = vadd.f32 %v2436, %v4152
  %v4154 = vpop.f32.mrb[0].mxu0
  %v4155 = vpop.f32.mrb[0].mxu0
  %v4156 = vadd.f32 %v2441, %v4155
  %v4157 = vpop.f32.mrb[0].mxu0
  %4158 = vmatprep.mubr.bf16.mxu0 0
  %4159 = vmatmul.mubr.bf16.gmra.mrb[0].mxu0 %v3628
  %v4160 = vpop.f32.mrb[0].mxu0
  %v4161 = vadd.f32 %v2446, %v4160
  %v4162 = vpop.f32.mrb[0].mxu0
  %v4163 = vpop.f32.mrb[0].mxu0
  %v4164 = vadd.f32 %v2451, %v4163
  %v4165 = vpop.f32.mrb[0].mxu0
  %4166 = vmatprep.mubr.bf16.mxu0 0
  %4167 = vmatmul.mubr.bf16.gmra.mrb[0].mxu0 %v3631
  %v4168 = vpop.f32.mrb[0].mxu0
  %v4169 = vadd.f32 %v2456, %v4168
  %v4170 = vpop.f32.mrb[0].mxu0
  %v4171 = vpop.f32.mrb[0].mxu0
  %v4172 = vadd.f32 %v2461, %v4171
  %v4173 = vpop.f32.mrb[0].mxu0
  %4174 = vmatprep.mubr.bf16.mxu0 0
  %4175 = vmatmul.mubr.bf16.gmra.mrb[0].mxu0 %v3634
  %v4176 = vpop.f32.mrb[0].mxu0
  %v4177 = vadd.f32 %v2466, %v4176
  %v4178 = vpop.f32.mrb[0].mxu0
  %v4179 = vpop.f32.mrb[0].mxu0
  %v4180 = vadd.f32 %v2471, %v4179
  %v4181 = vpop.f32.mrb[0].mxu0
  %4182 = vmatprep.mubr.bf16.mxu0 0
  %4183 = vmatmul.mubr.bf16.gmra.mrb[0].mxu0 %v3637
  %v4184 = vpop.f32.mrb[0].mxu0
  %v4185 = vadd.f32 %v2476, %v4184
  %v4186 = vpop.f32.mrb[0].mxu0
  %v4187 = vpop.f32.mrb[0].mxu0
  %v4188 = vadd.f32 %v2481, %v4187
  %v4189 = vpop.f32.mrb[0].mxu0
  %4190 = vmatprep.mubr.bf16.mxu0 0
  %4191 = vmatmul.mubr.bf16.gmra.mrb[0].mxu0 %v3640
  %v4192 = vpop.f32.mrb[0].mxu0
  %v4193 = vadd.f32 %v2486, %v4192
  %v4194 = vpop.f32.mrb[0].mxu0
  %v4195 = vpop.f32.mrb[0].mxu0
  %v4196 = vadd.f32 %v2491, %v4195
  %v4197 = vpop.f32.mrb[0].mxu0
  %4198 = vmatprep.mubr.bf16.mxu0 0
  %4199 = vmatmul.mubr.bf16.gmra.mrb[0].mxu0 %v3643
  %v4200 = vpop.f32.mrb[0].mxu0
  %v4201 = vadd.f32 %v2496, %v4200
  %v4202 = vpop.f32.mrb[0].mxu0
  %v4203 = vpop.f32.mrb[0].mxu0
  %v4204 = vadd.f32 %v2501, %v4203
  %v4205 = vpop.f32.mrb[0].mxu0
  %4206 = vmatprep.mubr.bf16.mxu0 0
  %4207 = vmatmul.mubr.bf16.gmra.mrb[0].mxu0 %v3646
  %v4208 = vpop.f32.mrb[0].mxu0
  %v4209 = vadd.f32 %v2506, %v4208
  %v4210 = vpop.f32.mrb[0].mxu0
  %v4211 = vpop.f32.mrb[0].mxu0
  %v4212 = vadd.f32 %v2511, %v4211
  %v4213 = vpop.f32.mrb[0].mxu0
  %4214 = vmatprep.mubr.bf16.mxu0 0
  %4215 = vmatmul.mubr.bf16.gmra.mrb[0].mxu0 %v3649
  %v4216 = vpop.f32.mrb[0].mxu0
  %v4217 = vadd.f32 %v2516, %v4216
  %v4218 = vpop.f32.mrb[0].mxu0
  %v4219 = vpop.f32.mrb[0].mxu0
  %v4220 = vadd.f32 %v2521, %v4219
  %v4221 = vpop.f32.mrb[0].mxu0
  %4222 = vmatprep.mubr.bf16.mxu0 0
  %4223 = vmatmul.mubr.bf16.gmra.mrb[0].mxu0 %v3652
  %v4224 = vpop.f32.mrb[0].mxu0
  %v4225 = vadd.f32 %v2526, %v4224
  %v4226 = vpop.f32.mrb[0].mxu0
  %v4227 = vpop.f32.mrb[0].mxu0
  %v4228 = vadd.f32 %v2531, %v4227
  %v4229 = vpop.f32.mrb[0].mxu0
  %4230 = vmatprep.mubr.bf16.mxu0 0
  %4231 = vmatmul.mubr.bf16.gmra.mrb[0].mxu0 %v3655
  %v4232 = vpop.f32.mrb[0].mxu0
  %v4233 = vadd.f32 %v2536, %v4232
  %v4234 = vpop.f32.mrb[0].mxu0
  %v4235 = vpop.f32.mrb[0].mxu0
  %v4236 = vadd.f32 %v2541, %v4235
  %v4237 = vpop.f32.mrb[0].mxu0
  %4238 = vmatprep.mubr.bf16.mxu0 0
  %4239 = vmatmul.mubr.bf16.gmra.mrb[0].mxu0 %v3658
  %v4240 = vpop.f32.mrb[0].mxu0
  %v4241 = vadd.f32 %v2546, %v4240
  %v4242 = vpop.f32.mrb[0].mxu0
  %v4243 = vpop.f32.mrb[0].mxu0
  %v4244 = vadd.f32 %v2551, %v4243
  %v4245 = vpop.f32.mrb[0].mxu0
  %4246 = vmatprep.mubr.bf16.mxu0 0
  %4247 = vmatmul.mubr.bf16.gmra.mrb[0].mxu0 %v3661
  %v4248 = vpop.f32.mrb[0].mxu0
  %v4249 = vadd.f32 %v2556, %v4248
  %v4250 = vpop.f32.mrb[0].mxu0
  %v4251 = vpop.f32.mrb[0].mxu0
  %v4252 = vadd.f32 %v2561, %v4251
  %v4253 = vpop.f32.mrb[0].mxu0
  %4254 = vmatprep.mubr.bf16.mxu0 0
  %4255 = vmatmul.mubr.bf16.gmra.mrb[0].mxu0 %v3664
  %v4256 = vpop.f32.mrb[0].mxu0
  %v4257 = vadd.f32 %v2566, %v4256
  %v4258 = vpop.f32.mrb[0].mxu0
  %v4259 = vpop.f32.mrb[0].mxu0
  %v4260 = vadd.f32 %v2571, %v4259
  %v4261 = vpop.f32.mrb[0].mxu0
  %4262 = vmatprep.mubr.bf16.mxu0 0
  %4263 = vmatmul.mubr.bf16.gmra.mrb[0].mxu0 %v3667
  %v4264 = vpop.f32.mrb[0].mxu0
  %v4265 = vadd.f32 %v2576, %v4264
  %v4266 = vpop.f32.mrb[0].mxu0
  %v4267 = vpop.f32.mrb[0].mxu0
  %v4268 = vadd.f32 %v2581, %v4267
  %v4269 = vpop.f32.mrb[0].mxu0
  %4270 = vmatprep.mubr.bf16.mxu0 0
  %4271 = vmatmul.mubr.bf16.gmra.mrb[0].mxu0 %v3670
  %v4272 = vpop.f32.mrb[0].mxu0
  %v4273 = vadd.f32 %v2586, %v4272
  %v4274 = vpop.f32.mrb[0].mxu0
  %v4275 = vpop.f32.mrb[0].mxu0
  %v4276 = vadd.f32 %v2591, %v4275
  %v4277 = vpop.f32.mrb[0].mxu0
  %4278 = vmatprep.mubr.bf16.mxu0 0
  %4279 = vmatmul.mubr.bf16.gmra.mrb[0].mxu0 %v3673
  %v4280 = vpop.f32.mrb[0].mxu0
  %v4281 = vadd.f32 %v2596, %v4280
  %v4282 = vpop.f32.mrb[0].mxu0
  %v4283 = vpop.f32.mrb[0].mxu0
  %v4284 = vadd.f32 %v2601, %v4283
  %v4285 = vpop.f32.mrb[0].mxu0
  %4286 = vmatprep.mubr.bf16.mxu0 0
  %4287 = vmatmul.mubr.bf16.gmra.mrb[0].mxu0 %v3676
  %v4288 = vpop.f32.mrb[0].mxu0
  %v4289 = vadd.f32 %v2606, %v4288
  %v4290 = vpop.f32.mrb[0].mxu0
  %v4291 = vpop.f32.mrb[0].mxu0
  %v4292 = vadd.f32 %v2611, %v4291
  %v4293 = vpop.f32.mrb[0].mxu0
  %4294 = vmatprep.mubr.bf16.mxu0 0
  %4295 = vmatmul.mubr.bf16.gmra.mrb[0].mxu0 %v3679
  %v4296 = vpop.f32.mrb[0].mxu0
  %v4297 = vadd.f32 %v2616, %v4296
  %v4298 = vpop.f32.mrb[0].mxu0
  %v4299 = vpop.f32.mrb[0].mxu0
  %v4300 = vadd.f32 %v2621, %v4299
  %v4301 = vpop.f32.mrb[0].mxu0
  %4302 = vmatprep.mubr.bf16.mxu0 0
  %4303 = vmatmul.mubr.bf16.gmra.mrb[0].mxu0 %v3682
  %v4304 = vpop.f32.mrb[0].mxu0
  %v4305 = vadd.f32 %v2626, %v4304
  %v4306 = vpop.f32.mrb[0].mxu0
  %v4307 = vpop.f32.mrb[0].mxu0
  %v4308 = vadd.f32 %v2631, %v4307
  %v4309 = vpop.f32.mrb[0].mxu0
  %4310 = vmatprep.mubr.bf16.mxu0 0
  %4311 = vmatmul.mubr.bf16.gmra.mrb[0].mxu0 %v3685
  %v4312 = vpop.f32.mrb[0].mxu0
  %v4313 = vadd.f32 %v2636, %v4312
  %v4314 = vpop.f32.mrb[0].mxu0
  %v4315 = vpop.f32.mrb[0].mxu0
  %v4316 = vadd.f32 %v2641, %v4315
  %v4317 = vpop.f32.mrb[0].mxu0
  %4318 = vmatprep.mubr.bf16.mxu0 0
  %4319 = vmatmul.mubr.bf16.gmra.mrb[0].mxu0 %v3688
  %v4320 = vpop.f32.mrb[0].mxu0
  %v4321 = vadd.f32 %v2646, %v4320
  %v4322 = vpop.f32.mrb[0].mxu0
  %v4323 = vpop.f32.mrb[0].mxu0
  %v4324 = vadd.f32 %v2651, %v4323
  %v4325 = vpop.f32.mrb[0].mxu0
  %4326 = vmatprep.mubr.bf16.mxu0 0
  %4327 = vmatmul.mubr.bf16.gmra.mrb[0].mxu0 %v3691
  %v4328 = vpop.f32.mrb[0].mxu0
  %v4329 = vadd.f32 %v2656, %v4328
  %v4330 = vpop.f32.mrb[0].mxu0
  %v4331 = vpop.f32.mrb[0].mxu0
  %v4332 = vadd.f32 %v2661, %v4331
  %v4333 = vpop.f32.mrb[0].mxu0
  %4334 = vmatprep.mubr.bf16.mxu0 0
  %4335 = vmatmul.mubr.bf16.gmra.mrb[0].mxu0 %v3694
  %v4336 = vpop.f32.mrb[0].mxu0
  %v4337 = vadd.f32 %v2666, %v4336
  %v4338 = vpop.f32.mrb[0].mxu0
  %v4339 = vpop.f32.mrb[0].mxu0
  %v4340 = vadd.f32 %v2671, %v4339
  %v4341 = vpop.f32.mrb[0].mxu0
  %4342 = vmatprep.mubr.bf16.mxu0 0
  %4343 = vmatmul.mubr.bf16.gmra.mrb[0].mxu0 %v3697
  %v4344 = vpop.f32.mrb[0].mxu0
  %v4345 = vadd.f32 %v2676, %v4344
  %v4346 = vpop.f32.mrb[0].mxu0
  %v4347 = vpop.f32.mrb[0].mxu0
  %v4348 = vadd.f32 %v2681, %v4347
  %v4349 = vpop.f32.mrb[0].mxu0
  %4350 = vmatprep.mubr.bf16.mxu0 0
  %4351 = vmatmul.mubr.bf16.gmra.mrb[0].mxu0 %v3700
  %v4352 = vpop.f32.mrb[0].mxu0
  %v4353 = vadd.f32 %v2686, %v4352
  %v4354 = vpop.f32.mrb[0].mxu0
  %v4355 = vpop.f32.mrb[0].mxu0
  %v4356 = vadd.f32 %v2691, %v4355
  %v4357 = vpop.f32.mrb[0].mxu0
  %4358 = vmatprep.mubr.bf16.mxu0 0
  %4359 = vmatmul.mubr.bf16.gmra.mrb[0].mxu0 %v3703
  %v4360 = vpop.f32.mrb[0].mxu0
  %v4361 = vadd.f32 %v2696, %v4360
  %v4362 = vpop.f32.mrb[0].mxu0
  %v4363 = vpop.f32.mrb[0].mxu0
  %v4364 = vadd.f32 %v2701, %v4363
  %v4365 = vpop.f32.mrb[0].mxu0
  %4366 = vmatprep.mubr.bf16.mxu0 0
  %4367 = vmatmul.mubr.bf16.gmra.mrb[0].mxu0 %v3706
  %v4368 = vpop.f32.mrb[0].mxu0
  %v4369 = vadd.f32 %v2706, %v4368
  %v4370 = vpop.f32.mrb[0].mxu0
  %v4371 = vpop.f32.mrb[0].mxu0
  %v4372 = vadd.f32 %v2711, %v4371
  %v4373 = vpop.f32.mrb[0].mxu0
  %4374 = vmatprep.mubr.bf16.mxu0 0
  %4375 = vmatmul.mubr.bf16.gmra.mrb[0].mxu0 %v3709
  %v4376 = vpop.f32.mrb[0].mxu0
  %v4377 = vadd.f32 %v2716, %v4376
  %v4378 = vpop.f32.mrb[0].mxu0
  %v4379 = vpop.f32.mrb[0].mxu0
  %v4380 = vadd.f32 %v2721, %v4379
  %v4381 = vpop.f32.mrb[0].mxu0
  %4382 = vmatprep.mubr.bf16.mxu0 0
  %4383 = vmatmul.mubr.bf16.gmra.mrb[0].mxu0 %v3712
  %v4384 = vpop.f32.mrb[0].mxu0
  %v4385 = vadd.f32 %v2726, %v4384
  %v4386 = vpop.f32.mrb[0].mxu0
  %v4387 = vpop.f32.mrb[0].mxu0
  %v4388 = vadd.f32 %v2731, %v4387
  %v4389 = vpop.f32.mrb[0].mxu0
  %4390 = vmatprep.mubr.bf16.mxu0 0
  %4391 = vmatmul.mubr.bf16.gmra.mrb[0].mxu0 %v3715
  %v4392 = vpop.f32.mrb[0].mxu0
  %v4393 = vadd.f32 %v2736, %v4392
  %v4394 = vpop.f32.mrb[0].mxu0
  %v4395 = vpop.f32.mrb[0].mxu0
  %v4396 = vadd.f32 %v2741, %v4395
  %v4397 = vpop.f32.mrb[0].mxu0
  %4398 = vmatprep.mubr.bf16.mxu0 0
  %4399 = vmatmul.mubr.bf16.gmra.mrb[0].mxu0 %v3718
  %v4400 = vpop.f32.mrb[0].mxu0
  %v4401 = vadd.f32 %v2746, %v4400
  %v4402 = vpop.f32.mrb[0].mxu0
  %v4403 = vpop.f32.mrb[0].mxu0
  %v4404 = vadd.f32 %v2751, %v4403
  %v4405 = vpop.f32.mrb[0].mxu0
  %4406 = vmatprep.mubr.bf16.mxu0 0
  %4407 = vmatmul.mubr.bf16.gmra.mrb[0].mxu0 %v3721
  %v4408 = vpop.f32.mrb[0].mxu0
  %v4409 = vadd.f32 %v2756, %v4408
  %v4410 = vpop.f32.mrb[0].mxu0
  %v4411 = vpop.f32.mrb[0].mxu0
  %v4412 = vadd.f32 %v2761, %v4411
  %v4413 = vpop.f32.mrb[0].mxu0
  %4414 = vmatprep.mubr.bf16.mxu0 0
  %4415 = vmatmul.mubr.bf16.gmra.mrb[0].mxu0 %v3724
  %v4416 = vpop.f32.mrb[0].mxu0
  %v4417 = vadd.f32 %v2766, %v4416
  %v4418 = vpop.f32.mrb[0].mxu0
  %v4419 = vpop.f32.mrb[0].mxu0
  %v4420 = vadd.f32 %v2771, %v4419
  %v4421 = vpop.f32.mrb[0].mxu0
  %4422 = vmatprep.mubr.bf16.mxu0 0
  %4423 = vmatmul.mubr.bf16.gmra.mrb[0].mxu0 %v3727
  %v4424 = vpop.f32.mrb[0].mxu0
  %v4425 = vadd.f32 %v2776, %v4424
  %v4426 = vpop.f32.mrb[0].mxu0
  %v4427 = vpop.f32.mrb[0].mxu0
  %v4428 = vadd.f32 %v2781, %v4427
  %v4429 = vpop.f32.mrb[0].mxu0
  %4430 = vmatprep.mubr.bf16.mxu0 0
  %4431 = vmatmul.mubr.bf16.gmra.mrb[0].mxu0 %v3730
  %v4432 = vpop.f32.mrb[0].mxu0
  %v4433 = vadd.f32 %v2786, %v4432
  %v4434 = vpop.f32.mrb[0].mxu0
  %v4435 = vpop.f32.mrb[0].mxu0
  %v4436 = vadd.f32 %v2791, %v4435
  %v4437 = vpop.f32.mrb[0].mxu0
  %4438 = vmatprep.mubr.bf16.mxu0 0
  %4439 = vmatmul.mubr.bf16.gmra.mrb[0].mxu0 %v3733
  %v4440 = vpop.f32.mrb[0].mxu0
  %v4441 = vadd.f32 %v2796, %v4440
  %v4442 = vpop.f32.mrb[0].mxu0
  %v4443 = vpop.f32.mrb[0].mxu0
  %v4444 = vadd.f32 %v2801, %v4443
  %v4445 = vpop.f32.mrb[0].mxu0
  %4446 = vmatprep.mubr.bf16.mxu0 0
  %4447 = vmatmul.mubr.bf16.gmra.mrb[0].mxu0 %v3736
  %v4448 = vpop.f32.mrb[0].mxu0
  %v4449 = vadd.f32 %v2806, %v4448
  %v4450 = vpop.f32.mrb[0].mxu0
  %v4451 = vpop.f32.mrb[0].mxu0
  %v4452 = vadd.f32 %v2811, %v4451
  %v4453 = vpop.f32.mrb[0].mxu0
  %4454 = vmatprep.mubr.bf16.mxu0 0
  %4455 = vmatmul.mubr.bf16.gmra.mrb[0].mxu0 %v3739
  %v4456 = vpop.f32.mrb[0].mxu0
  %v4457 = vadd.f32 %v2816, %v4456
  %v4458 = vpop.f32.mrb[0].mxu0
  %v4459 = vpop.f32.mrb[0].mxu0
  %v4460 = vadd.f32 %v2821, %v4459
  %v4461 = vpop.f32.mrb[0].mxu0
  %4462 = vmatprep.mubr.bf16.mxu0 0
  %4463 = vmatmul.mubr.bf16.gmra.mrb[0].mxu0 %v3742
  %v4464 = vpop.f32.mrb[0].mxu0
  %v4465 = vadd.f32 %v2826, %v4464
  %v4466 = vpop.f32.mrb[0].mxu0
  %v4467 = vpop.f32.mrb[0].mxu0
  %v4468 = vadd.f32 %v2831, %v4467
  %v4469 = vpop.f32.mrb[0].mxu0
  %4470 = vmatprep.mubr.bf16.mxu0 0
  %4471 = vmatmul.mubr.bf16.gmra.mrb[0].mxu0 %v3745
  %v4472 = vpop.f32.mrb[0].mxu0
  %v4473 = vadd.f32 %v2836, %v4472
  %v4474 = vpop.f32.mrb[0].mxu0
  %v4475 = vpop.f32.mrb[0].mxu0
  %v4476 = vadd.f32 %v2841, %v4475
  %v4477 = vpop.f32.mrb[0].mxu0
  %4478 = vmatprep.mubr.bf16.mxu0 0
  %4479 = vmatmul.mubr.bf16.gmra.mrb[0].mxu0 %v3748
  %v4480 = vpop.f32.mrb[0].mxu0
  %v4481 = vadd.f32 %v2846, %v4480
  %v4482 = vpop.f32.mrb[0].mxu0
  %v4483 = vpop.f32.mrb[0].mxu0
  %v4484 = vadd.f32 %v2851, %v4483
  %v4485 = vpop.f32.mrb[0].mxu0
  %4486 = vmatprep.mubr.bf16.mxu0 0
  %4487 = vmatmul.mubr.bf16.gmra.mrb[0].mxu0 %v3751
  %v4488 = vpop.f32.mrb[0].mxu0
  %v4489 = vadd.f32 %v2856, %v4488
  %v4490 = vpop.f32.mrb[0].mxu0
  %v4491 = vpop.f32.mrb[0].mxu0
  %v4492 = vadd.f32 %v2861, %v4491
  %v4493 = vpop.f32.mrb[0].mxu0
  %4494 = vmatprep.mubr.bf16.mxu0 0
  %4495 = vmatmul.mubr.bf16.gmra.mrb[0].mxu0 %v3754
  %v4496 = vpop.f32.mrb[0].mxu0
  %v4497 = vadd.f32 %v2866, %v4496
  %v4498 = vpop.f32.mrb[0].mxu0
  %v4499 = vpop.f32.mrb[0].mxu0
  %v4500 = vadd.f32 %v2871, %v4499
  %v4501 = vpop.f32.mrb[0].mxu0
  %4502 = vmatprep.mubr.bf16.mxu0 0
  %4503 = vmatmul.mubr.bf16.gmra.mrb[0].mxu0 %v3757
  %v4504 = vpop.f32.mrb[0].mxu0
  %v4505 = vadd.f32 %v2876, %v4504
  %v4506 = vpop.f32.mrb[0].mxu0
  %v4507 = vpop.f32.mrb[0].mxu0
  %v4508 = vadd.f32 %v2881, %v4507
  %v4509 = vpop.f32.mrb[0].mxu0
  %4510 = vmatprep.mubr.bf16.mxu0 0
  %4511 = vmatmul.mubr.bf16.gmra.mrb[0].mxu0 %v3760
  %v4512 = vpop.f32.mrb[0].mxu0
  %v4513 = vadd.f32 %v2886, %v4512
  %v4514 = vpop.f32.mrb[0].mxu0
  %v4515 = vpop.f32.mrb[0].mxu0
  %v4516 = vadd.f32 %v2891, %v4515
  %v4517 = vpop.f32.mrb[0].mxu0
  %4518 = vmatprep.mubr.bf16.mxu0 0
  %4519 = vmatmul.mubr.bf16.gmra.mrb[0].mxu0 %v3763
  %v4520 = vpop.f32.mrb[0].mxu0
  %v4521 = vadd.f32 %v2896, %v4520
  %v4522 = vpop.f32.mrb[0].mxu0
  %v4523 = vpop.f32.mrb[0].mxu0
  %v4524 = vadd.f32 %v2901, %v4523
  %v4525 = vpop.f32.mrb[0].mxu0
  %4526 = vmatprep.mubr.bf16.mxu0 0
  %4527 = vmatmul.mubr.bf16.gmra.mrb[0].mxu0 %v3766
  %v4528 = vpop.f32.mrb[0].mxu0
  %v4529 = vadd.f32 %v2906, %v4528
  %v4530 = vpop.f32.mrb[0].mxu0
  %v4531 = vpop.f32.mrb[0].mxu0
  %v4532 = vadd.f32 %v2911, %v4531
  %v4533 = vpop.f32.mrb[0].mxu0
  %4534 = vmatprep.mubr.bf16.mxu0 0
  %4535 = vmatmul.mubr.bf16.gmra.mrb[0].mxu0 %v3769
  %v4536 = vpop.f32.mrb[0].mxu0
  %v4537 = vadd.f32 %v2916, %v4536
  %v4538 = vpop.f32.mrb[0].mxu0
  %v4539 = vpop.f32.mrb[0].mxu0
  %v4540 = vadd.f32 %v2921, %v4539
  %v4541 = vpop.f32.mrb[0].mxu0
  %4542 = vmatprep.mubr.bf16.mxu0 0
  %4543 = vmatmul.mubr.bf16.gmra.mrb[0].mxu0 %v3772
  %v4544 = vpop.f32.mrb[0].mxu0
  %v4545 = vadd.f32 %v2926, %v4544
  %v4546 = vpop.f32.mrb[0].mxu0
  %v4547 = vpop.f32.mrb[0].mxu0
  %v4548 = vadd.f32 %v2931, %v4547
  %v4549 = vpop.f32.mrb[0].mxu0
  %4550 = vmatprep.mubr.bf16.mxu0 0
  %4551 = vmatmul.mubr.bf16.gmra.mrb[0].mxu0 %v3775
  %v4552 = vpop.f32.mrb[0].mxu0
  %v4553 = vadd.f32 %v2936, %v4552
  %v4554 = vpop.f32.mrb[0].mxu0
  %v4555 = vpop.f32.mrb[0].mxu0
  %v4556 = vadd.f32 %v2941, %v4555
  %v4557 = vpop.f32.mrb[0].mxu0
  %4558 = vmatprep.mubr.bf16.mxu0 0
  %4559 = vmatmul.mubr.bf16.gmra.mrb[0].mxu0 %v3778
  %v4560 = vpop.f32.mrb[0].mxu0
  %v4561 = vadd.f32 %v2946, %v4560
  %v4562 = vpop.f32.mrb[0].mxu0
  %v4563 = vpop.f32.mrb[0].mxu0
  %v4564 = vadd.f32 %v2951, %v4563
  %v4565 = vpop.f32.mrb[0].mxu0
  %4566 = vmatprep.mubr.bf16.mxu0 0
  %4567 = vmatmul.mubr.bf16.gmra.mrb[0].mxu0 %v3781
  %v4568 = vpop.f32.mrb[0].mxu0
  %v4569 = vadd.f32 %v2956, %v4568
  %v4570 = vpop.f32.mrb[0].mxu0
  %v4571 = vpop.f32.mrb[0].mxu0
  %v4572 = vadd.f32 %v2961, %v4571
  %v4573 = vpop.f32.mrb[0].mxu0
  %4574 = vmatprep.mubr.bf16.mxu0 0
  %4575 = vmatmul.mubr.bf16.gmra.mrb[0].mxu0 %v3784
  %v4576 = vpop.f32.mrb[0].mxu0
  %v4577 = vadd.f32 %v2966, %v4576
  %v4578 = vpop.f32.mrb[0].mxu0
  %v4579 = vpop.f32.mrb[0].mxu0
  %v4580 = vadd.f32 %v2971, %v4579
  %v4581 = vpop.f32.mrb[0].mxu0
  %4582 = vmatprep.mubr.bf16.mxu0 0
  %4583 = vmatmul.mubr.bf16.gmra.mrb[0].mxu0 %v3787
  %v4584 = vpop.f32.mrb[0].mxu0
  %v4585 = vadd.f32 %v2976, %v4584
  %v4586 = vpop.f32.mrb[0].mxu0
  %v4587 = vpop.f32.mrb[0].mxu0
  %v4588 = vadd.f32 %v2981, %v4587
  %v4589 = vpop.f32.mrb[0].mxu0
  %4590 = vmatprep.mubr.bf16.mxu0 0
  %4591 = vmatmul.mubr.bf16.gmra.mrb[0].mxu0 %v3790
  %v4592 = vpop.f32.mrb[0].mxu0
  %v4593 = vadd.f32 %v2986, %v4592
  %v4594 = vpop.f32.mrb[0].mxu0
  %v4595 = vpop.f32.mrb[0].mxu0
  %v4596 = vadd.f32 %v2991, %v4595
  %v4597 = vpop.f32.mrb[0].mxu0
  %4598 = vmatprep.mubr.bf16.mxu0 0
  %4599 = vmatmul.mubr.bf16.gmra.mrb[0].mxu0 %v3793
  %v4600 = vpop.f32.mrb[0].mxu0
  %v4601 = vadd.f32 %v2996, %v4600
  %v4602 = vpop.f32.mrb[0].mxu0
  %v4603 = vpop.f32.mrb[0].mxu0
  %v4604 = vadd.f32 %v3001, %v4603
  %v4605 = vpop.f32.mrb[0].mxu0
  %4606 = vmatprep.mubr.bf16.mxu0 0
  %4607 = vmatmul.mubr.bf16.gmra.mrb[0].mxu0 %v3796
  %v4608 = vpop.f32.mrb[0].mxu0
  %v4609 = vadd.f32 %v3006, %v4608
  %v4610 = vpop.f32.mrb[0].mxu0
  %v4611 = vpop.f32.mrb[0].mxu0
  %v4612 = vadd.f32 %v3011, %v4611
  %v4613 = vpop.f32.mrb[0].mxu0
  %4614 = vdwg.mxu0
  %v4615 = vmax.f32 %v3833, 0.0
  %v4616 = vmax.f32 %v3836, 0.0
  %v4617 = vmax.f32 %v3841, 0.0
  %v4618 = vmax.f32 %v3844, 0.0
  %v4619 = vmax.f32 %v3849, 0.0
  %v4620 = vmax.f32 %v3852, 0.0
  %v4621 = vmax.f32 %v3857, 0.0
  %v4622 = vmax.f32 %v3860, 0.0
  %v4623 = vmax.f32 %v3865, 0.0
  %v4624 = vmax.f32 %v3868, 0.0
  %v4625 = vmax.f32 %v3873, 0.0
  %v4626 = vmax.f32 %v3876, 0.0
  %v4627 = vmax.f32 %v3881, 0.0
  %v4628 = vmax.f32 %v3884, 0.0
  %v4629 = vmax.f32 %v3889, 0.0
  %v4630 = vmax.f32 %v3892, 0.0
  %v4631 = vmax.f32 %v3897, 0.0
  %v4632 = vmax.f32 %v3900, 0.0
  %v4633 = vmax.f32 %v3905, 0.0
  %v4634 = vmax.f32 %v3908, 0.0
  %v4635 = vmax.f32 %v3913, 0.0
  %v4636 = vmax.f32 %v3916, 0.0
  %v4637 = vmax.f32 %v3921, 0.0
  %v4638 = vmax.f32 %v3924, 0.0
  %v4639 = vmax.f32 %v3929, 0.0
  %v4640 = vmax.f32 %v3932, 0.0
  %v4641 = vmax.f32 %v3937, 0.0
  %v4642 = vmax.f32 %v3940, 0.0
  %v4643 = vmax.f32 %v3945, 0.0
  %v4644 = vmax.f32 %v3948, 0.0
  %v4645 = vmax.f32 %v3953, 0.0
  %v4646 = vmax.f32 %v3956, 0.0
  %v4647 = vmax.f32 %v3961, 0.0
  %v4648 = vmax.f32 %v3964, 0.0
  %v4649 = vmax.f32 %v3969, 0.0
  %v4650 = vmax.f32 %v3972, 0.0
  %v4651 = vmax.f32 %v3977, 0.0
  %v4652 = vmax.f32 %v3980, 0.0
  %v4653 = vmax.f32 %v3985, 0.0
  %v4654 = vmax.f32 %v3988, 0.0
  %v4655 = vmax.f32 %v3993, 0.0
  %v4656 = vmax.f32 %v3996, 0.0
  %v4657 = vmax.f32 %v4001, 0.0
  %v4658 = vmax.f32 %v4004, 0.0
  %v4659 = vmax.f32 %v4009, 0.0
  %v4660 = vmax.f32 %v4012, 0.0
  %v4661 = vmax.f32 %v4017, 0.0
  %v4662 = vmax.f32 %v4020, 0.0
  %v4663 = vmax.f32 %v4025, 0.0
  %v4664 = vmax.f32 %v4028, 0.0
  %v4665 = vmax.f32 %v4033, 0.0
  %v4666 = vmax.f32 %v4036, 0.0
  %v4667 = vmax.f32 %v4041, 0.0
  %v4668 = vmax.f32 %v4044, 0.0
  %v4669 = vmax.f32 %v4049, 0.0
  %v4670 = vmax.f32 %v4052, 0.0
  %v4671 = vmax.f32 %v4057, 0.0
  %v4672 = vmax.f32 %v4060, 0.0
  %v4673 = vmax.f32 %v4065, 0.0
  %v4674 = vmax.f32 %v4068, 0.0
  %v4675 = vmax.f32 %v4073, 0.0
  %v4676 = vmax.f32 %v4076, 0.0
  %v4677 = vmax.f32 %v4081, 0.0
  %v4678 = vmax.f32 %v4084, 0.0
  %v4679 = vmax.f32 %v4089, 0.0
  %v4680 = vmax.f32 %v4092, 0.0
  %v4681 = vmax.f32 %v4097, 0.0
  %v4682 = vmax.f32 %v4100, 0.0
  %v4683 = vmax.f32 %v4105, 0.0
  %v4684 = vmax.f32 %v4108, 0.0
  %v4685 = vmax.f32 %v4113, 0.0
  %v4686 = vmax.f32 %v4116, 0.0
  %v4687 = vmax.f32 %v4121, 0.0
  %v4688 = vmax.f32 %v4124, 0.0
  %v4689 = vmax.f32 %v4129, 0.0
  %v4690 = vmax.f32 %v4132, 0.0
  %v4691 = vmax.f32 %v4137, 0.0
  %v4692 = vmax.f32 %v4140, 0.0
  %v4693 = vmax.f32 %v4145, 0.0
  %v4694 = vmax.f32 %v4148, 0.0
  %v4695 = vmax.f32 %v4153, 0.0
  %v4696 = vmax.f32 %v4156, 0.0
  %v4697 = vmax.f32 %v4161, 0.0
  %v4698 = vmax.f32 %v4164, 0.0
  %v4699 = vmax.f32 %v4169, 0.0
  %v4700 = vmax.f32 %v4172, 0.0
  %v4701 = vmax.f32 %v4177, 0.0
  %v4702 = vmax.f32 %v4180, 0.0
  %v4703 = vmax.f32 %v4185, 0.0
  %v4704 = vmax.f32 %v4188, 0.0
  %v4705 = vmax.f32 %v4193, 0.0
  %v4706 = vmax.f32 %v4196, 0.0
  %v4707 = vmax.f32 %v4201, 0.0
  %v4708 = vmax.f32 %v4204, 0.0
  %v4709 = vmax.f32 %v4209, 0.0
  %v4710 = vmax.f32 %v4212, 0.0
  %v4711 = vmax.f32 %v4217, 0.0
  %v4712 = vmax.f32 %v4220, 0.0
  %v4713 = vmax.f32 %v4225, 0.0
  %v4714 = vmax.f32 %v4228, 0.0
  %v4715 = vmax.f32 %v4233, 0.0
  %v4716 = vmax.f32 %v4236, 0.0
  %v4717 = vmax.f32 %v4241, 0.0
  %v4718 = vmax.f32 %v4244, 0.0
  %v4719 = vmax.f32 %v4249, 0.0
  %v4720 = vmax.f32 %v4252, 0.0
  %v4721 = vmax.f32 %v4257, 0.0
  %v4722 = vmax.f32 %v4260, 0.0
  %v4723 = vmax.f32 %v4265, 0.0
  %v4724 = vmax.f32 %v4268, 0.0
  %v4725 = vmax.f32 %v4273, 0.0
  %v4726 = vmax.f32 %v4276, 0.0
  %v4727 = vmax.f32 %v4281, 0.0
  %v4728 = vmax.f32 %v4284, 0.0
  %v4729 = vmax.f32 %v4289, 0.0
  %v4730 = vmax.f32 %v4292, 0.0
  %v4731 = vmax.f32 %v4297, 0.0
  %v4732 = vmax.f32 %v4300, 0.0
  %v4733 = vmax.f32 %v4305, 0.0
  %v4734 = vmax.f32 %v4308, 0.0
  %v4735 = vmax.f32 %v4313, 0.0
  %v4736 = vmax.f32 %v4316, 0.0
  %v4737 = vmax.f32 %v4321, 0.0
  %v4738 = vmax.f32 %v4324, 0.0
  %v4739 = vmax.f32 %v4329, 0.0
  %v4740 = vmax.f32 %v4332, 0.0
  %v4741 = vmax.f32 %v4337, 0.0
  %v4742 = vmax.f32 %v4340, 0.0
  %v4743 = vmax.f32 %v4345, 0.0
  %v4744 = vmax.f32 %v4348, 0.0
  %v4745 = vmax.f32 %v4353, 0.0
  %v4746 = vmax.f32 %v4356, 0.0
  %v4747 = vmax.f32 %v4361, 0.0
  %v4748 = vmax.f32 %v4364, 0.0
  %v4749 = vmax.f32 %v4369, 0.0
  %v4750 = vmax.f32 %v4372, 0.0
  %v4751 = vmax.f32 %v4377, 0.0
  %v4752 = vmax.f32 %v4380, 0.0
  %v4753 = vmax.f32 %v4385, 0.0
  %v4754 = vmax.f32 %v4388, 0.0
  %v4755 = vmax.f32 %v4393, 0.0
  %v4756 = vmax.f32 %v4396, 0.0
  %v4757 = vmax.f32 %v4401, 0.0
  %v4758 = vmax.f32 %v4404, 0.0
  %v4759 = vmax.f32 %v4409, 0.0
  %v4760 = vmax.f32 %v4412, 0.0
  %v4761 = vmax.f32 %v4417, 0.0
  %v4762 = vmax.f32 %v4420, 0.0
  %v4763 = vmax.f32 %v4425, 0.0
  %v4764 = vmax.f32 %v4428, 0.0
  %v4765 = vmax.f32 %v4433, 0.0
  %v4766 = vmax.f32 %v4436, 0.0
  %v4767 = vmax.f32 %v4441, 0.0
  %v4768 = vmax.f32 %v4444, 0.0
  %v4769 = vmax.f32 %v4449, 0.0
  %v4770 = vmax.f32 %v4452, 0.0
  %v4771 = vmax.f32 %v4457, 0.0
  %v4772 = vmax.f32 %v4460, 0.0
  %v4773 = vmax.f32 %v4465, 0.0
  %v4774 = vmax.f32 %v4468, 0.0
  %v4775 = vmax.f32 %v4473, 0.0
  %v4776 = vmax.f32 %v4476, 0.0
  %v4777 = vmax.f32 %v4481, 0.0
  %v4778 = vmax.f32 %v4484, 0.0
  %v4779 = vmax.f32 %v4489, 0.0
  %v4780 = vmax.f32 %v4492, 0.0
  %v4781 = vmax.f32 %v4497, 0.0
  %v4782 = vmax.f32 %v4500, 0.0
  %v4783 = vmax.f32 %v4505, 0.0
  %v4784 = vmax.f32 %v4508, 0.0
  %v4785 = vmax.f32 %v4513, 0.0
  %v4786 = vmax.f32 %v4516, 0.0
  %v4787 = vmax.f32 %v4521, 0.0
  %v4788 = vmax.f32 %v4524, 0.0
  %v4789 = vmax.f32 %v4529, 0.0
  %v4790 = vmax.f32 %v4532, 0.0
  %v4791 = vmax.f32 %v4537, 0.0
  %v4792 = vmax.f32 %v4540, 0.0
  %v4793 = vmax.f32 %v4545, 0.0
  %v4794 = vmax.f32 %v4548, 0.0
  %v4795 = vmax.f32 %v4553, 0.0
  %v4796 = vmax.f32 %v4556, 0.0
  %v4797 = vmax.f32 %v4561, 0.0
  %v4798 = vmax.f32 %v4564, 0.0
  %v4799 = vmax.f32 %v4569, 0.0
  %v4800 = vmax.f32 %v4572, 0.0
  %v4801 = vmax.f32 %v4577, 0.0
  %v4802 = vmax.f32 %v4580, 0.0
  %v4803 = vmax.f32 %v4585, 0.0
  %v4804 = vmax.f32 %v4588, 0.0
  %v4805 = vmax.f32 %v4593, 0.0
  %v4806 = vmax.f32 %v4596, 0.0
  %v4807 = vmax.f32 %v4601, 0.0
  %v4808 = vmax.f32 %v4604, 0.0
  %v4809 = vmax.f32 %v4609, 0.0
  %v4810 = vmax.f32 %v4612, 0.0
  %v4811 = vpack.c.bf16 %v4616, %v4615
  %v4812 = vpack.c.bf16 %v4618, %v4617
  %v4813 = vpack.c.bf16 %v4620, %v4619
  %v4814 = vpack.c.bf16 %v4622, %v4621
  %v4815 = vpack.c.bf16 %v4624, %v4623
  %v4816 = vpack.c.bf16 %v4626, %v4625
  %v4817 = vpack.c.bf16 %v4628, %v4627
  %v4818 = vpack.c.bf16 %v4630, %v4629
  %v4819 = vpack.c.bf16 %v4632, %v4631
  %v4820 = vpack.c.bf16 %v4634, %v4633
  %v4821 = vpack.c.bf16 %v4636, %v4635
  %v4822 = vpack.c.bf16 %v4638, %v4637
  %v4823 = vpack.c.bf16 %v4640, %v4639
  %v4824 = vpack.c.bf16 %v4642, %v4641
  %v4825 = vpack.c.bf16 %v4644, %v4643
  %v4826 = vpack.c.bf16 %v4646, %v4645
  %v4827 = vpack.c.bf16 %v4648, %v4647
  %v4828 = vpack.c.bf16 %v4650, %v4649
  %v4829 = vpack.c.bf16 %v4652, %v4651
  %v4830 = vpack.c.bf16 %v4654, %v4653
  %v4831 = vpack.c.bf16 %v4656, %v4655
  %v4832 = vpack.c.bf16 %v4658, %v4657
  %v4833 = vpack.c.bf16 %v4660, %v4659
  %v4834 = vpack.c.bf16 %v4662, %v4661
  %v4835 = vpack.c.bf16 %v4664, %v4663
  %v4836 = vpack.c.bf16 %v4666, %v4665
  %v4837 = vpack.c.bf16 %v4668, %v4667
  %v4838 = vpack.c.bf16 %v4670, %v4669
  %v4839 = vpack.c.bf16 %v4672, %v4671
  %v4840 = vpack.c.bf16 %v4674, %v4673
  %v4841 = vpack.c.bf16 %v4676, %v4675
  %v4842 = vpack.c.bf16 %v4678, %v4677
  %v4843 = vpack.c.bf16 %v4680, %v4679
  %v4844 = vpack.c.bf16 %v4682, %v4681
  %v4845 = vpack.c.bf16 %v4684, %v4683
  %v4846 = vpack.c.bf16 %v4686, %v4685
  %v4847 = vpack.c.bf16 %v4688, %v4687
  %v4848 = vpack.c.bf16 %v4690, %v4689
  %v4849 = vpack.c.bf16 %v4692, %v4691
  %v4850 = vpack.c.bf16 %v4694, %v4693
  %v4851 = vpack.c.bf16 %v4696, %v4695
  %v4852 = vpack.c.bf16 %v4698, %v4697
  %v4853 = vpack.c.bf16 %v4700, %v4699
  %v4854 = vpack.c.bf16 %v4702, %v4701
  %v4855 = vpack.c.bf16 %v4704, %v4703
  %v4856 = vpack.c.bf16 %v4706, %v4705
  %v4857 = vpack.c.bf16 %v4708, %v4707
  %v4858 = vpack.c.bf16 %v4710, %v4709
  %v4859 = vpack.c.bf16 %v4712, %v4711
  %v4860 = vpack.c.bf16 %v4714, %v4713
  %v4861 = vpack.c.bf16 %v4716, %v4715
  %v4862 = vpack.c.bf16 %v4718, %v4717
  %v4863 = vpack.c.bf16 %v4720, %v4719
  %v4864 = vpack.c.bf16 %v4722, %v4721
  %v4865 = vpack.c.bf16 %v4724, %v4723
  %v4866 = vpack.c.bf16 %v4726, %v4725
  %v4867 = vpack.c.bf16 %v4728, %v4727
  %v4868 = vpack.c.bf16 %v4730, %v4729
  %v4869 = vpack.c.bf16 %v4732, %v4731
  %v4870 = vpack.c.bf16 %v4734, %v4733
  %v4871 = vpack.c.bf16 %v4736, %v4735
  %v4872 = vpack.c.bf16 %v4738, %v4737
  %v4873 = vpack.c.bf16 %v4740, %v4739
  %v4874 = vpack.c.bf16 %v4742, %v4741
  %v4875 = vpack.c.bf16 %v4744, %v4743
  %v4876 = vpack.c.bf16 %v4746, %v4745
  %v4877 = vpack.c.bf16 %v4748, %v4747
  %v4878 = vpack.c.bf16 %v4750, %v4749
  %v4879 = vpack.c.bf16 %v4752, %v4751
  %v4880 = vpack.c.bf16 %v4754, %v4753
  %v4881 = vpack.c.bf16 %v4756, %v4755
  %v4882 = vpack.c.bf16 %v4758, %v4757
  %v4883 = vpack.c.bf16 %v4760, %v4759
  %v4884 = vpack.c.bf16 %v4762, %v4761
  %v4885 = vpack.c.bf16 %v4764, %v4763
  %v4886 = vpack.c.bf16 %v4766, %v4765
  %v4887 = vpack.c.bf16 %v4768, %v4767
  %v4888 = vpack.c.bf16 %v4770, %v4769
  %v4889 = vpack.c.bf16 %v4772, %v4771
  %v4890 = vpack.c.bf16 %v4774, %v4773
  %v4891 = vpack.c.bf16 %v4776, %v4775
  %v4892 = vpack.c.bf16 %v4778, %v4777
  %v4893 = vpack.c.bf16 %v4780, %v4779
  %v4894 = vpack.c.bf16 %v4782, %v4781
  %v4895 = vpack.c.bf16 %v4784, %v4783
  %v4896 = vpack.c.bf16 %v4786, %v4785
  %v4897 = vpack.c.bf16 %v4788, %v4787
  %v4898 = vpack.c.bf16 %v4790, %v4789
  %v4899 = vpack.c.bf16 %v4792, %v4791
  %v4900 = vpack.c.bf16 %v4794, %v4793
  %v4901 = vpack.c.bf16 %v4796, %v4795
  %v4902 = vpack.c.bf16 %v4798, %v4797
  %v4903 = vpack.c.bf16 %v4800, %v4799
  %v4904 = vpack.c.bf16 %v4802, %v4801
  %v4905 = vpack.c.bf16 %v4804, %v4803
  %v4906 = vpack.c.bf16 %v4806, %v4805
  %v4907 = vpack.c.bf16 %v4808, %v4807
  %v4908 = vpack.c.bf16 %v4810, %v4809
  %v5007 = vunpack.c.l.b16 %v4811
  %v5008 = vunpack.c.h.b16 %v4811
  %v5009 = vunpack.c.l.b16 %v4812
  %v5010 = vunpack.c.h.b16 %v4812
  %v5011 = vunpack.c.l.b16 %v4813
  %v5012 = vunpack.c.h.b16 %v4813
  %v5013 = vunpack.c.l.b16 %v4814
  %v5014 = vunpack.c.h.b16 %v4814
  %v5015 = vunpack.c.l.b16 %v4815
  %v5016 = vunpack.c.h.b16 %v4815
  %v5017 = vunpack.c.l.b16 %v4816
  %v5018 = vunpack.c.h.b16 %v4816
  %v5019 = vunpack.c.l.b16 %v4817
  %v5020 = vunpack.c.h.b16 %v4817
  %v5021 = vunpack.c.l.b16 %v4818
  %v5022 = vunpack.c.h.b16 %v4818
  %v5023 = vunpack.c.l.b16 %v4819
  %v5024 = vunpack.c.h.b16 %v4819
  %v5025 = vunpack.c.l.b16 %v4820
  %v5026 = vunpack.c.h.b16 %v4820
  %v5027 = vunpack.c.l.b16 %v4821
  %v5028 = vunpack.c.h.b16 %v4821
  %v5029 = vunpack.c.l.b16 %v4822
  %v5030 = vunpack.c.h.b16 %v4822
  %v5031 = vunpack.c.l.b16 %v4823
  %v5032 = vunpack.c.h.b16 %v4823
  %v5033 = vunpack.c.l.b16 %v4824
  %v5034 = vunpack.c.h.b16 %v4824
  %v5035 = vunpack.c.l.b16 %v4825
  %v5036 = vunpack.c.h.b16 %v4825
  %v5037 = vunpack.c.l.b16 %v4826
  %v5038 = vunpack.c.h.b16 %v4826
  %v5039 = vunpack.c.l.b16 %v4827
  %v5040 = vunpack.c.h.b16 %v4827
  %v5041 = vunpack.c.l.b16 %v4828
  %v5042 = vunpack.c.h.b16 %v4828
  %v5043 = vunpack.c.l.b16 %v4829
  %v5044 = vunpack.c.h.b16 %v4829
  %v5045 = vunpack.c.l.b16 %v4830
  %v5046 = vunpack.c.h.b16 %v4830
  %v5047 = vunpack.c.l.b16 %v4831
  %v5048 = vunpack.c.h.b16 %v4831
  %v5049 = vunpack.c.l.b16 %v4832
  %v5050 = vunpack.c.h.b16 %v4832
  %v5051 = vunpack.c.l.b16 %v4833
  %v5052 = vunpack.c.h.b16 %v4833
  %v5053 = vunpack.c.l.b16 %v4834
  %v5054 = vunpack.c.h.b16 %v4834
  %v5055 = vunpack.c.l.b16 %v4835
  %v5056 = vunpack.c.h.b16 %v4835
  %v5057 = vunpack.c.l.b16 %v4836
  %v5058 = vunpack.c.h.b16 %v4836
  %v5059 = vunpack.c.l.b16 %v4837
  %v5060 = vunpack.c.h.b16 %v4837
  %v5061 = vunpack.c.l.b16 %v4838
  %v5062 = vunpack.c.h.b16 %v4838
  %v5063 = vunpack.c.l.b16 %v4839
  %v5064 = vunpack.c.h.b16 %v4839
  %v5065 = vunpack.c.l.b16 %v4840
  %v5066 = vunpack.c.h.b16 %v4840
  %v5067 = vunpack.c.l.b16 %v4841
  %v5068 = vunpack.c.h.b16 %v4841
  %v5069 = vunpack.c.l.b16 %v4842
  %v5070 = vunpack.c.h.b16 %v4842
  %v5071 = vunpack.c.l.b16 %v4843
  %v5072 = vunpack.c.h.b16 %v4843
  %v5073 = vunpack.c.l.b16 %v4844
  %v5074 = vunpack.c.h.b16 %v4844
  %v5075 = vunpack.c.l.b16 %v4845
  %v5076 = vunpack.c.h.b16 %v4845
  %v5077 = vunpack.c.l.b16 %v4846
  %v5078 = vunpack.c.h.b16 %v4846
  %v5079 = vunpack.c.l.b16 %v4847
  %v5080 = vunpack.c.h.b16 %v4847
  %v5081 = vunpack.c.l.b16 %v4848
  %v5082 = vunpack.c.h.b16 %v4848
  %v5083 = vunpack.c.l.b16 %v4849
  %v5084 = vunpack.c.h.b16 %v4849
  %v5085 = vunpack.c.l.b16 %v4850
  %v5086 = vunpack.c.h.b16 %v4850
  %v5087 = vunpack.c.l.b16 %v4851
  %v5088 = vunpack.c.h.b16 %v4851
  %v5089 = vunpack.c.l.b16 %v4852
  %v5090 = vunpack.c.h.b16 %v4852
  %v5091 = vunpack.c.l.b16 %v4853
  %v5092 = vunpack.c.h.b16 %v4853
  %v5093 = vunpack.c.l.b16 %v4854
  %v5094 = vunpack.c.h.b16 %v4854
  %v5095 = vunpack.c.l.b16 %v4855
  %v5096 = vunpack.c.h.b16 %v4855
  %v5097 = vunpack.c.l.b16 %v4856
  %v5098 = vunpack.c.h.b16 %v4856
  %v5099 = vunpack.c.l.b16 %v4857
  %v5100 = vunpack.c.h.b16 %v4857
  %v5101 = vunpack.c.l.b16 %v4858
  %v5102 = vunpack.c.h.b16 %v4858
  %v5103 = vunpack.c.l.b16 %v4859
  %v5104 = vunpack.c.h.b16 %v4859
  %v5105 = vunpack.c.l.b16 %v4860
  %v5106 = vunpack.c.h.b16 %v4860
  %v5107 = vunpack.c.l.b16 %v4861
  %v5108 = vunpack.c.h.b16 %v4861
  %v5109 = vunpack.c.l.b16 %v4862
  %v5110 = vunpack.c.h.b16 %v4862
  %v5111 = vunpack.c.l.b16 %v4863
  %v5112 = vunpack.c.h.b16 %v4863
  %v5113 = vunpack.c.l.b16 %v4864
  %v5114 = vunpack.c.h.b16 %v4864
  %v5115 = vunpack.c.l.b16 %v4865
  %v5116 = vunpack.c.h.b16 %v4865
  %v5117 = vunpack.c.l.b16 %v4866
  %v5118 = vunpack.c.h.b16 %v4866
  %v5119 = vunpack.c.l.b16 %v4867
  %v5120 = vunpack.c.h.b16 %v4867
  %v5121 = vunpack.c.l.b16 %v4868
  %v5122 = vunpack.c.h.b16 %v4868
  %v5123 = vunpack.c.l.b16 %v4869
  %v5124 = vunpack.c.h.b16 %v4869
  %v5125 = vunpack.c.l.b16 %v4870
  %v5126 = vunpack.c.h.b16 %v4870
  %v5127 = vunpack.c.l.b16 %v4871
  %v5128 = vunpack.c.h.b16 %v4871
  %v5129 = vunpack.c.l.b16 %v4872
  %v5130 = vunpack.c.h.b16 %v4872
  %v5131 = vunpack.c.l.b16 %v4873
  %v5132 = vunpack.c.h.b16 %v4873
  %v5133 = vunpack.c.l.b16 %v4874
  %v5134 = vunpack.c.h.b16 %v4874
  %v5135 = vunpack.c.l.b16 %v4875
  %v5136 = vunpack.c.h.b16 %v4875
  %v5137 = vunpack.c.l.b16 %v4876
  %v5138 = vunpack.c.h.b16 %v4876
  %v5139 = vunpack.c.l.b16 %v4877
  %v5140 = vunpack.c.h.b16 %v4877
  %v5141 = vunpack.c.l.b16 %v4878
  %v5142 = vunpack.c.h.b16 %v4878
  %v5143 = vunpack.c.l.b16 %v4879
  %v5144 = vunpack.c.h.b16 %v4879
  %v5145 = vunpack.c.l.b16 %v4880
  %v5146 = vunpack.c.h.b16 %v4880
  %v5147 = vunpack.c.l.b16 %v4881
  %v5148 = vunpack.c.h.b16 %v4881
  %v5149 = vunpack.c.l.b16 %v4882
  %v5150 = vunpack.c.h.b16 %v4882
  %v5151 = vunpack.c.l.b16 %v4883
  %v5152 = vunpack.c.h.b16 %v4883
  %v5153 = vunpack.c.l.b16 %v4884
  %v5154 = vunpack.c.h.b16 %v4884
  %v5155 = vunpack.c.l.b16 %v4885
  %v5156 = vunpack.c.h.b16 %v4885
  %v5157 = vunpack.c.l.b16 %v4886
  %v5158 = vunpack.c.h.b16 %v4886
  %v5159 = vunpack.c.l.b16 %v4887
  %v5160 = vunpack.c.h.b16 %v4887
  %v5161 = vunpack.c.l.b16 %v4888
  %v5162 = vunpack.c.h.b16 %v4888
  %v5163 = vunpack.c.l.b16 %v4889
  %v5164 = vunpack.c.h.b16 %v4889
  %v5165 = vunpack.c.l.b16 %v4890
  %v5166 = vunpack.c.h.b16 %v4890
  %v5167 = vunpack.c.l.b16 %v4891
  %v5168 = vunpack.c.h.b16 %v4891
  %v5169 = vunpack.c.l.b16 %v4892
  %v5170 = vunpack.c.h.b16 %v4892
  %v5171 = vunpack.c.l.b16 %v4893
  %v5172 = vunpack.c.h.b16 %v4893
  %v5173 = vunpack.c.l.b16 %v4894
  %v5174 = vunpack.c.h.b16 %v4894
  %v5175 = vunpack.c.l.b16 %v4895
  %v5176 = vunpack.c.h.b16 %v4895
  %v5177 = vunpack.c.l.b16 %v4896
  %v5178 = vunpack.c.h.b16 %v4896
  %v5179 = vunpack.c.l.b16 %v4897
  %v5180 = vunpack.c.h.b16 %v4897
  %v5181 = vunpack.c.l.b16 %v4898
  %v5182 = vunpack.c.h.b16 %v4898
  %v5183 = vunpack.c.l.b16 %v4899
  %v5184 = vunpack.c.h.b16 %v4899
  %v5185 = vunpack.c.l.b16 %v4900
  %v5186 = vunpack.c.h.b16 %v4900
  %v5187 = vunpack.c.l.b16 %v4901
  %v5188 = vunpack.c.h.b16 %v4901
  %v5189 = vunpack.c.l.b16 %v4902
  %v5190 = vunpack.c.h.b16 %v4902
  %v5191 = vunpack.c.l.b16 %v4903
  %v5192 = vunpack.c.h.b16 %v4903
  %v5193 = vunpack.c.l.b16 %v4904
  %v5194 = vunpack.c.h.b16 %v4904
  %v5195 = vunpack.c.l.b16 %v4905
  %v5196 = vunpack.c.h.b16 %v4905
  %v5197 = vunpack.c.l.b16 %v4906
  %v5198 = vunpack.c.h.b16 %v4906
  %v5199 = vunpack.c.l.b16 %v4907
  %v5200 = vunpack.c.h.b16 %v4907
  %v5201 = vunpack.c.l.b16 %v4908
  %v5202 = vunpack.c.h.b16 %v4908
  %v5203 = vpack.c.b16 %v5007, %v5007
  %v5204 = vpack.c.b16 %v5008, %v5008
  %v5205 = vpack.c.b16 %v5009, %v5009
  %v5206 = vpack.c.b16 %v5010, %v5010
  %v5207 = vpack.c.b16 %v5011, %v5011
  %v5208 = vpack.c.b16 %v5012, %v5012
  %v5209 = vpack.c.b16 %v5013, %v5013
  %v5210 = vpack.c.b16 %v5014, %v5014
  %v5211 = vpack.c.b16 %v5015, %v5015
  %v5212 = vpack.c.b16 %v5016, %v5016
  %v5213 = vpack.c.b16 %v5017, %v5017
  %v5214 = vpack.c.b16 %v5018, %v5018
  %v5215 = vpack.c.b16 %v5019, %v5019
  %v5216 = vpack.c.b16 %v5020, %v5020
  %v5217 = vpack.c.b16 %v5021, %v5021
  %v5218 = vpack.c.b16 %v5022, %v5022
  %v5219 = vpack.c.b16 %v5023, %v5023
  %v5220 = vpack.c.b16 %v5024, %v5024
  %v5221 = vpack.c.b16 %v5025, %v5025
  %v5222 = vpack.c.b16 %v5026, %v5026
  %v5223 = vpack.c.b16 %v5027, %v5027
  %v5224 = vpack.c.b16 %v5028, %v5028
  %v5225 = vpack.c.b16 %v5029, %v5029
  %v5226 = vpack.c.b16 %v5030, %v5030
  %v5227 = vpack.c.b16 %v5031, %v5031
  %v5228 = vpack.c.b16 %v5032, %v5032
  %v5229 = vpack.c.b16 %v5033, %v5033
  %v5230 = vpack.c.b16 %v5034, %v5034
  %v5231 = vpack.c.b16 %v5035, %v5035
  %v5232 = vpack.c.b16 %v5036, %v5036
  %v5233 = vpack.c.b16 %v5037, %v5037
  %v5234 = vpack.c.b16 %v5038, %v5038
  %v5235 = vpack.c.b16 %v5039, %v5039
  %v5236 = vpack.c.b16 %v5040, %v5040
  %v5237 = vpack.c.b16 %v5041, %v5041
  %v5238 = vpack.c.b16 %v5042, %v5042
  %v5239 = vpack.c.b16 %v5043, %v5043
  %v5240 = vpack.c.b16 %v5044, %v5044
  %v5241 = vpack.c.b16 %v5045, %v5045
  %v5242 = vpack.c.b16 %v5046, %v5046
  %v5243 = vpack.c.b16 %v5047, %v5047
  %v5244 = vpack.c.b16 %v5048, %v5048
  %v5245 = vpack.c.b16 %v5049, %v5049
  %v5246 = vpack.c.b16 %v5050, %v5050
  %v5247 = vpack.c.b16 %v5051, %v5051
  %v5248 = vpack.c.b16 %v5052, %v5052
  %v5249 = vpack.c.b16 %v5053, %v5053
  %v5250 = vpack.c.b16 %v5054, %v5054
  %v5251 = vpack.c.b16 %v5055, %v5055
  %v5252 = vpack.c.b16 %v5056, %v5056
  %v5253 = vpack.c.b16 %v5057, %v5057
  %v5254 = vpack.c.b16 %v5058, %v5058
  %v5255 = vpack.c.b16 %v5059, %v5059
  %v5256 = vpack.c.b16 %v5060, %v5060
  %v5257 = vpack.c.b16 %v5061, %v5061
  %v5258 = vpack.c.b16 %v5062, %v5062
  %v5259 = vpack.c.b16 %v5063, %v5063
  %v5260 = vpack.c.b16 %v5064, %v5064
  %v5261 = vpack.c.b16 %v5065, %v5065
  %v5262 = vpack.c.b16 %v5066, %v5066
  %v5263 = vpack.c.b16 %v5067, %v5067
  %v5264 = vpack.c.b16 %v5068, %v5068
  %v5265 = vpack.c.b16 %v5069, %v5069
  %v5266 = vpack.c.b16 %v5070, %v5070
  %v5267 = vpack.c.b16 %v5071, %v5071
  %v5268 = vpack.c.b16 %v5072, %v5072
  %v5269 = vpack.c.b16 %v5073, %v5073
  %v5270 = vpack.c.b16 %v5074, %v5074
  %v5271 = vpack.c.b16 %v5075, %v5075
  %v5272 = vpack.c.b16 %v5076, %v5076
  %v5273 = vpack.c.b16 %v5077, %v5077
  %v5274 = vpack.c.b16 %v5078, %v5078
  %v5275 = vpack.c.b16 %v5079, %v5079
  %v5276 = vpack.c.b16 %v5080, %v5080
  %v5277 = vpack.c.b16 %v5081, %v5081
  %v5278 = vpack.c.b16 %v5082, %v5082
  %v5279 = vpack.c.b16 %v5083, %v5083
  %v5280 = vpack.c.b16 %v5084, %v5084
  %v5281 = vpack.c.b16 %v5085, %v5085
  %v5282 = vpack.c.b16 %v5086, %v5086
  %v5283 = vpack.c.b16 %v5087, %v5087
  %v5284 = vpack.c.b16 %v5088, %v5088
  %v5285 = vpack.c.b16 %v5089, %v5089
  %v5286 = vpack.c.b16 %v5090, %v5090
  %v5287 = vpack.c.b16 %v5091, %v5091
  %v5288 = vpack.c.b16 %v5092, %v5092
  %v5289 = vpack.c.b16 %v5093, %v5093
  %v5290 = vpack.c.b16 %v5094, %v5094
  %v5291 = vpack.c.b16 %v5095, %v5095
  %v5292 = vpack.c.b16 %v5096, %v5096
  %v5293 = vpack.c.b16 %v5097, %v5097
  %v5294 = vpack.c.b16 %v5098, %v5098
  %v5295 = vpack.c.b16 %v5099, %v5099
  %v5296 = vpack.c.b16 %v5100, %v5100
  %v5297 = vpack.c.b16 %v5101, %v5101
  %v5298 = vpack.c.b16 %v5102, %v5102
  %v5299 = vpack.c.b16 %v5103, %v5103
  %v5300 = vpack.c.b16 %v5104, %v5104
  %v5301 = vpack.c.b16 %v5105, %v5105
  %v5302 = vpack.c.b16 %v5106, %v5106
  %v5303 = vpack.c.b16 %v5107, %v5107
  %v5304 = vpack.c.b16 %v5108, %v5108
  %v5305 = vpack.c.b16 %v5109, %v5109
  %v5306 = vpack.c.b16 %v5110, %v5110
  %v5307 = vpack.c.b16 %v5111, %v5111
  %v5308 = vpack.c.b16 %v5112, %v5112
  %v5309 = vpack.c.b16 %v5113, %v5113
  %v5310 = vpack.c.b16 %v5114, %v5114
  %v5311 = vpack.c.b16 %v5115, %v5115
  %v5312 = vpack.c.b16 %v5116, %v5116
  %v5313 = vpack.c.b16 %v5117, %v5117
  %v5314 = vpack.c.b16 %v5118, %v5118
  %v5315 = vpack.c.b16 %v5119, %v5119
  %v5316 = vpack.c.b16 %v5120, %v5120
  %v5317 = vpack.c.b16 %v5121, %v5121
  %v5318 = vpack.c.b16 %v5122, %v5122
  %v5319 = vpack.c.b16 %v5123, %v5123
  %v5320 = vpack.c.b16 %v5124, %v5124
  %v5321 = vpack.c.b16 %v5125, %v5125
  %v5322 = vpack.c.b16 %v5126, %v5126
  %v5323 = vpack.c.b16 %v5127, %v5127
  %v5324 = vpack.c.b16 %v5128, %v5128
  %v5325 = vpack.c.b16 %v5129, %v5129
  %v5326 = vpack.c.b16 %v5130, %v5130
  %v5327 = vpack.c.b16 %v5131, %v5131
  %v5328 = vpack.c.b16 %v5132, %v5132
  %v5329 = vpack.c.b16 %v5133, %v5133
  %v5330 = vpack.c.b16 %v5134, %v5134
  %v5331 = vpack.c.b16 %v5135, %v5135
  %v5332 = vpack.c.b16 %v5136, %v5136
  %v5333 = vpack.c.b16 %v5137, %v5137
  %v5334 = vpack.c.b16 %v5138, %v5138
  %v5335 = vpack.c.b16 %v5139, %v5139
  %v5336 = vpack.c.b16 %v5140, %v5140
  %v5337 = vpack.c.b16 %v5141, %v5141
  %v5338 = vpack.c.b16 %v5142, %v5142
  %v5339 = vpack.c.b16 %v5143, %v5143
  %v5340 = vpack.c.b16 %v5144, %v5144
  %v5341 = vpack.c.b16 %v5145, %v5145
  %v5342 = vpack.c.b16 %v5146, %v5146
  %v5343 = vpack.c.b16 %v5147, %v5147
  %v5344 = vpack.c.b16 %v5148, %v5148
  %v5345 = vpack.c.b16 %v5149, %v5149
  %v5346 = vpack.c.b16 %v5150, %v5150
  %v5347 = vpack.c.b16 %v5151, %v5151
  %v5348 = vpack.c.b16 %v5152, %v5152
  %v5349 = vpack.c.b16 %v5153, %v5153
  %v5350 = vpack.c.b16 %v5154, %v5154
  %v5351 = vpack.c.b16 %v5155, %v5155
  %v5352 = vpack.c.b16 %v5156, %v5156
  %v5353 = vpack.c.b16 %v5157, %v5157
  %v5354 = vpack.c.b16 %v5158, %v5158
  %v5355 = vpack.c.b16 %v5159, %v5159
  %v5356 = vpack.c.b16 %v5160, %v5160
  %v5357 = vpack.c.b16 %v5161, %v5161
  %v5358 = vpack.c.b16 %v5162, %v5162
  %v5359 = vpack.c.b16 %v5163, %v5163
  %v5360 = vpack.c.b16 %v5164, %v5164
  %v5361 = vpack.c.b16 %v5165, %v5165
  %v5362 = vpack.c.b16 %v5166, %v5166
  %v5363 = vpack.c.b16 %v5167, %v5167
  %v5364 = vpack.c.b16 %v5168, %v5168
  %v5365 = vpack.c.b16 %v5169, %v5169
  %v5366 = vpack.c.b16 %v5170, %v5170
  %v5367 = vpack.c.b16 %v5171, %v5171
  %v5368 = vpack.c.b16 %v5172, %v5172
  %v5369 = vpack.c.b16 %v5173, %v5173
  %v5370 = vpack.c.b16 %v5174, %v5174
  %v5371 = vpack.c.b16 %v5175, %v5175
  %v5372 = vpack.c.b16 %v5176, %v5176
  %v5373 = vpack.c.b16 %v5177, %v5177
  %v5374 = vpack.c.b16 %v5178, %v5178
  %v5375 = vpack.c.b16 %v5179, %v5179
  %v5376 = vpack.c.b16 %v5180, %v5180
  %v5377 = vpack.c.b16 %v5181, %v5181
  %v5378 = vpack.c.b16 %v5182, %v5182
  %v5379 = vpack.c.b16 %v5183, %v5183
  %v5380 = vpack.c.b16 %v5184, %v5184
  %v5381 = vpack.c.b16 %v5185, %v5185
  %v5382 = vpack.c.b16 %v5186, %v5186
  %v5383 = vpack.c.b16 %v5187, %v5187
  %v5384 = vpack.c.b16 %v5188, %v5188
  %v5385 = vpack.c.b16 %v5189, %v5189
  %v5386 = vpack.c.b16 %v5190, %v5190
  %v5387 = vpack.c.b16 %v5191, %v5191
  %v5388 = vpack.c.b16 %v5192, %v5192
  %v5389 = vpack.c.b16 %v5193, %v5193
  %v5390 = vpack.c.b16 %v5194, %v5194
  %v5391 = vpack.c.b16 %v5195, %v5195
  %v5392 = vpack.c.b16 %v5196, %v5196
  %v5393 = vpack.c.b16 %v5197, %v5197
  %v5394 = vpack.c.b16 %v5198, %v5198
  %v5395 = vpack.c.b16 %v5199, %v5199
  %v5396 = vpack.c.b16 %v5200, %v5200
  %v5397 = vpack.c.b16 %v5201, %v5201
  %v5398 = vpack.c.b16 %v5202, %v5202
  %5595 = vst [vmem:[%s5] sm:$0xf] %v5203
  %5596 = vst [vmem:[%s5 + $0x4] sm:$0xf] %v5204
  %5597 = vst [vmem:[%s5 + $0x8] sm:$0xf] %v5205
  %5598 = vst [vmem:[%s5 + $0xc] sm:$0xf] %v5206
  %5599 = vst [vmem:[%s5 + $0x10] sm:$0xf] %v5207
  %5600 = vst [vmem:[%s5 + $0x14] sm:$0xf] %v5208
  %5601 = vst [vmem:[%s5 + $0x18] sm:$0xf] %v5209
  %5602 = vst [vmem:[%s5 + $0x1c] sm:$0xf] %v5210
  %5603 = vst [vmem:[%s5 + $0x20] sm:$0xf] %v5211
  %5604 = vst [vmem:[%s5 + $0x24] sm:$0xf] %v5212
  %5605 = vst [vmem:[%s5 + $0x28] sm:$0xf] %v5213
  %5606 = vst [vmem:[%s5 + $0x2c] sm:$0xf] %v5214
  %5607 = vst [vmem:[%s5 + $0x30] sm:$0xf] %v5215
  %5608 = vst [vmem:[%s5 + $0x34] sm:$0xf] %v5216
  %5609 = vst [vmem:[%s5 + $0x38] sm:$0xf] %v5217
  %5610 = vst [vmem:[%s5 + $0x3c] sm:$0xf] %v5218
  %5611 = vst [vmem:[%s5 + $0x40] sm:$0xf] %v5219
  %5612 = vst [vmem:[%s5 + $0x44] sm:$0xf] %v5220
  %5613 = vst [vmem:[%s5 + $0x48] sm:$0xf] %v5221
  %5614 = vst [vmem:[%s5 + $0x4c] sm:$0xf] %v5222
  %5615 = vst [vmem:[%s5 + $0x50] sm:$0xf] %v5223
  %5616 = vst [vmem:[%s5 + $0x54] sm:$0xf] %v5224
  %5617 = vst [vmem:[%s5 + $0x58] sm:$0xf] %v5225
  %5618 = vst [vmem:[%s5 + $0x5c] sm:$0xf] %v5226
  %5619 = vst [vmem:[%s5 + $0x60] sm:$0xf] %v5227
  %5620 = vst [vmem:[%s5 + $0x64] sm:$0xf] %v5228
  %5621 = vst [vmem:[%s5 + $0x68] sm:$0xf] %v5229
  %5622 = vst [vmem:[%s5 + $0x6c] sm:$0xf] %v5230
  %5623 = vst [vmem:[%s5 + $0x70] sm:$0xf] %v5231
  %5624 = vst [vmem:[%s5 + $0x74] sm:$0xf] %v5232
  %5625 = vst [vmem:[%s5 + $0x78] sm:$0xf] %v5233
  %5626 = vst [vmem:[%s5 + $0x7c] sm:$0xf] %v5234
  %5627 = vst [vmem:[%s5 + $0x80] sm:$0xf] %v5235
  %5628 = vst [vmem:[%s5 + $0x84] sm:$0xf] %v5236
  %5629 = vst [vmem:[%s5 + $0x88] sm:$0xf] %v5237
  %5630 = vst [vmem:[%s5 + $0x8c] sm:$0xf] %v5238
  %5631 = vst [vmem:[%s5 + $0x90] sm:$0xf] %v5239
  %5632 = vst [vmem:[%s5 + $0x94] sm:$0xf] %v5240
  %5633 = vst [vmem:[%s5 + $0x98] sm:$0xf] %v5241
  %5634 = vst [vmem:[%s5 + $0x9c] sm:$0xf] %v5242
  %5635 = vst [vmem:[%s5 + $0xa0] sm:$0xf] %v5243
  %5636 = vst [vmem:[%s5 + $0xa4] sm:$0xf] %v5244
  %5637 = vst [vmem:[%s5 + $0xa8] sm:$0xf] %v5245
  %5638 = vst [vmem:[%s5 + $0xac] sm:$0xf] %v5246
  %5639 = vst [vmem:[%s5 + $0xb0] sm:$0xf] %v5247
  %5640 = vst [vmem:[%s5 + $0xb4] sm:$0xf] %v5248
  %5641 = vst [vmem:[%s5 + $0xb8] sm:$0xf] %v5249
  %5642 = vst [vmem:[%s5 + $0xbc] sm:$0xf] %v5250
  %5643 = vst [vmem:[%s5 + $0xc0] sm:$0xf] %v5251
  %5644 = vst [vmem:[%s5 + $0xc4] sm:$0xf] %v5252
  %5645 = vst [vmem:[%s5 + $0xc8] sm:$0xf] %v5253
  %5646 = vst [vmem:[%s5 + $0xcc] sm:$0xf] %v5254
  %5647 = vst [vmem:[%s5 + $0xd0] sm:$0xf] %v5255
  %5648 = vst [vmem:[%s5 + $0xd4] sm:$0xf] %v5256
  %5649 = vst [vmem:[%s5 + $0xd8] sm:$0xf] %v5257
  %5650 = vst [vmem:[%s5 + $0xdc] sm:$0xf] %v5258
  %5651 = vst [vmem:[%s5 + $0xe0] sm:$0xf] %v5259
  %5652 = vst [vmem:[%s5 + $0xe4] sm:$0xf] %v5260
  %5653 = vst [vmem:[%s5 + $0xe8] sm:$0xf] %v5261
  %5654 = vst [vmem:[%s5 + $0xec] sm:$0xf] %v5262
  %5655 = vst [vmem:[%s5 + $0xf0] sm:$0xf] %v5263
  %5656 = vst [vmem:[%s5 + $0xf4] sm:$0xf] %v5264
  %5657 = vst [vmem:[%s5 + $0xf8] sm:$0xf] %v5265
  %5658 = vst [vmem:[%s5 + $0xfc] sm:$0xf] %v5266
  %5659 = vst [vmem:[%s5 + $0x100] sm:$0xf] %v5267
  %5660 = vst [vmem:[%s5 + $0x104] sm:$0xf] %v5268
  %5661 = vst [vmem:[%s5 + $0x108] sm:$0xf] %v5269
  %5662 = vst [vmem:[%s5 + $0x10c] sm:$0xf] %v5270
  %5663 = vst [vmem:[%s5 + $0x110] sm:$0xf] %v5271
  %5664 = vst [vmem:[%s5 + $0x114] sm:$0xf] %v5272
  %5665 = vst [vmem:[%s5 + $0x118] sm:$0xf] %v5273
  %5666 = vst [vmem:[%s5 + $0x11c] sm:$0xf] %v5274
  %5667 = vst [vmem:[%s5 + $0x120] sm:$0xf] %v5275
  %5668 = vst [vmem:[%s5 + $0x124] sm:$0xf] %v5276
  %5669 = vst [vmem:[%s5 + $0x128] sm:$0xf] %v5277
  %5670 = vst [vmem:[%s5 + $0x12c] sm:$0xf] %v5278
  %5671 = vst [vmem:[%s5 + $0x130] sm:$0xf] %v5279
  %5672 = vst [vmem:[%s5 + $0x134] sm:$0xf] %v5280
  %5673 = vst [vmem:[%s5 + $0x138] sm:$0xf] %v5281
  %5674 = vst [vmem:[%s5 + $0x13c] sm:$0xf] %v5282
  %5675 = vst [vmem:[%s5 + $0x140] sm:$0xf] %v5283
  %5676 = vst [vmem:[%s5 + $0x144] sm:$0xf] %v5284
  %5677 = vst [vmem:[%s5 + $0x148] sm:$0xf] %v5285
  %5678 = vst [vmem:[%s5 + $0x14c] sm:$0xf] %v5286
  %5679 = vst [vmem:[%s5 + $0x150] sm:$0xf] %v5287
  %5680 = vst [vmem:[%s5 + $0x154] sm:$0xf] %v5288
  %5681 = vst [vmem:[%s5 + $0x158] sm:$0xf] %v5289
  %5682 = vst [vmem:[%s5 + $0x15c] sm:$0xf] %v5290
  %5683 = vst [vmem:[%s5 + $0x160] sm:$0xf] %v5291
  %5684 = vst [vmem:[%s5 + $0x164] sm:$0xf] %v5292
  %5685 = vst [vmem:[%s5 + $0x168] sm:$0xf] %v5293
  %5686 = vst [vmem:[%s5 + $0x16c] sm:$0xf] %v5294
  %5687 = vst [vmem:[%s5 + $0x170] sm:$0xf] %v5295
  %5688 = vst [vmem:[%s5 + $0x174] sm:$0xf] %v5296
  %5689 = vst [vmem:[%s5 + $0x178] sm:$0xf] %v5297
  %5690 = vst [vmem:[%s5 + $0x17c] sm:$0xf] %v5298
  %5691 = vst [vmem:[%s5 + $0x180] sm:$0xf] %v5299
  %5692 = vst [vmem:[%s5 + $0x184] sm:$0xf] %v5300
  %5693 = vst [vmem:[%s5 + $0x188] sm:$0xf] %v5301
  %5694 = vst [vmem:[%s5 + $0x18c] sm:$0xf] %v5302
  %5695 = vst [vmem:[%s5 + $0x190] sm:$0xf] %v5303
  %5696 = vst [vmem:[%s5 + $0x194] sm:$0xf] %v5304
  %5697 = vst [vmem:[%s5 + $0x198] sm:$0xf] %v5305
  %5698 = vst [vmem:[%s5 + $0x19c] sm:$0xf] %v5306
  %5699 = vst [vmem:[%s5 + $0x1a0] sm:$0xf] %v5307
  %5700 = vst [vmem:[%s5 + $0x1a4] sm:$0xf] %v5308
  %5701 = vst [vmem:[%s5 + $0x1a8] sm:$0xf] %v5309
  %5702 = vst [vmem:[%s5 + $0x1ac] sm:$0xf] %v5310
  %5703 = vst [vmem:[%s5 + $0x1b0] sm:$0xf] %v5311
  %5704 = vst [vmem:[%s5 + $0x1b4] sm:$0xf] %v5312
  %5705 = vst [vmem:[%s5 + $0x1b8] sm:$0xf] %v5313
  %5706 = vst [vmem:[%s5 + $0x1bc] sm:$0xf] %v5314
  %5707 = vst [vmem:[%s5 + $0x1c0] sm:$0xf] %v5315
  %5708 = vst [vmem:[%s5 + $0x1c4] sm:$0xf] %v5316
  %5709 = vst [vmem:[%s5 + $0x1c8] sm:$0xf] %v5317
  %5710 = vst [vmem:[%s5 + $0x1cc] sm:$0xf] %v5318
  %5711 = vst [vmem:[%s5 + $0x1d0] sm:$0xf] %v5319
  %5712 = vst [vmem:[%s5 + $0x1d4] sm:$0xf] %v5320
  %5713 = vst [vmem:[%s5 + $0x1d8] sm:$0xf] %v5321
  %5714 = vst [vmem:[%s5 + $0x1dc] sm:$0xf] %v5322
  %5715 = vst [vmem:[%s5 + $0x1e0] sm:$0xf] %v5323
  %5716 = vst [vmem:[%s5 + $0x1e4] sm:$0xf] %v5324
  %5717 = vst [vmem:[%s5 + $0x1e8] sm:$0xf] %v5325
  %5718 = vst [vmem:[%s5 + $0x1ec] sm:$0xf] %v5326
  %5719 = vst [vmem:[%s5 + $0x1f0] sm:$0xf] %v5327
  %5720 = vst [vmem:[%s5 + $0x1f4] sm:$0xf] %v5328
  %5721 = vst [vmem:[%s5 + $0x1f8] sm:$0xf] %v5329
  %5722 = vst [vmem:[%s5 + $0x1fc] sm:$0xf] %v5330
  %5723 = vst [vmem:[%s5 + $0x200] sm:$0xf] %v5331
  %5724 = vst [vmem:[%s5 + $0x204] sm:$0xf] %v5332
  %5725 = vst [vmem:[%s5 + $0x208] sm:$0xf] %v5333
  %5726 = vst [vmem:[%s5 + $0x20c] sm:$0xf] %v5334
  %5727 = vst [vmem:[%s5 + $0x210] sm:$0xf] %v5335
  %5728 = vst [vmem:[%s5 + $0x214] sm:$0xf] %v5336
  %5729 = vst [vmem:[%s5 + $0x218] sm:$0xf] %v5337
  %5730 = vst [vmem:[%s5 + $0x21c] sm:$0xf] %v5338
  %5731 = vst [vmem:[%s5 + $0x220] sm:$0xf] %v5339
  %5732 = vst [vmem:[%s5 + $0x224] sm:$0xf] %v5340
  %5733 = vst [vmem:[%s5 + $0x228] sm:$0xf] %v5341
  %5734 = vst [vmem:[%s5 + $0x22c] sm:$0xf] %v5342
  %5735 = vst [vmem:[%s5 + $0x230] sm:$0xf] %v5343
  %5736 = vst [vmem:[%s5 + $0x234] sm:$0xf] %v5344
  %5737 = vst [vmem:[%s5 + $0x238] sm:$0xf] %v5345
  %5738 = vst [vmem:[%s5 + $0x23c] sm:$0xf] %v5346
  %5739 = vst [vmem:[%s5 + $0x240] sm:$0xf] %v5347
  %5740 = vst [vmem:[%s5 + $0x244] sm:$0xf] %v5348
  %5741 = vst [vmem:[%s5 + $0x248] sm:$0xf] %v5349
  %5742 = vst [vmem:[%s5 + $0x24c] sm:$0xf] %v5350
  %5743 = vst [vmem:[%s5 + $0x250] sm:$0xf] %v5351
  %5744 = vst [vmem:[%s5 + $0x254] sm:$0xf] %v5352
  %5745 = vst [vmem:[%s5 + $0x258] sm:$0xf] %v5353
  %5746 = vst [vmem:[%s5 + $0x25c] sm:$0xf] %v5354
  %5747 = vst [vmem:[%s5 + $0x260] sm:$0xf] %v5355
  %5748 = vst [vmem:[%s5 + $0x264] sm:$0xf] %v5356
  %5749 = vst [vmem:[%s5 + $0x268] sm:$0xf] %v5357
  %5750 = vst [vmem:[%s5 + $0x26c] sm:$0xf] %v5358
  %5751 = vst [vmem:[%s5 + $0x270] sm:$0xf] %v5359
  %5752 = vst [vmem:[%s5 + $0x274] sm:$0xf] %v5360
  %5753 = vst [vmem:[%s5 + $0x278] sm:$0xf] %v5361
  %5754 = vst [vmem:[%s5 + $0x27c] sm:$0xf] %v5362
  %5755 = vst [vmem:[%s5 + $0x280] sm:$0xf] %v5363
  %5756 = vst [vmem:[%s5 + $0x284] sm:$0xf] %v5364
  %5757 = vst [vmem:[%s5 + $0x288] sm:$0xf] %v5365
  %5758 = vst [vmem:[%s5 + $0x28c] sm:$0xf] %v5366
  %5759 = vst [vmem:[%s5 + $0x290] sm:$0xf] %v5367
  %5760 = vst [vmem:[%s5 + $0x294] sm:$0xf] %v5368
  %5761 = vst [vmem:[%s5 + $0x298] sm:$0xf] %v5369
  %5762 = vst [vmem:[%s5 + $0x29c] sm:$0xf] %v5370
  %5763 = vst [vmem:[%s5 + $0x2a0] sm:$0xf] %v5371
  %5764 = vst [vmem:[%s5 + $0x2a4] sm:$0xf] %v5372
  %5765 = vst [vmem:[%s5 + $0x2a8] sm:$0xf] %v5373
  %5766 = vst [vmem:[%s5 + $0x2ac] sm:$0xf] %v5374
  %5767 = vst [vmem:[%s5 + $0x2b0] sm:$0xf] %v5375
  %5768 = vst [vmem:[%s5 + $0x2b4] sm:$0xf] %v5376
  %5769 = vst [vmem:[%s5 + $0x2b8] sm:$0xf] %v5377
  %5770 = vst [vmem:[%s5 + $0x2bc] sm:$0xf] %v5378
  %5771 = vst [vmem:[%s5 + $0x2c0] sm:$0xf] %v5379
  %5772 = vst [vmem:[%s5 + $0x2c4] sm:$0xf] %v5380
  %5773 = vst [vmem:[%s5 + $0x2c8] sm:$0xf] %v5381
  %5774 = vst [vmem:[%s5 + $0x2cc] sm:$0xf] %v5382
  %5775 = vst [vmem:[%s5 + $0x2d0] sm:$0xf] %v5383
  %5776 = vst [vmem:[%s5 + $0x2d4] sm:$0xf] %v5384
  %5777 = vst [vmem:[%s5 + $0x2d8] sm:$0xf] %v5385
  %5778 = vst [vmem:[%s5 + $0x2dc] sm:$0xf] %v5386
  %5779 = vst [vmem:[%s5 + $0x2e0] sm:$0xf] %v5387
  %5780 = vst [vmem:[%s5 + $0x2e4] sm:$0xf] %v5388
  %5781 = vst [vmem:[%s5 + $0x2e8] sm:$0xf] %v5389
  %5782 = vst [vmem:[%s5 + $0x2ec] sm:$0xf] %v5390
  %5783 = vst [vmem:[%s5 + $0x2f0] sm:$0xf] %v5391
  %5784 = vst [vmem:[%s5 + $0x2f4] sm:$0xf] %v5392
  %5785 = vst [vmem:[%s5 + $0x2f8] sm:$0xf] %v5393
  %5786 = vst [vmem:[%s5 + $0x2fc] sm:$0xf] %v5394
  %5787 = vst [vmem:[%s5 + $0x300] sm:$0xf] %v5395
  %5788 = vst [vmem:[%s5 + $0x304] sm:$0xf] %v5396
  %5789 = vst [vmem:[%s5 + $0x308] sm:$0xf] %v5397
  %5790 = vst [vmem:[%s5 + $0x30c] sm:$0xf] %v5398
  // Predicated region
  $region22: #{autoencoder_forward.7} parent=0 // pred_check
    _
  $region23: #{autoencoder_forward.7} parent=0 // pred_check_branch
    %5792 = sbr.rel (0) target = $region25
  $region24: #{autoencoder_forward.7} parent=0 // pred_region
    _
  $region25: #{autoencoder_forward.7} parent=0 // pred_fallthru
    _
  // Predicated region
  $region26: #{autoencoder_forward.7} parent=0 // pred_check
    _
  $region27: #{autoencoder_forward.7} parent=0 // pred_check_branch
    %5794 = sbr.rel (0) target = $region29
  $region28: #{autoencoder_forward.7} parent=0 // pred_region
    _
  $region29: #{autoencoder_forward.7} parent=0 // pred_fallthru
    _

// kernel: tile.12
$region0: #{tile.12}
  #allocation0 [shape = 's32[1]{0}', space=sflag, size = 0x4, scoped, tag = 'scoped memory for tile.12']
  %s0 = inlined_call_operand.vmem [shape: f32[16], index: 0, kind: input, shape index: {}]
  %s1 = inlined_call_operand.vmem [shape: f32[4,16], index: 1, kind: output, shape index: {}]
  // Predicated region
  $region2: #{tile.12} parent=0 // pred_check
    _
  $region3: #{tile.12} parent=0 // pred_check_branch
    %3 = sbr.rel (0) target = $region5
  $region4: #{tile.12} parent=0 // pred_region
    _
  $region5: #{tile.12} parent=0 // pred_fallthru
    _
  %v4 = vld [vmem:[%s0] ss:$0 sm:$0xff]
  %5 = vst [vmem:[%s1] sm:$0xf] %v4

// kernel: tile.0
$region0: #{tile.0}
  %s0 = inlined_call_operand.vmem [shape: f32[4,16], index: 0, kind: input, shape index: {}]
  %s1 = inlined_call_operand.vmem [shape: f32[64,1], index: 1, kind: output, shape index: {}]
  $region1: #{tile.0} parent=0
    #allocation0 [shape = 'u8[4096]{0}', space=vmem, size = 0x1000, scoped, tag = 'scoped mem for input reshape']
    %s3 = sshllo.u32 0, 4
    %v4 = vld [vmem:[%s0] sm:%s3]
    %5 = vst [vmem:[#allocation0] sm:%s3] %v4
    %v6 = vld [vmem:[#allocation0] sm:$0xf]
    %vm7 = vcmask 7168
    %8 = vst.msk [vmem:[%s1] ss:$16 sm:$0x3] %vm7, %v6
    %9 = vst.msk [vmem:[%s1] ss:$16 sm:$0xc] %vm7, %v6
    %v10 = vld [vmem:[#allocation0] sm:$0xf]
    %11 = vrot.lane.b32.xlu0 %v10, 127
    %v12 = vpop.permute.xlu0 %11
    %vm13 = vcmask 7168
    %s14 = scalar_lea.vmem %s1, 1
    %15 = vst.msk [vmem:[%s14] ss:$16 sm:$0x3] %vm13, %v12
    %s16 = scalar_lea.vmem %s1, 1
    %17 = vst.msk [vmem:[%s16] ss:$16 sm:$0xc] %vm13, %v12
    %v18 = vld [vmem:[#allocation0] sm:$0xf]
    %19 = vrot.lane.b32.xlu0 %v18, 126
    %v20 = vpop.permute.xlu0 %19
    %vm21 = vcmask 7168
    %s22 = scalar_lea.vmem %s1, 2
    %23 = vst.msk [vmem:[%s22] ss:$16 sm:$0x3] %vm21, %v20
    %s24 = scalar_lea.vmem %s1, 2
    %25 = vst.msk [vmem:[%s24] ss:$16 sm:$0xc] %vm21, %v20
    %v26 = vld [vmem:[#allocation0] sm:$0xf]
    %27 = vrot.lane.b32.xlu0 %v26, 125
    %v28 = vpop.permute.xlu0 %27
    %vm29 = vcmask 7168
    %s30 = scalar_lea.vmem %s1, 3
    %31 = vst.msk [vmem:[%s30] ss:$16 sm:$0x3] %vm29, %v28
    %s32 = scalar_lea.vmem %s1, 3
    %33 = vst.msk [vmem:[%s32] ss:$16 sm:$0xc] %vm29, %v28
    %v34 = vld [vmem:[#allocation0] sm:$0xf]
    %35 = vrot.lane.b32.xlu0 %v34, 124
    %v36 = vpop.permute.xlu0 %35
    %vm37 = vcmask 7168
    %s38 = scalar_lea.vmem %s1, 4
    %39 = vst.msk [vmem:[%s38] ss:$16 sm:$0x3] %vm37, %v36
    %s40 = scalar_lea.vmem %s1, 4
    %41 = vst.msk [vmem:[%s40] ss:$16 sm:$0xc] %vm37, %v36
    %v42 = vld [vmem:[#allocation0] sm:$0xf]
    %43 = vrot.lane.b32.xlu0 %v42, 123
    %v44 = vpop.permute.xlu0 %43
    %vm45 = vcmask 7168
    %s46 = scalar_lea.vmem %s1, 5
    %47 = vst.msk [vmem:[%s46] ss:$16 sm:$0x3] %vm45, %v44
    %s48 = scalar_lea.vmem %s1, 5
    %49 = vst.msk [vmem:[%s48] ss:$16 sm:$0xc] %vm45, %v44
    %v50 = vld [vmem:[#allocation0] sm:$0xf]
    %51 = vrot.lane.b32.xlu0 %v50, 122
    %v52 = vpop.permute.xlu0 %51
    %vm53 = vcmask 7168
    %s54 = scalar_lea.vmem %s1, 6
    %55 = vst.msk [vmem:[%s54] ss:$16 sm:$0x3] %vm53, %v52
    %s56 = scalar_lea.vmem %s1, 6
    %57 = vst.msk [vmem:[%s56] ss:$16 sm:$0xc] %vm53, %v52
    %v58 = vld [vmem:[#allocation0] sm:$0xf]
    %59 = vrot.lane.b32.xlu0 %v58, 121
    %v60 = vpop.permute.xlu0 %59
    %vm61 = vcmask 7168
    %s62 = scalar_lea.vmem %s1, 7
    %63 = vst.msk [vmem:[%s62] ss:$16 sm:$0x3] %vm61, %v60
    %s64 = scalar_lea.vmem %s1, 7
    %65 = vst.msk [vmem:[%s64] ss:$16 sm:$0xc] %vm61, %v60
    %v66 = vld [vmem:[#allocation0] sm:$0xf]
    %67 = vrot.lane.b32.xlu0 %v66, 120
    %v68 = vpop.permute.xlu0 %67
    %vm69 = vcmask 7168
    %s70 = scalar_lea.vmem %s1, 8
    %71 = vst.msk [vmem:[%s70] ss:$16 sm:$0x3] %vm69, %v68
    %s72 = scalar_lea.vmem %s1, 8
    %73 = vst.msk [vmem:[%s72] ss:$16 sm:$0xc] %vm69, %v68
    %v74 = vld [vmem:[#allocation0] sm:$0xf]
    %75 = vrot.lane.b32.xlu0 %v74, 119
    %v76 = vpop.permute.xlu0 %75
    %vm77 = vcmask 7168
    %s78 = scalar_lea.vmem %s1, 9
    %79 = vst.msk [vmem:[%s78] ss:$16 sm:$0x3] %vm77, %v76
    %s80 = scalar_lea.vmem %s1, 9
    %81 = vst.msk [vmem:[%s80] ss:$16 sm:$0xc] %vm77, %v76
    %v82 = vld [vmem:[#allocation0] sm:$0xf]
    %83 = vrot.lane.b32.xlu0 %v82, 118
    %v84 = vpop.permute.xlu0 %83
    %vm85 = vcmask 7168
    %s86 = scalar_lea.vmem %s1, 10
    %87 = vst.msk [vmem:[%s86] ss:$16 sm:$0x3] %vm85, %v84
    %s88 = scalar_lea.vmem %s1, 10
    %89 = vst.msk [vmem:[%s88] ss:$16 sm:$0xc] %vm85, %v84
    %v90 = vld [vmem:[#allocation0] sm:$0xf]
    %91 = vrot.lane.b32.xlu0 %v90, 117
    %v92 = vpop.permute.xlu0 %91
    %vm93 = vcmask 7168
    %s94 = scalar_lea.vmem %s1, 11
    %95 = vst.msk [vmem:[%s94] ss:$16 sm:$0x3] %vm93, %v92
    %s96 = scalar_lea.vmem %s1, 11
    %97 = vst.msk [vmem:[%s96] ss:$16 sm:$0xc] %vm93, %v92
    %v98 = vld [vmem:[#allocation0] sm:$0xf]
    %99 = vrot.lane.b32.xlu0 %v98, 116
    %v100 = vpop.permute.xlu0 %99
    %vm101 = vcmask 7168
    %s102 = scalar_lea.vmem %s1, 12
    %103 = vst.msk [vmem:[%s102] ss:$16 sm:$0x3] %vm101, %v100
    %s104 = scalar_lea.vmem %s1, 12
    %105 = vst.msk [vmem:[%s104] ss:$16 sm:$0xc] %vm101, %v100
    %v106 = vld [vmem:[#allocation0] sm:$0xf]
    %107 = vrot.lane.b32.xlu0 %v106, 115
    %v108 = vpop.permute.xlu0 %107
    %vm109 = vcmask 7168
    %s110 = scalar_lea.vmem %s1, 13
    %111 = vst.msk [vmem:[%s110] ss:$16 sm:$0x3] %vm109, %v108
    %s112 = scalar_lea.vmem %s1, 13
    %113 = vst.msk [vmem:[%s112] ss:$16 sm:$0xc] %vm109, %v108
    %v114 = vld [vmem:[#allocation0] sm:$0xf]
    %115 = vrot.lane.b32.xlu0 %v114, 114
    %v116 = vpop.permute.xlu0 %115
    %vm117 = vcmask 7168
    %s118 = scalar_lea.vmem %s1, 14
    %119 = vst.msk [vmem:[%s118] ss:$16 sm:$0x3] %vm117, %v116
    %s120 = scalar_lea.vmem %s1, 14
    %121 = vst.msk [vmem:[%s120] ss:$16 sm:$0xc] %vm117, %v116
    %v122 = vld [vmem:[#allocation0] sm:$0xf]
    %123 = vrot.lane.b32.xlu0 %v122, 113
    %v124 = vpop.permute.xlu0 %123
    %vm125 = vcmask 7168
    %s126 = scalar_lea.vmem %s1, 15
    %127 = vst.msk [vmem:[%s126] ss:$16 sm:$0x3] %vm125, %v124
    %s128 = scalar_lea.vmem %s1, 15
    %129 = vst.msk [vmem:[%s128] ss:$16 sm:$0xc] %vm125, %v124

// kernel: autoencoder_forward.8
$region0: #{autoencoder_forward.8}
  #allocation0 [shape = 'u32[]', space=smem, size = 0x4, offset = 0x4, fixed_abs, tag = 'smem constant byte address 0x4 - core index']
  #allocation1 [shape = 'u32[144,128]{1,0:T(1,128)}', space=vmem, size = 0x12000, scoped, tag = 'internal scratch']
  %s0 = inlined_call_operand.vmem [shape: bf16[64,128], index: 0, kind: input, shape index: {}]
  %s1 = inlined_call_operand.vmem [shape: bf16[128,128], index: 1, kind: input, shape index: {}]
  %s2 = inlined_call_operand.vmem [shape: f32[64,1], index: 2, kind: input, shape index: {}]
  %s3 = inlined_call_operand.vmem [shape: bf16[64,128], index: 3, kind: output, shape index: {}]
  %s4 = sld [smem:[#allocation0]]
  $region22: #{autoencoder_forward.8} parent=0
    _
  %s6 = ssub.s32 1, %s4
  %s7 = scalar_select 0, %s6, %s4
  // Predicated region
  $region2: #{autoencoder_forward.8} parent=0 // pred_check
    _
  $region3: #{autoencoder_forward.8} parent=0 // pred_check_branch
    %9 = sbr.rel (0) target = $region5
  $region4: #{autoencoder_forward.8} parent=0 // pred_region
    _
  $region5: #{autoencoder_forward.8} parent=0 // pred_fallthru
    _
  // Predicated region
  $region6: #{autoencoder_forward.8} parent=0 // pred_check
    _
  $region7: #{autoencoder_forward.8} parent=0 // pred_check_branch
    %11 = sbr.rel (0) target = $region9
  $region8: #{autoencoder_forward.8} parent=0 // pred_region
    _
  $region9: #{autoencoder_forward.8} parent=0 // pred_fallthru
    _
  // Predicated region
  $region10: #{autoencoder_forward.8} parent=0 // pred_check
    _
  $region11: #{autoencoder_forward.8} parent=0 // pred_check_branch
    %13 = sbr.rel (0) target = $region13
  $region12: #{autoencoder_forward.8} parent=0 // pred_region
    _
  $region13: #{autoencoder_forward.8} parent=0 // pred_fallthru
    _
  %v15 = vld [vmem:[%s0] sm:$0xf]
  %v16 = vld [vmem:[%s0 + $0x4] sm:$0xf]
  %v17 = vld [vmem:[%s0 + $0x8] sm:$0xf]
  %v18 = vld [vmem:[%s0 + $0xc] sm:$0xf]
  %v19 = vld [vmem:[%s0 + $0x10] sm:$0xf]
  %v20 = vld [vmem:[%s0 + $0x14] sm:$0xf]
  %v21 = vld [vmem:[%s0 + $0x18] sm:$0xf]
  %v22 = vld [vmem:[%s0 + $0x1c] sm:$0xf]
  %v23 = vld [vmem:[%s1] sm:$0xf]
  %v24 = vld [vmem:[%s1 + $0x4] sm:$0xf]
  %v25 = vld [vmem:[%s1 + $0x8] sm:$0xf]
  %v26 = vld [vmem:[%s1 + $0xc] sm:$0xf]
  %v27 = vld [vmem:[%s1 + $0x10] sm:$0xf]
  %v28 = vld [vmem:[%s1 + $0x14] sm:$0xf]
  %v29 = vld [vmem:[%s1 + $0x18] sm:$0xf]
  %v30 = vld [vmem:[%s1 + $0x1c] sm:$0xf]
  %v31 = vld [vmem:[%s1 + $0x20] sm:$0xf]
  %v32 = vld [vmem:[%s1 + $0x24] sm:$0xf]
  %v33 = vld [vmem:[%s1 + $0x28] sm:$0xf]
  %v34 = vld [vmem:[%s1 + $0x2c] sm:$0xf]
  %v35 = vld [vmem:[%s1 + $0x30] sm:$0xf]
  %v36 = vld [vmem:[%s1 + $0x34] sm:$0xf]
  %v37 = vld [vmem:[%s1 + $0x38] sm:$0xf]
  %v38 = vld [vmem:[%s1 + $0x3c] sm:$0xf]
  %v39 = vld [vmem:[%s2] sm:$0xff]
  %v40 = vld [vmem:[%s2 + $0x8] sm:$0xff]
  %v41 = vld [vmem:[%s2 + $0x10] sm:$0xff]
  %v42 = vld [vmem:[%s2 + $0x18] sm:$0xff]
  %v43 = vld [vmem:[%s2 + $0x20] sm:$0xff]
  %v44 = vld [vmem:[%s2 + $0x28] sm:$0xff]
  %v45 = vld [vmem:[%s2 + $0x30] sm:$0xff]
  %v46 = vld [vmem:[%s2 + $0x38] sm:$0xff]
  %48 = vset.pattern.permute.xlu0 0
  %49 = vperm.xlu0 %48, %v39
  %v50 = vpop.permute.xlu0 %49
  %53 = vset.pattern.permute.xlu0 0
  %54 = vperm.xlu0 %53, %v40
  %v55 = vpop.permute.xlu0 %54
  %58 = vset.pattern.permute.xlu0 0
  %59 = vperm.xlu0 %58, %v41
  %v60 = vpop.permute.xlu0 %59
  %63 = vset.pattern.permute.xlu0 0
  %64 = vperm.xlu0 %63, %v42
  %v65 = vpop.permute.xlu0 %64
  %68 = vset.pattern.permute.xlu0 0
  %69 = vperm.xlu0 %68, %v43
  %v70 = vpop.permute.xlu0 %69
  %73 = vset.pattern.permute.xlu0 0
  %74 = vperm.xlu0 %73, %v44
  %v75 = vpop.permute.xlu0 %74
  %78 = vset.pattern.permute.xlu0 0
  %79 = vperm.xlu0 %78, %v45
  %v80 = vpop.permute.xlu0 %79
  %83 = vset.pattern.permute.xlu0 0
  %84 = vperm.xlu0 %83, %v46
  %v85 = vpop.permute.xlu0 %84
  %v95 = vunpack.c.l.b16 %v15
  %v96 = vunpack.c.l.b16 %v16
  %v97 = vunpack.c.l.b16 %v17
  %v98 = vunpack.c.l.b16 %v18
  %v99 = vunpack.c.l.b16 %v19
  %v100 = vunpack.c.l.b16 %v20
  %v101 = vunpack.c.l.b16 %v21
  %v102 = vunpack.c.l.b16 %v22
  %v103 = vpack.c.b16 %v96, %v95
  %v104 = vpack.c.b16 %v98, %v97
  %v105 = vpack.c.b16 %v100, %v99
  %v106 = vpack.c.b16 %v102, %v101
  %v127 = vunpack.c.l.b16 %v23
  %v128 = vunpack.c.l.b16 %v24
  %v129 = vunpack.c.l.b16 %v25
  %v130 = vunpack.c.l.b16 %v26
  %v131 = vunpack.c.l.b16 %v27
  %v132 = vunpack.c.l.b16 %v28
  %v133 = vunpack.c.l.b16 %v29
  %v134 = vunpack.c.l.b16 %v30
  %v135 = vunpack.c.l.b16 %v31
  %v136 = vunpack.c.l.b16 %v32
  %v137 = vunpack.c.l.b16 %v33
  %v138 = vunpack.c.l.b16 %v34
  %v139 = vunpack.c.l.b16 %v35
  %v140 = vunpack.c.l.b16 %v36
  %v141 = vunpack.c.l.b16 %v37
  %v142 = vunpack.c.l.b16 %v38
  %v143 = vpack.c.b16 %v128, %v127
  %v144 = vpack.c.b16 %v130, %v129
  %v145 = vpack.c.b16 %v132, %v131
  %v146 = vpack.c.b16 %v134, %v133
  %v147 = vpack.c.b16 %v136, %v135
  %v148 = vpack.c.b16 %v138, %v137
  %v149 = vpack.c.b16 %v140, %v139
  %v150 = vpack.c.b16 %v142, %v141
  %159 = vmatprep.subr.bf16.mxu0 0
  %160 = vmatpush1.bf16.msra.mxu0 %v143
  %161 = vmatprep.subr.bf16.mxu0 0
  %162 = vmatpush1.bf16.msra.mxu0 %v144
  %163 = vmatprep.subr.bf16.mxu0 0
  %164 = vmatpush1.bf16.msra.mxu0 %v145
  %165 = vmatprep.subr.bf16.mxu0 0
  %166 = vmatpush1.bf16.msra.mxu0 %v146
  %167 = vmatprep.subr.bf16.mxu0 0
  %168 = vmatpush1.bf16.msra.mxu0 %v147
  %169 = vmatprep.subr.bf16.mxu0 0
  %170 = vmatpush1.bf16.msra.mxu0 %v148
  %171 = vmatprep.subr.bf16.mxu0 0
  %172 = vmatpush1.bf16.msra.mxu0 %v149
  %173 = vmatprep.subr.bf16.mxu0 0
  %174 = vmatpush1.bf16.msra.mxu0 %v150
  %175 = vmatprep.subr.bf16.mxu0 0
  %176 = vmatpush1.bf16.msra.mxu0 0
  %177 = vmatprep.subr.bf16.mxu0 0
  %178 = vmatpush1.bf16.msra.mxu0 0
  %179 = vmatprep.subr.bf16.mxu0 0
  %180 = vmatpush1.bf16.msra.mxu0 0
  %181 = vmatprep.subr.bf16.mxu0 0
  %182 = vmatpush1.bf16.msra.mxu0 0
  %183 = vmatprep.subr.bf16.mxu0 0
  %184 = vmatpush1.bf16.msra.mxu0 0
  %185 = vmatprep.subr.bf16.mxu0 0
  %186 = vmatpush1.bf16.msra.mxu0 0
  %187 = vmatprep.subr.bf16.mxu0 0
  %188 = vmatpush1.bf16.msra.mxu0 0
  %189 = vmatprep.subr.bf16.mxu0 0
  %190 = vmatpush1.bf16.msra.mxu0 0
  %191 = vmatprep.mubr.bf16.mxu0 0
  %192 = vmatmul.mubr.bf16.gmra.mrb[0].mxu0 %v103
  %v193 = vpop.f32.mrb[0].mxu0
  %v194 = vadd.f32 %v50, %v193
  %v195 = vpop.f32.mrb[0].mxu0
  %v196 = vpop.f32.mrb[0].mxu0
  %v197 = vadd.f32 %v55, %v196
  %v198 = vpop.f32.mrb[0].mxu0
  %199 = vmatprep.mubr.bf16.mxu0 0
  %200 = vmatmul.mubr.bf16.gmra.mrb[0].mxu0 %v104
  %v201 = vpop.f32.mrb[0].mxu0
  %v202 = vadd.f32 %v60, %v201
  %v203 = vpop.f32.mrb[0].mxu0
  %v204 = vpop.f32.mrb[0].mxu0
  %v205 = vadd.f32 %v65, %v204
  %v206 = vpop.f32.mrb[0].mxu0
  %207 = vmatprep.mubr.bf16.mxu0 0
  %208 = vmatmul.mubr.bf16.gmra.mrb[0].mxu0 %v105
  %v209 = vpop.f32.mrb[0].mxu0
  %v210 = vadd.f32 %v70, %v209
  %v211 = vpop.f32.mrb[0].mxu0
  %v212 = vpop.f32.mrb[0].mxu0
  %v213 = vadd.f32 %v75, %v212
  %v214 = vpop.f32.mrb[0].mxu0
  %215 = vmatprep.mubr.bf16.mxu0 0
  %216 = vmatmul.mubr.bf16.gmra.mrb[0].mxu0 %v106
  %v217 = vpop.f32.mrb[0].mxu0
  %v218 = vadd.f32 %v80, %v217
  %v219 = vpop.f32.mrb[0].mxu0
  %v220 = vpop.f32.mrb[0].mxu0
  %v221 = vadd.f32 %v85, %v220
  %v222 = vpop.f32.mrb[0].mxu0
  %223 = vdwg.mxu0
  %v224 = vmax.f32 %v194, 0.0
  %v225 = vmax.f32 %v197, 0.0
  %v226 = vmax.f32 %v202, 0.0
  %v227 = vmax.f32 %v205, 0.0
  %v228 = vmax.f32 %v210, 0.0
  %v229 = vmax.f32 %v213, 0.0
  %v230 = vmax.f32 %v218, 0.0
  %v231 = vmax.f32 %v221, 0.0
  %v232 = vpack.c.bf16 %v225, %v224
  %v233 = vpack.c.bf16 %v227, %v226
  %v234 = vpack.c.bf16 %v229, %v228
  %v235 = vpack.c.bf16 %v231, %v230
  %v240 = vunpack.c.l.b16 %v232
  %v241 = vunpack.c.h.b16 %v232
  %v242 = vunpack.c.l.b16 %v233
  %v243 = vunpack.c.h.b16 %v233
  %v244 = vunpack.c.l.b16 %v234
  %v245 = vunpack.c.h.b16 %v234
  %v246 = vunpack.c.l.b16 %v235
  %v247 = vunpack.c.h.b16 %v235
  %v248 = vpack.c.b16 %v240, %v240
  %v249 = vpack.c.b16 %v241, %v241
  %v250 = vpack.c.b16 %v242, %v242
  %v251 = vpack.c.b16 %v243, %v243
  %v252 = vpack.c.b16 %v244, %v244
  %v253 = vpack.c.b16 %v245, %v245
  %v254 = vpack.c.b16 %v246, %v246
  %v255 = vpack.c.b16 %v247, %v247
  %264 = vst [vmem:[%s3] sm:$0xf] %v248
  %265 = vst [vmem:[%s3 + $0x4] sm:$0xf] %v249
  %266 = vst [vmem:[%s3 + $0x8] sm:$0xf] %v250
  %267 = vst [vmem:[%s3 + $0xc] sm:$0xf] %v251
  %268 = vst [vmem:[%s3 + $0x10] sm:$0xf] %v252
  %269 = vst [vmem:[%s3 + $0x14] sm:$0xf] %v253
  %270 = vst [vmem:[%s3 + $0x18] sm:$0xf] %v254
  %271 = vst [vmem:[%s3 + $0x1c] sm:$0xf] %v255
  // Predicated region
  $region14: #{autoencoder_forward.8} parent=0 // pred_check
    _
  $region15: #{autoencoder_forward.8} parent=0 // pred_check_branch
    %273 = sbr.rel (0) target = $region17
  $region16: #{autoencoder_forward.8} parent=0 // pred_region
    _
  $region17: #{autoencoder_forward.8} parent=0 // pred_fallthru
    _
  // Predicated region
  $region18: #{autoencoder_forward.8} parent=0 // pred_check
    _
  $region19: #{autoencoder_forward.8} parent=0 // pred_check_branch
    %275 = sbr.rel (0) target = $region21
  $region20: #{autoencoder_forward.8} parent=0 // pred_region
    _
  $region21: #{autoencoder_forward.8} parent=0 // pred_fallthru
    _

// kernel: tile.17
$region0: #{tile.17}
  #allocation0 [shape = 's32[1]{0}', space=sflag, size = 0x4, scoped, tag = 'scoped memory for tile.17']
  %s0 = inlined_call_operand.<no memory space> [shape: f32[], index: 0, kind: input, shape index: {}]
  %s1 = inlined_call_operand.vmem [shape: f32[4,1], index: 1, kind: output, shape index: {}]
  %v2 = vstv %s0
  %3 = vst [vmem:[%s1] sm:$0xf] %v2

// kernel: autoencoder_forward.9
$region0: #{autoencoder_forward.9}
  #allocation0 [shape = 'u32[]', space=smem, size = 0x4, offset = 0x4, fixed_abs, tag = 'smem constant byte address 0x4 - core index']
  #allocation1 [shape = 'u32[144,128]{1,0:T(1,128)}', space=vmem, size = 0x12000, scoped, tag = 'internal scratch']
  %s0 = inlined_call_operand.vmem [shape: bf16[4,64], index: 0, kind: input, shape index: {}]
  %s1 = inlined_call_operand.vmem [shape: bf16[64,512], index: 1, kind: input, shape index: {}]
  %s2 = inlined_call_operand.vmem [shape: f32[4,1], index: 2, kind: input, shape index: {}]
  %s3 = inlined_call_operand.vmem [shape: f32[4,512], index: 3, kind: output, shape index: {}]
  %s4 = sld [smem:[#allocation0]]
  $region83: #{autoencoder_forward.9} parent=0
    _
  %s6 = ssub.s32 1, %s4
  %s7 = scalar_select 0, %s6, %s4
  $region1: #{autoencoder_forward.9} parent=0
    #allocation2 [shape = 'u8[65536]{0}', space=vmem, size = 0x10000, scoped, tag = 'input window, operand 1']
    loop: start=0, step=1, limit=4
    $region2: #{autoencoder_forward.9} parent=1 // loop_pre_header
      _
    $region3: #{autoencoder_forward.9} parent=1 // loop_header
      %s9 = sphi 0, %s13
      %p10 = scmp.ge.s32.totalorder %s9, 4
      %s17 = sphi 0, %s17
      %s19 = sphi 0, %s17
      %s20 = sphi 0, %s19
      %s34 = sphi 0, %s20
      %s40 = sphi 0, %s42
      %s43 = sphi 0, %s40
      %s44 = sphi 0, %s43
      %s60 = sphi 0, %s44
      %s64 = sphi 0, %s64
      %s66 = sphi 0, %s64
      %s67 = sphi 0, %s66
      %s81 = sphi 0, %s67
      %s87 = sphi 0, %s89
      %s90 = sphi 0, %s87
      %s91 = sphi 0, %s90
      %s107 = sphi 0, %s91
    $region4: #{autoencoder_forward.9} parent=1 // loop_header_branch
      %12 = sbr.rel (%p10) target = $region8
    $region5: #{autoencoder_forward.9} parent=1 // loop_body
      %s14 = ssub.s32 %s9, 1
      %s15 = ssub.s32 %s9, 2
      %s16 = sadd.s32 %s9, 1
      %s18 = sadd.s32 %s17, 1
      %p21 = scmp.eq.s32.totalorder %s9, 1
      %p22 = scmp.ne.s32.totalorder %s17, %s19
      %p23 = scmp.eq.s32.totalorder %s9, 0
      %p24 = por %p22, %p23
      %p25 = scmp.ne.s32.totalorder %s17, %s19
      %p26 = scmp.eq.s32.totalorder %s14, 1
      %p27 = por %p25, %p26
      %p28 = scmp.ne.s32.totalorder %s19, %s20
      %p29 = scmp.eq.s32.totalorder %s14, 0
      %p30 = por %p28, %p29
      %p31 = scmp.ne.s32.totalorder %s19, %s20
      %p32 = scmp.eq.s32.totalorder %s15, 1
      %p33 = por %p31, %p32
      %p35 = scmp.ne.s32.totalorder %s20, %s34
      %p36 = scmp.eq.s32.totalorder %s15, 0
      %p37 = por %p35, %p36
      %s38 = ssub.s32 %s9, %s16
      %p39 = scmp.eq.s32.totalorder %s38, 0
      %s41 = sadd.s32 %s40, 1
      %s42 = scalar_select %p39, %s40, %s41
      %p45 = pneg %p39
      %p46 = scmp.eq.s32.totalorder %s9, 1
      %p47 = por %p45, %p46
      %p48 = scmp.ne.s32.totalorder %s40, %s43
      %p49 = scmp.eq.s32.totalorder %s9, 0
      %p50 = por %p48, %p49
      %p51 = scmp.ne.s32.totalorder %s40, %s43
      %p52 = scmp.eq.s32.totalorder %s14, 1
      %p53 = por %p51, %p52
      %p54 = scmp.ne.s32.totalorder %s43, %s44
      %p55 = scmp.eq.s32.totalorder %s14, 0
      %p56 = por %p54, %p55
      %p57 = scmp.ne.s32.totalorder %s43, %s44
      %p58 = scmp.eq.s32.totalorder %s15, 1
      %p59 = por %p57, %p58
      %p61 = scmp.ne.s32.totalorder %s44, %s60
      %p62 = scmp.eq.s32.totalorder %s15, 0
      %p63 = por %p61, %p62
      %s65 = sadd.s32 %s64, 1
      %p68 = scmp.eq.s32.totalorder %s9, 1
      %p69 = scmp.ne.s32.totalorder %s64, %s66
      %p70 = scmp.eq.s32.totalorder %s9, 0
      %p71 = por %p69, %p70
      %p72 = scmp.ne.s32.totalorder %s64, %s66
      %p73 = scmp.eq.s32.totalorder %s14, 1
      %p74 = por %p72, %p73
      %p75 = scmp.ne.s32.totalorder %s66, %s67
      %p76 = scmp.eq.s32.totalorder %s14, 0
      %p77 = por %p75, %p76
      %p78 = scmp.ne.s32.totalorder %s66, %s67
      %p79 = scmp.eq.s32.totalorder %s15, 1
      %p80 = por %p78, %p79
      %p82 = scmp.ne.s32.totalorder %s67, %s81
      %p83 = scmp.eq.s32.totalorder %s15, 0
      %p84 = por %p82, %p83
      %s85 = ssub.s32 %s9, %s16
      %p86 = scmp.eq.s32.totalorder %s85, 0
      %s88 = sadd.s32 %s87, 1
      %s89 = scalar_select %p86, %s87, %s88
      %p92 = pneg %p86
      %p93 = scmp.eq.s32.totalorder %s9, 1
      %p94 = por %p92, %p93
      %p95 = scmp.ne.s32.totalorder %s87, %s90
      %p96 = scmp.eq.s32.totalorder %s9, 0
      %p97 = por %p95, %p96
      %p98 = scmp.ne.s32.totalorder %s87, %s90
      %p99 = scmp.eq.s32.totalorder %s14, 1
      %p100 = por %p98, %p99
      %p101 = scmp.ne.s32.totalorder %s90, %s91
      %p102 = scmp.eq.s32.totalorder %s14, 0
      %p103 = por %p101, %p102
      %p104 = scmp.ne.s32.totalorder %s90, %s91
      %p105 = scmp.eq.s32.totalorder %s15, 1
      %p106 = por %p104, %p105
      %p108 = scmp.ne.s32.totalorder %s91, %s107
      %p109 = scmp.eq.s32.totalorder %s15, 0
      %p110 = por %p108, %p109
      %p111 = scmp.le.s32.totalorder 1, %s9
      %p112 = scmp.lt.s32.totalorder %s9, 3
      %p113 = pnand %p111, %p112
      %p114 = pneg %p113
      // Predicated region
      $region9: #{autoencoder_forward.9} parent=5 // pred_check
        _
      $region10: #{autoencoder_forward.9} parent=5 // pred_check_branch
        %116 = sbr.rel (%p113) target = $region12
      $region11: #{autoencoder_forward.9} parent=5 // pred_region
        %s117 = ssub.s32 %s9, 1
        // Predicated region
        $region13: #{autoencoder_forward.9} parent=11 // pred_check
          %p118 = pneg %p30
        $region14: #{autoencoder_forward.9} parent=11 // pred_check_branch
          %120 = sbr.rel (%p118) target = $region16
        $region15: #{autoencoder_forward.9} parent=11 // pred_region
          _
        $region16: #{autoencoder_forward.9} parent=11 // pred_fallthru
          _
        // Predicated region
        $region17: #{autoencoder_forward.9} parent=11 // pred_check
          %p121 = pneg %p77
        $region18: #{autoencoder_forward.9} parent=11 // pred_check_branch
          %123 = sbr.rel (%p121) target = $region20
        $region19: #{autoencoder_forward.9} parent=11 // pred_region
          _
        $region20: #{autoencoder_forward.9} parent=11 // pred_fallthru
          _
      $region12: #{autoencoder_forward.9} parent=5 // pred_fallthru
        _
      %p124 = scmp.lt.s32.totalorder %s9, 2
      // Predicated region
      $region21: #{autoencoder_forward.9} parent=5 // pred_check
        %p125 = pneg %p124
      $region22: #{autoencoder_forward.9} parent=5 // pred_check_branch
        %127 = sbr.rel (%p125) target = $region24
      $region23: #{autoencoder_forward.9} parent=5 // pred_region
        // Predicated region
        $region25: #{autoencoder_forward.9} parent=23 // pred_check
          %p128 = pneg %p50
        $region26: #{autoencoder_forward.9} parent=23 // pred_check_branch
          %130 = sbr.rel (%p128) target = $region28
        $region27: #{autoencoder_forward.9} parent=23 // pred_region
          %s131 = sand.u32 %s40, 1
          %s132 = sand.u32 %s40, 1
          %s133 = smul.addr %s132, 64
          %s134 = scalar_lea.vmem [#allocation2], %s133
          %s135 = smul.u32 2, %s9
          %s136 = smul.addr %s135, 4
          %s137 = scalar_lea.vmem %s1, %s136
          // Predicated region
          $region29: #{autoencoder_forward.9} parent=27 // pred_check
            _
          $region30: #{autoencoder_forward.9} parent=27 // pred_check_branch
            %139 = sbr.rel (0) target = $region32
          $region31: #{autoencoder_forward.9} parent=27 // pred_region
            // Predicated region
            $region33: #{autoencoder_forward.9} parent=31 // pred_check
              _
            $region34: #{autoencoder_forward.9} parent=31 // pred_check_branch
              %141 = sbr.rel (0) target = $region36
            $region35: #{autoencoder_forward.9} parent=31 // pred_region
              // Predicated region
              $region48: #{autoencoder_forward.9} parent=35 // pred_check
                _
              $region49: #{autoencoder_forward.9} parent=35 // pred_check_branch
                %170 = sbr.rel (0) target = $region51
              $region50: #{autoencoder_forward.9} parent=35 // pred_region
                loop: start=0, step=1, limit=1
                $region52: #{autoencoder_forward.9} parent=50 // loop_pre_header
                  _
                $region53: #{autoencoder_forward.9} parent=50 // loop_header
                  %s172 = sphi 0, %s176
                  %p173 = scmp.ge.s32.totalorder %s172, 1
                  %s177 = sphi %s137, %s137
                  %s178 = sphi %s134, %s134
                $region54: #{autoencoder_forward.9} parent=50 // loop_header_branch
                  %175 = sbr.rel (%p173) target = $region58
                $region55: #{autoencoder_forward.9} parent=50 // loop_body
                  %v179 = vld [vmem:[%s177] sm:$0xff]
                  %180 = vst [vmem:[%s178] sm:$0xff] %v179
                  %v181 = vld [vmem:[%s177 + $0x10] sm:$0xff]
                  %182 = vst [vmem:[%s178 + $0x8] sm:$0xff] %v181
                  %v183 = vld [vmem:[%s177 + $0x20] sm:$0xff]
                  %184 = vst [vmem:[%s178 + $0x10] sm:$0xff] %v183
                  %v185 = vld [vmem:[%s177 + $0x30] sm:$0xff]
                  %186 = vst [vmem:[%s178 + $0x18] sm:$0xff] %v185
                  %v187 = vld [vmem:[%s177 + $0x40] sm:$0xff]
                  %188 = vst [vmem:[%s178 + $0x20] sm:$0xff] %v187
                  %v189 = vld [vmem:[%s177 + $0x50] sm:$0xff]
                  %190 = vst [vmem:[%s178 + $0x28] sm:$0xff] %v189
                  %v191 = vld [vmem:[%s177 + $0x60] sm:$0xff]
                  %192 = vst [vmem:[%s178 + $0x30] sm:$0xff] %v191
                  %v193 = vld [vmem:[%s177 + $0x70] sm:$0xff]
                  %194 = vst [vmem:[%s178 + $0x38] sm:$0xff] %v193
                $region56: #{autoencoder_forward.9} parent=50 // loop_footer
                  %s176 = sadd.s32 1, %s172
                $region57: #{autoencoder_forward.9} parent=50 // loop_footer_branch
                  %171 = sbr.rel target = $region53
                $region58: #{autoencoder_forward.9} parent=50 // loop_exit
                  _
              $region51: #{autoencoder_forward.9} parent=35 // pred_fallthru
                _
              // Predicated region
              $region59: #{autoencoder_forward.9} parent=35 // pred_check
                _
              $region60: #{autoencoder_forward.9} parent=35 // pred_check_branch
                %196 = sbr.rel target = $region62
              $region61: #{autoencoder_forward.9} parent=35 // pred_region
                _
              $region62: #{autoencoder_forward.9} parent=35 // pred_fallthru
                _
            $region36: #{autoencoder_forward.9} parent=31 // pred_fallthru
              _
            // Predicated region
            $region37: #{autoencoder_forward.9} parent=31 // pred_check
              _
            $region38: #{autoencoder_forward.9} parent=31 // pred_check_branch
              %143 = sbr.rel target = $region40
            $region39: #{autoencoder_forward.9} parent=31 // pred_region
              loop: start=0, step=1, limit=1
              $region41: #{autoencoder_forward.9} parent=39 // loop_pre_header
                _
              $region42: #{autoencoder_forward.9} parent=39 // loop_header
                %s146 = sphi 0, %s150
                %p147 = scmp.ge.s32.totalorder %s146, 1
                %s151 = sphi %s137, %s137
                %s152 = sphi %s134, %s134
              $region43: #{autoencoder_forward.9} parent=39 // loop_header_branch
                %149 = sbr.rel (%p147) target = $region47
              $region44: #{autoencoder_forward.9} parent=39 // loop_body
                %v153 = vld [vmem:[%s151] sm:$0xff]
                %154 = vst [vmem:[%s152] sm:$0xff] %v153
                %v155 = vld [vmem:[%s151 + $0x10] sm:$0xff]
                %156 = vst [vmem:[%s152 + $0x8] sm:$0xff] %v155
                %v157 = vld [vmem:[%s151 + $0x20] sm:$0xff]
                %158 = vst [vmem:[%s152 + $0x10] sm:$0xff] %v157
                %v159 = vld [vmem:[%s151 + $0x30] sm:$0xff]
                %160 = vst [vmem:[%s152 + $0x18] sm:$0xff] %v159
                %v161 = vld [vmem:[%s151 + $0x40] sm:$0xff]
                %162 = vst [vmem:[%s152 + $0x20] sm:$0xff] %v161
                %v163 = vld [vmem:[%s151 + $0x50] sm:$0xff]
                %164 = vst [vmem:[%s152 + $0x28] sm:$0xff] %v163
                %v165 = vld [vmem:[%s151 + $0x60] sm:$0xff]
                %166 = vst [vmem:[%s152 + $0x30] sm:$0xff] %v165
                %v167 = vld [vmem:[%s151 + $0x70] sm:$0xff]
                %168 = vst [vmem:[%s152 + $0x38] sm:$0xff] %v167
              $region45: #{autoencoder_forward.9} parent=39 // loop_footer
                %s150 = sadd.s32 1, %s146
              $region46: #{autoencoder_forward.9} parent=39 // loop_footer_branch
                %145 = sbr.rel target = $region42
              $region47: #{autoencoder_forward.9} parent=39 // loop_exit
                _
            $region40: #{autoencoder_forward.9} parent=31 // pred_fallthru
              _
          $region32: #{autoencoder_forward.9} parent=27 // pred_fallthru
            _
          %197 = vnop
        $region28: #{autoencoder_forward.9} parent=23 // pred_fallthru
          _
      $region24: #{autoencoder_forward.9} parent=5 // pred_fallthru
        _
      %p198 = scmp.le.s32.totalorder 1, %s9
      %p199 = scmp.lt.s32.totalorder %s9, 3
      %p200 = pnand %p198, %p199
      %p201 = pneg %p200
      // Predicated region
      $region63: #{autoencoder_forward.9} parent=5 // pred_check
        _
      $region64: #{autoencoder_forward.9} parent=5 // pred_check_branch
        %203 = sbr.rel (%p200) target = $region66
      $region65: #{autoencoder_forward.9} parent=5 // pred_region
        %s204 = ssub.s32 %s9, 1
        %s205 = sand.u32 %s43, 1
        %s206 = sand.u32 %s43, 1
        %s207 = smul.addr %s206, 64
        %s208 = scalar_lea.vmem [#allocation2], %s207
        // Predicated region
        $region67: #{autoencoder_forward.9} parent=65 // pred_check
          %p209 = pneg %p56
        $region68: #{autoencoder_forward.9} parent=65 // pred_check_branch
          %211 = sbr.rel (%p209) target = $region70
        $region69: #{autoencoder_forward.9} parent=65 // pred_region
          _
        $region70: #{autoencoder_forward.9} parent=65 // pred_fallthru
          _
        %p212 = pneg %p30
        %p213 = pneg %p27
        %s214 = sand.u32 %s43, 1
        %s215 = sand.u32 %s43, 1
        %s216 = smul.addr %s215, 64
        %s217 = scalar_lea.vmem [#allocation2], %s216
        %p218 = pneg %p56
        %p219 = pneg %p53
        %p220 = pneg %p77
        %p221 = pneg %p74
        %p222 = pneg %p103
        %p223 = pneg %p100
        %s224 = smul.u32 2, %s14
        %p225 = scmp.lt.s32.totalorder %s224, 3
        %s226 = scalar_select %p225, %s224, 3
        %s227 = smul.addr %s226, 4
        %s228 = scalar_lea.vmem %s3, %s227
        %s229 = smul.u32 2, %s14
        %s230 = smul.u32 2, %s14
        %p231 = scmp.lt.s32.totalorder %s230, 3
        %s232 = scalar_select %p231, %s230, 3
        %s233 = smul.addr %s232, 4
        %s234 = scalar_lea.vmem %s3, %s233
        %s235 = smul.u32 2, %s14
        %v237 = vld [vmem:[%s0] sm:$0x3]
        %v238 = vld [vmem:[%s208] sm:$0xff]
        %v239 = vld [vmem:[%s208 + $0x8] sm:$0xff]
        %v240 = vld [vmem:[%s208 + $0x10] sm:$0xff]
        %v241 = vld [vmem:[%s208 + $0x18] sm:$0xff]
        %v242 = vld [vmem:[%s208 + $0x20] sm:$0xff]
        %v243 = vld [vmem:[%s208 + $0x28] sm:$0xff]
        %v244 = vld [vmem:[%s208 + $0x30] sm:$0xff]
        %v245 = vld [vmem:[%s208 + $0x38] sm:$0xff]
        %v246 = vld [vmem:[%s2] sm:$0xf]
        %248 = vset.pattern.permute.xlu0 0
        %249 = vperm.xlu0 %248, %v246
        %v250 = vpop.permute.xlu0 %249
        %v260 = vunpack.c.l.b16 %v238
        %v261 = vunpack.c.h.b16 %v238
        %v262 = vunpack.c.l.b16 %v239
        %v263 = vunpack.c.h.b16 %v239
        %v264 = vunpack.c.l.b16 %v240
        %v265 = vunpack.c.h.b16 %v240
        %v266 = vunpack.c.l.b16 %v241
        %v267 = vunpack.c.h.b16 %v241
        %v268 = vunpack.c.l.b16 %v242
        %v269 = vunpack.c.h.b16 %v242
        %v270 = vunpack.c.l.b16 %v243
        %v271 = vunpack.c.h.b16 %v243
        %v272 = vunpack.c.l.b16 %v244
        %v273 = vunpack.c.h.b16 %v244
        %v274 = vunpack.c.l.b16 %v245
        %v275 = vunpack.c.h.b16 %v245
        %v276 = vpack.c.b16 %v262, %v260
        %v277 = vpack.c.b16 %v263, %v261
        %v278 = vpack.c.b16 %v266, %v264
        %v279 = vpack.c.b16 %v267, %v265
        %v280 = vpack.c.b16 %v270, %v268
        %v281 = vpack.c.b16 %v271, %v269
        %v282 = vpack.c.b16 %v274, %v272
        %v283 = vpack.c.b16 %v275, %v273
        %vm292 = vcmask 523264
        %v294 = vsel %vm292, %v237, 0
        %296 = vmatprep.subr.bf16.mxu0 %v277
        %297 = vmatpush1.bf16.msra.mxu0 %v276
        %298 = vmatprep.subr.bf16.mxu0 %v279
        %299 = vmatpush1.bf16.msra.mxu0 %v278
        %300 = vmatprep.subr.bf16.mxu0 %v281
        %301 = vmatpush1.bf16.msra.mxu0 %v280
        %302 = vmatprep.subr.bf16.mxu0 %v283
        %303 = vmatpush1.bf16.msra.mxu0 %v282
        %304 = vmatprep.subr.bf16.mxu0 0
        %305 = vmatpush1.bf16.msra.mxu0 0
        %306 = vmatprep.subr.bf16.mxu0 0
        %307 = vmatpush1.bf16.msra.mxu0 0
        %308 = vmatprep.subr.bf16.mxu0 0
        %309 = vmatpush1.bf16.msra.mxu0 0
        %310 = vmatprep.subr.bf16.mxu0 0
        %311 = vmatpush1.bf16.msra.mxu0 0
        %312 = vmatprep.subr.bf16.mxu0 0
        %313 = vmatpush1.bf16.msra.mxu0 0
        %314 = vmatprep.subr.bf16.mxu0 0
        %315 = vmatpush1.bf16.msra.mxu0 0
        %316 = vmatprep.subr.bf16.mxu0 0
        %317 = vmatpush1.bf16.msra.mxu0 0
        %318 = vmatprep.subr.bf16.mxu0 0
        %319 = vmatpush1.bf16.msra.mxu0 0
        %320 = vmatprep.subr.bf16.mxu0 0
        %321 = vmatpush1.bf16.msra.mxu0 0
        %322 = vmatprep.subr.bf16.mxu0 0
        %323 = vmatpush1.bf16.msra.mxu0 0
        %324 = vmatprep.subr.bf16.mxu0 0
        %325 = vmatpush1.bf16.msra.mxu0 0
        %326 = vmatprep.subr.bf16.mxu0 0
        %327 = vmatpush1.bf16.msra.mxu0 0
        %328 = vmatprep.mubr.bf16.mxu0 0
        %329 = vmatmul.mubr.bf16.gmra.mrb[0].mxu0 %v294
        %v330 = vpop.f32.mrb[0].mxu0
        %v331 = vadd.f32 %v250, %v330
        %v332 = vpop.f32.mrb[0].mxu0
        %v333 = vadd.f32 %v250, %v332
        %v334 = vpop.f32.mrb[0].mxu0
        %v335 = vpop.f32.mrb[0].mxu0
        %336 = vdwg.mxu0
        %v337 = vsub.f32 0.0, %v331
        %v338 = vsub.f32 0.0, %v333
        %v339 = vmul.f32 %v337, 1.442695
        %v340 = vpow.pop %v339
        %v341 = vmul.f32 %v338, 1.442695
        %v342 = vpow.pop %v341
        %v343 = vadd.f32 %v340, 1.0
        %v344 = vadd.f32 %v342, 1.0
        %v345 = vrcp.pop %v343
        %v346 = vrcp.pop %v344
        %v347 = vmax.f32 %v345, 0.0
        %v348 = vmax.f32 %v346, 0.0
        %v349 = vmin.f32 %v347, 1.0
        %v350 = vmin.f32 %v348, 1.0
        %v353 = vcombine.low %v349, %v350
        %355 = vst [vmem:[%s234] sm:$0xff] %v353
        %s356 = smul.u32 2, %s14
        %p357 = scmp.lt.s32.totalorder %s356, 3
        %s358 = scalar_select %p357, %s356, 3
        %s359 = smul.addr %s358, 4
        %s360 = scalar_lea.vmem %s3, %s359
        // Predicated region
        $region71: #{autoencoder_forward.9} parent=65 // pred_check
          %p361 = pneg %p100
        $region72: #{autoencoder_forward.9} parent=65 // pred_check_branch
          %363 = sbr.rel (%p361) target = $region74
        $region73: #{autoencoder_forward.9} parent=65 // pred_region
          %s364 = smul.u32 2, %s14
        $region74: #{autoencoder_forward.9} parent=65 // pred_fallthru
          _
      $region66: #{autoencoder_forward.9} parent=5 // pred_fallthru
        _
      %p365 = scmp.le.s32.totalorder 2, %s9
      // Predicated region
      $region75: #{autoencoder_forward.9} parent=5 // pred_check
        %p366 = pneg %p365
      $region76: #{autoencoder_forward.9} parent=5 // pred_check_branch
        %368 = sbr.rel (%p366) target = $region78
      $region77: #{autoencoder_forward.9} parent=5 // pred_region
        %s369 = ssub.s32 %s9, 2
        // Predicated region
        $region79: #{autoencoder_forward.9} parent=77 // pred_check
          %p370 = pneg %p106
        $region80: #{autoencoder_forward.9} parent=77 // pred_check_branch
          %372 = sbr.rel (%p370) target = $region82
        $region81: #{autoencoder_forward.9} parent=77 // pred_region
          %s373 = smul.u32 2, %s15
          %p374 = scmp.lt.s32.totalorder %s373, 3
          %s375 = scalar_select %p374, %s373, 3
          %s376 = smul.addr %s375, 4
          %s377 = scalar_lea.vmem %s3, %s376
        $region82: #{autoencoder_forward.9} parent=77 // pred_fallthru
          _
      $region78: #{autoencoder_forward.9} parent=5 // pred_fallthru
        _
    $region6: #{autoencoder_forward.9} parent=1 // loop_footer
      %s13 = sadd.s32 1, %s9
    $region7: #{autoencoder_forward.9} parent=1 // loop_footer_branch
      %8 = sbr.rel target = $region3
    $region8: #{autoencoder_forward.9} parent=1 // loop_exit
      _

</llo_original>
